<compile_context>
chip_gen: v5e
topology: v5e:2x2
jax: 0.10.0
libtpu: 0.0.40
codegen_flags: <defaults>
</compile_context>

<pallas_src>
import functools
import math

import jax
import jax.numpy as jnp
from jax.experimental import pallas as pl
from jax.experimental.pallas import tpu as pltpu

# ----------------------------- model hyperparameters (small) -----------------------------
EMBED = 32        # transformer width == vision width == embed_dim
N_HEADS = 4
TEXT_LAYERS = 2
VIS_LAYERS = 2
VOCAB = 64
CTX = 8           # context length (text seq)
PATCH = 16
IMG = 32          # image resolution -> 2x2 grid -> 4 patches + 1 cls = 5 tokens
FRAMES = 2        # max_frames
BATCH = 2
VIS_TOKENS = (IMG // PATCH) ** 2 + 1      # 5
VIS_TOKENS_PAD = 8                        # padded to a full sublane tile

VMEM = pl.BlockSpec(memory_space=pltpu.MemorySpace.VMEM)
SMEM = pl.BlockSpec(memory_space=pltpu.MemorySpace.SMEM)

LAYER_W_ROWS = 7 * EMBED   # bf16-slab rows per layer: wqkv(D) + wout(D) + wfc1(D) + wfc2(4D)
LAYER_P_ROWS = 8           # f32-slab rows per layer: ln1g,ln1b,ln2g,ln2b,bqkv,bout,bfc1,bfc2


# --------------------------------- in-kernel helpers ---------------------------------
def _wrows(ref, start, nrows, ncols):
    """(nrows, ncols) static window of a packed (R, 128)-lane slab ref."""
    return ref[pl.ds(start, nrows), :][:, :ncols]


def _ln(x, g, b):
    """LayerNorm over the last dim. x: (M, D) f32; g, b: (1, D) f32."""
    mean = jnp.mean(x, axis=-1, keepdims=True)
    xc = x - mean
    var = jnp.mean(xc * xc, axis=-1, keepdims=True)
    return xc * jax.lax.rsqrt(var + 1e-5) * g + b


def _mm(a, w, b=None):
    """MXU matmul: bf16 operands, f32 accumulation."""
    y = jnp.dot(a.astype(jnp.bfloat16), w.astype(jnp.bfloat16),
                preferred_element_type=jnp.float32)
    if b is not None:
        y = y + b
    return y


def _block(x, mask, wb_ref, pf_ref, w_base, p_base, n_heads):
    """One CLIP residual attention block, fully VMEM/vreg resident.

    x: (B, T, D) f32; mask: (n_heads*B, T, T) or (1, T, T) additive f32 mask.
    wb_ref / pf_ref: packed bf16 / f32 parameter slabs; *_base: static row offsets.
    """
    B, T, D = x.shape
    H = n_heads
    Dh = D // H
    scale = 1.0 / math.sqrt(Dh)

    wqkv = _wrows(wb_ref, w_base, D, 3 * D)            # bf16
    wout = _wrows(wb_ref, w_base + D, D, D)            # bf16
    wfc1 = _wrows(wb_ref, w_base + 2 * D, D, 4 * D)    # bf16
    wfc2 = _wrows(wb_ref, w_base + 3 * D, 4 * D, D)    # bf16
    ln1g = _wrows(pf_ref, p_base + 0, 1, D)
    ln1b = _wrows(pf_ref, p_base + 1, 1, D)
    ln2g = _wrows(pf_ref, p_base + 2, 1, D)
    ln2b = _wrows(pf_ref, p_base + 3, 1, D)
    bqkv = _wrows(pf_ref, p_base + 4, 1, 3 * D)
    bout = _wrows(pf_ref, p_base + 5, 1, D)
    bfc1 = _wrows(pf_ref, p_base + 6, 1, 4 * D)
    bfc2 = _wrows(pf_ref, p_base + 7, 1, D)

    x2 = x.reshape(B * T, D)
    h = _ln(x2, ln1g, ln1b)
    qkv = _mm(h, wqkv, bqkv).reshape(B, T, 3 * D)      # f32 (B, T, 3D)

    # head-batched attention: one QK/mask/softmax/PV over the fused (head*batch) dim
    q = jnp.stack([qkv[:, :, i * Dh:(i + 1) * Dh] for i in range(H)], axis=0)
    k = jnp.stack([qkv[:, :, D + i * Dh:D + (i + 1) * Dh] for i in range(H)], axis=0)
    v = jnp.stack([qkv[:, :, 2 * D + i * Dh:2 * D + (i + 1) * Dh] for i in range(H)], axis=0)
    q = q.reshape(H * B, T, Dh).astype(jnp.bfloat16)
    k = k.reshape(H * B, T, Dh).astype(jnp.bfloat16)
    v = v.reshape(H * B, T, Dh).astype(jnp.bfloat16)
    s = jnp.einsum("nqd,nkd->nqk", q, k, preferred_element_type=jnp.float32) * scale
    s = s + mask                                       # (H*B,T,T) or broadcast (1,T,T)
    s = s - jnp.max(s, axis=-1, keepdims=True)
    p = jnp.exp(s)
    p = p * pl.reciprocal(jnp.sum(p, axis=-1, keepdims=True), approx=True)
    o = jnp.einsum("nqk,nkd->nqd", p.astype(jnp.bfloat16), v,
                   preferred_element_type=jnp.float32)  # (H*B, T, Dh) f32

    # fold the per-head concat into the output projection (sublane-aligned weight slices)
    attn = None
    for i in range(H):
        o_i = o[i * B:(i + 1) * B].reshape(B * T, Dh)
        c = _mm(o_i, wout[i * Dh:(i + 1) * Dh, :])
        attn = c if attn is None else attn + c

    x2 = x2 + attn + bout
    h2 = _ln(x2, ln2g, ln2b)
    f = _mm(h2, wfc1, bfc1)
    f = f * jax.nn.sigmoid(1.702 * f)                  # CLIP QuickGELU (f32)
    x2 = x2 + _mm(f, wfc2, bfc2)
    return x2.reshape(B, T, D)


# ----------------------------------- fused Pallas kernel -----------------------------------
def _vtr_fused_kernel(xt_ref, tmask_ref, tgather_ref,
                      aug_ref, vpos_ref, vmask_ref, vgather_ref, pool_ref,
                      wb_ref, pf_ref, scale_ref, loss_ref,
                      *, text_layers, vis_layers, n_heads):
    D = xt_ref.shape[-1]                 # = EMBED (projection width E == D in this config)
    L = text_layers + vis_layers
    LW = 7 * D
    LP = 8
    g_base = L * LP                      # global LN rows in the f32 slab
    proj_base = L * LW                   # text/vis projection rows in the bf16 slab

    # ------------------------------ text encoder ------------------------------
    x = xt_ref[...]                      # (B, T, D) token+pos embeddings
    B, T, _ = x.shape
    mask_t = tmask_ref[...]              # (H*B, T, T) additive (causal + key-padding) mask
    for l in range(text_layers):
        x = _block(x, mask_t, wb_ref, pf_ref, l * LW, l * LP, n_heads)
    hidden = _ln(x.reshape(B * T, D),
                 _wrows(pf_ref, g_base + 0, 1, D), _wrows(pf_ref, g_base + 1, 1, D))
    # gather the EOT rows (one-hot matmul) *before* the text projection
    cls = _mm(tgather_ref[...], hidden)
    t_feat = _mm(cls, _wrows(wb_ref, proj_base, D, D))          # (B, E)

    # ------------------------------ vision encoder ------------------------------
    aug = aug_ref[...]                   # (BN, Tp, Kpad) bf16 [patch pixels | cls indicator]
    BN, Tp, Kpad = aug.shape
    emb_base = proj_base + 2 * D
    w_emb = _wrows(wb_ref, emb_base, Kpad, D)                    # (Kpad, D) bf16
    tokens = jnp.dot(aug.reshape(BN * Tp, Kpad), w_emb,
                     preferred_element_type=jnp.float32)
    xv = tokens.reshape(BN, Tp, D) + vpos_ref[...][None, :, :]
    xv = _ln(xv.reshape(BN * Tp, D),
             _wrows(pf_ref, g_base + 2, 1, D),
             _wrows(pf_ref, g_base + 3, 1, D)).reshape(BN, Tp, D)
    mask_v = vmask_ref[...]              # (1, Tp, Tp): -inf on padded key tokens
    for l in range(vis_layers):
        li = text_layers + l
        xv = _block(xv, mask_v, wb_ref, pf_ref, li * LW, li * LP, n_heads)
    # per-frame cls token (one-hot gather) -> ln_post -> visual projection
    xc = _mm(vgather_ref[...], xv.reshape(BN * Tp, D))
    xc = _ln(xc, _wrows(pf_ref, g_base + 4, 1, D), _wrows(pf_ref, g_base + 5, 1, D))
    v_frame = _mm(xc, _wrows(wb_ref, proj_base + D, D, D))       # (BN, E)

    # ---------------------- masked frame pooling + contrastive loss ----------------------
    vf = v_frame * jax.lax.rsqrt(jnp.sum(v_frame * v_frame, axis=-1, keepdims=True))
    pool = pool_ref[...]                 # (B, BN) block-diagonal frame-validity selector
    num = jnp.dot(pool, vf, preferred_element_type=jnp.float32)  # sum of valid frame feats
    den = jnp.sum(pool, axis=-1, keepdims=True)                  # valid frame counts
    den = jnp.where(den == 0.0, 1.0, den)
    v = num * pl.reciprocal(den, approx=True)
    t = t_feat * jax.lax.rsqrt(jnp.sum(t_feat * t_feat, axis=-1, keepdims=True))
    v = v * jax.lax.rsqrt(jnp.sum(v * v, axis=-1, keepdims=True))
    logits = jax.lax.dot_general(t, v, (((1,), (1,)), ((), ())),
                                 preferred_element_type=jnp.float32)
    logits = logits * scale_ref[0, 0]
    nB = logits.shape[0]
    ii = jax.lax.broadcasted_iota(jnp.int32, logits.shape, 0)
    jj = jax.lax.broadcasted_iota(jnp.int32, logits.shape, 1)
    eye = ii == jj
    diag_r = jnp.sum(jnp.where(eye, logits, 0.0), axis=-1, keepdims=True)   # (B,1)
    diag_c = jnp.sum(jnp.where(eye, logits, 0.0), axis=0, keepdims=True)    # (1,B)
    mx_r = jnp.max(logits, axis=-1, keepdims=True)
    lse_r = jnp.log(jnp.sum(jnp.exp(logits - mx_r), axis=-1, keepdims=True)) + mx_r
    mx_c = jnp.max(logits, axis=0, keepdims=True)
    lse_c = jnp.log(jnp.sum(jnp.exp(logits - mx_c), axis=0, keepdims=True)) + mx_c
    loss_t2v = -jnp.sum(diag_r - lse_r, keepdims=True) / nB                 # (1,1)
    loss_v2t = -jnp.sum(diag_c - lse_c, keepdims=True) / nB                 # (1,1)
    loss_ref[...] = 0.5 * (loss_t2v + loss_v2t)


# -------------------------------- parameter slab packing --------------------------------
def _pad_cols(w, width=128):
    out = jnp.zeros((w.shape[0], width), jnp.float32)
    return out.at[:, :w.shape[1]].set(w.astype(jnp.float32))


def _pack_bf16_slab(params, cpp, kpad):
    """One bf16 slab: per-layer [wqkv|wout|wfc1|wfc2], then tproj, vproj, patch-embed."""
    d = EMBED
    pieces = []
    for blk in params["text_blocks"] + params["vis_blocks"]:
        pieces += [_pad_cols(blk["in_w"].T),   # (D, 3D)
                   _pad_cols(blk["out_w"].T),  # (D, D)
                   _pad_cols(blk["fc1_w"].T),  # (D, 4D)
                   _pad_cols(blk["fc2_w"].T)]  # (4D, D)
    pieces += [_pad_cols(params["text_projection"]), _pad_cols(params["vis_proj"])]
    # conv1 (stride=kernel=PATCH, no bias) folded with the cls token into one augmented
    # embedding matrix; K padded to a multiple of 128 with the cls row inside the padding.
    w_emb = jnp.zeros((kpad, d), jnp.float32)
    w_emb = w_emb.at[:cpp, :].set(params["conv1_w"].reshape(d, cpp).T)
    w_emb = w_emb.at[cpp, :].set(params["class_embedding"])
    pieces.append(_pad_cols(w_emb))
    return jnp.concatenate(pieces, axis=0).astype(jnp.bfloat16)


def _pack_f32_slab(params):
    """One f32 slab: per-layer LN gammas/betas + biases, then the global LN params."""
    def row(v):
        r = jnp.zeros((1, 128), jnp.float32)
        return r.at[0, :v.shape[0]].set(v.astype(jnp.float32))
    rows = []
    for blk in params["text_blocks"] + params["vis_blocks"]:
        rows += [row(blk["ln1_g"]), row(blk["ln1_b"]), row(blk["ln2_g"]), row(blk["ln2_b"]),
                 row(blk["in_b"]), row(blk["out_b"]), row(blk["fc1_b"]), row(blk["fc2_b"])]
    rows += [row(params["ln_final_g"]), row(params["ln_final_b"]),
             row(params["ln_pre_g"]), row(params["ln_pre_b"]),
             row(params["ln_post_g"]), row(params["ln_post_b"]),
             jnp.zeros((2, 128), jnp.float32)]
    return jnp.concatenate(rows, axis=0)


# ------------------------------------ forward wrapper ------------------------------------
def vtr_forward(params, text_ids, text_mask, video, video_mask):
    text_ids = text_ids.reshape(-1, text_ids.shape[-1])
    text_mask = text_mask.reshape(-1, text_mask.shape[-1])
    video_mask = video_mask.reshape(-1, video_mask.shape[-1])
    video = video.astype(jnp.float32)
    b, n_f, C, H, W = video.shape
    video = video.reshape(b * n_f, C, H, W)
    bn = b * n_f
    d = EMBED
    T = text_ids.shape[-1]

    # ---- text-side inputs (embedding lookup + masks / one-hot gathers stay in plain JAX) ----
    xt = params["token_embedding"][text_ids] + params["positional_embedding"][:T]
    causal = jnp.triu(jnp.full((T, T), float("-inf"), jnp.float32), k=1)
    amask = jnp.where(text_mask[:, None, :] > 0, causal[None, :, :], float("-inf"))
    amask = jnp.tile(amask, (N_HEADS, 1, 1))        # head-batched attention: n = h*B + b
    eot = jnp.argmax(text_ids, axis=-1)
    tgather = jax.nn.one_hot(jnp.arange(b) * T + eot, b * T, dtype=jnp.float32)

    # ---- vision-side inputs ----
    g = H // PATCH
    pn = g * g
    cpp = C * PATCH * PATCH
    kpad = ((cpp + 1 + 127) // 128) * 128           # 769 -> 896, tile-aligned contraction
    Tp = VIS_TOKENS_PAD
    patches = video.reshape(bn, C, g, PATCH, g, PATCH).transpose(0, 2, 4, 1, 3, 5)
    patches = patches.reshape(bn, pn, cpp)
    aug = jnp.zeros((bn, Tp, kpad), jnp.float32)
    aug = aug.at[:, 1:pn + 1, :cpp].set(patches)
    aug = aug.at[:, 0, cpp].set(1.0)                # cls-indicator column lives in the padding
    vpos = jnp.zeros((Tp, d), jnp.float32).at[:VIS_TOKENS].set(params["vis_pos_embedding"])
    key_valid = jnp.arange(Tp) < VIS_TOKENS
    vmask = jnp.broadcast_to(
        jnp.where(key_valid, 0.0, float("-inf"))[None, None, :], (1, Tp, Tp))
    vgather = jax.nn.one_hot(jnp.arange(bn) * Tp, bn * Tp, dtype=jnp.float32)
    # block-diagonal frame-pooling selector: pool[b, b*n_f+f] = video_mask[b, f]
    pool = (jnp.repeat(jnp.eye(b, dtype=jnp.float32), n_f, axis=1)
            * video_mask.reshape(1, -1).astype(jnp.float32))

    wb = _pack_bf16_slab(params, cpp, kpad)
    pf = _pack_f32_slab(params)
    scale = jnp.exp(params["logit_scale"]).reshape(1, 1)

    kern = functools.partial(_vtr_fused_kernel,
                             text_layers=len(params["text_blocks"]),
                             vis_layers=len(params["vis_blocks"]),
                             n_heads=N_HEADS)
    out = pl.pallas_call(
        kern,
        out_shape=jax.ShapeDtypeStruct((1, 1), jnp.float32),
        in_specs=[VMEM] * 10 + [SMEM],
        out_specs=VMEM,
    )(xt.astype(jnp.float32), amask.astype(jnp.float32), tgather,
      aug.astype(jnp.bfloat16), vpos, vmask.astype(jnp.float32), vgather, pool,
      wb, pf, scale.astype(jnp.float32))
    return out[0, 0]


# -------------------------------- parameter initialization --------------------------------
def _block_params(key, d):
    ks = jax.random.split(key, 4)
    s = 0.02
    return dict(
        ln1_g=jnp.ones((d,), jnp.float32), ln1_b=jnp.zeros((d,), jnp.float32),
        in_w=s * jax.random.normal(ks[0], (3 * d, d), jnp.float32),
        in_b=jnp.zeros((3 * d,), jnp.float32),
        out_w=s * jax.random.normal(ks[1], (d, d), jnp.float32),
        out_b=jnp.zeros((d,), jnp.float32),
        ln2_g=jnp.ones((d,), jnp.float32), ln2_b=jnp.zeros((d,), jnp.float32),
        fc1_w=s * jax.random.normal(ks[2], (4 * d, d), jnp.float32),
        fc1_b=jnp.zeros((4 * d,), jnp.float32),
        fc2_w=s * jax.random.normal(ks[3], (d, 4 * d), jnp.float32),
        fc2_b=jnp.zeros((d,), jnp.float32),
    )


def init_params(key):
    d = EMBED
    keys = jax.random.split(key, 10 + TEXT_LAYERS + VIS_LAYERS)
    n_tok = VIS_TOKENS
    p = dict(
        token_embedding=0.02 * jax.random.normal(keys[0], (VOCAB, d), jnp.float32),
        positional_embedding=0.01 * jax.random.normal(keys[1], (CTX, d), jnp.float32),
        ln_final_g=jnp.ones((d,), jnp.float32), ln_final_b=jnp.zeros((d,), jnp.float32),
        text_projection=0.02 * jax.random.normal(keys[2], (d, EMBED), jnp.float32),
        conv1_w=0.02 * jax.random.normal(keys[3], (d, 3, PATCH, PATCH), jnp.float32),
        class_embedding=0.02 * jax.random.normal(keys[4], (d,), jnp.float32),
        vis_pos_embedding=0.01 * jax.random.normal(keys[5], (n_tok, d), jnp.float32),
        ln_pre_g=jnp.ones((d,), jnp.float32), ln_pre_b=jnp.zeros((d,), jnp.float32),
        ln_post_g=jnp.ones((d,), jnp.float32), ln_post_b=jnp.zeros((d,), jnp.float32),
        vis_proj=0.02 * jax.random.normal(keys[6], (d, EMBED), jnp.float32),
        logit_scale=jnp.array(math.log(1.0 / 0.07), jnp.float32),
    )
    p["text_blocks"] = [_block_params(keys[10 + i], d) for i in range(TEXT_LAYERS)]
    p["vis_blocks"] = [_block_params(keys[10 + TEXT_LAYERS + i], d) for i in range(VIS_LAYERS)]
    return p


# ------------------------------------------ main ------------------------------------------
if __name__ == "__main__":
    key = jax.random.PRNGKey(0)
    kp, k1, k2 = jax.random.split(key, 3)
    params = init_params(kp)

    lengths = jnp.array([CTX, CTX - 3], jnp.int32)
    pos = jnp.arange(CTX)[None, :]
    text_mask = (pos < lengths[:, None]).astype(jnp.int32)
    text_ids = jax.random.randint(k1, (BATCH, CTX), 1, VOCAB - 1)
    text_ids = text_ids * text_mask
    text_ids = text_ids.at[jnp.arange(BATCH), lengths - 1].set(VOCAB - 1)  # EOT = max id

    video = jax.random.normal(k2, (BATCH, FRAMES, 3, IMG, IMG), jnp.float32)
    video_mask = jnp.array([[1, 1], [1, 0]], jnp.int32)

    loss = jax.jit(vtr_forward)(params, text_ids, text_mask, video, video_mask)
    loss = jax.block_until_ready(loss)
    assert loss.shape == () and bool(jnp.isfinite(loss))
    print("KERNEL_OK")
</pallas_src>

<mosaic_0001>
module attributes {stable_mosaic.version = 11 : i64} {
  func.func @_vtr_fused_kernel(%arg0: memref<2x8x32xf32, #tpu.memory_space<vmem>>, %arg1: memref<8x8x8xf32, #tpu.memory_space<vmem>>, %arg2: memref<2x16xf32, #tpu.memory_space<vmem>>, %arg3: memref<4x8x896xbf16, #tpu.memory_space<vmem>>, %arg4: memref<8x32xf32, #tpu.memory_space<vmem>>, %arg5: memref<1x8x8xf32, #tpu.memory_space<vmem>>, %arg6: memref<4x32xf32, #tpu.memory_space<vmem>>, %arg7: memref<2x4xf32, #tpu.memory_space<vmem>>, %arg8: memref<1856x128xbf16, #tpu.memory_space<vmem>>, %arg9: memref<40x128xf32, #tpu.memory_space<vmem>>, %arg10: memref<1x1xf32, #tpu.memory_space<smem>>, %arg11: memref<1x1xf32, #tpu.memory_space<vmem>>) attributes {dimension_semantics = [], scalar_prefetch = 0 : i64, scratch_operands = 0 : i64, tpu.core_type = #tpu.core_type<tc>} {
    %c0 = arith.constant 0 : index
    %c0_0 = arith.constant 0 : index
    %c0_1 = arith.constant 0 : index
    %0 = vector.load %arg0[%c0, %c0_0, %c0_1] : memref<2x8x32xf32, #tpu.memory_space<vmem>>, vector<2x8x32xf32>
    %c0_2 = arith.constant 0 : index
    %c0_3 = arith.constant 0 : index
    %c0_4 = arith.constant 0 : index
    %1 = vector.load %arg1[%c0_2, %c0_3, %c0_4] : memref<8x8x8xf32, #tpu.memory_space<vmem>>, vector<8x8x8xf32>
    %c0_5 = arith.constant 0 : index
    %c0_6 = arith.constant 0 : index
    %2 = vector.load %arg8[%c0_5, %c0_6] : memref<1856x128xbf16, #tpu.memory_space<vmem>>, vector<32x128xbf16>
    %3 = vector.extract_strided_slice %2 {offsets = [0, 0], sizes = [32, 96], strides = [1, 1]} : vector<32x128xbf16> to vector<32x96xbf16>
    %c32 = arith.constant 32 : index
    %c0_7 = arith.constant 0 : index
    %4 = vector.load %arg8[%c32, %c0_7] : memref<1856x128xbf16, #tpu.memory_space<vmem>>, vector<32x128xbf16>
    %5 = vector.extract_strided_slice %4 {offsets = [0, 0], sizes = [32, 32], strides = [1, 1]} : vector<32x128xbf16> to vector<32x32xbf16>
    %c64 = arith.constant 64 : index
    %c0_8 = arith.constant 0 : index
    %6 = vector.load %arg8[%c64, %c0_8] : memref<1856x128xbf16, #tpu.memory_space<vmem>>, vector<32x128xbf16>
    %c96 = arith.constant 96 : index
    %c0_9 = arith.constant 0 : index
    %7 = vector.load %arg8[%c96, %c0_9] : memref<1856x128xbf16, #tpu.memory_space<vmem>>, vector<128x128xbf16>
    %8 = vector.extract_strided_slice %7 {offsets = [0, 0], sizes = [128, 32], strides = [1, 1]} : vector<128x128xbf16> to vector<128x32xbf16>
    %c0_10 = arith.constant 0 : index
    %c0_11 = arith.constant 0 : index
    %9 = vector.load %arg9[%c0_10, %c0_11] : memref<40x128xf32, #tpu.memory_space<vmem>>, vector<1x128xf32>
    %10 = vector.extract_strided_slice %9 {offsets = [0, 0], sizes = [1, 32], strides = [1, 1]} : vector<1x128xf32> to vector<1x32xf32>
    %c1 = arith.constant 1 : index
    %c0_12 = arith.constant 0 : index
    %11 = vector.load %arg9[%c1, %c0_12] : memref<40x128xf32, #tpu.memory_space<vmem>>, vector<1x128xf32>
    %12 = vector.extract_strided_slice %11 {offsets = [0, 0], sizes = [1, 32], strides = [1, 1]} : vector<1x128xf32> to vector<1x32xf32>
    %c2 = arith.constant 2 : index
    %c0_13 = arith.constant 0 : index
    %13 = vector.load %arg9[%c2, %c0_13] : memref<40x128xf32, #tpu.memory_space<vmem>>, vector<1x128xf32>
    %14 = vector.extract_strided_slice %13 {offsets = [0, 0], sizes = [1, 32], strides = [1, 1]} : vector<1x128xf32> to vector<1x32xf32>
    %c3 = arith.constant 3 : index
    %c0_14 = arith.constant 0 : index
    %15 = vector.load %arg9[%c3, %c0_14] : memref<40x128xf32, #tpu.memory_space<vmem>>, vector<1x128xf32>
    %16 = vector.extract_strided_slice %15 {offsets = [0, 0], sizes = [1, 32], strides = [1, 1]} : vector<1x128xf32> to vector<1x32xf32>
    %c4 = arith.constant 4 : index
    %c0_15 = arith.constant 0 : index
    %17 = vector.load %arg9[%c4, %c0_15] : memref<40x128xf32, #tpu.memory_space<vmem>>, vector<1x128xf32>
    %18 = vector.extract_strided_slice %17 {offsets = [0, 0], sizes = [1, 96], strides = [1, 1]} : vector<1x128xf32> to vector<1x96xf32>
    %c5 = arith.constant 5 : index
    %c0_16 = arith.constant 0 : index
    %19 = vector.load %arg9[%c5, %c0_16] : memref<40x128xf32, #tpu.memory_space<vmem>>, vector<1x128xf32>
    %20 = vector.extract_strided_slice %19 {offsets = [0, 0], sizes = [1, 32], strides = [1, 1]} : vector<1x128xf32> to vector<1x32xf32>
    %c6 = arith.constant 6 : index
    %c0_17 = arith.constant 0 : index
    %21 = vector.load %arg9[%c6, %c0_17] : memref<40x128xf32, #tpu.memory_space<vmem>>, vector<1x128xf32>
    %c7 = arith.constant 7 : index
    %c0_18 = arith.constant 0 : index
    %22 = vector.load %arg9[%c7, %c0_18] : memref<40x128xf32, #tpu.memory_space<vmem>>, vector<1x128xf32>
    %23 = vector.extract_strided_slice %22 {offsets = [0, 0], sizes = [1, 32], strides = [1, 1]} : vector<1x128xf32> to vector<1x32xf32>
    %24 = vector.shape_cast %0 : vector<2x8x32xf32> to vector<16x32xf32>
    %cst = arith.constant dense<0.000000e+00> : vector<16xf32>
    %25 = vector.multi_reduction <add>, %24, %cst [1] : vector<16x32xf32> to vector<16xf32>
    %26 = vector.shape_cast %25 : vector<16xf32> to vector<16x1xf32>
    %cst_19 = arith.constant 3.200000e+01 : f32
    %27 = vector.broadcast %cst_19 : f32 to vector<16x1xf32>
    %28 = arith.divf %26, %27 : vector<16x1xf32>
    %29 = vector.broadcast %28 : vector<16x1xf32> to vector<16x32xf32>
    %30 = arith.subf %24, %29 : vector<16x32xf32>
    %31 = arith.mulf %30, %30 : vector<16x32xf32>
    %cst_20 = arith.constant dense<0.000000e+00> : vector<16xf32>
    %32 = vector.multi_reduction <add>, %31, %cst_20 [1] : vector<16x32xf32> to vector<16xf32>
    %33 = vector.shape_cast %32 : vector<16xf32> to vector<16x1xf32>
    %cst_21 = arith.constant 3.200000e+01 : f32
    %34 = vector.broadcast %cst_21 : f32 to vector<16x1xf32>
    %35 = arith.divf %33, %34 : vector<16x1xf32>
    %cst_22 = arith.constant 9.99999974E-6 : f32
    %36 = vector.broadcast %cst_22 : f32 to vector<16x1xf32>
    %37 = arith.addf %35, %36 : vector<16x1xf32>
    %38 = math.rsqrt %37 : vector<16x1xf32>
    %39 = vector.broadcast %38 : vector<16x1xf32> to vector<16x32xf32>
    %40 = arith.mulf %30, %39 : vector<16x32xf32>
    %41 = vector.broadcast %10 : vector<1x32xf32> to vector<16x32xf32>
    %42 = arith.mulf %40, %41 : vector<16x32xf32>
    %43 = vector.broadcast %12 : vector<1x32xf32> to vector<16x32xf32>
    %44 = arith.addf %42, %43 : vector<16x32xf32>
    %45 = arith.truncf %44 : vector<16x32xf32> to vector<16x32xbf16>
    %cst_23 = arith.constant dense<0.000000e+00> : vector<16x96xf32>
    %46 = tpu.matmul %45, %3, %cst_23 {dimension_numbers = #tpu.dot_dimension_numbers<[1], [0], [0], [1], [0, 0, 1, 1], [], []>} : vector<16x32xbf16>, vector<32x96xbf16>, vector<16x96xf32> -> vector<16x96xf32>
    %47 = vector.broadcast %18 : vector<1x96xf32> to vector<16x96xf32>
    %48 = arith.addf %46, %47 : vector<16x96xf32>
    %49 = vector.shape_cast %48 : vector<16x96xf32> to vector<2x8x96xf32>
    %50 = vector.extract_strided_slice %49 {offsets = [0, 0, 0], sizes = [2, 8, 8], strides = [1, 1, 1]} : vector<2x8x96xf32> to vector<2x8x8xf32>
    %51 = vector.extract_strided_slice %49 {offsets = [0, 0, 8], sizes = [2, 8, 8], strides = [1, 1, 1]} : vector<2x8x96xf32> to vector<2x8x8xf32>
    %52 = vector.extract_strided_slice %49 {offsets = [0, 0, 16], sizes = [2, 8, 8], strides = [1, 1, 1]} : vector<2x8x96xf32> to vector<2x8x8xf32>
    %53 = vector.extract_strided_slice %49 {offsets = [0, 0, 24], sizes = [2, 8, 8], strides = [1, 1, 1]} : vector<2x8x96xf32> to vector<2x8x8xf32>
    %54 = vector.shape_cast %50 : vector<2x8x8xf32> to vector<1x2x8x8xf32>
    %55 = vector.shape_cast %51 : vector<2x8x8xf32> to vector<1x2x8x8xf32>
    %56 = vector.shape_cast %52 : vector<2x8x8xf32> to vector<1x2x8x8xf32>
    %57 = vector.shape_cast %53 : vector<2x8x8xf32> to vector<1x2x8x8xf32>
    %58 = tpu.concatenate %54, %55, %56, %57 in 0 : vector<1x2x8x8xf32>, vector<1x2x8x8xf32>, vector<1x2x8x8xf32>, vector<1x2x8x8xf32> -> vector<4x2x8x8xf32>
    %59 = vector.extract_strided_slice %49 {offsets = [0, 0, 32], sizes = [2, 8, 8], strides = [1, 1, 1]} : vector<2x8x96xf32> to vector<2x8x8xf32>
    %60 = vector.extract_strided_slice %49 {offsets = [0, 0, 40], sizes = [2, 8, 8], strides = [1, 1, 1]} : vector<2x8x96xf32> to vector<2x8x8xf32>
    %61 = vector.extract_strided_slice %49 {offsets = [0, 0, 48], sizes = [2, 8, 8], strides = [1, 1, 1]} : vector<2x8x96xf32> to vector<2x8x8xf32>
    %62 = vector.extract_strided_slice %49 {offsets = [0, 0, 56], sizes = [2, 8, 8], strides = [1, 1, 1]} : vector<2x8x96xf32> to vector<2x8x8xf32>
    %63 = vector.shape_cast %59 : vector<2x8x8xf32> to vector<1x2x8x8xf32>
    %64 = vector.shape_cast %60 : vector<2x8x8xf32> to vector<1x2x8x8xf32>
    %65 = vector.shape_cast %61 : vector<2x8x8xf32> to vector<1x2x8x8xf32>
    %66 = vector.shape_cast %62 : vector<2x8x8xf32> to vector<1x2x8x8xf32>
    %67 = tpu.concatenate %63, %64, %65, %66 in 0 : vector<1x2x8x8xf32>, vector<1x2x8x8xf32>, vector<1x2x8x8xf32>, vector<1x2x8x8xf32> -> vector<4x2x8x8xf32>
    %68 = vector.extract_strided_slice %49 {offsets = [0, 0, 64], sizes = [2, 8, 8], strides = [1, 1, 1]} : vector<2x8x96xf32> to vector<2x8x8xf32>
    %69 = vector.extract_strided_slice %49 {offsets = [0, 0, 72], sizes = [2, 8, 8], strides = [1, 1, 1]} : vector<2x8x96xf32> to vector<2x8x8xf32>
    %70 = vector.extract_strided_slice %49 {offsets = [0, 0, 80], sizes = [2, 8, 8], strides = [1, 1, 1]} : vector<2x8x96xf32> to vector<2x8x8xf32>
    %71 = vector.extract_strided_slice %49 {offsets = [0, 0, 88], sizes = [2, 8, 8], strides = [1, 1, 1]} : vector<2x8x96xf32> to vector<2x8x8xf32>
    %72 = vector.shape_cast %68 : vector<2x8x8xf32> to vector<1x2x8x8xf32>
    %73 = vector.shape_cast %69 : vector<2x8x8xf32> to vector<1x2x8x8xf32>
    %74 = vector.shape_cast %70 : vector<2x8x8xf32> to vector<1x2x8x8xf32>
    %75 = vector.shape_cast %71 : vector<2x8x8xf32> to vector<1x2x8x8xf32>
    %76 = tpu.concatenate %72, %73, %74, %75 in 0 : vector<1x2x8x8xf32>, vector<1x2x8x8xf32>, vector<1x2x8x8xf32>, vector<1x2x8x8xf32> -> vector<4x2x8x8xf32>
    %77 = vector.shape_cast %58 : vector<4x2x8x8xf32> to vector<8x8x8xf32>
    %78 = arith.truncf %77 : vector<8x8x8xf32> to vector<8x8x8xbf16>
    %79 = vector.shape_cast %67 : vector<4x2x8x8xf32> to vector<8x8x8xf32>
    %80 = arith.truncf %79 : vector<8x8x8xf32> to vector<8x8x8xbf16>
    %81 = vector.shape_cast %76 : vector<4x2x8x8xf32> to vector<8x8x8xf32>
    %82 = arith.truncf %81 : vector<8x8x8xf32> to vector<8x8x8xbf16>
    "tpu.trace_start"() <{level = 10 : i32, message = "nqd,nkd->nqk"}> : () -> ()
    %cst_24 = arith.constant dense<0.000000e+00> : vector<8x8x8xf32>
    %83 = tpu.matmul %78, %80, %cst_24 {dimension_numbers = #tpu.dot_dimension_numbers<[2], [2], [1], [1], [0, 0, 0, 1, 1, 1], [0], [0]>} : vector<8x8x8xbf16>, vector<8x8x8xbf16>, vector<8x8x8xf32> -> vector<8x8x8xf32>
    "tpu.trace_stop"() : () -> ()
    %cst_25 = arith.constant 0.353553385 : f32
    %84 = vector.broadcast %cst_25 : f32 to vector<8x8x8xf32>
    %85 = arith.mulf %83, %84 : vector<8x8x8xf32>
    %86 = arith.addf %85, %1 : vector<8x8x8xf32>
    %cst_26 = arith.constant dense<0xFF800000> : vector<8x8xf32>
    %87 = vector.multi_reduction <maximumf>, %86, %cst_26 [2] : vector<8x8x8xf32> to vector<8x8xf32>
    %88 = vector.shape_cast %87 : vector<8x8xf32> to vector<8x8x1xf32>
    %89 = vector.broadcast %88 : vector<8x8x1xf32> to vector<8x8x8xf32>
    %90 = arith.subf %86, %89 : vector<8x8x8xf32>
    %91 = math.exp %90 : vector<8x8x8xf32>
    %cst_27 = arith.constant dense<0.000000e+00> : vector<8x8xf32>
    %92 = vector.multi_reduction <add>, %91, %cst_27 [2] : vector<8x8x8xf32> to vector<8x8xf32>
    %93 = vector.shape_cast %92 : vector<8x8xf32> to vector<8x8x1xf32>
    %94 = tpu.reciprocal %93 {approx = true} : vector<8x8x1xf32> -> vector<8x8x1xf32>
    %95 = vector.broadcast %94 : vector<8x8x1xf32> to vector<8x8x8xf32>
    %96 = arith.mulf %91, %95 : vector<8x8x8xf32>
    %97 = arith.truncf %96 : vector<8x8x8xf32> to vector<8x8x8xbf16>
    "tpu.trace_start"() <{level = 10 : i32, message = "nqk,nkd->nqd"}> : () -> ()
    %cst_28 = arith.constant dense<0.000000e+00> : vector<8x8x8xf32>
    %98 = tpu.matmul %97, %82, %cst_28 {dimension_numbers = #tpu.dot_dimension_numbers<[2], [1], [1], [2], [0, 0, 0, 1, 1, 2], [0], [0]>} : vector<8x8x8xbf16>, vector<8x8x8xbf16>, vector<8x8x8xf32> -> vector<8x8x8xf32>
    "tpu.trace_stop"() : () -> ()
    %99 = vector.extract_strided_slice %98 {offsets = [0, 0, 0], sizes = [2, 8, 8], strides = [1, 1, 1]} : vector<8x8x8xf32> to vector<2x8x8xf32>
    %100 = vector.shape_cast %99 : vector<2x8x8xf32> to vector<16x8xf32>
    %101 = vector.extract_strided_slice %5 {offsets = [0, 0], sizes = [8, 32], strides = [1, 1]} : vector<32x32xbf16> to vector<8x32xbf16>
    %102 = arith.truncf %100 : vector<16x8xf32> to vector<16x8xbf16>
    %cst_29 = arith.constant dense<0.000000e+00> : vector<16x32xf32>
    %103 = tpu.matmul %102, %101, %cst_29 {dimension_numbers = #tpu.dot_dimension_numbers<[1], [0], [0], [1], [0, 0, 1, 1], [], []>} : vector<16x8xbf16>, vector<8x32xbf16>, vector<16x32xf32> -> vector<16x32xf32>
    %104 = vector.extract_strided_slice %98 {offsets = [2, 0, 0], sizes = [2, 8, 8], strides = [1, 1, 1]} : vector<8x8x8xf32> to vector<2x8x8xf32>
    %105 = vector.shape_cast %104 : vector<2x8x8xf32> to vector<16x8xf32>
    %106 = vector.extract_strided_slice %5 {offsets = [8, 0], sizes = [8, 32], strides = [1, 1]} : vector<32x32xbf16> to vector<8x32xbf16>
    %107 = arith.truncf %105 : vector<16x8xf32> to vector<16x8xbf16>
    %cst_30 = arith.constant dense<0.000000e+00> : vector<16x32xf32>
    %108 = tpu.matmul %107, %106, %cst_30 {dimension_numbers = #tpu.dot_dimension_numbers<[1], [0], [0], [1], [0, 0, 1, 1], [], []>} : vector<16x8xbf16>, vector<8x32xbf16>, vector<16x32xf32> -> vector<16x32xf32>
    %109 = arith.addf %103, %108 : vector<16x32xf32>
    %110 = vector.extract_strided_slice %98 {offsets = [4, 0, 0], sizes = [2, 8, 8], strides = [1, 1, 1]} : vector<8x8x8xf32> to vector<2x8x8xf32>
    %111 = vector.shape_cast %110 : vector<2x8x8xf32> to vector<16x8xf32>
    %112 = vector.extract_strided_slice %5 {offsets = [16, 0], sizes = [8, 32], strides = [1, 1]} : vector<32x32xbf16> to vector<8x32xbf16>
    %113 = arith.truncf %111 : vector<16x8xf32> to vector<16x8xbf16>
    %cst_31 = arith.constant dense<0.000000e+00> : vector<16x32xf32>
    %114 = tpu.matmul %113, %112, %cst_31 {dimension_numbers = #tpu.dot_dimension_numbers<[1], [0], [0], [1], [0, 0, 1, 1], [], []>} : vector<16x8xbf16>, vector<8x32xbf16>, vector<16x32xf32> -> vector<16x32xf32>
    %115 = arith.addf %109, %114 : vector<16x32xf32>
    %116 = vector.extract_strided_slice %98 {offsets = [6, 0, 0], sizes = [2, 8, 8], strides = [1, 1, 1]} : vector<8x8x8xf32> to vector<2x8x8xf32>
    %117 = vector.shape_cast %116 : vector<2x8x8xf32> to vector<16x8xf32>
    %118 = vector.extract_strided_slice %5 {offsets = [24, 0], sizes = [8, 32], strides = [1, 1]} : vector<32x32xbf16> to vector<8x32xbf16>
    %119 = arith.truncf %117 : vector<16x8xf32> to vector<16x8xbf16>
    %cst_32 = arith.constant dense<0.000000e+00> : vector<16x32xf32>
    %120 = tpu.matmul %119, %118, %cst_32 {dimension_numbers = #tpu.dot_dimension_numbers<[1], [0], [0], [1], [0, 0, 1, 1], [], []>} : vector<16x8xbf16>, vector<8x32xbf16>, vector<16x32xf32> -> vector<16x32xf32>
    %121 = arith.addf %115, %120 : vector<16x32xf32>
    %122 = arith.addf %24, %121 : vector<16x32xf32>
    %123 = vector.broadcast %20 : vector<1x32xf32> to vector<16x32xf32>
    %124 = arith.addf %122, %123 : vector<16x32xf32>
    %cst_33 = arith.constant dense<0.000000e+00> : vector<16xf32>
    %125 = vector.multi_reduction <add>, %124, %cst_33 [1] : vector<16x32xf32> to vector<16xf32>
    %126 = vector.shape_cast %125 : vector<16xf32> to vector<16x1xf32>
    %cst_34 = arith.constant 3.200000e+01 : f32
    %127 = vector.broadcast %cst_34 : f32 to vector<16x1xf32>
    %128 = arith.divf %126, %127 : vector<16x1xf32>
    %129 = vector.broadcast %128 : vector<16x1xf32> to vector<16x32xf32>
    %130 = arith.subf %124, %129 : vector<16x32xf32>
    %131 = arith.mulf %130, %130 : vector<16x32xf32>
    %cst_35 = arith.constant dense<0.000000e+00> : vector<16xf32>
    %132 = vector.multi_reduction <add>, %131, %cst_35 [1] : vector<16x32xf32> to vector<16xf32>
    %133 = vector.shape_cast %132 : vector<16xf32> to vector<16x1xf32>
    %cst_36 = arith.constant 3.200000e+01 : f32
    %134 = vector.broadcast %cst_36 : f32 to vector<16x1xf32>
    %135 = arith.divf %133, %134 : vector<16x1xf32>
    %cst_37 = arith.constant 9.99999974E-6 : f32
    %136 = vector.broadcast %cst_37 : f32 to vector<16x1xf32>
    %137 = arith.addf %135, %136 : vector<16x1xf32>
    %138 = math.rsqrt %137 : vector<16x1xf32>
    %139 = vector.broadcast %138 : vector<16x1xf32> to vector<16x32xf32>
    %140 = arith.mulf %130, %139 : vector<16x32xf32>
    %141 = vector.broadcast %14 : vector<1x32xf32> to vector<16x32xf32>
    %142 = arith.mulf %140, %141 : vector<16x32xf32>
    %143 = vector.broadcast %16 : vector<1x32xf32> to vector<16x32xf32>
    %144 = arith.addf %142, %143 : vector<16x32xf32>
    %145 = arith.truncf %144 : vector<16x32xf32> to vector<16x32xbf16>
    %cst_38 = arith.constant dense<0.000000e+00> : vector<16x128xf32>
    %146 = tpu.matmul %145, %6, %cst_38 {dimension_numbers = #tpu.dot_dimension_numbers<[1], [0], [0], [1], [0, 0, 1, 1], [], []>} : vector<16x32xbf16>, vector<32x128xbf16>, vector<16x128xf32> -> vector<16x128xf32>
    %147 = vector.broadcast %21 : vector<1x128xf32> to vector<16x128xf32>
    %148 = arith.addf %146, %147 : vector<16x128xf32>
    %cst_39 = arith.constant 1.702000e+00 : f32
    %149 = vector.broadcast %cst_39 : f32 to vector<16x128xf32>
    %150 = arith.mulf %149, %148 : vector<16x128xf32>
    %151 = arith.negf %150 : vector<16x128xf32>
    %152 = math.exp %151 : vector<16x128xf32>
    %cst_40 = arith.constant 1.000000e+00 : f32
    %153 = vector.broadcast %cst_40 : f32 to vector<16x128xf32>
    %154 = arith.addf %153, %152 : vector<16x128xf32>
    %155 = arith.divf %153, %154 : vector<16x128xf32>
    %156 = arith.mulf %148, %155 : vector<16x128xf32>
    %157 = arith.truncf %156 : vector<16x128xf32> to vector<16x128xbf16>
    %cst_41 = arith.constant dense<0.000000e+00> : vector<16x32xf32>
    %158 = tpu.matmul %157, %8, %cst_41 {dimension_numbers = #tpu.dot_dimension_numbers<[1], [0], [0], [1], [0, 0, 1, 1], [], []>} : vector<16x128xbf16>, vector<128x32xbf16>, vector<16x32xf32> -> vector<16x32xf32>
    %159 = vector.broadcast %23 : vector<1x32xf32> to vector<16x32xf32>
    %160 = arith.addf %158, %159 : vector<16x32xf32>
    %161 = arith.addf %124, %160 : vector<16x32xf32>
    %162 = vector.shape_cast %161 : vector<16x32xf32> to vector<2x8x32xf32>
    %c224 = arith.constant 224 : index
    %c0_42 = arith.constant 0 : index
    %163 = vector.load %arg8[%c224, %c0_42] : memref<1856x128xbf16, #tpu.memory_space<vmem>>, vector<32x128xbf16>
    %164 = vector.extract_strided_slice %163 {offsets = [0, 0], sizes = [32, 96], strides = [1, 1]} : vector<32x128xbf16> to vector<32x96xbf16>
    %c256 = arith.constant 256 : index
    %c0_43 = arith.constant 0 : index
    %165 = vector.load %arg8[%c256, %c0_43] : memref<1856x128xbf16, #tpu.memory_space<vmem>>, vector<32x128xbf16>
    %166 = vector.extract_strided_slice %165 {offsets = [0, 0], sizes = [32, 32], strides = [1, 1]} : vector<32x128xbf16> to vector<32x32xbf16>
    %c288 = arith.constant 288 : index
    %c0_44 = arith.constant 0 : index
    %167 = vector.load %arg8[%c288, %c0_44] : memref<1856x128xbf16, #tpu.memory_space<vmem>>, vector<32x128xbf16>
    %c320 = arith.constant 320 : index
    %c0_45 = arith.constant 0 : index
    %168 = vector.load %arg8[%c320, %c0_45] : memref<1856x128xbf16, #tpu.memory_space<vmem>>, vector<128x128xbf16>
    %169 = vector.extract_strided_slice %168 {offsets = [0, 0], sizes = [128, 32], strides = [1, 1]} : vector<128x128xbf16> to vector<128x32xbf16>
    %c8 = arith.constant 8 : index
    %c0_46 = arith.constant 0 : index
    %170 = vector.load %arg9[%c8, %c0_46] : memref<40x128xf32, #tpu.memory_space<vmem>>, vector<1x128xf32>
    %171 = vector.extract_strided_slice %170 {offsets = [0, 0], sizes = [1, 32], strides = [1, 1]} : vector<1x128xf32> to vector<1x32xf32>
    %c9 = arith.constant 9 : index
    %c0_47 = arith.constant 0 : index
    %172 = vector.load %arg9[%c9, %c0_47] : memref<40x128xf32, #tpu.memory_space<vmem>>, vector<1x128xf32>
    %173 = vector.extract_strided_slice %172 {offsets = [0, 0], sizes = [1, 32], strides = [1, 1]} : vector<1x128xf32> to vector<1x32xf32>
    %c10 = arith.constant 10 : index
    %c0_48 = arith.constant 0 : index
    %174 = vector.load %arg9[%c10, %c0_48] : memref<40x128xf32, #tpu.memory_space<vmem>>, vector<1x128xf32>
    %175 = vector.extract_strided_slice %174 {offsets = [0, 0], sizes = [1, 32], strides = [1, 1]} : vector<1x128xf32> to vector<1x32xf32>
    %c11 = arith.constant 11 : index
    %c0_49 = arith.constant 0 : index
    %176 = vector.load %arg9[%c11, %c0_49] : memref<40x128xf32, #tpu.memory_space<vmem>>, vector<1x128xf32>
    %177 = vector.extract_strided_slice %176 {offsets = [0, 0], sizes = [1, 32], strides = [1, 1]} : vector<1x128xf32> to vector<1x32xf32>
    %c12 = arith.constant 12 : index
    %c0_50 = arith.constant 0 : index
    %178 = vector.load %arg9[%c12, %c0_50] : memref<40x128xf32, #tpu.memory_space<vmem>>, vector<1x128xf32>
    %179 = vector.extract_strided_slice %178 {offsets = [0, 0], sizes = [1, 96], strides = [1, 1]} : vector<1x128xf32> to vector<1x96xf32>
    %c13 = arith.constant 13 : index
    %c0_51 = arith.constant 0 : index
    %180 = vector.load %arg9[%c13, %c0_51] : memref<40x128xf32, #tpu.memory_space<vmem>>, vector<1x128xf32>
    %181 = vector.extract_strided_slice %180 {offsets = [0, 0], sizes = [1, 32], strides = [1, 1]} : vector<1x128xf32> to vector<1x32xf32>
    %c14 = arith.constant 14 : index
    %c0_52 = arith.constant 0 : index
    %182 = vector.load %arg9[%c14, %c0_52] : memref<40x128xf32, #tpu.memory_space<vmem>>, vector<1x128xf32>
    %c15 = arith.constant 15 : index
    %c0_53 = arith.constant 0 : index
    %183 = vector.load %arg9[%c15, %c0_53] : memref<40x128xf32, #tpu.memory_space<vmem>>, vector<1x128xf32>
    %184 = vector.extract_strided_slice %183 {offsets = [0, 0], sizes = [1, 32], strides = [1, 1]} : vector<1x128xf32> to vector<1x32xf32>
    %185 = vector.shape_cast %162 : vector<2x8x32xf32> to vector<16x32xf32>
    %cst_54 = arith.constant dense<0.000000e+00> : vector<16xf32>
    %186 = vector.multi_reduction <add>, %185, %cst_54 [1] : vector<16x32xf32> to vector<16xf32>
    %187 = vector.shape_cast %186 : vector<16xf32> to vector<16x1xf32>
    %cst_55 = arith.constant 3.200000e+01 : f32
    %188 = vector.broadcast %cst_55 : f32 to vector<16x1xf32>
    %189 = arith.divf %187, %188 : vector<16x1xf32>
    %190 = vector.broadcast %189 : vector<16x1xf32> to vector<16x32xf32>
    %191 = arith.subf %185, %190 : vector<16x32xf32>
    %192 = arith.mulf %191, %191 : vector<16x32xf32>
    %cst_56 = arith.constant dense<0.000000e+00> : vector<16xf32>
    %193 = vector.multi_reduction <add>, %192, %cst_56 [1] : vector<16x32xf32> to vector<16xf32>
    %194 = vector.shape_cast %193 : vector<16xf32> to vector<16x1xf32>
    %cst_57 = arith.constant 3.200000e+01 : f32
    %195 = vector.broadcast %cst_57 : f32 to vector<16x1xf32>
    %196 = arith.divf %194, %195 : vector<16x1xf32>
    %cst_58 = arith.constant 9.99999974E-6 : f32
    %197 = vector.broadcast %cst_58 : f32 to vector<16x1xf32>
    %198 = arith.addf %196, %197 : vector<16x1xf32>
    %199 = math.rsqrt %198 : vector<16x1xf32>
    %200 = vector.broadcast %199 : vector<16x1xf32> to vector<16x32xf32>
    %201 = arith.mulf %191, %200 : vector<16x32xf32>
    %202 = vector.broadcast %171 : vector<1x32xf32> to vector<16x32xf32>
    %203 = arith.mulf %201, %202 : vector<16x32xf32>
    %204 = vector.broadcast %173 : vector<1x32xf32> to vector<16x32xf32>
    %205 = arith.addf %203, %204 : vector<16x32xf32>
    %206 = arith.truncf %205 : vector<16x32xf32> to vector<16x32xbf16>
    %cst_59 = arith.constant dense<0.000000e+00> : vector<16x96xf32>
    %207 = tpu.matmul %206, %164, %cst_59 {dimension_numbers = #tpu.dot_dimension_numbers<[1], [0], [0], [1], [0, 0, 1, 1], [], []>} : vector<16x32xbf16>, vector<32x96xbf16>, vector<16x96xf32> -> vector<16x96xf32>
    %208 = vector.broadcast %179 : vector<1x96xf32> to vector<16x96xf32>
    %209 = arith.addf %207, %208 : vector<16x96xf32>
    %210 = vector.shape_cast %209 : vector<16x96xf32> to vector<2x8x96xf32>
    %211 = vector.extract_strided_slice %210 {offsets = [0, 0, 0], sizes = [2, 8, 8], strides = [1, 1, 1]} : vector<2x8x96xf32> to vector<2x8x8xf32>
    %212 = vector.extract_strided_slice %210 {offsets = [0, 0, 8], sizes = [2, 8, 8], strides = [1, 1, 1]} : vector<2x8x96xf32> to vector<2x8x8xf32>
    %213 = vector.extract_strided_slice %210 {offsets = [0, 0, 16], sizes = [2, 8, 8], strides = [1, 1, 1]} : vector<2x8x96xf32> to vector<2x8x8xf32>
    %214 = vector.extract_strided_slice %210 {offsets = [0, 0, 24], sizes = [2, 8, 8], strides = [1, 1, 1]} : vector<2x8x96xf32> to vector<2x8x8xf32>
    %215 = vector.shape_cast %211 : vector<2x8x8xf32> to vector<1x2x8x8xf32>
    %216 = vector.shape_cast %212 : vector<2x8x8xf32> to vector<1x2x8x8xf32>
    %217 = vector.shape_cast %213 : vector<2x8x8xf32> to vector<1x2x8x8xf32>
    %218 = vector.shape_cast %214 : vector<2x8x8xf32> to vector<1x2x8x8xf32>
    %219 = tpu.concatenate %215, %216, %217, %218 in 0 : vector<1x2x8x8xf32>, vector<1x2x8x8xf32>, vector<1x2x8x8xf32>, vector<1x2x8x8xf32> -> vector<4x2x8x8xf32>
    %220 = vector.extract_strided_slice %210 {offsets = [0, 0, 32], sizes = [2, 8, 8], strides = [1, 1, 1]} : vector<2x8x96xf32> to vector<2x8x8xf32>
    %221 = vector.extract_strided_slice %210 {offsets = [0, 0, 40], sizes = [2, 8, 8], strides = [1, 1, 1]} : vector<2x8x96xf32> to vector<2x8x8xf32>
    %222 = vector.extract_strided_slice %210 {offsets = [0, 0, 48], sizes = [2, 8, 8], strides = [1, 1, 1]} : vector<2x8x96xf32> to vector<2x8x8xf32>
    %223 = vector.extract_strided_slice %210 {offsets = [0, 0, 56], sizes = [2, 8, 8], strides = [1, 1, 1]} : vector<2x8x96xf32> to vector<2x8x8xf32>
    %224 = vector.shape_cast %220 : vector<2x8x8xf32> to vector<1x2x8x8xf32>
    %225 = vector.shape_cast %221 : vector<2x8x8xf32> to vector<1x2x8x8xf32>
    %226 = vector.shape_cast %222 : vector<2x8x8xf32> to vector<1x2x8x8xf32>
    %227 = vector.shape_cast %223 : vector<2x8x8xf32> to vector<1x2x8x8xf32>
    %228 = tpu.concatenate %224, %225, %226, %227 in 0 : vector<1x2x8x8xf32>, vector<1x2x8x8xf32>, vector<1x2x8x8xf32>, vector<1x2x8x8xf32> -> vector<4x2x8x8xf32>
    %229 = vector.extract_strided_slice %210 {offsets = [0, 0, 64], sizes = [2, 8, 8], strides = [1, 1, 1]} : vector<2x8x96xf32> to vector<2x8x8xf32>
    %230 = vector.extract_strided_slice %210 {offsets = [0, 0, 72], sizes = [2, 8, 8], strides = [1, 1, 1]} : vector<2x8x96xf32> to vector<2x8x8xf32>
    %231 = vector.extract_strided_slice %210 {offsets = [0, 0, 80], sizes = [2, 8, 8], strides = [1, 1, 1]} : vector<2x8x96xf32> to vector<2x8x8xf32>
    %232 = vector.extract_strided_slice %210 {offsets = [0, 0, 88], sizes = [2, 8, 8], strides = [1, 1, 1]} : vector<2x8x96xf32> to vector<2x8x8xf32>
    %233 = vector.shape_cast %229 : vector<2x8x8xf32> to vector<1x2x8x8xf32>
    %234 = vector.shape_cast %230 : vector<2x8x8xf32> to vector<1x2x8x8xf32>
    %235 = vector.shape_cast %231 : vector<2x8x8xf32> to vector<1x2x8x8xf32>
    %236 = vector.shape_cast %232 : vector<2x8x8xf32> to vector<1x2x8x8xf32>
    %237 = tpu.concatenate %233, %234, %235, %236 in 0 : vector<1x2x8x8xf32>, vector<1x2x8x8xf32>, vector<1x2x8x8xf32>, vector<1x2x8x8xf32> -> vector<4x2x8x8xf32>
    %238 = vector.shape_cast %219 : vector<4x2x8x8xf32> to vector<8x8x8xf32>
    %239 = arith.truncf %238 : vector<8x8x8xf32> to vector<8x8x8xbf16>
    %240 = vector.shape_cast %228 : vector<4x2x8x8xf32> to vector<8x8x8xf32>
    %241 = arith.truncf %240 : vector<8x8x8xf32> to vector<8x8x8xbf16>
    %242 = vector.shape_cast %237 : vector<4x2x8x8xf32> to vector<8x8x8xf32>
    %243 = arith.truncf %242 : vector<8x8x8xf32> to vector<8x8x8xbf16>
    "tpu.trace_start"() <{level = 10 : i32, message = "nqd,nkd->nqk"}> : () -> ()
    %cst_60 = arith.constant dense<0.000000e+00> : vector<8x8x8xf32>
    %244 = tpu.matmul %239, %241, %cst_60 {dimension_numbers = #tpu.dot_dimension_numbers<[2], [2], [1], [1], [0, 0, 0, 1, 1, 1], [0], [0]>} : vector<8x8x8xbf16>, vector<8x8x8xbf16>, vector<8x8x8xf32> -> vector<8x8x8xf32>
    "tpu.trace_stop"() : () -> ()
    %cst_61 = arith.constant 0.353553385 : f32
    %245 = vector.broadcast %cst_61 : f32 to vector<8x8x8xf32>
    %246 = arith.mulf %244, %245 : vector<8x8x8xf32>
    %247 = arith.addf %246, %1 : vector<8x8x8xf32>
    %cst_62 = arith.constant dense<0xFF800000> : vector<8x8xf32>
    %248 = vector.multi_reduction <maximumf>, %247, %cst_62 [2] : vector<8x8x8xf32> to vector<8x8xf32>
    %249 = vector.shape_cast %248 : vector<8x8xf32> to vector<8x8x1xf32>
    %250 = vector.broadcast %249 : vector<8x8x1xf32> to vector<8x8x8xf32>
    %251 = arith.subf %247, %250 : vector<8x8x8xf32>
    %252 = math.exp %251 : vector<8x8x8xf32>
    %cst_63 = arith.constant dense<0.000000e+00> : vector<8x8xf32>
    %253 = vector.multi_reduction <add>, %252, %cst_63 [2] : vector<8x8x8xf32> to vector<8x8xf32>
    %254 = vector.shape_cast %253 : vector<8x8xf32> to vector<8x8x1xf32>
    %255 = tpu.reciprocal %254 {approx = true} : vector<8x8x1xf32> -> vector<8x8x1xf32>
    %256 = vector.broadcast %255 : vector<8x8x1xf32> to vector<8x8x8xf32>
    %257 = arith.mulf %252, %256 : vector<8x8x8xf32>
    %258 = arith.truncf %257 : vector<8x8x8xf32> to vector<8x8x8xbf16>
    "tpu.trace_start"() <{level = 10 : i32, message = "nqk,nkd->nqd"}> : () -> ()
    %cst_64 = arith.constant dense<0.000000e+00> : vector<8x8x8xf32>
    %259 = tpu.matmul %258, %243, %cst_64 {dimension_numbers = #tpu.dot_dimension_numbers<[2], [1], [1], [2], [0, 0, 0, 1, 1, 2], [0], [0]>} : vector<8x8x8xbf16>, vector<8x8x8xbf16>, vector<8x8x8xf32> -> vector<8x8x8xf32>
    "tpu.trace_stop"() : () -> ()
    %260 = vector.extract_strided_slice %259 {offsets = [0, 0, 0], sizes = [2, 8, 8], strides = [1, 1, 1]} : vector<8x8x8xf32> to vector<2x8x8xf32>
    %261 = vector.shape_cast %260 : vector<2x8x8xf32> to vector<16x8xf32>
    %262 = vector.extract_strided_slice %166 {offsets = [0, 0], sizes = [8, 32], strides = [1, 1]} : vector<32x32xbf16> to vector<8x32xbf16>
    %263 = arith.truncf %261 : vector<16x8xf32> to vector<16x8xbf16>
    %cst_65 = arith.constant dense<0.000000e+00> : vector<16x32xf32>
    %264 = tpu.matmul %263, %262, %cst_65 {dimension_numbers = #tpu.dot_dimension_numbers<[1], [0], [0], [1], [0, 0, 1, 1], [], []>} : vector<16x8xbf16>, vector<8x32xbf16>, vector<16x32xf32> -> vector<16x32xf32>
    %265 = vector.extract_strided_slice %259 {offsets = [2, 0, 0], sizes = [2, 8, 8], strides = [1, 1, 1]} : vector<8x8x8xf32> to vector<2x8x8xf32>
    %266 = vector.shape_cast %265 : vector<2x8x8xf32> to vector<16x8xf32>
    %267 = vector.extract_strided_slice %166 {offsets = [8, 0], sizes = [8, 32], strides = [1, 1]} : vector<32x32xbf16> to vector<8x32xbf16>
    %268 = arith.truncf %266 : vector<16x8xf32> to vector<16x8xbf16>
    %cst_66 = arith.constant dense<0.000000e+00> : vector<16x32xf32>
    %269 = tpu.matmul %268, %267, %cst_66 {dimension_numbers = #tpu.dot_dimension_numbers<[1], [0], [0], [1], [0, 0, 1, 1], [], []>} : vector<16x8xbf16>, vector<8x32xbf16>, vector<16x32xf32> -> vector<16x32xf32>
    %270 = arith.addf %264, %269 : vector<16x32xf32>
    %271 = vector.extract_strided_slice %259 {offsets = [4, 0, 0], sizes = [2, 8, 8], strides = [1, 1, 1]} : vector<8x8x8xf32> to vector<2x8x8xf32>
    %272 = vector.shape_cast %271 : vector<2x8x8xf32> to vector<16x8xf32>
    %273 = vector.extract_strided_slice %166 {offsets = [16, 0], sizes = [8, 32], strides = [1, 1]} : vector<32x32xbf16> to vector<8x32xbf16>
    %274 = arith.truncf %272 : vector<16x8xf32> to vector<16x8xbf16>
    %cst_67 = arith.constant dense<0.000000e+00> : vector<16x32xf32>
    %275 = tpu.matmul %274, %273, %cst_67 {dimension_numbers = #tpu.dot_dimension_numbers<[1], [0], [0], [1], [0, 0, 1, 1], [], []>} : vector<16x8xbf16>, vector<8x32xbf16>, vector<16x32xf32> -> vector<16x32xf32>
    %276 = arith.addf %270, %275 : vector<16x32xf32>
    %277 = vector.extract_strided_slice %259 {offsets = [6, 0, 0], sizes = [2, 8, 8], strides = [1, 1, 1]} : vector<8x8x8xf32> to vector<2x8x8xf32>
    %278 = vector.shape_cast %277 : vector<2x8x8xf32> to vector<16x8xf32>
    %279 = vector.extract_strided_slice %166 {offsets = [24, 0], sizes = [8, 32], strides = [1, 1]} : vector<32x32xbf16> to vector<8x32xbf16>
    %280 = arith.truncf %278 : vector<16x8xf32> to vector<16x8xbf16>
    %cst_68 = arith.constant dense<0.000000e+00> : vector<16x32xf32>
    %281 = tpu.matmul %280, %279, %cst_68 {dimension_numbers = #tpu.dot_dimension_numbers<[1], [0], [0], [1], [0, 0, 1, 1], [], []>} : vector<16x8xbf16>, vector<8x32xbf16>, vector<16x32xf32> -> vector<16x32xf32>
    %282 = arith.addf %276, %281 : vector<16x32xf32>
    %283 = arith.addf %185, %282 : vector<16x32xf32>
    %284 = vector.broadcast %181 : vector<1x32xf32> to vector<16x32xf32>
    %285 = arith.addf %283, %284 : vector<16x32xf32>
    %cst_69 = arith.constant dense<0.000000e+00> : vector<16xf32>
    %286 = vector.multi_reduction <add>, %285, %cst_69 [1] : vector<16x32xf32> to vector<16xf32>
    %287 = vector.shape_cast %286 : vector<16xf32> to vector<16x1xf32>
    %cst_70 = arith.constant 3.200000e+01 : f32
    %288 = vector.broadcast %cst_70 : f32 to vector<16x1xf32>
    %289 = arith.divf %287, %288 : vector<16x1xf32>
    %290 = vector.broadcast %289 : vector<16x1xf32> to vector<16x32xf32>
    %291 = arith.subf %285, %290 : vector<16x32xf32>
    %292 = arith.mulf %291, %291 : vector<16x32xf32>
    %cst_71 = arith.constant dense<0.000000e+00> : vector<16xf32>
    %293 = vector.multi_reduction <add>, %292, %cst_71 [1] : vector<16x32xf32> to vector<16xf32>
    %294 = vector.shape_cast %293 : vector<16xf32> to vector<16x1xf32>
    %cst_72 = arith.constant 3.200000e+01 : f32
    %295 = vector.broadcast %cst_72 : f32 to vector<16x1xf32>
    %296 = arith.divf %294, %295 : vector<16x1xf32>
    %cst_73 = arith.constant 9.99999974E-6 : f32
    %297 = vector.broadcast %cst_73 : f32 to vector<16x1xf32>
    %298 = arith.addf %296, %297 : vector<16x1xf32>
    %299 = math.rsqrt %298 : vector<16x1xf32>
    %300 = vector.broadcast %299 : vector<16x1xf32> to vector<16x32xf32>
    %301 = arith.mulf %291, %300 : vector<16x32xf32>
    %302 = vector.broadcast %175 : vector<1x32xf32> to vector<16x32xf32>
    %303 = arith.mulf %301, %302 : vector<16x32xf32>
    %304 = vector.broadcast %177 : vector<1x32xf32> to vector<16x32xf32>
    %305 = arith.addf %303, %304 : vector<16x32xf32>
    %306 = arith.truncf %305 : vector<16x32xf32> to vector<16x32xbf16>
    %cst_74 = arith.constant dense<0.000000e+00> : vector<16x128xf32>
    %307 = tpu.matmul %306, %167, %cst_74 {dimension_numbers = #tpu.dot_dimension_numbers<[1], [0], [0], [1], [0, 0, 1, 1], [], []>} : vector<16x32xbf16>, vector<32x128xbf16>, vector<16x128xf32> -> vector<16x128xf32>
    %308 = vector.broadcast %182 : vector<1x128xf32> to vector<16x128xf32>
    %309 = arith.addf %307, %308 : vector<16x128xf32>
    %cst_75 = arith.constant 1.702000e+00 : f32
    %310 = vector.broadcast %cst_75 : f32 to vector<16x128xf32>
    %311 = arith.mulf %310, %309 : vector<16x128xf32>
    %312 = arith.negf %311 : vector<16x128xf32>
    %313 = math.exp %312 : vector<16x128xf32>
    %cst_76 = arith.constant 1.000000e+00 : f32
    %314 = vector.broadcast %cst_76 : f32 to vector<16x128xf32>
    %315 = arith.addf %314, %313 : vector<16x128xf32>
    %316 = arith.divf %314, %315 : vector<16x128xf32>
    %317 = arith.mulf %309, %316 : vector<16x128xf32>
    %318 = arith.truncf %317 : vector<16x128xf32> to vector<16x128xbf16>
    %cst_77 = arith.constant dense<0.000000e+00> : vector<16x32xf32>
    %319 = tpu.matmul %318, %169, %cst_77 {dimension_numbers = #tpu.dot_dimension_numbers<[1], [0], [0], [1], [0, 0, 1, 1], [], []>} : vector<16x128xbf16>, vector<128x32xbf16>, vector<16x32xf32> -> vector<16x32xf32>
    %320 = vector.broadcast %184 : vector<1x32xf32> to vector<16x32xf32>
    %321 = arith.addf %319, %320 : vector<16x32xf32>
    %322 = arith.addf %285, %321 : vector<16x32xf32>
    %323 = vector.shape_cast %322 : vector<16x32xf32> to vector<2x8x32xf32>
    %324 = vector.shape_cast %323 : vector<2x8x32xf32> to vector<16x32xf32>
    %c32_78 = arith.constant 32 : index
    %c0_79 = arith.constant 0 : index
    %325 = vector.load %arg9[%c32_78, %c0_79] : memref<40x128xf32, #tpu.memory_space<vmem>>, vector<1x128xf32>
    %326 = vector.extract_strided_slice %325 {offsets = [0, 0], sizes = [1, 32], strides = [1, 1]} : vector<1x128xf32> to vector<1x32xf32>
    %c33 = arith.constant 33 : index
    %c0_80 = arith.constant 0 : index
    %327 = vector.load %arg9[%c33, %c0_80] : memref<40x128xf32, #tpu.memory_space<vmem>>, vector<1x128xf32>
    %328 = vector.extract_strided_slice %327 {offsets = [0, 0], sizes = [1, 32], strides = [1, 1]} : vector<1x128xf32> to vector<1x32xf32>
    %cst_81 = arith.constant dense<0.000000e+00> : vector<16xf32>
    %329 = vector.multi_reduction <add>, %324, %cst_81 [1] : vector<16x32xf32> to vector<16xf32>
    %330 = vector.shape_cast %329 : vector<16xf32> to vector<16x1xf32>
    %cst_82 = arith.constant 3.200000e+01 : f32
    %331 = vector.broadcast %cst_82 : f32 to vector<16x1xf32>
    %332 = arith.divf %330, %331 : vector<16x1xf32>
    %333 = vector.broadcast %332 : vector<16x1xf32> to vector<16x32xf32>
    %334 = arith.subf %324, %333 : vector<16x32xf32>
    %335 = arith.mulf %334, %334 : vector<16x32xf32>
    %cst_83 = arith.constant dense<0.000000e+00> : vector<16xf32>
    %336 = vector.multi_reduction <add>, %335, %cst_83 [1] : vector<16x32xf32> to vector<16xf32>
    %337 = vector.shape_cast %336 : vector<16xf32> to vector<16x1xf32>
    %cst_84 = arith.constant 3.200000e+01 : f32
    %338 = vector.broadcast %cst_84 : f32 to vector<16x1xf32>
    %339 = arith.divf %337, %338 : vector<16x1xf32>
    %cst_85 = arith.constant 9.99999974E-6 : f32
    %340 = vector.broadcast %cst_85 : f32 to vector<16x1xf32>
    %341 = arith.addf %339, %340 : vector<16x1xf32>
    %342 = math.rsqrt %341 : vector<16x1xf32>
    %343 = vector.broadcast %342 : vector<16x1xf32> to vector<16x32xf32>
    %344 = arith.mulf %334, %343 : vector<16x32xf32>
    %345 = vector.broadcast %326 : vector<1x32xf32> to vector<16x32xf32>
    %346 = arith.mulf %344, %345 : vector<16x32xf32>
    %347 = vector.broadcast %328 : vector<1x32xf32> to vector<16x32xf32>
    %348 = arith.addf %346, %347 : vector<16x32xf32>
    %c0_86 = arith.constant 0 : index
    %c0_87 = arith.constant 0 : index
    %349 = vector.load %arg2[%c0_86, %c0_87] : memref<2x16xf32, #tpu.memory_space<vmem>>, vector<2x16xf32>
    %350 = arith.truncf %349 : vector<2x16xf32> to vector<2x16xbf16>
    %351 = arith.truncf %348 : vector<16x32xf32> to vector<16x32xbf16>
    %cst_88 = arith.constant dense<0.000000e+00> : vector<2x32xf32>
    %352 = tpu.matmul %350, %351, %cst_88 {dimension_numbers = #tpu.dot_dimension_numbers<[1], [0], [0], [1], [0, 0, 1, 1], [], []>} : vector<2x16xbf16>, vector<16x32xbf16>, vector<2x32xf32> -> vector<2x32xf32>
    %c896 = arith.constant 896 : index
    %c0_89 = arith.constant 0 : index
    %353 = vector.load %arg8[%c896, %c0_89] : memref<1856x128xbf16, #tpu.memory_space<vmem>>, vector<32x128xbf16>
    %354 = vector.extract_strided_slice %353 {offsets = [0, 0], sizes = [32, 32], strides = [1, 1]} : vector<32x128xbf16> to vector<32x32xbf16>
    %355 = arith.truncf %352 : vector<2x32xf32> to vector<2x32xbf16>
    %cst_90 = arith.constant dense<0.000000e+00> : vector<2x32xf32>
    %356 = tpu.matmul %355, %354, %cst_90 {dimension_numbers = #tpu.dot_dimension_numbers<[1], [0], [0], [1], [0, 0, 1, 1], [], []>} : vector<2x32xbf16>, vector<32x32xbf16>, vector<2x32xf32> -> vector<2x32xf32>
    %c0_91 = arith.constant 0 : index
    %c0_92 = arith.constant 0 : index
    %c0_93 = arith.constant 0 : index
    %357 = vector.load %arg3[%c0_91, %c0_92, %c0_93] : memref<4x8x896xbf16, #tpu.memory_space<vmem>>, vector<4x8x896xbf16>
    %c960 = arith.constant 960 : index
    %c0_94 = arith.constant 0 : index
    %358 = vector.load %arg8[%c960, %c0_94] : memref<1856x128xbf16, #tpu.memory_space<vmem>>, vector<896x128xbf16>
    %359 = vector.extract_strided_slice %358 {offsets = [0, 0], sizes = [896, 32], strides = [1, 1]} : vector<896x128xbf16> to vector<896x32xbf16>
    %360 = vector.shape_cast %357 : vector<4x8x896xbf16> to vector<32x896xbf16>
    %cst_95 = arith.constant dense<0.000000e+00> : vector<32x32xf32>
    %361 = tpu.matmul %360, %359, %cst_95 {dimension_numbers = #tpu.dot_dimension_numbers<[1], [0], [0], [1], [0, 0, 1, 1], [], []>} : vector<32x896xbf16>, vector<896x32xbf16>, vector<32x32xf32> -> vector<32x32xf32>
    %362 = vector.shape_cast %361 : vector<32x32xf32> to vector<4x8x32xf32>
    %c0_96 = arith.constant 0 : index
    %c0_97 = arith.constant 0 : index
    %363 = vector.load %arg4[%c0_96, %c0_97] : memref<8x32xf32, #tpu.memory_space<vmem>>, vector<8x32xf32>
    %364 = vector.shape_cast %363 : vector<8x32xf32> to vector<1x8x32xf32>
    %365 = vector.broadcast %364 : vector<1x8x32xf32> to vector<4x8x32xf32>
    %366 = arith.addf %362, %365 : vector<4x8x32xf32>
    %367 = vector.shape_cast %366 : vector<4x8x32xf32> to vector<32x32xf32>
    %c34 = arith.constant 34 : index
    %c0_98 = arith.constant 0 : index
    %368 = vector.load %arg9[%c34, %c0_98] : memref<40x128xf32, #tpu.memory_space<vmem>>, vector<1x128xf32>
    %369 = vector.extract_strided_slice %368 {offsets = [0, 0], sizes = [1, 32], strides = [1, 1]} : vector<1x128xf32> to vector<1x32xf32>
    %c35 = arith.constant 35 : index
    %c0_99 = arith.constant 0 : index
    %370 = vector.load %arg9[%c35, %c0_99] : memref<40x128xf32, #tpu.memory_space<vmem>>, vector<1x128xf32>
    %371 = vector.extract_strided_slice %370 {offsets = [0, 0], sizes = [1, 32], strides = [1, 1]} : vector<1x128xf32> to vector<1x32xf32>
    %cst_100 = arith.constant dense<0.000000e+00> : vector<32xf32>
    %372 = vector.multi_reduction <add>, %367, %cst_100 [1] : vector<32x32xf32> to vector<32xf32>
    %373 = vector.shape_cast %372 : vector<32xf32> to vector<32x1xf32>
    %cst_101 = arith.constant 3.200000e+01 : f32
    %374 = vector.broadcast %cst_101 : f32 to vector<32x1xf32>
    %375 = arith.divf %373, %374 : vector<32x1xf32>
    %376 = vector.broadcast %375 : vector<32x1xf32> to vector<32x32xf32>
    %377 = arith.subf %367, %376 : vector<32x32xf32>
    %378 = arith.mulf %377, %377 : vector<32x32xf32>
    %cst_102 = arith.constant dense<0.000000e+00> : vector<32xf32>
    %379 = vector.multi_reduction <add>, %378, %cst_102 [1] : vector<32x32xf32> to vector<32xf32>
    %380 = vector.shape_cast %379 : vector<32xf32> to vector<32x1xf32>
    %cst_103 = arith.constant 3.200000e+01 : f32
    %381 = vector.broadcast %cst_103 : f32 to vector<32x1xf32>
    %382 = arith.divf %380, %381 : vector<32x1xf32>
    %cst_104 = arith.constant 9.99999974E-6 : f32
    %383 = vector.broadcast %cst_104 : f32 to vector<32x1xf32>
    %384 = arith.addf %382, %383 : vector<32x1xf32>
    %385 = math.rsqrt %384 : vector<32x1xf32>
    %386 = vector.broadcast %385 : vector<32x1xf32> to vector<32x32xf32>
    %387 = arith.mulf %377, %386 : vector<32x32xf32>
    %388 = vector.broadcast %369 : vector<1x32xf32> to vector<32x32xf32>
    %389 = arith.mulf %387, %388 : vector<32x32xf32>
    %390 = vector.broadcast %371 : vector<1x32xf32> to vector<32x32xf32>
    %391 = arith.addf %389, %390 : vector<32x32xf32>
    %392 = vector.shape_cast %391 : vector<32x32xf32> to vector<4x8x32xf32>
    %c0_105 = arith.constant 0 : index
    %c0_106 = arith.constant 0 : index
    %c0_107 = arith.constant 0 : index
    %393 = vector.load %arg5[%c0_105, %c0_106, %c0_107] : memref<1x8x8xf32, #tpu.memory_space<vmem>>, vector<1x8x8xf32>
    %c448 = arith.constant 448 : index
    %c0_108 = arith.constant 0 : index
    %394 = vector.load %arg8[%c448, %c0_108] : memref<1856x128xbf16, #tpu.memory_space<vmem>>, vector<32x128xbf16>
    %395 = vector.extract_strided_slice %394 {offsets = [0, 0], sizes = [32, 96], strides = [1, 1]} : vector<32x128xbf16> to vector<32x96xbf16>
    %c480 = arith.constant 480 : index
    %c0_109 = arith.constant 0 : index
    %396 = vector.load %arg8[%c480, %c0_109] : memref<1856x128xbf16, #tpu.memory_space<vmem>>, vector<32x128xbf16>
    %397 = vector.extract_strided_slice %396 {offsets = [0, 0], sizes = [32, 32], strides = [1, 1]} : vector<32x128xbf16> to vector<32x32xbf16>
    %c512 = arith.constant 512 : index
    %c0_110 = arith.constant 0 : index
    %398 = vector.load %arg8[%c512, %c0_110] : memref<1856x128xbf16, #tpu.memory_space<vmem>>, vector<32x128xbf16>
    %c544 = arith.constant 544 : index
    %c0_111 = arith.constant 0 : index
    %399 = vector.load %arg8[%c544, %c0_111] : memref<1856x128xbf16, #tpu.memory_space<vmem>>, vector<128x128xbf16>
    %400 = vector.extract_strided_slice %399 {offsets = [0, 0], sizes = [128, 32], strides = [1, 1]} : vector<128x128xbf16> to vector<128x32xbf16>
    %c16 = arith.constant 16 : index
    %c0_112 = arith.constant 0 : index
    %401 = vector.load %arg9[%c16, %c0_112] : memref<40x128xf32, #tpu.memory_space<vmem>>, vector<1x128xf32>
    %402 = vector.extract_strided_slice %401 {offsets = [0, 0], sizes = [1, 32], strides = [1, 1]} : vector<1x128xf32> to vector<1x32xf32>
    %c17 = arith.constant 17 : index
    %c0_113 = arith.constant 0 : index
    %403 = vector.load %arg9[%c17, %c0_113] : memref<40x128xf32, #tpu.memory_space<vmem>>, vector<1x128xf32>
    %404 = vector.extract_strided_slice %403 {offsets = [0, 0], sizes = [1, 32], strides = [1, 1]} : vector<1x128xf32> to vector<1x32xf32>
    %c18 = arith.constant 18 : index
    %c0_114 = arith.constant 0 : index
    %405 = vector.load %arg9[%c18, %c0_114] : memref<40x128xf32, #tpu.memory_space<vmem>>, vector<1x128xf32>
    %406 = vector.extract_strided_slice %405 {offsets = [0, 0], sizes = [1, 32], strides = [1, 1]} : vector<1x128xf32> to vector<1x32xf32>
    %c19 = arith.constant 19 : index
    %c0_115 = arith.constant 0 : index
    %407 = vector.load %arg9[%c19, %c0_115] : memref<40x128xf32, #tpu.memory_space<vmem>>, vector<1x128xf32>
    %408 = vector.extract_strided_slice %407 {offsets = [0, 0], sizes = [1, 32], strides = [1, 1]} : vector<1x128xf32> to vector<1x32xf32>
    %c20 = arith.constant 20 : index
    %c0_116 = arith.constant 0 : index
    %409 = vector.load %arg9[%c20, %c0_116] : memref<40x128xf32, #tpu.memory_space<vmem>>, vector<1x128xf32>
    %410 = vector.extract_strided_slice %409 {offsets = [0, 0], sizes = [1, 96], strides = [1, 1]} : vector<1x128xf32> to vector<1x96xf32>
    %c21 = arith.constant 21 : index
    %c0_117 = arith.constant 0 : index
    %411 = vector.load %arg9[%c21, %c0_117] : memref<40x128xf32, #tpu.memory_space<vmem>>, vector<1x128xf32>
    %412 = vector.extract_strided_slice %411 {offsets = [0, 0], sizes = [1, 32], strides = [1, 1]} : vector<1x128xf32> to vector<1x32xf32>
    %c22 = arith.constant 22 : index
    %c0_118 = arith.constant 0 : index
    %413 = vector.load %arg9[%c22, %c0_118] : memref<40x128xf32, #tpu.memory_space<vmem>>, vector<1x128xf32>
    %c23 = arith.constant 23 : index
    %c0_119 = arith.constant 0 : index
    %414 = vector.load %arg9[%c23, %c0_119] : memref<40x128xf32, #tpu.memory_space<vmem>>, vector<1x128xf32>
    %415 = vector.extract_strided_slice %414 {offsets = [0, 0], sizes = [1, 32], strides = [1, 1]} : vector<1x128xf32> to vector<1x32xf32>
    %416 = vector.shape_cast %392 : vector<4x8x32xf32> to vector<32x32xf32>
    %cst_120 = arith.constant dense<0.000000e+00> : vector<32xf32>
    %417 = vector.multi_reduction <add>, %416, %cst_120 [1] : vector<32x32xf32> to vector<32xf32>
    %418 = vector.shape_cast %417 : vector<32xf32> to vector<32x1xf32>
    %cst_121 = arith.constant 3.200000e+01 : f32
    %419 = vector.broadcast %cst_121 : f32 to vector<32x1xf32>
    %420 = arith.divf %418, %419 : vector<32x1xf32>
    %421 = vector.broadcast %420 : vector<32x1xf32> to vector<32x32xf32>
    %422 = arith.subf %416, %421 : vector<32x32xf32>
    %423 = arith.mulf %422, %422 : vector<32x32xf32>
    %cst_122 = arith.constant dense<0.000000e+00> : vector<32xf32>
    %424 = vector.multi_reduction <add>, %423, %cst_122 [1] : vector<32x32xf32> to vector<32xf32>
    %425 = vector.shape_cast %424 : vector<32xf32> to vector<32x1xf32>
    %cst_123 = arith.constant 3.200000e+01 : f32
    %426 = vector.broadcast %cst_123 : f32 to vector<32x1xf32>
    %427 = arith.divf %425, %426 : vector<32x1xf32>
    %cst_124 = arith.constant 9.99999974E-6 : f32
    %428 = vector.broadcast %cst_124 : f32 to vector<32x1xf32>
    %429 = arith.addf %427, %428 : vector<32x1xf32>
    %430 = math.rsqrt %429 : vector<32x1xf32>
    %431 = vector.broadcast %430 : vector<32x1xf32> to vector<32x32xf32>
    %432 = arith.mulf %422, %431 : vector<32x32xf32>
    %433 = vector.broadcast %402 : vector<1x32xf32> to vector<32x32xf32>
    %434 = arith.mulf %432, %433 : vector<32x32xf32>
    %435 = vector.broadcast %404 : vector<1x32xf32> to vector<32x32xf32>
    %436 = arith.addf %434, %435 : vector<32x32xf32>
    %437 = arith.truncf %436 : vector<32x32xf32> to vector<32x32xbf16>
    %cst_125 = arith.constant dense<0.000000e+00> : vector<32x96xf32>
    %438 = tpu.matmul %437, %395, %cst_125 {dimension_numbers = #tpu.dot_dimension_numbers<[1], [0], [0], [1], [0, 0, 1, 1], [], []>} : vector<32x32xbf16>, vector<32x96xbf16>, vector<32x96xf32> -> vector<32x96xf32>
    %439 = vector.broadcast %410 : vector<1x96xf32> to vector<32x96xf32>
    %440 = arith.addf %438, %439 : vector<32x96xf32>
    %441 = vector.shape_cast %440 : vector<32x96xf32> to vector<4x8x96xf32>
    %442 = vector.extract_strided_slice %441 {offsets = [0, 0, 0], sizes = [4, 8, 8], strides = [1, 1, 1]} : vector<4x8x96xf32> to vector<4x8x8xf32>
    %443 = vector.extract_strided_slice %441 {offsets = [0, 0, 8], sizes = [4, 8, 8], strides = [1, 1, 1]} : vector<4x8x96xf32> to vector<4x8x8xf32>
    %444 = vector.extract_strided_slice %441 {offsets = [0, 0, 16], sizes = [4, 8, 8], strides = [1, 1, 1]} : vector<4x8x96xf32> to vector<4x8x8xf32>
    %445 = vector.extract_strided_slice %441 {offsets = [0, 0, 24], sizes = [4, 8, 8], strides = [1, 1, 1]} : vector<4x8x96xf32> to vector<4x8x8xf32>
    %446 = vector.shape_cast %442 : vector<4x8x8xf32> to vector<1x4x8x8xf32>
    %447 = vector.shape_cast %443 : vector<4x8x8xf32> to vector<1x4x8x8xf32>
    %448 = vector.shape_cast %444 : vector<4x8x8xf32> to vector<1x4x8x8xf32>
    %449 = vector.shape_cast %445 : vector<4x8x8xf32> to vector<1x4x8x8xf32>
    %450 = tpu.concatenate %446, %447, %448, %449 in 0 : vector<1x4x8x8xf32>, vector<1x4x8x8xf32>, vector<1x4x8x8xf32>, vector<1x4x8x8xf32> -> vector<4x4x8x8xf32>
    %451 = vector.extract_strided_slice %441 {offsets = [0, 0, 32], sizes = [4, 8, 8], strides = [1, 1, 1]} : vector<4x8x96xf32> to vector<4x8x8xf32>
    %452 = vector.extract_strided_slice %441 {offsets = [0, 0, 40], sizes = [4, 8, 8], strides = [1, 1, 1]} : vector<4x8x96xf32> to vector<4x8x8xf32>
    %453 = vector.extract_strided_slice %441 {offsets = [0, 0, 48], sizes = [4, 8, 8], strides = [1, 1, 1]} : vector<4x8x96xf32> to vector<4x8x8xf32>
    %454 = vector.extract_strided_slice %441 {offsets = [0, 0, 56], sizes = [4, 8, 8], strides = [1, 1, 1]} : vector<4x8x96xf32> to vector<4x8x8xf32>
    %455 = vector.shape_cast %451 : vector<4x8x8xf32> to vector<1x4x8x8xf32>
    %456 = vector.shape_cast %452 : vector<4x8x8xf32> to vector<1x4x8x8xf32>
    %457 = vector.shape_cast %453 : vector<4x8x8xf32> to vector<1x4x8x8xf32>
    %458 = vector.shape_cast %454 : vector<4x8x8xf32> to vector<1x4x8x8xf32>
    %459 = tpu.concatenate %455, %456, %457, %458 in 0 : vector<1x4x8x8xf32>, vector<1x4x8x8xf32>, vector<1x4x8x8xf32>, vector<1x4x8x8xf32> -> vector<4x4x8x8xf32>
    %460 = vector.extract_strided_slice %441 {offsets = [0, 0, 64], sizes = [4, 8, 8], strides = [1, 1, 1]} : vector<4x8x96xf32> to vector<4x8x8xf32>
    %461 = vector.extract_strided_slice %441 {offsets = [0, 0, 72], sizes = [4, 8, 8], strides = [1, 1, 1]} : vector<4x8x96xf32> to vector<4x8x8xf32>
    %462 = vector.extract_strided_slice %441 {offsets = [0, 0, 80], sizes = [4, 8, 8], strides = [1, 1, 1]} : vector<4x8x96xf32> to vector<4x8x8xf32>
    %463 = vector.extract_strided_slice %441 {offsets = [0, 0, 88], sizes = [4, 8, 8], strides = [1, 1, 1]} : vector<4x8x96xf32> to vector<4x8x8xf32>
    %464 = vector.shape_cast %460 : vector<4x8x8xf32> to vector<1x4x8x8xf32>
    %465 = vector.shape_cast %461 : vector<4x8x8xf32> to vector<1x4x8x8xf32>
    %466 = vector.shape_cast %462 : vector<4x8x8xf32> to vector<1x4x8x8xf32>
    %467 = vector.shape_cast %463 : vector<4x8x8xf32> to vector<1x4x8x8xf32>
    %468 = tpu.concatenate %464, %465, %466, %467 in 0 : vector<1x4x8x8xf32>, vector<1x4x8x8xf32>, vector<1x4x8x8xf32>, vector<1x4x8x8xf32> -> vector<4x4x8x8xf32>
    %469 = vector.shape_cast %450 : vector<4x4x8x8xf32> to vector<16x8x8xf32>
    %470 = arith.truncf %469 : vector<16x8x8xf32> to vector<16x8x8xbf16>
    %471 = vector.shape_cast %459 : vector<4x4x8x8xf32> to vector<16x8x8xf32>
    %472 = arith.truncf %471 : vector<16x8x8xf32> to vector<16x8x8xbf16>
    %473 = vector.shape_cast %468 : vector<4x4x8x8xf32> to vector<16x8x8xf32>
    %474 = arith.truncf %473 : vector<16x8x8xf32> to vector<16x8x8xbf16>
    "tpu.trace_start"() <{level = 10 : i32, message = "nqd,nkd->nqk"}> : () -> ()
    %cst_126 = arith.constant dense<0.000000e+00> : vector<16x8x8xf32>
    %475 = tpu.matmul %470, %472, %cst_126 {dimension_numbers = #tpu.dot_dimension_numbers<[2], [2], [1], [1], [0, 0, 0, 1, 1, 1], [0], [0]>} : vector<16x8x8xbf16>, vector<16x8x8xbf16>, vector<16x8x8xf32> -> vector<16x8x8xf32>
    "tpu.trace_stop"() : () -> ()
    %cst_127 = arith.constant 0.353553385 : f32
    %476 = vector.broadcast %cst_127 : f32 to vector<16x8x8xf32>
    %477 = arith.mulf %475, %476 : vector<16x8x8xf32>
    %478 = vector.broadcast %393 : vector<1x8x8xf32> to vector<16x8x8xf32>
    %479 = arith.addf %477, %478 : vector<16x8x8xf32>
    %cst_128 = arith.constant dense<0xFF800000> : vector<16x8xf32>
    %480 = vector.multi_reduction <maximumf>, %479, %cst_128 [2] : vector<16x8x8xf32> to vector<16x8xf32>
    %481 = vector.shape_cast %480 : vector<16x8xf32> to vector<16x8x1xf32>
    %482 = vector.broadcast %481 : vector<16x8x1xf32> to vector<16x8x8xf32>
    %483 = arith.subf %479, %482 : vector<16x8x8xf32>
    %484 = math.exp %483 : vector<16x8x8xf32>
    %cst_129 = arith.constant dense<0.000000e+00> : vector<16x8xf32>
    %485 = vector.multi_reduction <add>, %484, %cst_129 [2] : vector<16x8x8xf32> to vector<16x8xf32>
    %486 = vector.shape_cast %485 : vector<16x8xf32> to vector<16x8x1xf32>
    %487 = tpu.reciprocal %486 {approx = true} : vector<16x8x1xf32> -> vector<16x8x1xf32>
    %488 = vector.broadcast %487 : vector<16x8x1xf32> to vector<16x8x8xf32>
    %489 = arith.mulf %484, %488 : vector<16x8x8xf32>
    %490 = arith.truncf %489 : vector<16x8x8xf32> to vector<16x8x8xbf16>
    "tpu.trace_start"() <{level = 10 : i32, message = "nqk,nkd->nqd"}> : () -> ()
    %cst_130 = arith.constant dense<0.000000e+00> : vector<16x8x8xf32>
    %491 = tpu.matmul %490, %474, %cst_130 {dimension_numbers = #tpu.dot_dimension_numbers<[2], [1], [1], [2], [0, 0, 0, 1, 1, 2], [0], [0]>} : vector<16x8x8xbf16>, vector<16x8x8xbf16>, vector<16x8x8xf32> -> vector<16x8x8xf32>
    "tpu.trace_stop"() : () -> ()
    %492 = vector.extract_strided_slice %491 {offsets = [0, 0, 0], sizes = [4, 8, 8], strides = [1, 1, 1]} : vector<16x8x8xf32> to vector<4x8x8xf32>
    %493 = vector.shape_cast %492 : vector<4x8x8xf32> to vector<32x8xf32>
    %494 = vector.extract_strided_slice %397 {offsets = [0, 0], sizes = [8, 32], strides = [1, 1]} : vector<32x32xbf16> to vector<8x32xbf16>
    %495 = arith.truncf %493 : vector<32x8xf32> to vector<32x8xbf16>
    %cst_131 = arith.constant dense<0.000000e+00> : vector<32x32xf32>
    %496 = tpu.matmul %495, %494, %cst_131 {dimension_numbers = #tpu.dot_dimension_numbers<[1], [0], [0], [1], [0, 0, 1, 1], [], []>} : vector<32x8xbf16>, vector<8x32xbf16>, vector<32x32xf32> -> vector<32x32xf32>
    %497 = vector.extract_strided_slice %491 {offsets = [4, 0, 0], sizes = [4, 8, 8], strides = [1, 1, 1]} : vector<16x8x8xf32> to vector<4x8x8xf32>
    %498 = vector.shape_cast %497 : vector<4x8x8xf32> to vector<32x8xf32>
    %499 = vector.extract_strided_slice %397 {offsets = [8, 0], sizes = [8, 32], strides = [1, 1]} : vector<32x32xbf16> to vector<8x32xbf16>
    %500 = arith.truncf %498 : vector<32x8xf32> to vector<32x8xbf16>
    %cst_132 = arith.constant dense<0.000000e+00> : vector<32x32xf32>
    %501 = tpu.matmul %500, %499, %cst_132 {dimension_numbers = #tpu.dot_dimension_numbers<[1], [0], [0], [1], [0, 0, 1, 1], [], []>} : vector<32x8xbf16>, vector<8x32xbf16>, vector<32x32xf32> -> vector<32x32xf32>
    %502 = arith.addf %496, %501 : vector<32x32xf32>
    %503 = vector.extract_strided_slice %491 {offsets = [8, 0, 0], sizes = [4, 8, 8], strides = [1, 1, 1]} : vector<16x8x8xf32> to vector<4x8x8xf32>
    %504 = vector.shape_cast %503 : vector<4x8x8xf32> to vector<32x8xf32>
    %505 = vector.extract_strided_slice %397 {offsets = [16, 0], sizes = [8, 32], strides = [1, 1]} : vector<32x32xbf16> to vector<8x32xbf16>
    %506 = arith.truncf %504 : vector<32x8xf32> to vector<32x8xbf16>
    %cst_133 = arith.constant dense<0.000000e+00> : vector<32x32xf32>
    %507 = tpu.matmul %506, %505, %cst_133 {dimension_numbers = #tpu.dot_dimension_numbers<[1], [0], [0], [1], [0, 0, 1, 1], [], []>} : vector<32x8xbf16>, vector<8x32xbf16>, vector<32x32xf32> -> vector<32x32xf32>
    %508 = arith.addf %502, %507 : vector<32x32xf32>
    %509 = vector.extract_strided_slice %491 {offsets = [12, 0, 0], sizes = [4, 8, 8], strides = [1, 1, 1]} : vector<16x8x8xf32> to vector<4x8x8xf32>
    %510 = vector.shape_cast %509 : vector<4x8x8xf32> to vector<32x8xf32>
    %511 = vector.extract_strided_slice %397 {offsets = [24, 0], sizes = [8, 32], strides = [1, 1]} : vector<32x32xbf16> to vector<8x32xbf16>
    %512 = arith.truncf %510 : vector<32x8xf32> to vector<32x8xbf16>
    %cst_134 = arith.constant dense<0.000000e+00> : vector<32x32xf32>
    %513 = tpu.matmul %512, %511, %cst_134 {dimension_numbers = #tpu.dot_dimension_numbers<[1], [0], [0], [1], [0, 0, 1, 1], [], []>} : vector<32x8xbf16>, vector<8x32xbf16>, vector<32x32xf32> -> vector<32x32xf32>
    %514 = arith.addf %508, %513 : vector<32x32xf32>
    %515 = arith.addf %416, %514 : vector<32x32xf32>
    %516 = vector.broadcast %412 : vector<1x32xf32> to vector<32x32xf32>
    %517 = arith.addf %515, %516 : vector<32x32xf32>
    %cst_135 = arith.constant dense<0.000000e+00> : vector<32xf32>
    %518 = vector.multi_reduction <add>, %517, %cst_135 [1] : vector<32x32xf32> to vector<32xf32>
    %519 = vector.shape_cast %518 : vector<32xf32> to vector<32x1xf32>
    %cst_136 = arith.constant 3.200000e+01 : f32
    %520 = vector.broadcast %cst_136 : f32 to vector<32x1xf32>
    %521 = arith.divf %519, %520 : vector<32x1xf32>
    %522 = vector.broadcast %521 : vector<32x1xf32> to vector<32x32xf32>
    %523 = arith.subf %517, %522 : vector<32x32xf32>
    %524 = arith.mulf %523, %523 : vector<32x32xf32>
    %cst_137 = arith.constant dense<0.000000e+00> : vector<32xf32>
    %525 = vector.multi_reduction <add>, %524, %cst_137 [1] : vector<32x32xf32> to vector<32xf32>
    %526 = vector.shape_cast %525 : vector<32xf32> to vector<32x1xf32>
    %cst_138 = arith.constant 3.200000e+01 : f32
    %527 = vector.broadcast %cst_138 : f32 to vector<32x1xf32>
    %528 = arith.divf %526, %527 : vector<32x1xf32>
    %cst_139 = arith.constant 9.99999974E-6 : f32
    %529 = vector.broadcast %cst_139 : f32 to vector<32x1xf32>
    %530 = arith.addf %528, %529 : vector<32x1xf32>
    %531 = math.rsqrt %530 : vector<32x1xf32>
    %532 = vector.broadcast %531 : vector<32x1xf32> to vector<32x32xf32>
    %533 = arith.mulf %523, %532 : vector<32x32xf32>
    %534 = vector.broadcast %406 : vector<1x32xf32> to vector<32x32xf32>
    %535 = arith.mulf %533, %534 : vector<32x32xf32>
    %536 = vector.broadcast %408 : vector<1x32xf32> to vector<32x32xf32>
    %537 = arith.addf %535, %536 : vector<32x32xf32>
    %538 = arith.truncf %537 : vector<32x32xf32> to vector<32x32xbf16>
    %cst_140 = arith.constant dense<0.000000e+00> : vector<32x128xf32>
    %539 = tpu.matmul %538, %398, %cst_140 {dimension_numbers = #tpu.dot_dimension_numbers<[1], [0], [0], [1], [0, 0, 1, 1], [], []>} : vector<32x32xbf16>, vector<32x128xbf16>, vector<32x128xf32> -> vector<32x128xf32>
    %540 = vector.broadcast %413 : vector<1x128xf32> to vector<32x128xf32>
    %541 = arith.addf %539, %540 : vector<32x128xf32>
    %cst_141 = arith.constant 1.702000e+00 : f32
    %542 = vector.broadcast %cst_141 : f32 to vector<32x128xf32>
    %543 = arith.mulf %542, %541 : vector<32x128xf32>
    %544 = arith.negf %543 : vector<32x128xf32>
    %545 = math.exp %544 : vector<32x128xf32>
    %cst_142 = arith.constant 1.000000e+00 : f32
    %546 = vector.broadcast %cst_142 : f32 to vector<32x128xf32>
    %547 = arith.addf %546, %545 : vector<32x128xf32>
    %548 = arith.divf %546, %547 : vector<32x128xf32>
    %549 = arith.mulf %541, %548 : vector<32x128xf32>
    %550 = arith.truncf %549 : vector<32x128xf32> to vector<32x128xbf16>
    %cst_143 = arith.constant dense<0.000000e+00> : vector<32x32xf32>
    %551 = tpu.matmul %550, %400, %cst_143 {dimension_numbers = #tpu.dot_dimension_numbers<[1], [0], [0], [1], [0, 0, 1, 1], [], []>} : vector<32x128xbf16>, vector<128x32xbf16>, vector<32x32xf32> -> vector<32x32xf32>
    %552 = vector.broadcast %415 : vector<1x32xf32> to vector<32x32xf32>
    %553 = arith.addf %551, %552 : vector<32x32xf32>
    %554 = arith.addf %517, %553 : vector<32x32xf32>
    %555 = vector.shape_cast %554 : vector<32x32xf32> to vector<4x8x32xf32>
    %c672 = arith.constant 672 : index
    %c0_144 = arith.constant 0 : index
    %556 = vector.load %arg8[%c672, %c0_144] : memref<1856x128xbf16, #tpu.memory_space<vmem>>, vector<32x128xbf16>
    %557 = vector.extract_strided_slice %556 {offsets = [0, 0], sizes = [32, 96], strides = [1, 1]} : vector<32x128xbf16> to vector<32x96xbf16>
    %c704 = arith.constant 704 : index
    %c0_145 = arith.constant 0 : index
    %558 = vector.load %arg8[%c704, %c0_145] : memref<1856x128xbf16, #tpu.memory_space<vmem>>, vector<32x128xbf16>
    %559 = vector.extract_strided_slice %558 {offsets = [0, 0], sizes = [32, 32], strides = [1, 1]} : vector<32x128xbf16> to vector<32x32xbf16>
    %c736 = arith.constant 736 : index
    %c0_146 = arith.constant 0 : index
    %560 = vector.load %arg8[%c736, %c0_146] : memref<1856x128xbf16, #tpu.memory_space<vmem>>, vector<32x128xbf16>
    %c768 = arith.constant 768 : index
    %c0_147 = arith.constant 0 : index
    %561 = vector.load %arg8[%c768, %c0_147] : memref<1856x128xbf16, #tpu.memory_space<vmem>>, vector<128x128xbf16>
    %562 = vector.extract_strided_slice %561 {offsets = [0, 0], sizes = [128, 32], strides = [1, 1]} : vector<128x128xbf16> to vector<128x32xbf16>
    %c24 = arith.constant 24 : index
    %c0_148 = arith.constant 0 : index
    %563 = vector.load %arg9[%c24, %c0_148] : memref<40x128xf32, #tpu.memory_space<vmem>>, vector<1x128xf32>
    %564 = vector.extract_strided_slice %563 {offsets = [0, 0], sizes = [1, 32], strides = [1, 1]} : vector<1x128xf32> to vector<1x32xf32>
    %c25 = arith.constant 25 : index
    %c0_149 = arith.constant 0 : index
    %565 = vector.load %arg9[%c25, %c0_149] : memref<40x128xf32, #tpu.memory_space<vmem>>, vector<1x128xf32>
    %566 = vector.extract_strided_slice %565 {offsets = [0, 0], sizes = [1, 32], strides = [1, 1]} : vector<1x128xf32> to vector<1x32xf32>
    %c26 = arith.constant 26 : index
    %c0_150 = arith.constant 0 : index
    %567 = vector.load %arg9[%c26, %c0_150] : memref<40x128xf32, #tpu.memory_space<vmem>>, vector<1x128xf32>
    %568 = vector.extract_strided_slice %567 {offsets = [0, 0], sizes = [1, 32], strides = [1, 1]} : vector<1x128xf32> to vector<1x32xf32>
    %c27 = arith.constant 27 : index
    %c0_151 = arith.constant 0 : index
    %569 = vector.load %arg9[%c27, %c0_151] : memref<40x128xf32, #tpu.memory_space<vmem>>, vector<1x128xf32>
    %570 = vector.extract_strided_slice %569 {offsets = [0, 0], sizes = [1, 32], strides = [1, 1]} : vector<1x128xf32> to vector<1x32xf32>
    %c28 = arith.constant 28 : index
    %c0_152 = arith.constant 0 : index
    %571 = vector.load %arg9[%c28, %c0_152] : memref<40x128xf32, #tpu.memory_space<vmem>>, vector<1x128xf32>
    %572 = vector.extract_strided_slice %571 {offsets = [0, 0], sizes = [1, 96], strides = [1, 1]} : vector<1x128xf32> to vector<1x96xf32>
    %c29 = arith.constant 29 : index
    %c0_153 = arith.constant 0 : index
    %573 = vector.load %arg9[%c29, %c0_153] : memref<40x128xf32, #tpu.memory_space<vmem>>, vector<1x128xf32>
    %574 = vector.extract_strided_slice %573 {offsets = [0, 0], sizes = [1, 32], strides = [1, 1]} : vector<1x128xf32> to vector<1x32xf32>
    %c30 = arith.constant 30 : index
    %c0_154 = arith.constant 0 : index
    %575 = vector.load %arg9[%c30, %c0_154] : memref<40x128xf32, #tpu.memory_space<vmem>>, vector<1x128xf32>
    %c31 = arith.constant 31 : index
    %c0_155 = arith.constant 0 : index
    %576 = vector.load %arg9[%c31, %c0_155] : memref<40x128xf32, #tpu.memory_space<vmem>>, vector<1x128xf32>
    %577 = vector.extract_strided_slice %576 {offsets = [0, 0], sizes = [1, 32], strides = [1, 1]} : vector<1x128xf32> to vector<1x32xf32>
    %578 = vector.shape_cast %555 : vector<4x8x32xf32> to vector<32x32xf32>
    %cst_156 = arith.constant dense<0.000000e+00> : vector<32xf32>
    %579 = vector.multi_reduction <add>, %578, %cst_156 [1] : vector<32x32xf32> to vector<32xf32>
    %580 = vector.shape_cast %579 : vector<32xf32> to vector<32x1xf32>
    %cst_157 = arith.constant 3.200000e+01 : f32
    %581 = vector.broadcast %cst_157 : f32 to vector<32x1xf32>
    %582 = arith.divf %580, %581 : vector<32x1xf32>
    %583 = vector.broadcast %582 : vector<32x1xf32> to vector<32x32xf32>
    %584 = arith.subf %578, %583 : vector<32x32xf32>
    %585 = arith.mulf %584, %584 : vector<32x32xf32>
    %cst_158 = arith.constant dense<0.000000e+00> : vector<32xf32>
    %586 = vector.multi_reduction <add>, %585, %cst_158 [1] : vector<32x32xf32> to vector<32xf32>
    %587 = vector.shape_cast %586 : vector<32xf32> to vector<32x1xf32>
    %cst_159 = arith.constant 3.200000e+01 : f32
    %588 = vector.broadcast %cst_159 : f32 to vector<32x1xf32>
    %589 = arith.divf %587, %588 : vector<32x1xf32>
    %cst_160 = arith.constant 9.99999974E-6 : f32
    %590 = vector.broadcast %cst_160 : f32 to vector<32x1xf32>
    %591 = arith.addf %589, %590 : vector<32x1xf32>
    %592 = math.rsqrt %591 : vector<32x1xf32>
    %593 = vector.broadcast %592 : vector<32x1xf32> to vector<32x32xf32>
    %594 = arith.mulf %584, %593 : vector<32x32xf32>
    %595 = vector.broadcast %564 : vector<1x32xf32> to vector<32x32xf32>
    %596 = arith.mulf %594, %595 : vector<32x32xf32>
    %597 = vector.broadcast %566 : vector<1x32xf32> to vector<32x32xf32>
    %598 = arith.addf %596, %597 : vector<32x32xf32>
    %599 = arith.truncf %598 : vector<32x32xf32> to vector<32x32xbf16>
    %cst_161 = arith.constant dense<0.000000e+00> : vector<32x96xf32>
    %600 = tpu.matmul %599, %557, %cst_161 {dimension_numbers = #tpu.dot_dimension_numbers<[1], [0], [0], [1], [0, 0, 1, 1], [], []>} : vector<32x32xbf16>, vector<32x96xbf16>, vector<32x96xf32> -> vector<32x96xf32>
    %601 = vector.broadcast %572 : vector<1x96xf32> to vector<32x96xf32>
    %602 = arith.addf %600, %601 : vector<32x96xf32>
    %603 = vector.shape_cast %602 : vector<32x96xf32> to vector<4x8x96xf32>
    %604 = vector.extract_strided_slice %603 {offsets = [0, 0, 0], sizes = [4, 8, 8], strides = [1, 1, 1]} : vector<4x8x96xf32> to vector<4x8x8xf32>
    %605 = vector.extract_strided_slice %603 {offsets = [0, 0, 8], sizes = [4, 8, 8], strides = [1, 1, 1]} : vector<4x8x96xf32> to vector<4x8x8xf32>
    %606 = vector.extract_strided_slice %603 {offsets = [0, 0, 16], sizes = [4, 8, 8], strides = [1, 1, 1]} : vector<4x8x96xf32> to vector<4x8x8xf32>
    %607 = vector.extract_strided_slice %603 {offsets = [0, 0, 24], sizes = [4, 8, 8], strides = [1, 1, 1]} : vector<4x8x96xf32> to vector<4x8x8xf32>
    %608 = vector.shape_cast %604 : vector<4x8x8xf32> to vector<1x4x8x8xf32>
    %609 = vector.shape_cast %605 : vector<4x8x8xf32> to vector<1x4x8x8xf32>
    %610 = vector.shape_cast %606 : vector<4x8x8xf32> to vector<1x4x8x8xf32>
    %611 = vector.shape_cast %607 : vector<4x8x8xf32> to vector<1x4x8x8xf32>
    %612 = tpu.concatenate %608, %609, %610, %611 in 0 : vector<1x4x8x8xf32>, vector<1x4x8x8xf32>, vector<1x4x8x8xf32>, vector<1x4x8x8xf32> -> vector<4x4x8x8xf32>
    %613 = vector.extract_strided_slice %603 {offsets = [0, 0, 32], sizes = [4, 8, 8], strides = [1, 1, 1]} : vector<4x8x96xf32> to vector<4x8x8xf32>
    %614 = vector.extract_strided_slice %603 {offsets = [0, 0, 40], sizes = [4, 8, 8], strides = [1, 1, 1]} : vector<4x8x96xf32> to vector<4x8x8xf32>
    %615 = vector.extract_strided_slice %603 {offsets = [0, 0, 48], sizes = [4, 8, 8], strides = [1, 1, 1]} : vector<4x8x96xf32> to vector<4x8x8xf32>
    %616 = vector.extract_strided_slice %603 {offsets = [0, 0, 56], sizes = [4, 8, 8], strides = [1, 1, 1]} : vector<4x8x96xf32> to vector<4x8x8xf32>
    %617 = vector.shape_cast %613 : vector<4x8x8xf32> to vector<1x4x8x8xf32>
    %618 = vector.shape_cast %614 : vector<4x8x8xf32> to vector<1x4x8x8xf32>
    %619 = vector.shape_cast %615 : vector<4x8x8xf32> to vector<1x4x8x8xf32>
    %620 = vector.shape_cast %616 : vector<4x8x8xf32> to vector<1x4x8x8xf32>
    %621 = tpu.concatenate %617, %618, %619, %620 in 0 : vector<1x4x8x8xf32>, vector<1x4x8x8xf32>, vector<1x4x8x8xf32>, vector<1x4x8x8xf32> -> vector<4x4x8x8xf32>
    %622 = vector.extract_strided_slice %603 {offsets = [0, 0, 64], sizes = [4, 8, 8], strides = [1, 1, 1]} : vector<4x8x96xf32> to vector<4x8x8xf32>
    %623 = vector.extract_strided_slice %603 {offsets = [0, 0, 72], sizes = [4, 8, 8], strides = [1, 1, 1]} : vector<4x8x96xf32> to vector<4x8x8xf32>
    %624 = vector.extract_strided_slice %603 {offsets = [0, 0, 80], sizes = [4, 8, 8], strides = [1, 1, 1]} : vector<4x8x96xf32> to vector<4x8x8xf32>
    %625 = vector.extract_strided_slice %603 {offsets = [0, 0, 88], sizes = [4, 8, 8], strides = [1, 1, 1]} : vector<4x8x96xf32> to vector<4x8x8xf32>
    %626 = vector.shape_cast %622 : vector<4x8x8xf32> to vector<1x4x8x8xf32>
    %627 = vector.shape_cast %623 : vector<4x8x8xf32> to vector<1x4x8x8xf32>
    %628 = vector.shape_cast %624 : vector<4x8x8xf32> to vector<1x4x8x8xf32>
    %629 = vector.shape_cast %625 : vector<4x8x8xf32> to vector<1x4x8x8xf32>
    %630 = tpu.concatenate %626, %627, %628, %629 in 0 : vector<1x4x8x8xf32>, vector<1x4x8x8xf32>, vector<1x4x8x8xf32>, vector<1x4x8x8xf32> -> vector<4x4x8x8xf32>
    %631 = vector.shape_cast %612 : vector<4x4x8x8xf32> to vector<16x8x8xf32>
    %632 = arith.truncf %631 : vector<16x8x8xf32> to vector<16x8x8xbf16>
    %633 = vector.shape_cast %621 : vector<4x4x8x8xf32> to vector<16x8x8xf32>
    %634 = arith.truncf %633 : vector<16x8x8xf32> to vector<16x8x8xbf16>
    %635 = vector.shape_cast %630 : vector<4x4x8x8xf32> to vector<16x8x8xf32>
    %636 = arith.truncf %635 : vector<16x8x8xf32> to vector<16x8x8xbf16>
    "tpu.trace_start"() <{level = 10 : i32, message = "nqd,nkd->nqk"}> : () -> ()
    %cst_162 = arith.constant dense<0.000000e+00> : vector<16x8x8xf32>
    %637 = tpu.matmul %632, %634, %cst_162 {dimension_numbers = #tpu.dot_dimension_numbers<[2], [2], [1], [1], [0, 0, 0, 1, 1, 1], [0], [0]>} : vector<16x8x8xbf16>, vector<16x8x8xbf16>, vector<16x8x8xf32> -> vector<16x8x8xf32>
    "tpu.trace_stop"() : () -> ()
    %cst_163 = arith.constant 0.353553385 : f32
    %638 = vector.broadcast %cst_163 : f32 to vector<16x8x8xf32>
    %639 = arith.mulf %637, %638 : vector<16x8x8xf32>
    %640 = vector.broadcast %393 : vector<1x8x8xf32> to vector<16x8x8xf32>
    %641 = arith.addf %639, %640 : vector<16x8x8xf32>
    %cst_164 = arith.constant dense<0xFF800000> : vector<16x8xf32>
    %642 = vector.multi_reduction <maximumf>, %641, %cst_164 [2] : vector<16x8x8xf32> to vector<16x8xf32>
    %643 = vector.shape_cast %642 : vector<16x8xf32> to vector<16x8x1xf32>
    %644 = vector.broadcast %643 : vector<16x8x1xf32> to vector<16x8x8xf32>
    %645 = arith.subf %641, %644 : vector<16x8x8xf32>
    %646 = math.exp %645 : vector<16x8x8xf32>
    %cst_165 = arith.constant dense<0.000000e+00> : vector<16x8xf32>
    %647 = vector.multi_reduction <add>, %646, %cst_165 [2] : vector<16x8x8xf32> to vector<16x8xf32>
    %648 = vector.shape_cast %647 : vector<16x8xf32> to vector<16x8x1xf32>
    %649 = tpu.reciprocal %648 {approx = true} : vector<16x8x1xf32> -> vector<16x8x1xf32>
    %650 = vector.broadcast %649 : vector<16x8x1xf32> to vector<16x8x8xf32>
    %651 = arith.mulf %646, %650 : vector<16x8x8xf32>
    %652 = arith.truncf %651 : vector<16x8x8xf32> to vector<16x8x8xbf16>
    "tpu.trace_start"() <{level = 10 : i32, message = "nqk,nkd->nqd"}> : () -> ()
    %cst_166 = arith.constant dense<0.000000e+00> : vector<16x8x8xf32>
    %653 = tpu.matmul %652, %636, %cst_166 {dimension_numbers = #tpu.dot_dimension_numbers<[2], [1], [1], [2], [0, 0, 0, 1, 1, 2], [0], [0]>} : vector<16x8x8xbf16>, vector<16x8x8xbf16>, vector<16x8x8xf32> -> vector<16x8x8xf32>
    "tpu.trace_stop"() : () -> ()
    %654 = vector.extract_strided_slice %653 {offsets = [0, 0, 0], sizes = [4, 8, 8], strides = [1, 1, 1]} : vector<16x8x8xf32> to vector<4x8x8xf32>
    %655 = vector.shape_cast %654 : vector<4x8x8xf32> to vector<32x8xf32>
    %656 = vector.extract_strided_slice %559 {offsets = [0, 0], sizes = [8, 32], strides = [1, 1]} : vector<32x32xbf16> to vector<8x32xbf16>
    %657 = arith.truncf %655 : vector<32x8xf32> to vector<32x8xbf16>
    %cst_167 = arith.constant dense<0.000000e+00> : vector<32x32xf32>
    %658 = tpu.matmul %657, %656, %cst_167 {dimension_numbers = #tpu.dot_dimension_numbers<[1], [0], [0], [1], [0, 0, 1, 1], [], []>} : vector<32x8xbf16>, vector<8x32xbf16>, vector<32x32xf32> -> vector<32x32xf32>
    %659 = vector.extract_strided_slice %653 {offsets = [4, 0, 0], sizes = [4, 8, 8], strides = [1, 1, 1]} : vector<16x8x8xf32> to vector<4x8x8xf32>
    %660 = vector.shape_cast %659 : vector<4x8x8xf32> to vector<32x8xf32>
    %661 = vector.extract_strided_slice %559 {offsets = [8, 0], sizes = [8, 32], strides = [1, 1]} : vector<32x32xbf16> to vector<8x32xbf16>
    %662 = arith.truncf %660 : vector<32x8xf32> to vector<32x8xbf16>
    %cst_168 = arith.constant dense<0.000000e+00> : vector<32x32xf32>
    %663 = tpu.matmul %662, %661, %cst_168 {dimension_numbers = #tpu.dot_dimension_numbers<[1], [0], [0], [1], [0, 0, 1, 1], [], []>} : vector<32x8xbf16>, vector<8x32xbf16>, vector<32x32xf32> -> vector<32x32xf32>
    %664 = arith.addf %658, %663 : vector<32x32xf32>
    %665 = vector.extract_strided_slice %653 {offsets = [8, 0, 0], sizes = [4, 8, 8], strides = [1, 1, 1]} : vector<16x8x8xf32> to vector<4x8x8xf32>
    %666 = vector.shape_cast %665 : vector<4x8x8xf32> to vector<32x8xf32>
    %667 = vector.extract_strided_slice %559 {offsets = [16, 0], sizes = [8, 32], strides = [1, 1]} : vector<32x32xbf16> to vector<8x32xbf16>
    %668 = arith.truncf %666 : vector<32x8xf32> to vector<32x8xbf16>
    %cst_169 = arith.constant dense<0.000000e+00> : vector<32x32xf32>
    %669 = tpu.matmul %668, %667, %cst_169 {dimension_numbers = #tpu.dot_dimension_numbers<[1], [0], [0], [1], [0, 0, 1, 1], [], []>} : vector<32x8xbf16>, vector<8x32xbf16>, vector<32x32xf32> -> vector<32x32xf32>
    %670 = arith.addf %664, %669 : vector<32x32xf32>
    %671 = vector.extract_strided_slice %653 {offsets = [12, 0, 0], sizes = [4, 8, 8], strides = [1, 1, 1]} : vector<16x8x8xf32> to vector<4x8x8xf32>
    %672 = vector.shape_cast %671 : vector<4x8x8xf32> to vector<32x8xf32>
    %673 = vector.extract_strided_slice %559 {offsets = [24, 0], sizes = [8, 32], strides = [1, 1]} : vector<32x32xbf16> to vector<8x32xbf16>
    %674 = arith.truncf %672 : vector<32x8xf32> to vector<32x8xbf16>
    %cst_170 = arith.constant dense<0.000000e+00> : vector<32x32xf32>
    %675 = tpu.matmul %674, %673, %cst_170 {dimension_numbers = #tpu.dot_dimension_numbers<[1], [0], [0], [1], [0, 0, 1, 1], [], []>} : vector<32x8xbf16>, vector<8x32xbf16>, vector<32x32xf32> -> vector<32x32xf32>
    %676 = arith.addf %670, %675 : vector<32x32xf32>
    %677 = arith.addf %578, %676 : vector<32x32xf32>
    %678 = vector.broadcast %574 : vector<1x32xf32> to vector<32x32xf32>
    %679 = arith.addf %677, %678 : vector<32x32xf32>
    %cst_171 = arith.constant dense<0.000000e+00> : vector<32xf32>
    %680 = vector.multi_reduction <add>, %679, %cst_171 [1] : vector<32x32xf32> to vector<32xf32>
    %681 = vector.shape_cast %680 : vector<32xf32> to vector<32x1xf32>
    %cst_172 = arith.constant 3.200000e+01 : f32
    %682 = vector.broadcast %cst_172 : f32 to vector<32x1xf32>
    %683 = arith.divf %681, %682 : vector<32x1xf32>
    %684 = vector.broadcast %683 : vector<32x1xf32> to vector<32x32xf32>
    %685 = arith.subf %679, %684 : vector<32x32xf32>
    %686 = arith.mulf %685, %685 : vector<32x32xf32>
    %cst_173 = arith.constant dense<0.000000e+00> : vector<32xf32>
    %687 = vector.multi_reduction <add>, %686, %cst_173 [1] : vector<32x32xf32> to vector<32xf32>
    %688 = vector.shape_cast %687 : vector<32xf32> to vector<32x1xf32>
    %cst_174 = arith.constant 3.200000e+01 : f32
    %689 = vector.broadcast %cst_174 : f32 to vector<32x1xf32>
    %690 = arith.divf %688, %689 : vector<32x1xf32>
    %cst_175 = arith.constant 9.99999974E-6 : f32
    %691 = vector.broadcast %cst_175 : f32 to vector<32x1xf32>
    %692 = arith.addf %690, %691 : vector<32x1xf32>
    %693 = math.rsqrt %692 : vector<32x1xf32>
    %694 = vector.broadcast %693 : vector<32x1xf32> to vector<32x32xf32>
    %695 = arith.mulf %685, %694 : vector<32x32xf32>
    %696 = vector.broadcast %568 : vector<1x32xf32> to vector<32x32xf32>
    %697 = arith.mulf %695, %696 : vector<32x32xf32>
    %698 = vector.broadcast %570 : vector<1x32xf32> to vector<32x32xf32>
    %699 = arith.addf %697, %698 : vector<32x32xf32>
    %700 = arith.truncf %699 : vector<32x32xf32> to vector<32x32xbf16>
    %cst_176 = arith.constant dense<0.000000e+00> : vector<32x128xf32>
    %701 = tpu.matmul %700, %560, %cst_176 {dimension_numbers = #tpu.dot_dimension_numbers<[1], [0], [0], [1], [0, 0, 1, 1], [], []>} : vector<32x32xbf16>, vector<32x128xbf16>, vector<32x128xf32> -> vector<32x128xf32>
    %702 = vector.broadcast %575 : vector<1x128xf32> to vector<32x128xf32>
    %703 = arith.addf %701, %702 : vector<32x128xf32>
    %cst_177 = arith.constant 1.702000e+00 : f32
    %704 = vector.broadcast %cst_177 : f32 to vector<32x128xf32>
    %705 = arith.mulf %704, %703 : vector<32x128xf32>
    %706 = arith.negf %705 : vector<32x128xf32>
    %707 = math.exp %706 : vector<32x128xf32>
    %cst_178 = arith.constant 1.000000e+00 : f32
    %708 = vector.broadcast %cst_178 : f32 to vector<32x128xf32>
    %709 = arith.addf %708, %707 : vector<32x128xf32>
    %710 = arith.divf %708, %709 : vector<32x128xf32>
    %711 = arith.mulf %703, %710 : vector<32x128xf32>
    %712 = arith.truncf %711 : vector<32x128xf32> to vector<32x128xbf16>
    %cst_179 = arith.constant dense<0.000000e+00> : vector<32x32xf32>
    %713 = tpu.matmul %712, %562, %cst_179 {dimension_numbers = #tpu.dot_dimension_numbers<[1], [0], [0], [1], [0, 0, 1, 1], [], []>} : vector<32x128xbf16>, vector<128x32xbf16>, vector<32x32xf32> -> vector<32x32xf32>
    %714 = vector.broadcast %577 : vector<1x32xf32> to vector<32x32xf32>
    %715 = arith.addf %713, %714 : vector<32x32xf32>
    %716 = arith.addf %679, %715 : vector<32x32xf32>
    %717 = vector.shape_cast %716 : vector<32x32xf32> to vector<4x8x32xf32>
    %c0_180 = arith.constant 0 : index
    %c0_181 = arith.constant 0 : index
    %718 = vector.load %arg6[%c0_180, %c0_181] : memref<4x32xf32, #tpu.memory_space<vmem>>, vector<4x32xf32>
    %719 = vector.shape_cast %717 : vector<4x8x32xf32> to vector<32x32xf32>
    %720 = arith.truncf %718 : vector<4x32xf32> to vector<4x32xbf16>
    %721 = arith.truncf %719 : vector<32x32xf32> to vector<32x32xbf16>
    %cst_182 = arith.constant dense<0.000000e+00> : vector<4x32xf32>
    %722 = tpu.matmul %720, %721, %cst_182 {dimension_numbers = #tpu.dot_dimension_numbers<[1], [0], [0], [1], [0, 0, 1, 1], [], []>} : vector<4x32xbf16>, vector<32x32xbf16>, vector<4x32xf32> -> vector<4x32xf32>
    %c36 = arith.constant 36 : index
    %c0_183 = arith.constant 0 : index
    %723 = vector.load %arg9[%c36, %c0_183] : memref<40x128xf32, #tpu.memory_space<vmem>>, vector<1x128xf32>
    %724 = vector.extract_strided_slice %723 {offsets = [0, 0], sizes = [1, 32], strides = [1, 1]} : vector<1x128xf32> to vector<1x32xf32>
    %c37 = arith.constant 37 : index
    %c0_184 = arith.constant 0 : index
    %725 = vector.load %arg9[%c37, %c0_184] : memref<40x128xf32, #tpu.memory_space<vmem>>, vector<1x128xf32>
    %726 = vector.extract_strided_slice %725 {offsets = [0, 0], sizes = [1, 32], strides = [1, 1]} : vector<1x128xf32> to vector<1x32xf32>
    %cst_185 = arith.constant dense<0.000000e+00> : vector<4xf32>
    %727 = vector.multi_reduction <add>, %722, %cst_185 [1] : vector<4x32xf32> to vector<4xf32>
    %728 = vector.shape_cast %727 : vector<4xf32> to vector<4x1xf32>
    %cst_186 = arith.constant 3.200000e+01 : f32
    %729 = vector.broadcast %cst_186 : f32 to vector<4x1xf32>
    %730 = arith.divf %728, %729 : vector<4x1xf32>
    %731 = vector.broadcast %730 : vector<4x1xf32> to vector<4x32xf32>
    %732 = arith.subf %722, %731 : vector<4x32xf32>
    %733 = arith.mulf %732, %732 : vector<4x32xf32>
    %cst_187 = arith.constant dense<0.000000e+00> : vector<4xf32>
    %734 = vector.multi_reduction <add>, %733, %cst_187 [1] : vector<4x32xf32> to vector<4xf32>
    %735 = vector.shape_cast %734 : vector<4xf32> to vector<4x1xf32>
    %cst_188 = arith.constant 3.200000e+01 : f32
    %736 = vector.broadcast %cst_188 : f32 to vector<4x1xf32>
    %737 = arith.divf %735, %736 : vector<4x1xf32>
    %cst_189 = arith.constant 9.99999974E-6 : f32
    %738 = vector.broadcast %cst_189 : f32 to vector<4x1xf32>
    %739 = arith.addf %737, %738 : vector<4x1xf32>
    %740 = math.rsqrt %739 : vector<4x1xf32>
    %741 = vector.broadcast %740 : vector<4x1xf32> to vector<4x32xf32>
    %742 = arith.mulf %732, %741 : vector<4x32xf32>
    %743 = vector.broadcast %724 : vector<1x32xf32> to vector<4x32xf32>
    %744 = arith.mulf %742, %743 : vector<4x32xf32>
    %745 = vector.broadcast %726 : vector<1x32xf32> to vector<4x32xf32>
    %746 = arith.addf %744, %745 : vector<4x32xf32>
    %c928 = arith.constant 928 : index
    %c0_190 = arith.constant 0 : index
    %747 = vector.load %arg8[%c928, %c0_190] : memref<1856x128xbf16, #tpu.memory_space<vmem>>, vector<32x128xbf16>
    %748 = vector.extract_strided_slice %747 {offsets = [0, 0], sizes = [32, 32], strides = [1, 1]} : vector<32x128xbf16> to vector<32x32xbf16>
    %749 = arith.truncf %746 : vector<4x32xf32> to vector<4x32xbf16>
    %cst_191 = arith.constant dense<0.000000e+00> : vector<4x32xf32>
    %750 = tpu.matmul %749, %748, %cst_191 {dimension_numbers = #tpu.dot_dimension_numbers<[1], [0], [0], [1], [0, 0, 1, 1], [], []>} : vector<4x32xbf16>, vector<32x32xbf16>, vector<4x32xf32> -> vector<4x32xf32>
    %751 = arith.mulf %750, %750 : vector<4x32xf32>
    %cst_192 = arith.constant dense<0.000000e+00> : vector<4xf32>
    %752 = vector.multi_reduction <add>, %751, %cst_192 [1] : vector<4x32xf32> to vector<4xf32>
    %753 = vector.shape_cast %752 : vector<4xf32> to vector<4x1xf32>
    %754 = math.rsqrt %753 : vector<4x1xf32>
    %755 = vector.broadcast %754 : vector<4x1xf32> to vector<4x32xf32>
    %756 = arith.mulf %750, %755 : vector<4x32xf32>
    %c0_193 = arith.constant 0 : index
    %c0_194 = arith.constant 0 : index
    %757 = vector.load %arg7[%c0_193, %c0_194] : memref<2x4xf32, #tpu.memory_space<vmem>>, vector<2x4xf32>
    %cst_195 = arith.constant dense<0.000000e+00> : vector<2x32xf32>
    %758 = tpu.matmul %757, %756, %cst_195 {dimension_numbers = #tpu.dot_dimension_numbers<[1], [0], [0], [1], [0, 0, 1, 1], [], []>} : vector<2x4xf32>, vector<4x32xf32>, vector<2x32xf32> -> vector<2x32xf32>
    %cst_196 = arith.constant dense<0.000000e+00> : vector<2xf32>
    %759 = vector.multi_reduction <add>, %757, %cst_196 [1] : vector<2x4xf32> to vector<2xf32>
    %760 = vector.shape_cast %759 : vector<2xf32> to vector<2x1xf32>
    %cst_197 = arith.constant 0.000000e+00 : f32
    %761 = vector.broadcast %cst_197 : f32 to vector<2x1xf32>
    %762 = arith.cmpf oeq, %760, %761 : vector<2x1xf32>
    %cst_198 = arith.constant 1.000000e+00 : f32
    %763 = vector.broadcast %cst_198 : f32 to vector<2x1xf32>
    %764 = arith.select %762, %763, %760 : vector<2x1xi1>, vector<2x1xf32>
    %765 = tpu.reciprocal %764 {approx = true} : vector<2x1xf32> -> vector<2x1xf32>
    %766 = vector.broadcast %765 : vector<2x1xf32> to vector<2x32xf32>
    %767 = arith.mulf %758, %766 : vector<2x32xf32>
    %768 = arith.mulf %356, %356 : vector<2x32xf32>
    %cst_199 = arith.constant dense<0.000000e+00> : vector<2xf32>
    %769 = vector.multi_reduction <add>, %768, %cst_199 [1] : vector<2x32xf32> to vector<2xf32>
    %770 = vector.shape_cast %769 : vector<2xf32> to vector<2x1xf32>
    %771 = math.rsqrt %770 : vector<2x1xf32>
    %772 = vector.broadcast %771 : vector<2x1xf32> to vector<2x32xf32>
    %773 = arith.mulf %356, %772 : vector<2x32xf32>
    %774 = arith.mulf %767, %767 : vector<2x32xf32>
    %cst_200 = arith.constant dense<0.000000e+00> : vector<2xf32>
    %775 = vector.multi_reduction <add>, %774, %cst_200 [1] : vector<2x32xf32> to vector<2xf32>
    %776 = vector.shape_cast %775 : vector<2xf32> to vector<2x1xf32>
    %777 = math.rsqrt %776 : vector<2x1xf32>
    %778 = vector.broadcast %777 : vector<2x1xf32> to vector<2x32xf32>
    %779 = arith.mulf %767, %778 : vector<2x32xf32>
    %cst_201 = arith.constant dense<0.000000e+00> : vector<2x2xf32>
    %780 = tpu.matmul %773, %779, %cst_201 {dimension_numbers = #tpu.dot_dimension_numbers<[1], [1], [0], [0], [0, 0, 1, 0], [], []>} : vector<2x32xf32>, vector<2x32xf32>, vector<2x2xf32> -> vector<2x2xf32>
    %c0_202 = arith.constant 0 : index
    %c0_203 = arith.constant 0 : index
    %781 = memref.load %arg10[%c0_202, %c0_203] : memref<1x1xf32, #tpu.memory_space<smem>>
    %782 = vector.broadcast %781 : f32 to vector<2x2xf32>
    %783 = arith.mulf %780, %782 : vector<2x2xf32>
    %784 = tpu.iota {dimensions = array<i32: 0>} : vector<2x2xi32>
    %785 = tpu.iota {dimensions = array<i32: 1>} : vector<2x2xi32>
    %786 = arith.cmpi eq, %784, %785 : vector<2x2xi32>
    %cst_204 = arith.constant 0.000000e+00 : f32
    %787 = vector.broadcast %cst_204 : f32 to vector<2x2xf32>
    %788 = arith.select %786, %783, %787 : vector<2x2xi1>, vector<2x2xf32>
    %cst_205 = arith.constant dense<0.000000e+00> : vector<2xf32>
    %789 = vector.multi_reduction <add>, %788, %cst_205 [1] : vector<2x2xf32> to vector<2xf32>
    %790 = vector.shape_cast %789 : vector<2xf32> to vector<2x1xf32>
    %cst_206 = arith.constant 0.000000e+00 : f32
    %791 = vector.broadcast %cst_206 : f32 to vector<2x2xf32>
    %792 = arith.select %786, %783, %791 : vector<2x2xi1>, vector<2x2xf32>
    %cst_207 = arith.constant dense<0.000000e+00> : vector<2xf32>
    %793 = vector.multi_reduction <add>, %792, %cst_207 [0] : vector<2x2xf32> to vector<2xf32>
    %794 = vector.shape_cast %793 : vector<2xf32> to vector<1x2xf32>
    %cst_208 = arith.constant dense<0xFF800000> : vector<2xf32>
    %795 = vector.multi_reduction <maximumf>, %783, %cst_208 [1] : vector<2x2xf32> to vector<2xf32>
    %796 = vector.shape_cast %795 : vector<2xf32> to vector<2x1xf32>
    %797 = vector.broadcast %796 : vector<2x1xf32> to vector<2x2xf32>
    %798 = arith.subf %783, %797 : vector<2x2xf32>
    %799 = math.exp %798 : vector<2x2xf32>
    %cst_209 = arith.constant dense<0.000000e+00> : vector<2xf32>
    %800 = vector.multi_reduction <add>, %799, %cst_209 [1] : vector<2x2xf32> to vector<2xf32>
    %801 = vector.shape_cast %800 : vector<2xf32> to vector<2x1xf32>
    %802 = math.log %801 : vector<2x1xf32>
    %803 = arith.addf %802, %796 : vector<2x1xf32>
    %cst_210 = arith.constant dense<0xFF800000> : vector<2xf32>
    %804 = vector.multi_reduction <maximumf>, %783, %cst_210 [0] : vector<2x2xf32> to vector<2xf32>
    %805 = vector.shape_cast %804 : vector<2xf32> to vector<1x2xf32>
    %806 = vector.broadcast %805 : vector<1x2xf32> to vector<2x2xf32>
    %807 = arith.subf %783, %806 : vector<2x2xf32>
    %808 = math.exp %807 : vector<2x2xf32>
    %cst_211 = arith.constant dense<0.000000e+00> : vector<2xf32>
    %809 = vector.multi_reduction <add>, %808, %cst_211 [0] : vector<2x2xf32> to vector<2xf32>
    %810 = vector.shape_cast %809 : vector<2xf32> to vector<1x2xf32>
    %811 = math.log %810 : vector<1x2xf32>
    %812 = arith.addf %811, %805 : vector<1x2xf32>
    %813 = arith.subf %790, %803 : vector<2x1xf32>
    %814 = vector.shape_cast %813 : vector<2x1xf32> to vector<1x2x1xf32>
    %cst_212 = arith.constant dense<0.000000e+00> : vector<1xf32>
    %815 = vector.multi_reduction <add>, %814, %cst_212 [1, 2] : vector<1x2x1xf32> to vector<1xf32>
    %816 = vector.shape_cast %815 : vector<1xf32> to vector<1x1x1xf32>
    %817 = vector.extract %816[0, 0, 0] : f32 from vector<1x1x1xf32>
    %818 = vector.broadcast %817 : f32 to vector<1x1xf32>
    %cst_213 = arith.constant 0.000000e+00 : f32
    %819 = vector.broadcast %cst_213 : f32 to vector<1x1xf32>
    %820 = arith.subf %819, %818 : vector<1x1xf32>
    %cst_214 = arith.constant 2.000000e+00 : f32
    %821 = vector.broadcast %cst_214 : f32 to vector<1x1xf32>
    %822 = arith.divf %820, %821 : vector<1x1xf32>
    %823 = arith.subf %794, %812 : vector<1x2xf32>
    %824 = vector.shape_cast %823 : vector<1x2xf32> to vector<1x1x2xf32>
    %cst_215 = arith.constant dense<0.000000e+00> : vector<1xf32>
    %825 = vector.multi_reduction <add>, %824, %cst_215 [1, 2] : vector<1x1x2xf32> to vector<1xf32>
    %826 = vector.shape_cast %825 : vector<1xf32> to vector<1x1x1xf32>
    %827 = vector.extract %826[0, 0, 0] : f32 from vector<1x1x1xf32>
    %828 = vector.broadcast %827 : f32 to vector<1x1xf32>
    %cst_216 = arith.constant 0.000000e+00 : f32
    %829 = vector.broadcast %cst_216 : f32 to vector<1x1xf32>
    %830 = arith.subf %829, %828 : vector<1x1xf32>
    %cst_217 = arith.constant 2.000000e+00 : f32
    %831 = vector.broadcast %cst_217 : f32 to vector<1x1xf32>
    %832 = arith.divf %830, %831 : vector<1x1xf32>
    %833 = arith.addf %822, %832 : vector<1x1xf32>
    %cst_218 = arith.constant 5.000000e-01 : f32
    %834 = vector.broadcast %cst_218 : f32 to vector<1x1xf32>
    %835 = arith.mulf %834, %833 : vector<1x1xf32>
    %c0_219 = arith.constant 0 : index
    %c0_220 = arith.constant 0 : index
    %836 = vector.load %arg11[%c0_219, %c0_220] : memref<1x1xf32, #tpu.memory_space<vmem>>, vector<1x1xf32>
    tpu.vector_store %arg11[%c0_219, %c0_220], %835 {strides = array<i32>} : memref<1x1xf32, #tpu.memory_space<vmem>>, vector<1x1xf32>,
    return
  }
}

</mosaic_0001>

<llo_original>
// kernel: vtr_forward.1
$region0: #{vtr_forward.1}
  #allocation0 [shape = 'u32[]', space=smem, size = 0x4, offset = 0x4, fixed_abs, tag = 'smem constant byte address 0x4 - core index']
  #allocation1 [shape = 'u32[72,128]{1,0:T(1,128)}', space=vmem, size = 0x9000, scoped, tag = 'internal scratch']
  #allocation2 [shape = 'f32[1,1]{1,0:T(1,128)S(6)}', space=smem, size = 0x200, scoped, tag = 'scoped memory for vtr_forward.1']
  %s0 = inlined_call_operand.vmem [shape: f32[2,8,32], index: 0, kind: input, shape index: {}]
  %s1 = inlined_call_operand.vmem [shape: f32[8,8,8], index: 1, kind: input, shape index: {}]
  %s2 = inlined_call_operand.vmem [shape: f32[2,16], index: 2, kind: input, shape index: {}]
  %s3 = inlined_call_operand.vmem [shape: bf16[4,8,896], index: 3, kind: input, shape index: {}]
  %s4 = inlined_call_operand.vmem [shape: f32[8,32], index: 4, kind: input, shape index: {}]
  %s5 = inlined_call_operand.vmem [shape: f32[1,8,8], index: 5, kind: input, shape index: {}]
  %s6 = inlined_call_operand.vmem [shape: f32[4,32], index: 6, kind: input, shape index: {}]
  %s7 = inlined_call_operand.vmem [shape: f32[2,4], index: 7, kind: input, shape index: {}]
  %s8 = inlined_call_operand.vmem [shape: bf16[1856,128], index: 8, kind: input, shape index: {}]
  %s9 = inlined_call_operand.vmem [shape: f32[40,128], index: 9, kind: input, shape index: {}]
  %s10 = inlined_call_operand.<no memory space> [shape: f32[1,1], index: 10, kind: input, shape index: {}]
  %s11 = inlined_call_operand.hbm [shape: f32[1,1], index: 11, kind: output, shape index: {}]
  %s12 = sld [smem:[#allocation0]]
  $region54: #{vtr_forward.1} parent=0
    _
  %s14 = ssub.s32 1, %s12
  %s15 = scalar_select 0, %s14, %s12
  %16 = sst [smem:[#allocation2]] %s10
  $region1: #{vtr_forward.1} parent=0
    #allocation3 [shape = 'u8[512]{0}', space=vmem, size = 0x400, scoped, tag = 'output window, operand 0, single buffered']
    #allocation4 [shape = 's32[1]{0}', space=sflag, size = 0x4, scoped, tag = 'scoped memory for vtr_forward.1']
    %17 = vsyncpa [#allocation4], 0
    // Predicated region
    $region2: #{vtr_forward.1} parent=1 // pred_check
      _
    $region3: #{vtr_forward.1} parent=1 // pred_check_branch
      %19 = sbr.rel (0) target = $region5
    $region4: #{vtr_forward.1} parent=1 // pred_region
      _
    $region5: #{vtr_forward.1} parent=1 // pred_fallthru
      _
    // Predicated region
    $region6: #{vtr_forward.1} parent=1 // pred_check
      _
    $region7: #{vtr_forward.1} parent=1 // pred_check_branch
      %21 = sbr.rel (0) target = $region9
    $region8: #{vtr_forward.1} parent=1 // pred_region
      _
    $region9: #{vtr_forward.1} parent=1 // pred_fallthru
      _
    // Predicated region
    $region10: #{vtr_forward.1} parent=1 // pred_check
      _
    $region11: #{vtr_forward.1} parent=1 // pred_check_branch
      %23 = sbr.rel (0) target = $region13
    $region12: #{vtr_forward.1} parent=1 // pred_region
      _
    $region13: #{vtr_forward.1} parent=1 // pred_fallthru
      _
    // Predicated region
    $region14: #{vtr_forward.1} parent=1 // pred_check
      _
    $region15: #{vtr_forward.1} parent=1 // pred_check_branch
      %25 = sbr.rel (0) target = $region17
    $region16: #{vtr_forward.1} parent=1 // pred_region
      _
    $region17: #{vtr_forward.1} parent=1 // pred_fallthru
      _
    // Predicated region
    $region18: #{vtr_forward.1} parent=1 // pred_check
      _
    $region19: #{vtr_forward.1} parent=1 // pred_check_branch
      %27 = sbr.rel (0) target = $region21
    $region20: #{vtr_forward.1} parent=1 // pred_region
      _
    $region21: #{vtr_forward.1} parent=1 // pred_fallthru
      _
    // Predicated region
    $region22: #{vtr_forward.1} parent=1 // pred_check
      _
    $region23: #{vtr_forward.1} parent=1 // pred_check_branch
      %29 = sbr.rel (0) target = $region25
    $region24: #{vtr_forward.1} parent=1 // pred_region
      _
    $region25: #{vtr_forward.1} parent=1 // pred_fallthru
      _
    // Predicated region
    $region26: #{vtr_forward.1} parent=1 // pred_check
      _
    $region27: #{vtr_forward.1} parent=1 // pred_check_branch
      %31 = sbr.rel (0) target = $region29
    $region28: #{vtr_forward.1} parent=1 // pred_region
      _
    $region29: #{vtr_forward.1} parent=1 // pred_fallthru
      _
    // Predicated region
    $region30: #{vtr_forward.1} parent=1 // pred_check
      _
    $region31: #{vtr_forward.1} parent=1 // pred_check_branch
      %33 = sbr.rel (0) target = $region33
    $region32: #{vtr_forward.1} parent=1 // pred_region
      _
    $region33: #{vtr_forward.1} parent=1 // pred_fallthru
      _
    // Predicated region
    $region34: #{vtr_forward.1} parent=1 // pred_check
      _
    $region35: #{vtr_forward.1} parent=1 // pred_check_branch
      %35 = sbr.rel (0) target = $region37
    $region36: #{vtr_forward.1} parent=1 // pred_region
      _
    $region37: #{vtr_forward.1} parent=1 // pred_fallthru
      _
    // Predicated region
    $region38: #{vtr_forward.1} parent=1 // pred_check
      _
    $region39: #{vtr_forward.1} parent=1 // pred_check_branch
      %37 = sbr.rel (0) target = $region41
    $region40: #{vtr_forward.1} parent=1 // pred_region
      _
    $region41: #{vtr_forward.1} parent=1 // pred_fallthru
      _
    // Predicated region
    $region42: #{vtr_forward.1} parent=1 // pred_check
      _
    $region43: #{vtr_forward.1} parent=1 // pred_check_branch
      %39 = sbr.rel (0) target = $region45
    $region44: #{vtr_forward.1} parent=1 // pred_region
      _
    $region45: #{vtr_forward.1} parent=1 // pred_fallthru
      _
    %v41 = vld [vmem:[%s0] sm:$0xff]
    %v42 = vld [vmem:[%s0 + $0x8] sm:$0xff]
    %v43 = vld [vmem:[%s1] sm:$0xff]
    %v44 = vld [vmem:[%s1 + $0x8] sm:$0xff]
    %v45 = vld [vmem:[%s1 + $0x10] sm:$0xff]
    %v46 = vld [vmem:[%s1 + $0x18] sm:$0xff]
    %v47 = vld [vmem:[%s1 + $0x20] sm:$0xff]
    %v48 = vld [vmem:[%s1 + $0x28] sm:$0xff]
    %v49 = vld [vmem:[%s1 + $0x30] sm:$0xff]
    %v50 = vld [vmem:[%s1 + $0x38] sm:$0xff]
    %v51 = vld [vmem:[%s8] sm:$0xf]
    %v52 = vld [vmem:[%s8 + $0x4] sm:$0xf]
    %v53 = vld [vmem:[%s8 + $0x8] sm:$0xf]
    %v54 = vld [vmem:[%s8 + $0xc] sm:$0xf]
    %v55 = vld [vmem:[%s8 + $0x10] sm:$0xf]
    %v56 = vld [vmem:[%s8 + $0x14] sm:$0xf]
    %v57 = vld [vmem:[%s8 + $0x18] sm:$0xf]
    %v58 = vld [vmem:[%s8 + $0x1c] sm:$0xf]
    %v59 = vld [vmem:[%s8 + $0x20] sm:$0xf]
    %v60 = vld [vmem:[%s8 + $0x24] sm:$0xf]
    %v61 = vld [vmem:[%s8 + $0x28] sm:$0xf]
    %v62 = vld [vmem:[%s8 + $0x2c] sm:$0xf]
    %v63 = vld [vmem:[%s8 + $0x30] sm:$0xf]
    %v64 = vld [vmem:[%s8 + $0x34] sm:$0xf]
    %v65 = vld [vmem:[%s8 + $0x38] sm:$0xf]
    %v66 = vld [vmem:[%s8 + $0x3c] sm:$0xf]
    %v67 = vld [vmem:[%s8 + $0x40] sm:$0xf]
    %v68 = vld [vmem:[%s8 + $0x44] sm:$0xf]
    %v69 = vld [vmem:[%s8 + $0x48] sm:$0xf]
    %v70 = vld [vmem:[%s8 + $0x4c] sm:$0xf]
    %v71 = vld [vmem:[%s8 + $0x50] sm:$0xf]
    %v72 = vld [vmem:[%s8 + $0x54] sm:$0xf]
    %v73 = vld [vmem:[%s8 + $0x58] sm:$0xf]
    %v74 = vld [vmem:[%s8 + $0x5c] sm:$0xf]
    %v75 = vld [vmem:[%s8 + $0x60] sm:$0xf]
    %v76 = vld [vmem:[%s8 + $0x64] sm:$0xf]
    %v77 = vld [vmem:[%s8 + $0x68] sm:$0xf]
    %v78 = vld [vmem:[%s8 + $0x6c] sm:$0xf]
    %v79 = vld [vmem:[%s9] sm:$0x1]
    %v80 = vld [vmem:[%s9 + $0x1] sm:$0x1]
    %v81 = vld [vmem:[%s9 + $0x2] sm:$0x1]
    %v82 = vld [vmem:[%s9 + $0x3] sm:$0x1]
    %v83 = vld [vmem:[%s9 + $0x4] sm:$0x1]
    %v84 = vld [vmem:[%s9 + $0x5] sm:$0x1]
    %v85 = vld [vmem:[%s9 + $0x6] sm:$0x1]
    %v86 = vld [vmem:[%s9 + $0x7] sm:$0x1]
    %vm87 = vcmask 261120
    %v88 = vsel %vm87, %v41, 0.0
    %89 = vadd.xlane.f32.xlu0 %v88
    %v90 = vpop.xlane.xlu0 %89
    %v91 = vsel %vm87, %v42, 0.0
    %92 = vadd.xlane.f32.xlu0 %v91
    %v93 = vpop.xlane.xlu0 %92
    %v94 = vrcp.pop 32.0
    %v95 = vmul.f32 32.0, %v94
    %v96 = vsub.f32 1.0, %v95
    %v97 = vmul.f32 %v94, %v96
    %v98 = vadd.f32 %v94, %v97
    %vm99 = vweird.f32 %v94
    %v100 = vsel %vm99, %v94, %v98
    %v101 = vmul.f32 %v90, %v100
    %v102 = vmul.f32 %v93, %v100
    %v103 = vsub.f32 %v41, %v101
    %v104 = vsub.f32 %v42, %v102
    %v105 = vmul.f32 %v103, %v103
    %v106 = vmul.f32 %v104, %v104
    %v107 = vsel %vm87, %v105, 0.0
    %108 = vadd.xlane.f32.xlu0 %v107
    %v109 = vpop.xlane.xlu0 %108
    %v110 = vsel %vm87, %v106, 0.0
    %111 = vadd.xlane.f32.xlu0 %v110
    %v112 = vpop.xlane.xlu0 %111
    %v113 = vmul.f32 %v109, %v100
    %v114 = vmul.f32 %v112, %v100
    %v115 = vadd.f32 %v113, 1e-05
    %v116 = vadd.f32 %v114, 1e-05
    %v117 = vrsqrt.pop %v115
    %v118 = vmul.f32 %v117, %v115
    %v119 = vmul.f32 %v118, %v117
    %v120 = vmul.f32 0.5, %v119
    %v121 = vsub.f32 1.5, %v120
    %v122 = vmul.f32 %v117, %v121
    %vm123 = vweird.f32 %v115
    %vm124 = vweird.f32 %v117
    %vm125 = vmor %vm123, %vm124
    %v126 = vsel %vm125, %v117, %v122
    %v127 = vrsqrt.pop %v116
    %v128 = vmul.f32 %v127, %v116
    %v129 = vmul.f32 %v128, %v127
    %v130 = vmul.f32 0.5, %v129
    %v131 = vsub.f32 1.5, %v130
    %v132 = vmul.f32 %v127, %v131
    %vm133 = vweird.f32 %v116
    %vm134 = vweird.f32 %v127
    %vm135 = vmor %vm133, %vm134
    %v136 = vsel %vm135, %v127, %v132
    %v137 = vmul.f32 %v103, %v126
    %v138 = vmul.f32 %v104, %v136
    %v139 = vperm.slane %v79, 0
    %v140 = vmul.f32 %v137, %v139
    %v141 = vmul.f32 %v138, %v139
    %v142 = vperm.slane %v80, 0
    %v143 = vadd.f32 %v140, %v142
    %v144 = vadd.f32 %v141, %v142
    %v145 = vpack.c.bf16 %v144, %v143
    %v146 = vperm.slane %v83, 0
    %v151 = vunpack.c.l.b16 %v51
    %v152 = vunpack.c.l.b16 %v52
    %v153 = vunpack.c.l.b16 %v53
    %v154 = vunpack.c.l.b16 %v54
    %v155 = vpack.c.b16 %v152, %v151
    %v156 = vpack.c.b16 %v154, %v153
    %v160 = vsel %vm87, %v145, 0
    %162 = vmatpush.bf16.msra.mxu0 0
    %163 = vmatpush.bf16.msra.mxu0 0
    %164 = vmatpush.bf16.msra.mxu0 0
    %165 = vmatpush.bf16.msra.mxu0 0
    %166 = vmatpush.bf16.msra.mxu0 0
    %167 = vmatpush.bf16.msra.mxu0 0
    %168 = vmatpush.bf16.msra.mxu0 %v156
    %169 = vmatpush.bf16.msra.mxu0 %v155
    %170 = vmatmul.bf16.gmra.mxu0 %v160
    %v171 = vpop.f32.mrf.mxu0
    %v172 = vadd.f32 %v146, %v171
    %v173 = vpop.f32.mrf.mxu0
    %v174 = vadd.f32 %v146, %v173
    %175 = vdwg.mxu0
    %178 = vrot.lane.b32.xlu0 %v172, 120
    %v179 = vpop.permute.xlu0 %178
    %180 = vrot.lane.b32.xlu0 %v174, 120
    %v181 = vpop.permute.xlu0 %180
    %184 = vrot.lane.b32.xlu0 %v172, 112
    %v185 = vpop.permute.xlu0 %184
    %186 = vrot.lane.b32.xlu0 %v174, 112
    %v187 = vpop.permute.xlu0 %186
    %190 = vrot.lane.b32.xlu0 %v172, 104
    %v191 = vpop.permute.xlu0 %190
    %192 = vrot.lane.b32.xlu0 %v174, 104
    %v193 = vpop.permute.xlu0 %192
    %v196 = vpack.c.bf16 %v172, %v172
    %v197 = vpack.c.bf16 %v174, %v174
    %v198 = vpack.c.bf16 %v179, %v179
    %v199 = vpack.c.bf16 %v181, %v181
    %v200 = vpack.c.bf16 %v185, %v185
    %v201 = vpack.c.bf16 %v187, %v187
    %v202 = vpack.c.bf16 %v191, %v191
    %v203 = vpack.c.bf16 %v193, %v193
    %v205 = vunpack.c.l.b16 %v196
    %v206 = vpack.c.b16 %v205, %v205
    %207 = vrot.lane.b32.xlu0 %v206, 96
    %v208 = vpop.permute.xlu0 %207
    %vm209 = vcmask 64512
    %v211 = vsel %vm209, %v196, 0
    %v214 = vsel %vm209, %v208, 0
    %216 = vmatpush.bf16.xpose.msra.mxu0 0
    %217 = vmatpush.bf16.xpose.msra.mxu0 0
    %218 = vmatpush.bf16.xpose.msra.mxu0 0
    %219 = vmatpush.bf16.xpose.msra.mxu0 0
    %220 = vmatpush.bf16.xpose.msra.mxu0 0
    %221 = vmatpush.bf16.xpose.msra.mxu0 0
    %222 = vmatpush.bf16.xpose.msra.mxu0 0
    %223 = vmatpush.bf16.xpose.msra.mxu0 %v214
    %224 = vmatmul.bf16.gmra.mxu0 %v211
    %v225 = vpop.f32.mrf.mxu0
    %v226 = vadd.f32 0.0, %v225
    %v227 = vpop.f32.mrf.mxu0
    %228 = vdwg.mxu0
    %v230 = vunpack.c.l.b16 %v197
    %v231 = vpack.c.b16 %v230, %v230
    %232 = vrot.lane.b32.xlu0 %v231, 96
    %v233 = vpop.permute.xlu0 %232
    %v235 = vsel %vm209, %v197, 0
    %v238 = vsel %vm209, %v233, 0
    %240 = vmatpush.bf16.xpose.msra.mxu0 0
    %241 = vmatpush.bf16.xpose.msra.mxu0 0
    %242 = vmatpush.bf16.xpose.msra.mxu0 0
    %243 = vmatpush.bf16.xpose.msra.mxu0 0
    %244 = vmatpush.bf16.xpose.msra.mxu0 0
    %245 = vmatpush.bf16.xpose.msra.mxu0 0
    %246 = vmatpush.bf16.xpose.msra.mxu0 0
    %247 = vmatpush.bf16.xpose.msra.mxu0 %v238
    %248 = vmatmul.bf16.gmra.mxu0 %v235
    %v249 = vpop.f32.mrf.mxu0
    %v250 = vadd.f32 0.0, %v249
    %v251 = vpop.f32.mrf.mxu0
    %252 = vdwg.mxu0
    %v254 = vunpack.c.l.b16 %v198
    %v255 = vpack.c.b16 %v254, %v254
    %256 = vrot.lane.b32.xlu0 %v255, 96
    %v257 = vpop.permute.xlu0 %256
    %v259 = vsel %vm209, %v198, 0
    %v262 = vsel %vm209, %v257, 0
    %264 = vmatpush.bf16.xpose.msra.mxu0 0
    %265 = vmatpush.bf16.xpose.msra.mxu0 0
    %266 = vmatpush.bf16.xpose.msra.mxu0 0
    %267 = vmatpush.bf16.xpose.msra.mxu0 0
    %268 = vmatpush.bf16.xpose.msra.mxu0 0
    %269 = vmatpush.bf16.xpose.msra.mxu0 0
    %270 = vmatpush.bf16.xpose.msra.mxu0 0
    %271 = vmatpush.bf16.xpose.msra.mxu0 %v262
    %272 = vmatmul.bf16.gmra.mxu0 %v259
    %v273 = vpop.f32.mrf.mxu0
    %v274 = vadd.f32 0.0, %v273
    %v275 = vpop.f32.mrf.mxu0
    %276 = vdwg.mxu0
    %v278 = vunpack.c.l.b16 %v199
    %v279 = vpack.c.b16 %v278, %v278
    %280 = vrot.lane.b32.xlu0 %v279, 96
    %v281 = vpop.permute.xlu0 %280
    %v283 = vsel %vm209, %v199, 0
    %v286 = vsel %vm209, %v281, 0
    %288 = vmatpush.bf16.xpose.msra.mxu0 0
    %289 = vmatpush.bf16.xpose.msra.mxu0 0
    %290 = vmatpush.bf16.xpose.msra.mxu0 0
    %291 = vmatpush.bf16.xpose.msra.mxu0 0
    %292 = vmatpush.bf16.xpose.msra.mxu0 0
    %293 = vmatpush.bf16.xpose.msra.mxu0 0
    %294 = vmatpush.bf16.xpose.msra.mxu0 0
    %295 = vmatpush.bf16.xpose.msra.mxu0 %v286
    %296 = vmatmul.bf16.gmra.mxu0 %v283
    %v297 = vpop.f32.mrf.mxu0
    %v298 = vadd.f32 0.0, %v297
    %v299 = vpop.f32.mrf.mxu0
    %300 = vdwg.mxu0
    %v302 = vunpack.c.l.b16 %v200
    %v303 = vpack.c.b16 %v302, %v302
    %304 = vrot.lane.b32.xlu0 %v303, 96
    %v305 = vpop.permute.xlu0 %304
    %v307 = vsel %vm209, %v200, 0
    %v310 = vsel %vm209, %v305, 0
    %312 = vmatpush.bf16.xpose.msra.mxu0 0
    %313 = vmatpush.bf16.xpose.msra.mxu0 0
    %314 = vmatpush.bf16.xpose.msra.mxu0 0
    %315 = vmatpush.bf16.xpose.msra.mxu0 0
    %316 = vmatpush.bf16.xpose.msra.mxu0 0
    %317 = vmatpush.bf16.xpose.msra.mxu0 0
    %318 = vmatpush.bf16.xpose.msra.mxu0 0
    %319 = vmatpush.bf16.xpose.msra.mxu0 %v310
    %320 = vmatmul.bf16.gmra.mxu0 %v307
    %v321 = vpop.f32.mrf.mxu0
    %v322 = vadd.f32 0.0, %v321
    %v323 = vpop.f32.mrf.mxu0
    %324 = vdwg.mxu0
    %v326 = vunpack.c.l.b16 %v201
    %v327 = vpack.c.b16 %v326, %v326
    %328 = vrot.lane.b32.xlu0 %v327, 96
    %v329 = vpop.permute.xlu0 %328
    %v331 = vsel %vm209, %v201, 0
    %v334 = vsel %vm209, %v329, 0
    %336 = vmatpush.bf16.xpose.msra.mxu0 0
    %337 = vmatpush.bf16.xpose.msra.mxu0 0
    %338 = vmatpush.bf16.xpose.msra.mxu0 0
    %339 = vmatpush.bf16.xpose.msra.mxu0 0
    %340 = vmatpush.bf16.xpose.msra.mxu0 0
    %341 = vmatpush.bf16.xpose.msra.mxu0 0
    %342 = vmatpush.bf16.xpose.msra.mxu0 0
    %343 = vmatpush.bf16.xpose.msra.mxu0 %v334
    %344 = vmatmul.bf16.gmra.mxu0 %v331
    %v345 = vpop.f32.mrf.mxu0
    %v346 = vadd.f32 0.0, %v345
    %v347 = vpop.f32.mrf.mxu0
    %348 = vdwg.mxu0
    %v350 = vunpack.c.l.b16 %v202
    %v351 = vpack.c.b16 %v350, %v350
    %352 = vrot.lane.b32.xlu0 %v351, 96
    %v353 = vpop.permute.xlu0 %352
    %v355 = vsel %vm209, %v202, 0
    %v358 = vsel %vm209, %v353, 0
    %360 = vmatpush.bf16.xpose.msra.mxu0 0
    %361 = vmatpush.bf16.xpose.msra.mxu0 0
    %362 = vmatpush.bf16.xpose.msra.mxu0 0
    %363 = vmatpush.bf16.xpose.msra.mxu0 0
    %364 = vmatpush.bf16.xpose.msra.mxu0 0
    %365 = vmatpush.bf16.xpose.msra.mxu0 0
    %366 = vmatpush.bf16.xpose.msra.mxu0 0
    %367 = vmatpush.bf16.xpose.msra.mxu0 %v358
    %368 = vmatmul.bf16.gmra.mxu0 %v355
    %v369 = vpop.f32.mrf.mxu0
    %v370 = vadd.f32 0.0, %v369
    %v371 = vpop.f32.mrf.mxu0
    %372 = vdwg.mxu0
    %v374 = vunpack.c.l.b16 %v203
    %v375 = vpack.c.b16 %v374, %v374
    %376 = vrot.lane.b32.xlu0 %v375, 96
    %v377 = vpop.permute.xlu0 %376
    %v379 = vsel %vm209, %v203, 0
    %v382 = vsel %vm209, %v377, 0
    %384 = vmatpush.bf16.xpose.msra.mxu0 0
    %385 = vmatpush.bf16.xpose.msra.mxu0 0
    %386 = vmatpush.bf16.xpose.msra.mxu0 0
    %387 = vmatpush.bf16.xpose.msra.mxu0 0
    %388 = vmatpush.bf16.xpose.msra.mxu0 0
    %389 = vmatpush.bf16.xpose.msra.mxu0 0
    %390 = vmatpush.bf16.xpose.msra.mxu0 0
    %391 = vmatpush.bf16.xpose.msra.mxu0 %v382
    %392 = vmatmul.bf16.gmra.mxu0 %v379
    %v393 = vpop.f32.mrf.mxu0
    %v394 = vadd.f32 0.0, %v393
    %v395 = vpop.f32.mrf.mxu0
    %396 = vdwg.mxu0
    %v397 = vmul.f32 %v226, 0.35355338
    %v398 = vmul.f32 %v250, 0.35355338
    %v399 = vmul.f32 %v274, 0.35355338
    %v400 = vmul.f32 %v298, 0.35355338
    %v401 = vmul.f32 %v322, 0.35355338
    %v402 = vmul.f32 %v346, 0.35355338
    %v403 = vmul.f32 %v370, 0.35355338
    %v404 = vmul.f32 %v394, 0.35355338
    %v405 = vadd.f32 %v397, %v43
    %v406 = vadd.f32 %v398, %v44
    %v407 = vadd.f32 %v399, %v45
    %v408 = vadd.f32 %v400, %v46
    %v409 = vadd.f32 %v401, %v47
    %v410 = vadd.f32 %v402, %v48
    %v411 = vadd.f32 %v403, %v49
    %v412 = vadd.f32 %v404, %v50
    %v413 = vsel %vm209, %v405, -inf
    %414 = vmax.xlane.f32.xlu0 %v413
    %v415 = vpop.xlane.xlu0 %414
    %v416 = vsel %vm209, %v406, -inf
    %417 = vmax.xlane.f32.xlu0 %v416
    %v418 = vpop.xlane.xlu0 %417
    %v419 = vsel %vm209, %v407, -inf
    %420 = vmax.xlane.f32.xlu0 %v419
    %v421 = vpop.xlane.xlu0 %420
    %v422 = vsel %vm209, %v408, -inf
    %423 = vmax.xlane.f32.xlu0 %v422
    %v424 = vpop.xlane.xlu0 %423
    %v425 = vsel %vm209, %v409, -inf
    %426 = vmax.xlane.f32.xlu0 %v425
    %v427 = vpop.xlane.xlu0 %426
    %v428 = vsel %vm209, %v410, -inf
    %429 = vmax.xlane.f32.xlu0 %v428
    %v430 = vpop.xlane.xlu0 %429
    %v431 = vsel %vm209, %v411, -inf
    %432 = vmax.xlane.f32.xlu0 %v431
    %v433 = vpop.xlane.xlu0 %432
    %v434 = vsel %vm209, %v412, -inf
    %435 = vmax.xlane.f32.xlu0 %v434
    %v436 = vpop.xlane.xlu0 %435
    %v437 = vsub.f32 %v405, %v415
    %v438 = vsub.f32 %v406, %v418
    %v439 = vsub.f32 %v407, %v421
    %v440 = vsub.f32 %v408, %v424
    %v441 = vsub.f32 %v409, %v427
    %v442 = vsub.f32 %v410, %v430
    %v443 = vsub.f32 %v411, %v433
    %v444 = vsub.f32 %v412, %v436
    %v445 = vmul.f32 %v437, 1.442695
    %v446 = vpow.pop %v445
    %v447 = vmul.f32 %v438, 1.442695
    %v448 = vpow.pop %v447
    %v449 = vmul.f32 %v439, 1.442695
    %v450 = vpow.pop %v449
    %v451 = vmul.f32 %v440, 1.442695
    %v452 = vpow.pop %v451
    %v453 = vmul.f32 %v441, 1.442695
    %v454 = vpow.pop %v453
    %v455 = vmul.f32 %v442, 1.442695
    %v456 = vpow.pop %v455
    %v457 = vmul.f32 %v443, 1.442695
    %v458 = vpow.pop %v457
    %v459 = vmul.f32 %v444, 1.442695
    %v460 = vpow.pop %v459
    %v461 = vsel %vm209, %v446, 0.0
    %462 = vadd.xlane.f32.xlu0 %v461
    %v463 = vpop.xlane.xlu0 %462
    %v464 = vsel %vm209, %v448, 0.0
    %465 = vadd.xlane.f32.xlu0 %v464
    %v466 = vpop.xlane.xlu0 %465
    %v467 = vsel %vm209, %v450, 0.0
    %468 = vadd.xlane.f32.xlu0 %v467
    %v469 = vpop.xlane.xlu0 %468
    %v470 = vsel %vm209, %v452, 0.0
    %471 = vadd.xlane.f32.xlu0 %v470
    %v472 = vpop.xlane.xlu0 %471
    %v473 = vsel %vm209, %v454, 0.0
    %474 = vadd.xlane.f32.xlu0 %v473
    %v475 = vpop.xlane.xlu0 %474
    %v476 = vsel %vm209, %v456, 0.0
    %477 = vadd.xlane.f32.xlu0 %v476
    %v478 = vpop.xlane.xlu0 %477
    %v479 = vsel %vm209, %v458, 0.0
    %480 = vadd.xlane.f32.xlu0 %v479
    %v481 = vpop.xlane.xlu0 %480
    %v482 = vsel %vm209, %v460, 0.0
    %483 = vadd.xlane.f32.xlu0 %v482
    %v484 = vpop.xlane.xlu0 %483
    %v485 = vrcp.pop %v463
    %v486 = vrcp.pop %v466
    %v487 = vrcp.pop %v469
    %v488 = vrcp.pop %v472
    %v489 = vrcp.pop %v475
    %v490 = vrcp.pop %v478
    %v491 = vrcp.pop %v481
    %v492 = vrcp.pop %v484
    %v493 = vmul.f32 %v446, %v485
    %v494 = vmul.f32 %v448, %v486
    %v495 = vmul.f32 %v450, %v487
    %v496 = vmul.f32 %v452, %v488
    %v497 = vmul.f32 %v454, %v489
    %v498 = vmul.f32 %v456, %v490
    %v499 = vmul.f32 %v458, %v491
    %v500 = vmul.f32 %v460, %v492
    %v501 = vpack.c.bf16 %v493, %v493
    %v502 = vpack.c.bf16 %v494, %v494
    %v503 = vpack.c.bf16 %v495, %v495
    %v504 = vpack.c.bf16 %v496, %v496
    %v505 = vpack.c.bf16 %v497, %v497
    %v506 = vpack.c.bf16 %v498, %v498
    %v507 = vpack.c.bf16 %v499, %v499
    %v508 = vpack.c.bf16 %v500, %v500
    %509 = vrot.lane.b32.xlu0 %v206, 64
    %v510 = vpop.permute.xlu0 %509
    %v512 = vsel %vm209, %v501, 0
    %vm514 = vcmask 1043456
    %v516 = vsel %vm514, %v510, 0
    %518 = vmatpush.bf16.msra.mxu0 0
    %519 = vmatpush.bf16.msra.mxu0 0
    %520 = vmatpush.bf16.msra.mxu0 0
    %521 = vmatpush.bf16.msra.mxu0 0
    %522 = vmatpush.bf16.msra.mxu0 0
    %523 = vmatpush.bf16.msra.mxu0 0
    %524 = vmatpush.bf16.msra.mxu0 0
    %525 = vmatpush.bf16.msra.mxu0 %v516
    %526 = vmatmul.bf16.gmra.mxu0 %v512
    %v527 = vpop.f32.mrf.mxu0
    %v528 = vadd.f32 0.0, %v527
    %v529 = vpop.f32.mrf.mxu0
    %530 = vdwg.mxu0
    %531 = vrot.lane.b32.xlu0 %v231, 64
    %v532 = vpop.permute.xlu0 %531
    %v534 = vsel %vm209, %v502, 0
    %v537 = vsel %vm514, %v532, 0
    %539 = vmatpush.bf16.msra.mxu0 0
    %540 = vmatpush.bf16.msra.mxu0 0
    %541 = vmatpush.bf16.msra.mxu0 0
    %542 = vmatpush.bf16.msra.mxu0 0
    %543 = vmatpush.bf16.msra.mxu0 0
    %544 = vmatpush.bf16.msra.mxu0 0
    %545 = vmatpush.bf16.msra.mxu0 0
    %546 = vmatpush.bf16.msra.mxu0 %v537
    %547 = vmatmul.bf16.gmra.mxu0 %v534
    %v548 = vpop.f32.mrf.mxu0
    %v549 = vadd.f32 0.0, %v548
    %v550 = vpop.f32.mrf.mxu0
    %551 = vdwg.mxu0
    %552 = vrot.lane.b32.xlu0 %v255, 64
    %v553 = vpop.permute.xlu0 %552
    %v555 = vsel %vm209, %v503, 0
    %v558 = vsel %vm514, %v553, 0
    %560 = vmatpush.bf16.msra.mxu0 0
    %561 = vmatpush.bf16.msra.mxu0 0
    %562 = vmatpush.bf16.msra.mxu0 0
    %563 = vmatpush.bf16.msra.mxu0 0
    %564 = vmatpush.bf16.msra.mxu0 0
    %565 = vmatpush.bf16.msra.mxu0 0
    %566 = vmatpush.bf16.msra.mxu0 0
    %567 = vmatpush.bf16.msra.mxu0 %v558
    %568 = vmatmul.bf16.gmra.mxu0 %v555
    %v569 = vpop.f32.mrf.mxu0
    %v570 = vadd.f32 0.0, %v569
    %v571 = vpop.f32.mrf.mxu0
    %572 = vdwg.mxu0
    %573 = vrot.lane.b32.xlu0 %v279, 64
    %v574 = vpop.permute.xlu0 %573
    %v576 = vsel %vm209, %v504, 0
    %v579 = vsel %vm514, %v574, 0
    %581 = vmatpush.bf16.msra.mxu0 0
    %582 = vmatpush.bf16.msra.mxu0 0
    %583 = vmatpush.bf16.msra.mxu0 0
    %584 = vmatpush.bf16.msra.mxu0 0
    %585 = vmatpush.bf16.msra.mxu0 0
    %586 = vmatpush.bf16.msra.mxu0 0
    %587 = vmatpush.bf16.msra.mxu0 0
    %588 = vmatpush.bf16.msra.mxu0 %v579
    %589 = vmatmul.bf16.gmra.mxu0 %v576
    %v590 = vpop.f32.mrf.mxu0
    %v591 = vadd.f32 0.0, %v590
    %v592 = vpop.f32.mrf.mxu0
    %593 = vdwg.mxu0
    %594 = vrot.lane.b32.xlu0 %v303, 64
    %v595 = vpop.permute.xlu0 %594
    %v597 = vsel %vm209, %v505, 0
    %v600 = vsel %vm514, %v595, 0
    %602 = vmatpush.bf16.msra.mxu0 0
    %603 = vmatpush.bf16.msra.mxu0 0
    %604 = vmatpush.bf16.msra.mxu0 0
    %605 = vmatpush.bf16.msra.mxu0 0
    %606 = vmatpush.bf16.msra.mxu0 0
    %607 = vmatpush.bf16.msra.mxu0 0
    %608 = vmatpush.bf16.msra.mxu0 0
    %609 = vmatpush.bf16.msra.mxu0 %v600
    %610 = vmatmul.bf16.gmra.mxu0 %v597
    %v611 = vpop.f32.mrf.mxu0
    %v612 = vadd.f32 0.0, %v611
    %v613 = vpop.f32.mrf.mxu0
    %614 = vdwg.mxu0
    %615 = vrot.lane.b32.xlu0 %v327, 64
    %v616 = vpop.permute.xlu0 %615
    %v618 = vsel %vm209, %v506, 0
    %v621 = vsel %vm514, %v616, 0
    %623 = vmatpush.bf16.msra.mxu0 0
    %624 = vmatpush.bf16.msra.mxu0 0
    %625 = vmatpush.bf16.msra.mxu0 0
    %626 = vmatpush.bf16.msra.mxu0 0
    %627 = vmatpush.bf16.msra.mxu0 0
    %628 = vmatpush.bf16.msra.mxu0 0
    %629 = vmatpush.bf16.msra.mxu0 0
    %630 = vmatpush.bf16.msra.mxu0 %v621
    %631 = vmatmul.bf16.gmra.mxu0 %v618
    %v632 = vpop.f32.mrf.mxu0
    %v633 = vadd.f32 0.0, %v632
    %v634 = vpop.f32.mrf.mxu0
    %635 = vdwg.mxu0
    %636 = vrot.lane.b32.xlu0 %v351, 64
    %v637 = vpop.permute.xlu0 %636
    %v639 = vsel %vm209, %v507, 0
    %v642 = vsel %vm514, %v637, 0
    %644 = vmatpush.bf16.msra.mxu0 0
    %645 = vmatpush.bf16.msra.mxu0 0
    %646 = vmatpush.bf16.msra.mxu0 0
    %647 = vmatpush.bf16.msra.mxu0 0
    %648 = vmatpush.bf16.msra.mxu0 0
    %649 = vmatpush.bf16.msra.mxu0 0
    %650 = vmatpush.bf16.msra.mxu0 0
    %651 = vmatpush.bf16.msra.mxu0 %v642
    %652 = vmatmul.bf16.gmra.mxu0 %v639
    %v653 = vpop.f32.mrf.mxu0
    %v654 = vadd.f32 0.0, %v653
    %v655 = vpop.f32.mrf.mxu0
    %656 = vdwg.mxu0
    %657 = vrot.lane.b32.xlu0 %v375, 64
    %v658 = vpop.permute.xlu0 %657
    %v660 = vsel %vm209, %v508, 0
    %v663 = vsel %vm514, %v658, 0
    %665 = vmatpush.bf16.msra.mxu0 0
    %666 = vmatpush.bf16.msra.mxu0 0
    %667 = vmatpush.bf16.msra.mxu0 0
    %668 = vmatpush.bf16.msra.mxu0 0
    %669 = vmatpush.bf16.msra.mxu0 0
    %670 = vmatpush.bf16.msra.mxu0 0
    %671 = vmatpush.bf16.msra.mxu0 0
    %672 = vmatpush.bf16.msra.mxu0 %v663
    %673 = vmatmul.bf16.gmra.mxu0 %v660
    %v674 = vpop.f32.mrf.mxu0
    %v675 = vadd.f32 0.0, %v674
    %v676 = vpop.f32.mrf.mxu0
    %677 = vdwg.mxu0
    %v678 = vpack.c.bf16 %v549, %v528
    %v679 = vpack.c.bf16 %v591, %v570
    %v681 = vsel %vm209, %v679, 0
    %v684 = vsel %vm514, %v56, 0
    %686 = vmatpush.bf16.msra.mxu0 0
    %687 = vmatpush.bf16.msra.mxu0 0
    %688 = vmatpush.bf16.msra.mxu0 0
    %689 = vmatpush.bf16.msra.mxu0 0
    %690 = vmatpush.bf16.msra.mxu0 0
    %691 = vmatpush.bf16.msra.mxu0 0
    %692 = vmatpush.bf16.msra.mxu0 0
    %693 = vmatpush.bf16.msra.mxu0 %v684
    %694 = vmatmul.bf16.gmra.mxu0 %v681
    %v695 = vpop.f32.mrf.mxu0
    %v696 = vadd.f32 0.0, %v695
    %v697 = vpop.f32.mrf.mxu0
    %v698 = vadd.f32 0.0, %v697
    %699 = vdwg.mxu0
    %v701 = vsel %vm209, %v678, 0
    %v704 = vsel %vm514, %v55, 0
    %706 = vmatpush.bf16.msra.mxu0 0
    %707 = vmatpush.bf16.msra.mxu0 0
    %708 = vmatpush.bf16.msra.mxu0 0
    %709 = vmatpush.bf16.msra.mxu0 0
    %710 = vmatpush.bf16.msra.mxu0 0
    %711 = vmatpush.bf16.msra.mxu0 0
    %712 = vmatpush.bf16.msra.mxu0 0
    %713 = vmatpush.bf16.msra.mxu0 %v704
    %714 = vmatmul.bf16.gmra.mxu0 %v701
    %v715 = vpop.f32.mrf.mxu0
    %v716 = vadd.f32 %v696, %v715
    %v717 = vpop.f32.mrf.mxu0
    %v718 = vadd.f32 %v698, %v717
    %719 = vdwg.mxu0
    %v720 = vpack.c.bf16 %v633, %v612
    %v722 = vsel %vm209, %v720, 0
    %v725 = vsel %vm514, %v57, 0
    %727 = vmatpush.bf16.msra.mxu0 0
    %728 = vmatpush.bf16.msra.mxu0 0
    %729 = vmatpush.bf16.msra.mxu0 0
    %730 = vmatpush.bf16.msra.mxu0 0
    %731 = vmatpush.bf16.msra.mxu0 0
    %732 = vmatpush.bf16.msra.mxu0 0
    %733 = vmatpush.bf16.msra.mxu0 0
    %734 = vmatpush.bf16.msra.mxu0 %v725
    %735 = vmatmul.bf16.gmra.mxu0 %v722
    %v736 = vpop.f32.mrf.mxu0
    %v737 = vadd.f32 0.0, %v736
    %v738 = vpop.f32.mrf.mxu0
    %v739 = vadd.f32 0.0, %v738
    %740 = vdwg.mxu0
    %v741 = vadd.f32 %v716, %v737
    %v742 = vadd.f32 %v718, %v739
    %v743 = vpack.c.bf16 %v675, %v654
    %v745 = vsel %vm209, %v743, 0
    %v748 = vsel %vm514, %v58, 0
    %750 = vmatpush.bf16.msra.mxu0 0
    %751 = vmatpush.bf16.msra.mxu0 0
    %752 = vmatpush.bf16.msra.mxu0 0
    %753 = vmatpush.bf16.msra.mxu0 0
    %754 = vmatpush.bf16.msra.mxu0 0
    %755 = vmatpush.bf16.msra.mxu0 0
    %756 = vmatpush.bf16.msra.mxu0 0
    %757 = vmatpush.bf16.msra.mxu0 %v748
    %758 = vmatmul.bf16.gmra.mxu0 %v745
    %v759 = vpop.f32.mrf.mxu0
    %v760 = vadd.f32 0.0, %v759
    %v761 = vpop.f32.mrf.mxu0
    %v762 = vadd.f32 0.0, %v761
    %763 = vdwg.mxu0
    %v764 = vadd.f32 %v741, %v760
    %v765 = vadd.f32 %v742, %v762
    %v766 = vadd.f32 %v41, %v764
    %v767 = vadd.f32 %v42, %v765
    %v768 = vperm.slane %v84, 0
    %v769 = vadd.f32 %v766, %v768
    %v770 = vadd.f32 %v767, %v768
    %v771 = vsel %vm87, %v769, 0.0
    %772 = vadd.xlane.f32.xlu0 %v771
    %v773 = vpop.xlane.xlu0 %772
    %v774 = vsel %vm87, %v770, 0.0
    %775 = vadd.xlane.f32.xlu0 %v774
    %v776 = vpop.xlane.xlu0 %775
    %v777 = vmul.f32 %v773, %v100
    %v778 = vmul.f32 %v776, %v100
    %v779 = vsub.f32 %v769, %v777
    %v780 = vsub.f32 %v770, %v778
    %v781 = vmul.f32 %v779, %v779
    %v782 = vmul.f32 %v780, %v780
    %v783 = vsel %vm87, %v781, 0.0
    %784 = vadd.xlane.f32.xlu0 %v783
    %v785 = vpop.xlane.xlu0 %784
    %v786 = vsel %vm87, %v782, 0.0
    %787 = vadd.xlane.f32.xlu0 %v786
    %v788 = vpop.xlane.xlu0 %787
    %v789 = vmul.f32 %v785, %v100
    %v790 = vmul.f32 %v788, %v100
    %v791 = vadd.f32 %v789, 1e-05
    %v792 = vadd.f32 %v790, 1e-05
    %v793 = vrsqrt.pop %v791
    %v794 = vmul.f32 %v793, %v791
    %v795 = vmul.f32 %v794, %v793
    %v796 = vmul.f32 0.5, %v795
    %v797 = vsub.f32 1.5, %v796
    %v798 = vmul.f32 %v793, %v797
    %vm799 = vweird.f32 %v791
    %vm800 = vweird.f32 %v793
    %vm801 = vmor %vm799, %vm800
    %v802 = vsel %vm801, %v793, %v798
    %v803 = vrsqrt.pop %v792
    %v804 = vmul.f32 %v803, %v792
    %v805 = vmul.f32 %v804, %v803
    %v806 = vmul.f32 0.5, %v805
    %v807 = vsub.f32 1.5, %v806
    %v808 = vmul.f32 %v803, %v807
    %vm809 = vweird.f32 %v792
    %vm810 = vweird.f32 %v803
    %vm811 = vmor %vm809, %vm810
    %v812 = vsel %vm811, %v803, %v808
    %v813 = vmul.f32 %v779, %v802
    %v814 = vmul.f32 %v780, %v812
    %v815 = vperm.slane %v81, 0
    %v816 = vmul.f32 %v813, %v815
    %v817 = vmul.f32 %v814, %v815
    %v818 = vperm.slane %v82, 0
    %v819 = vadd.f32 %v816, %v818
    %v820 = vadd.f32 %v817, %v818
    %v821 = vpack.c.bf16 %v820, %v819
    %v822 = vperm.slane %v85, 0
    %v827 = vunpack.c.l.b16 %v59
    %v828 = vunpack.c.l.b16 %v60
    %v829 = vunpack.c.l.b16 %v61
    %v830 = vunpack.c.l.b16 %v62
    %v831 = vpack.c.b16 %v828, %v827
    %v832 = vpack.c.b16 %v830, %v829
    %v836 = vsel %vm87, %v821, 0
    %838 = vmatpush.bf16.msra.mxu0 0
    %839 = vmatpush.bf16.msra.mxu0 0
    %840 = vmatpush.bf16.msra.mxu0 0
    %841 = vmatpush.bf16.msra.mxu0 0
    %842 = vmatpush.bf16.msra.mxu0 0
    %843 = vmatpush.bf16.msra.mxu0 0
    %844 = vmatpush.bf16.msra.mxu0 %v832
    %845 = vmatpush.bf16.msra.mxu0 %v831
    %846 = vmatmul.bf16.gmra.mxu0 %v836
    %v847 = vpop.f32.mrf.mxu0
    %v848 = vadd.f32 %v822, %v847
    %v849 = vpop.f32.mrf.mxu0
    %v850 = vadd.f32 %v822, %v849
    %851 = vdwg.mxu0
    %v852 = vmul.f32 %v848, 1.702
    %v853 = vmul.f32 %v850, 1.702
    %v854 = vxor.u32 %v852, 2147483648
    %v855 = vxor.u32 %v853, 2147483648
    %v856 = vmul.f32 %v854, 1.442695
    %v857 = vpow.pop %v856
    %v858 = vmul.f32 %v855, 1.442695
    %v859 = vpow.pop %v858
    %v860 = vadd.f32 %v857, 1.0
    %v861 = vadd.f32 %v859, 1.0
    %v862 = vrcp.pop %v860
    %v863 = vmul.f32 %v860, %v862
    %v864 = vsub.f32 1.0, %v863
    %v865 = vmul.f32 %v862, %v864
    %v866 = vadd.f32 %v862, %v865
    %vm867 = vweird.f32 %v860
    %vm868 = vweird.f32 %v862
    %vm869 = vmor %vm867, %vm868
    %v870 = vsel %vm869, %v862, %v866
    %v871 = vand.u32 2147483647, %v860
    %vm872 = vcmp.eq.f32.partialorder %v871, 8.507059e+37
    %v873 = vand.u32 %v860, 2147483648
    %v874 = vor.u32 1.1754944e-38, %v873
    %v875 = vsel %vm872, %v874, %v870
    %v876 = vmul.f32 1.0, %v875
    %v877 = vrcp.pop %v861
    %v878 = vmul.f32 %v861, %v877
    %v879 = vsub.f32 1.0, %v878
    %v880 = vmul.f32 %v877, %v879
    %v881 = vadd.f32 %v877, %v880
    %vm882 = vweird.f32 %v861
    %vm883 = vweird.f32 %v877
    %vm884 = vmor %vm882, %vm883
    %v885 = vsel %vm884, %v877, %v881
    %v886 = vand.u32 2147483647, %v861
    %vm887 = vcmp.eq.f32.partialorder %v886, 8.507059e+37
    %v888 = vand.u32 %v861, 2147483648
    %v889 = vor.u32 1.1754944e-38, %v888
    %v890 = vsel %vm887, %v889, %v885
    %v891 = vmul.f32 1.0, %v890
    %v892 = vmul.f32 %v848, %v876
    %v893 = vmul.f32 %v850, %v891
    %v894 = vpack.c.bf16 %v893, %v892
    %v895 = vperm.slane %v86, 0
    %v912 = vunpack.c.l.b16 %v63
    %v913 = vunpack.c.l.b16 %v64
    %v914 = vunpack.c.l.b16 %v65
    %v915 = vunpack.c.l.b16 %v66
    %v916 = vunpack.c.l.b16 %v67
    %v917 = vunpack.c.l.b16 %v68
    %v918 = vunpack.c.l.b16 %v69
    %v919 = vunpack.c.l.b16 %v70
    %v920 = vunpack.c.l.b16 %v71
    %v921 = vunpack.c.l.b16 %v72
    %v922 = vunpack.c.l.b16 %v73
    %v923 = vunpack.c.l.b16 %v74
    %v924 = vunpack.c.l.b16 %v75
    %v925 = vunpack.c.l.b16 %v76
    %v926 = vunpack.c.l.b16 %v77
    %v927 = vunpack.c.l.b16 %v78
    %v928 = vpack.c.b16 %v913, %v912
    %v929 = vpack.c.b16 %v915, %v914
    %v930 = vpack.c.b16 %v917, %v916
    %v931 = vpack.c.b16 %v919, %v918
    %v932 = vpack.c.b16 %v921, %v920
    %v933 = vpack.c.b16 %v923, %v922
    %v934 = vpack.c.b16 %v925, %v924
    %v935 = vpack.c.b16 %v927, %v926
    %944 = vmatpush.bf16.msra.mxu0 %v935
    %945 = vmatpush.bf16.msra.mxu0 %v934
    %946 = vmatpush.bf16.msra.mxu0 %v933
    %947 = vmatpush.bf16.msra.mxu0 %v932
    %948 = vmatpush.bf16.msra.mxu0 %v931
    %949 = vmatpush.bf16.msra.mxu0 %v930
    %950 = vmatpush.bf16.msra.mxu0 %v929
    %951 = vmatpush.bf16.msra.mxu0 %v928
    %952 = vmatmul.bf16.gmra.mxu0 %v894
    %v953 = vpop.f32.mrf.mxu0
    %v954 = vadd.f32 %v895, %v953
    %v955 = vpop.f32.mrf.mxu0
    %v956 = vadd.f32 %v895, %v955
    %957 = vdwg.mxu0
    %v958 = vadd.f32 %v769, %v954
    %v959 = vadd.f32 %v770, %v956
    %v960 = vld [vmem:[%s8 + $0x70] sm:$0xf]
    %v961 = vld [vmem:[%s8 + $0x74] sm:$0xf]
    %v962 = vld [vmem:[%s8 + $0x78] sm:$0xf]
    %v963 = vld [vmem:[%s8 + $0x7c] sm:$0xf]
    %v964 = vld [vmem:[%s8 + $0x80] sm:$0xf]
    %v965 = vld [vmem:[%s8 + $0x84] sm:$0xf]
    %v966 = vld [vmem:[%s8 + $0x88] sm:$0xf]
    %v967 = vld [vmem:[%s8 + $0x8c] sm:$0xf]
    %v968 = vld [vmem:[%s8 + $0x90] sm:$0xf]
    %v969 = vld [vmem:[%s8 + $0x94] sm:$0xf]
    %v970 = vld [vmem:[%s8 + $0x98] sm:$0xf]
    %v971 = vld [vmem:[%s8 + $0x9c] sm:$0xf]
    %v972 = vld [vmem:[%s8 + $0xa0] sm:$0xf]
    %v973 = vld [vmem:[%s8 + $0xa4] sm:$0xf]
    %v974 = vld [vmem:[%s8 + $0xa8] sm:$0xf]
    %v975 = vld [vmem:[%s8 + $0xac] sm:$0xf]
    %v976 = vld [vmem:[%s8 + $0xb0] sm:$0xf]
    %v977 = vld [vmem:[%s8 + $0xb4] sm:$0xf]
    %v978 = vld [vmem:[%s8 + $0xb8] sm:$0xf]
    %v979 = vld [vmem:[%s8 + $0xbc] sm:$0xf]
    %v980 = vld [vmem:[%s8 + $0xc0] sm:$0xf]
    %v981 = vld [vmem:[%s8 + $0xc4] sm:$0xf]
    %v982 = vld [vmem:[%s8 + $0xc8] sm:$0xf]
    %v983 = vld [vmem:[%s8 + $0xcc] sm:$0xf]
    %v984 = vld [vmem:[%s8 + $0xd0] sm:$0xf]
    %v985 = vld [vmem:[%s8 + $0xd4] sm:$0xf]
    %v986 = vld [vmem:[%s8 + $0xd8] sm:$0xf]
    %v987 = vld [vmem:[%s8 + $0xdc] sm:$0xf]
    %v988 = vld [vmem:[%s9 + $0x8] sm:$0x1]
    %v989 = vld [vmem:[%s9 + $0x9] sm:$0x1]
    %v990 = vld [vmem:[%s9 + $0xa] sm:$0x1]
    %v991 = vld [vmem:[%s9 + $0xb] sm:$0x1]
    %v992 = vld [vmem:[%s9 + $0xc] sm:$0x1]
    %v993 = vld [vmem:[%s9 + $0xd] sm:$0x1]
    %v994 = vld [vmem:[%s9 + $0xe] sm:$0x1]
    %v995 = vld [vmem:[%s9 + $0xf] sm:$0x1]
    %v996 = vsel %vm87, %v958, 0.0
    %997 = vadd.xlane.f32.xlu0 %v996
    %v998 = vpop.xlane.xlu0 %997
    %v999 = vsel %vm87, %v959, 0.0
    %1000 = vadd.xlane.f32.xlu0 %v999
    %v1001 = vpop.xlane.xlu0 %1000
    %v1002 = vmul.f32 %v998, %v100
    %v1003 = vmul.f32 %v1001, %v100
    %v1004 = vsub.f32 %v958, %v1002
    %v1005 = vsub.f32 %v959, %v1003
    %v1006 = vmul.f32 %v1004, %v1004
    %v1007 = vmul.f32 %v1005, %v1005
    %v1008 = vsel %vm87, %v1006, 0.0
    %1009 = vadd.xlane.f32.xlu0 %v1008
    %v1010 = vpop.xlane.xlu0 %1009
    %v1011 = vsel %vm87, %v1007, 0.0
    %1012 = vadd.xlane.f32.xlu0 %v1011
    %v1013 = vpop.xlane.xlu0 %1012
    %v1014 = vmul.f32 %v1010, %v100
    %v1015 = vmul.f32 %v1013, %v100
    %v1016 = vadd.f32 %v1014, 1e-05
    %v1017 = vadd.f32 %v1015, 1e-05
    %v1018 = vrsqrt.pop %v1016
    %v1019 = vmul.f32 %v1018, %v1016
    %v1020 = vmul.f32 %v1019, %v1018
    %v1021 = vmul.f32 0.5, %v1020
    %v1022 = vsub.f32 1.5, %v1021
    %v1023 = vmul.f32 %v1018, %v1022
    %vm1024 = vweird.f32 %v1016
    %vm1025 = vweird.f32 %v1018
    %vm1026 = vmor %vm1024, %vm1025
    %v1027 = vsel %vm1026, %v1018, %v1023
    %v1028 = vrsqrt.pop %v1017
    %v1029 = vmul.f32 %v1028, %v1017
    %v1030 = vmul.f32 %v1029, %v1028
    %v1031 = vmul.f32 0.5, %v1030
    %v1032 = vsub.f32 1.5, %v1031
    %v1033 = vmul.f32 %v1028, %v1032
    %vm1034 = vweird.f32 %v1017
    %vm1035 = vweird.f32 %v1028
    %vm1036 = vmor %vm1034, %vm1035
    %v1037 = vsel %vm1036, %v1028, %v1033
    %v1038 = vmul.f32 %v1004, %v1027
    %v1039 = vmul.f32 %v1005, %v1037
    %v1040 = vperm.slane %v988, 0
    %v1041 = vmul.f32 %v1038, %v1040
    %v1042 = vmul.f32 %v1039, %v1040
    %v1043 = vperm.slane %v989, 0
    %v1044 = vadd.f32 %v1041, %v1043
    %v1045 = vadd.f32 %v1042, %v1043
    %v1046 = vpack.c.bf16 %v1045, %v1044
    %v1047 = vperm.slane %v992, 0
    %v1052 = vunpack.c.l.b16 %v960
    %v1053 = vunpack.c.l.b16 %v961
    %v1054 = vunpack.c.l.b16 %v962
    %v1055 = vunpack.c.l.b16 %v963
    %v1056 = vpack.c.b16 %v1053, %v1052
    %v1057 = vpack.c.b16 %v1055, %v1054
    %v1061 = vsel %vm87, %v1046, 0
    %1063 = vmatpush.bf16.msra.mxu0 0
    %1064 = vmatpush.bf16.msra.mxu0 0
    %1065 = vmatpush.bf16.msra.mxu0 0
    %1066 = vmatpush.bf16.msra.mxu0 0
    %1067 = vmatpush.bf16.msra.mxu0 0
    %1068 = vmatpush.bf16.msra.mxu0 0
    %1069 = vmatpush.bf16.msra.mxu0 %v1057
    %1070 = vmatpush.bf16.msra.mxu0 %v1056
    %1071 = vmatmul.bf16.gmra.mxu0 %v1061
    %v1072 = vpop.f32.mrf.mxu0
    %v1073 = vadd.f32 %v1047, %v1072
    %v1074 = vpop.f32.mrf.mxu0
    %v1075 = vadd.f32 %v1047, %v1074
    %1076 = vdwg.mxu0
    %1079 = vrot.lane.b32.xlu0 %v1073, 120
    %v1080 = vpop.permute.xlu0 %1079
    %1081 = vrot.lane.b32.xlu0 %v1075, 120
    %v1082 = vpop.permute.xlu0 %1081
    %1085 = vrot.lane.b32.xlu0 %v1073, 112
    %v1086 = vpop.permute.xlu0 %1085
    %1087 = vrot.lane.b32.xlu0 %v1075, 112
    %v1088 = vpop.permute.xlu0 %1087
    %1091 = vrot.lane.b32.xlu0 %v1073, 104
    %v1092 = vpop.permute.xlu0 %1091
    %1093 = vrot.lane.b32.xlu0 %v1075, 104
    %v1094 = vpop.permute.xlu0 %1093
    %v1097 = vpack.c.bf16 %v1073, %v1073
    %v1098 = vpack.c.bf16 %v1075, %v1075
    %v1099 = vpack.c.bf16 %v1080, %v1080
    %v1100 = vpack.c.bf16 %v1082, %v1082
    %v1101 = vpack.c.bf16 %v1086, %v1086
    %v1102 = vpack.c.bf16 %v1088, %v1088
    %v1103 = vpack.c.bf16 %v1092, %v1092
    %v1104 = vpack.c.bf16 %v1094, %v1094
    %v1106 = vunpack.c.l.b16 %v1097
    %v1107 = vpack.c.b16 %v1106, %v1106
    %1108 = vrot.lane.b32.xlu0 %v1107, 96
    %v1109 = vpop.permute.xlu0 %1108
    %v1111 = vsel %vm209, %v1097, 0
    %v1114 = vsel %vm209, %v1109, 0
    %1116 = vmatpush.bf16.xpose.msra.mxu0 0
    %1117 = vmatpush.bf16.xpose.msra.mxu0 0
    %1118 = vmatpush.bf16.xpose.msra.mxu0 0
    %1119 = vmatpush.bf16.xpose.msra.mxu0 0
    %1120 = vmatpush.bf16.xpose.msra.mxu0 0
    %1121 = vmatpush.bf16.xpose.msra.mxu0 0
    %1122 = vmatpush.bf16.xpose.msra.mxu0 0
    %1123 = vmatpush.bf16.xpose.msra.mxu0 %v1114
    %1124 = vmatmul.bf16.gmra.mxu0 %v1111
    %v1125 = vpop.f32.mrf.mxu0
    %v1126 = vadd.f32 0.0, %v1125
    %v1127 = vpop.f32.mrf.mxu0
    %1128 = vdwg.mxu0
    %v1130 = vunpack.c.l.b16 %v1098
    %v1131 = vpack.c.b16 %v1130, %v1130
    %1132 = vrot.lane.b32.xlu0 %v1131, 96
    %v1133 = vpop.permute.xlu0 %1132
    %v1135 = vsel %vm209, %v1098, 0
    %v1138 = vsel %vm209, %v1133, 0
    %1140 = vmatpush.bf16.xpose.msra.mxu0 0
    %1141 = vmatpush.bf16.xpose.msra.mxu0 0
    %1142 = vmatpush.bf16.xpose.msra.mxu0 0
    %1143 = vmatpush.bf16.xpose.msra.mxu0 0
    %1144 = vmatpush.bf16.xpose.msra.mxu0 0
    %1145 = vmatpush.bf16.xpose.msra.mxu0 0
    %1146 = vmatpush.bf16.xpose.msra.mxu0 0
    %1147 = vmatpush.bf16.xpose.msra.mxu0 %v1138
    %1148 = vmatmul.bf16.gmra.mxu0 %v1135
    %v1149 = vpop.f32.mrf.mxu0
    %v1150 = vadd.f32 0.0, %v1149
    %v1151 = vpop.f32.mrf.mxu0
    %1152 = vdwg.mxu0
    %v1154 = vunpack.c.l.b16 %v1099
    %v1155 = vpack.c.b16 %v1154, %v1154
    %1156 = vrot.lane.b32.xlu0 %v1155, 96
    %v1157 = vpop.permute.xlu0 %1156
    %v1159 = vsel %vm209, %v1099, 0
    %v1162 = vsel %vm209, %v1157, 0
    %1164 = vmatpush.bf16.xpose.msra.mxu0 0
    %1165 = vmatpush.bf16.xpose.msra.mxu0 0
    %1166 = vmatpush.bf16.xpose.msra.mxu0 0
    %1167 = vmatpush.bf16.xpose.msra.mxu0 0
    %1168 = vmatpush.bf16.xpose.msra.mxu0 0
    %1169 = vmatpush.bf16.xpose.msra.mxu0 0
    %1170 = vmatpush.bf16.xpose.msra.mxu0 0
    %1171 = vmatpush.bf16.xpose.msra.mxu0 %v1162
    %1172 = vmatmul.bf16.gmra.mxu0 %v1159
    %v1173 = vpop.f32.mrf.mxu0
    %v1174 = vadd.f32 0.0, %v1173
    %v1175 = vpop.f32.mrf.mxu0
    %1176 = vdwg.mxu0
    %v1178 = vunpack.c.l.b16 %v1100
    %v1179 = vpack.c.b16 %v1178, %v1178
    %1180 = vrot.lane.b32.xlu0 %v1179, 96
    %v1181 = vpop.permute.xlu0 %1180
    %v1183 = vsel %vm209, %v1100, 0
    %v1186 = vsel %vm209, %v1181, 0
    %1188 = vmatpush.bf16.xpose.msra.mxu0 0
    %1189 = vmatpush.bf16.xpose.msra.mxu0 0
    %1190 = vmatpush.bf16.xpose.msra.mxu0 0
    %1191 = vmatpush.bf16.xpose.msra.mxu0 0
    %1192 = vmatpush.bf16.xpose.msra.mxu0 0
    %1193 = vmatpush.bf16.xpose.msra.mxu0 0
    %1194 = vmatpush.bf16.xpose.msra.mxu0 0
    %1195 = vmatpush.bf16.xpose.msra.mxu0 %v1186
    %1196 = vmatmul.bf16.gmra.mxu0 %v1183
    %v1197 = vpop.f32.mrf.mxu0
    %v1198 = vadd.f32 0.0, %v1197
    %v1199 = vpop.f32.mrf.mxu0
    %1200 = vdwg.mxu0
    %v1202 = vunpack.c.l.b16 %v1101
    %v1203 = vpack.c.b16 %v1202, %v1202
    %1204 = vrot.lane.b32.xlu0 %v1203, 96
    %v1205 = vpop.permute.xlu0 %1204
    %v1207 = vsel %vm209, %v1101, 0
    %v1210 = vsel %vm209, %v1205, 0
    %1212 = vmatpush.bf16.xpose.msra.mxu0 0
    %1213 = vmatpush.bf16.xpose.msra.mxu0 0
    %1214 = vmatpush.bf16.xpose.msra.mxu0 0
    %1215 = vmatpush.bf16.xpose.msra.mxu0 0
    %1216 = vmatpush.bf16.xpose.msra.mxu0 0
    %1217 = vmatpush.bf16.xpose.msra.mxu0 0
    %1218 = vmatpush.bf16.xpose.msra.mxu0 0
    %1219 = vmatpush.bf16.xpose.msra.mxu0 %v1210
    %1220 = vmatmul.bf16.gmra.mxu0 %v1207
    %v1221 = vpop.f32.mrf.mxu0
    %v1222 = vadd.f32 0.0, %v1221
    %v1223 = vpop.f32.mrf.mxu0
    %1224 = vdwg.mxu0
    %v1226 = vunpack.c.l.b16 %v1102
    %v1227 = vpack.c.b16 %v1226, %v1226
    %1228 = vrot.lane.b32.xlu0 %v1227, 96
    %v1229 = vpop.permute.xlu0 %1228
    %v1231 = vsel %vm209, %v1102, 0
    %v1234 = vsel %vm209, %v1229, 0
    %1236 = vmatpush.bf16.xpose.msra.mxu0 0
    %1237 = vmatpush.bf16.xpose.msra.mxu0 0
    %1238 = vmatpush.bf16.xpose.msra.mxu0 0
    %1239 = vmatpush.bf16.xpose.msra.mxu0 0
    %1240 = vmatpush.bf16.xpose.msra.mxu0 0
    %1241 = vmatpush.bf16.xpose.msra.mxu0 0
    %1242 = vmatpush.bf16.xpose.msra.mxu0 0
    %1243 = vmatpush.bf16.xpose.msra.mxu0 %v1234
    %1244 = vmatmul.bf16.gmra.mxu0 %v1231
    %v1245 = vpop.f32.mrf.mxu0
    %v1246 = vadd.f32 0.0, %v1245
    %v1247 = vpop.f32.mrf.mxu0
    %1248 = vdwg.mxu0
    %v1250 = vunpack.c.l.b16 %v1103
    %v1251 = vpack.c.b16 %v1250, %v1250
    %1252 = vrot.lane.b32.xlu0 %v1251, 96
    %v1253 = vpop.permute.xlu0 %1252
    %v1255 = vsel %vm209, %v1103, 0
    %v1258 = vsel %vm209, %v1253, 0
    %1260 = vmatpush.bf16.xpose.msra.mxu0 0
    %1261 = vmatpush.bf16.xpose.msra.mxu0 0
    %1262 = vmatpush.bf16.xpose.msra.mxu0 0
    %1263 = vmatpush.bf16.xpose.msra.mxu0 0
    %1264 = vmatpush.bf16.xpose.msra.mxu0 0
    %1265 = vmatpush.bf16.xpose.msra.mxu0 0
    %1266 = vmatpush.bf16.xpose.msra.mxu0 0
    %1267 = vmatpush.bf16.xpose.msra.mxu0 %v1258
    %1268 = vmatmul.bf16.gmra.mxu0 %v1255
    %v1269 = vpop.f32.mrf.mxu0
    %v1270 = vadd.f32 0.0, %v1269
    %v1271 = vpop.f32.mrf.mxu0
    %1272 = vdwg.mxu0
    %v1274 = vunpack.c.l.b16 %v1104
    %v1275 = vpack.c.b16 %v1274, %v1274
    %1276 = vrot.lane.b32.xlu0 %v1275, 96
    %v1277 = vpop.permute.xlu0 %1276
    %v1279 = vsel %vm209, %v1104, 0
    %v1282 = vsel %vm209, %v1277, 0
    %1284 = vmatpush.bf16.xpose.msra.mxu0 0
    %1285 = vmatpush.bf16.xpose.msra.mxu0 0
    %1286 = vmatpush.bf16.xpose.msra.mxu0 0
    %1287 = vmatpush.bf16.xpose.msra.mxu0 0
    %1288 = vmatpush.bf16.xpose.msra.mxu0 0
    %1289 = vmatpush.bf16.xpose.msra.mxu0 0
    %1290 = vmatpush.bf16.xpose.msra.mxu0 0
    %1291 = vmatpush.bf16.xpose.msra.mxu0 %v1282
    %1292 = vmatmul.bf16.gmra.mxu0 %v1279
    %v1293 = vpop.f32.mrf.mxu0
    %v1294 = vadd.f32 0.0, %v1293
    %v1295 = vpop.f32.mrf.mxu0
    %1296 = vdwg.mxu0
    %v1297 = vmul.f32 %v1126, 0.35355338
    %v1298 = vmul.f32 %v1150, 0.35355338
    %v1299 = vmul.f32 %v1174, 0.35355338
    %v1300 = vmul.f32 %v1198, 0.35355338
    %v1301 = vmul.f32 %v1222, 0.35355338
    %v1302 = vmul.f32 %v1246, 0.35355338
    %v1303 = vmul.f32 %v1270, 0.35355338
    %v1304 = vmul.f32 %v1294, 0.35355338
    %v1305 = vadd.f32 %v1297, %v43
    %v1306 = vadd.f32 %v1298, %v44
    %v1307 = vadd.f32 %v1299, %v45
    %v1308 = vadd.f32 %v1300, %v46
    %v1309 = vadd.f32 %v1301, %v47
    %v1310 = vadd.f32 %v1302, %v48
    %v1311 = vadd.f32 %v1303, %v49
    %v1312 = vadd.f32 %v1304, %v50
    %v1313 = vsel %vm209, %v1305, -inf
    %1314 = vmax.xlane.f32.xlu0 %v1313
    %v1315 = vpop.xlane.xlu0 %1314
    %v1316 = vsel %vm209, %v1306, -inf
    %1317 = vmax.xlane.f32.xlu0 %v1316
    %v1318 = vpop.xlane.xlu0 %1317
    %v1319 = vsel %vm209, %v1307, -inf
    %1320 = vmax.xlane.f32.xlu0 %v1319
    %v1321 = vpop.xlane.xlu0 %1320
    %v1322 = vsel %vm209, %v1308, -inf
    %1323 = vmax.xlane.f32.xlu0 %v1322
    %v1324 = vpop.xlane.xlu0 %1323
    %v1325 = vsel %vm209, %v1309, -inf
    %1326 = vmax.xlane.f32.xlu0 %v1325
    %v1327 = vpop.xlane.xlu0 %1326
    %v1328 = vsel %vm209, %v1310, -inf
    %1329 = vmax.xlane.f32.xlu0 %v1328
    %v1330 = vpop.xlane.xlu0 %1329
    %v1331 = vsel %vm209, %v1311, -inf
    %1332 = vmax.xlane.f32.xlu0 %v1331
    %v1333 = vpop.xlane.xlu0 %1332
    %v1334 = vsel %vm209, %v1312, -inf
    %1335 = vmax.xlane.f32.xlu0 %v1334
    %v1336 = vpop.xlane.xlu0 %1335
    %v1337 = vsub.f32 %v1305, %v1315
    %v1338 = vsub.f32 %v1306, %v1318
    %v1339 = vsub.f32 %v1307, %v1321
    %v1340 = vsub.f32 %v1308, %v1324
    %v1341 = vsub.f32 %v1309, %v1327
    %v1342 = vsub.f32 %v1310, %v1330
    %v1343 = vsub.f32 %v1311, %v1333
    %v1344 = vsub.f32 %v1312, %v1336
    %v1345 = vmul.f32 %v1337, 1.442695
    %v1346 = vpow.pop %v1345
    %v1347 = vmul.f32 %v1338, 1.442695
    %v1348 = vpow.pop %v1347
    %v1349 = vmul.f32 %v1339, 1.442695
    %v1350 = vpow.pop %v1349
    %v1351 = vmul.f32 %v1340, 1.442695
    %v1352 = vpow.pop %v1351
    %v1353 = vmul.f32 %v1341, 1.442695
    %v1354 = vpow.pop %v1353
    %v1355 = vmul.f32 %v1342, 1.442695
    %v1356 = vpow.pop %v1355
    %v1357 = vmul.f32 %v1343, 1.442695
    %v1358 = vpow.pop %v1357
    %v1359 = vmul.f32 %v1344, 1.442695
    %v1360 = vpow.pop %v1359
    %v1361 = vsel %vm209, %v1346, 0.0
    %1362 = vadd.xlane.f32.xlu0 %v1361
    %v1363 = vpop.xlane.xlu0 %1362
    %v1364 = vsel %vm209, %v1348, 0.0
    %1365 = vadd.xlane.f32.xlu0 %v1364
    %v1366 = vpop.xlane.xlu0 %1365
    %v1367 = vsel %vm209, %v1350, 0.0
    %1368 = vadd.xlane.f32.xlu0 %v1367
    %v1369 = vpop.xlane.xlu0 %1368
    %v1370 = vsel %vm209, %v1352, 0.0
    %1371 = vadd.xlane.f32.xlu0 %v1370
    %v1372 = vpop.xlane.xlu0 %1371
    %v1373 = vsel %vm209, %v1354, 0.0
    %1374 = vadd.xlane.f32.xlu0 %v1373
    %v1375 = vpop.xlane.xlu0 %1374
    %v1376 = vsel %vm209, %v1356, 0.0
    %1377 = vadd.xlane.f32.xlu0 %v1376
    %v1378 = vpop.xlane.xlu0 %1377
    %v1379 = vsel %vm209, %v1358, 0.0
    %1380 = vadd.xlane.f32.xlu0 %v1379
    %v1381 = vpop.xlane.xlu0 %1380
    %v1382 = vsel %vm209, %v1360, 0.0
    %1383 = vadd.xlane.f32.xlu0 %v1382
    %v1384 = vpop.xlane.xlu0 %1383
    %v1385 = vrcp.pop %v1363
    %v1386 = vrcp.pop %v1366
    %v1387 = vrcp.pop %v1369
    %v1388 = vrcp.pop %v1372
    %v1389 = vrcp.pop %v1375
    %v1390 = vrcp.pop %v1378
    %v1391 = vrcp.pop %v1381
    %v1392 = vrcp.pop %v1384
    %v1393 = vmul.f32 %v1346, %v1385
    %v1394 = vmul.f32 %v1348, %v1386
    %v1395 = vmul.f32 %v1350, %v1387
    %v1396 = vmul.f32 %v1352, %v1388
    %v1397 = vmul.f32 %v1354, %v1389
    %v1398 = vmul.f32 %v1356, %v1390
    %v1399 = vmul.f32 %v1358, %v1391
    %v1400 = vmul.f32 %v1360, %v1392
    %v1401 = vpack.c.bf16 %v1393, %v1393
    %v1402 = vpack.c.bf16 %v1394, %v1394
    %v1403 = vpack.c.bf16 %v1395, %v1395
    %v1404 = vpack.c.bf16 %v1396, %v1396
    %v1405 = vpack.c.bf16 %v1397, %v1397
    %v1406 = vpack.c.bf16 %v1398, %v1398
    %v1407 = vpack.c.bf16 %v1399, %v1399
    %v1408 = vpack.c.bf16 %v1400, %v1400
    %1409 = vrot.lane.b32.xlu0 %v1107, 64
    %v1410 = vpop.permute.xlu0 %1409
    %v1412 = vsel %vm209, %v1401, 0
    %v1415 = vsel %vm514, %v1410, 0
    %1417 = vmatpush.bf16.msra.mxu0 0
    %1418 = vmatpush.bf16.msra.mxu0 0
    %1419 = vmatpush.bf16.msra.mxu0 0
    %1420 = vmatpush.bf16.msra.mxu0 0
    %1421 = vmatpush.bf16.msra.mxu0 0
    %1422 = vmatpush.bf16.msra.mxu0 0
    %1423 = vmatpush.bf16.msra.mxu0 0
    %1424 = vmatpush.bf16.msra.mxu0 %v1415
    %1425 = vmatmul.bf16.gmra.mxu0 %v1412
    %v1426 = vpop.f32.mrf.mxu0
    %v1427 = vadd.f32 0.0, %v1426
    %v1428 = vpop.f32.mrf.mxu0
    %1429 = vdwg.mxu0
    %1430 = vrot.lane.b32.xlu0 %v1131, 64
    %v1431 = vpop.permute.xlu0 %1430
    %v1433 = vsel %vm209, %v1402, 0
    %v1436 = vsel %vm514, %v1431, 0
    %1438 = vmatpush.bf16.msra.mxu0 0
    %1439 = vmatpush.bf16.msra.mxu0 0
    %1440 = vmatpush.bf16.msra.mxu0 0
    %1441 = vmatpush.bf16.msra.mxu0 0
    %1442 = vmatpush.bf16.msra.mxu0 0
    %1443 = vmatpush.bf16.msra.mxu0 0
    %1444 = vmatpush.bf16.msra.mxu0 0
    %1445 = vmatpush.bf16.msra.mxu0 %v1436
    %1446 = vmatmul.bf16.gmra.mxu0 %v1433
    %v1447 = vpop.f32.mrf.mxu0
    %v1448 = vadd.f32 0.0, %v1447
    %v1449 = vpop.f32.mrf.mxu0
    %1450 = vdwg.mxu0
    %1451 = vrot.lane.b32.xlu0 %v1155, 64
    %v1452 = vpop.permute.xlu0 %1451
    %v1454 = vsel %vm209, %v1403, 0
    %v1457 = vsel %vm514, %v1452, 0
    %1459 = vmatpush.bf16.msra.mxu0 0
    %1460 = vmatpush.bf16.msra.mxu0 0
    %1461 = vmatpush.bf16.msra.mxu0 0
    %1462 = vmatpush.bf16.msra.mxu0 0
    %1463 = vmatpush.bf16.msra.mxu0 0
    %1464 = vmatpush.bf16.msra.mxu0 0
    %1465 = vmatpush.bf16.msra.mxu0 0
    %1466 = vmatpush.bf16.msra.mxu0 %v1457
    %1467 = vmatmul.bf16.gmra.mxu0 %v1454
    %v1468 = vpop.f32.mrf.mxu0
    %v1469 = vadd.f32 0.0, %v1468
    %v1470 = vpop.f32.mrf.mxu0
    %1471 = vdwg.mxu0
    %1472 = vrot.lane.b32.xlu0 %v1179, 64
    %v1473 = vpop.permute.xlu0 %1472
    %v1475 = vsel %vm209, %v1404, 0
    %v1478 = vsel %vm514, %v1473, 0
    %1480 = vmatpush.bf16.msra.mxu0 0
    %1481 = vmatpush.bf16.msra.mxu0 0
    %1482 = vmatpush.bf16.msra.mxu0 0
    %1483 = vmatpush.bf16.msra.mxu0 0
    %1484 = vmatpush.bf16.msra.mxu0 0
    %1485 = vmatpush.bf16.msra.mxu0 0
    %1486 = vmatpush.bf16.msra.mxu0 0
    %1487 = vmatpush.bf16.msra.mxu0 %v1478
    %1488 = vmatmul.bf16.gmra.mxu0 %v1475
    %v1489 = vpop.f32.mrf.mxu0
    %v1490 = vadd.f32 0.0, %v1489
    %v1491 = vpop.f32.mrf.mxu0
    %1492 = vdwg.mxu0
    %1493 = vrot.lane.b32.xlu0 %v1203, 64
    %v1494 = vpop.permute.xlu0 %1493
    %v1496 = vsel %vm209, %v1405, 0
    %v1499 = vsel %vm514, %v1494, 0
    %1501 = vmatpush.bf16.msra.mxu0 0
    %1502 = vmatpush.bf16.msra.mxu0 0
    %1503 = vmatpush.bf16.msra.mxu0 0
    %1504 = vmatpush.bf16.msra.mxu0 0
    %1505 = vmatpush.bf16.msra.mxu0 0
    %1506 = vmatpush.bf16.msra.mxu0 0
    %1507 = vmatpush.bf16.msra.mxu0 0
    %1508 = vmatpush.bf16.msra.mxu0 %v1499
    %1509 = vmatmul.bf16.gmra.mxu0 %v1496
    %v1510 = vpop.f32.mrf.mxu0
    %v1511 = vadd.f32 0.0, %v1510
    %v1512 = vpop.f32.mrf.mxu0
    %1513 = vdwg.mxu0
    %1514 = vrot.lane.b32.xlu0 %v1227, 64
    %v1515 = vpop.permute.xlu0 %1514
    %v1517 = vsel %vm209, %v1406, 0
    %v1520 = vsel %vm514, %v1515, 0
    %1522 = vmatpush.bf16.msra.mxu0 0
    %1523 = vmatpush.bf16.msra.mxu0 0
    %1524 = vmatpush.bf16.msra.mxu0 0
    %1525 = vmatpush.bf16.msra.mxu0 0
    %1526 = vmatpush.bf16.msra.mxu0 0
    %1527 = vmatpush.bf16.msra.mxu0 0
    %1528 = vmatpush.bf16.msra.mxu0 0
    %1529 = vmatpush.bf16.msra.mxu0 %v1520
    %1530 = vmatmul.bf16.gmra.mxu0 %v1517
    %v1531 = vpop.f32.mrf.mxu0
    %v1532 = vadd.f32 0.0, %v1531
    %v1533 = vpop.f32.mrf.mxu0
    %1534 = vdwg.mxu0
    %1535 = vrot.lane.b32.xlu0 %v1251, 64
    %v1536 = vpop.permute.xlu0 %1535
    %v1538 = vsel %vm209, %v1407, 0
    %v1541 = vsel %vm514, %v1536, 0
    %1543 = vmatpush.bf16.msra.mxu0 0
    %1544 = vmatpush.bf16.msra.mxu0 0
    %1545 = vmatpush.bf16.msra.mxu0 0
    %1546 = vmatpush.bf16.msra.mxu0 0
    %1547 = vmatpush.bf16.msra.mxu0 0
    %1548 = vmatpush.bf16.msra.mxu0 0
    %1549 = vmatpush.bf16.msra.mxu0 0
    %1550 = vmatpush.bf16.msra.mxu0 %v1541
    %1551 = vmatmul.bf16.gmra.mxu0 %v1538
    %v1552 = vpop.f32.mrf.mxu0
    %v1553 = vadd.f32 0.0, %v1552
    %v1554 = vpop.f32.mrf.mxu0
    %1555 = vdwg.mxu0
    %1556 = vrot.lane.b32.xlu0 %v1275, 64
    %v1557 = vpop.permute.xlu0 %1556
    %v1559 = vsel %vm209, %v1408, 0
    %v1562 = vsel %vm514, %v1557, 0
    %1564 = vmatpush.bf16.msra.mxu0 0
    %1565 = vmatpush.bf16.msra.mxu0 0
    %1566 = vmatpush.bf16.msra.mxu0 0
    %1567 = vmatpush.bf16.msra.mxu0 0
    %1568 = vmatpush.bf16.msra.mxu0 0
    %1569 = vmatpush.bf16.msra.mxu0 0
    %1570 = vmatpush.bf16.msra.mxu0 0
    %1571 = vmatpush.bf16.msra.mxu0 %v1562
    %1572 = vmatmul.bf16.gmra.mxu0 %v1559
    %v1573 = vpop.f32.mrf.mxu0
    %v1574 = vadd.f32 0.0, %v1573
    %v1575 = vpop.f32.mrf.mxu0
    %1576 = vdwg.mxu0
    %v1577 = vpack.c.bf16 %v1448, %v1427
    %v1578 = vpack.c.bf16 %v1490, %v1469
    %v1580 = vsel %vm209, %v1578, 0
    %v1583 = vsel %vm514, %v965, 0
    %1585 = vmatpush.bf16.msra.mxu0 0
    %1586 = vmatpush.bf16.msra.mxu0 0
    %1587 = vmatpush.bf16.msra.mxu0 0
    %1588 = vmatpush.bf16.msra.mxu0 0
    %1589 = vmatpush.bf16.msra.mxu0 0
    %1590 = vmatpush.bf16.msra.mxu0 0
    %1591 = vmatpush.bf16.msra.mxu0 0
    %1592 = vmatpush.bf16.msra.mxu0 %v1583
    %1593 = vmatmul.bf16.gmra.mxu0 %v1580
    %v1594 = vpop.f32.mrf.mxu0
    %v1595 = vadd.f32 0.0, %v1594
    %v1596 = vpop.f32.mrf.mxu0
    %v1597 = vadd.f32 0.0, %v1596
    %1598 = vdwg.mxu0
    %v1600 = vsel %vm209, %v1577, 0
    %v1603 = vsel %vm514, %v964, 0
    %1605 = vmatpush.bf16.msra.mxu0 0
    %1606 = vmatpush.bf16.msra.mxu0 0
    %1607 = vmatpush.bf16.msra.mxu0 0
    %1608 = vmatpush.bf16.msra.mxu0 0
    %1609 = vmatpush.bf16.msra.mxu0 0
    %1610 = vmatpush.bf16.msra.mxu0 0
    %1611 = vmatpush.bf16.msra.mxu0 0
    %1612 = vmatpush.bf16.msra.mxu0 %v1603
    %1613 = vmatmul.bf16.gmra.mxu0 %v1600
    %v1614 = vpop.f32.mrf.mxu0
    %v1615 = vadd.f32 %v1595, %v1614
    %v1616 = vpop.f32.mrf.mxu0
    %v1617 = vadd.f32 %v1597, %v1616
    %1618 = vdwg.mxu0
    %v1619 = vpack.c.bf16 %v1532, %v1511
    %v1621 = vsel %vm209, %v1619, 0
    %v1624 = vsel %vm514, %v966, 0
    %1626 = vmatpush.bf16.msra.mxu0 0
    %1627 = vmatpush.bf16.msra.mxu0 0
    %1628 = vmatpush.bf16.msra.mxu0 0
    %1629 = vmatpush.bf16.msra.mxu0 0
    %1630 = vmatpush.bf16.msra.mxu0 0
    %1631 = vmatpush.bf16.msra.mxu0 0
    %1632 = vmatpush.bf16.msra.mxu0 0
    %1633 = vmatpush.bf16.msra.mxu0 %v1624
    %1634 = vmatmul.bf16.gmra.mxu0 %v1621
    %v1635 = vpop.f32.mrf.mxu0
    %v1636 = vadd.f32 0.0, %v1635
    %v1637 = vpop.f32.mrf.mxu0
    %v1638 = vadd.f32 0.0, %v1637
    %1639 = vdwg.mxu0
    %v1640 = vadd.f32 %v1615, %v1636
    %v1641 = vadd.f32 %v1617, %v1638
    %v1642 = vpack.c.bf16 %v1574, %v1553
    %v1644 = vsel %vm209, %v1642, 0
    %v1647 = vsel %vm514, %v967, 0
    %1649 = vmatpush.bf16.msra.mxu0 0
    %1650 = vmatpush.bf16.msra.mxu0 0
    %1651 = vmatpush.bf16.msra.mxu0 0
    %1652 = vmatpush.bf16.msra.mxu0 0
    %1653 = vmatpush.bf16.msra.mxu0 0
    %1654 = vmatpush.bf16.msra.mxu0 0
    %1655 = vmatpush.bf16.msra.mxu0 0
    %1656 = vmatpush.bf16.msra.mxu0 %v1647
    %1657 = vmatmul.bf16.gmra.mxu0 %v1644
    %v1658 = vpop.f32.mrf.mxu0
    %v1659 = vadd.f32 0.0, %v1658
    %v1660 = vpop.f32.mrf.mxu0
    %v1661 = vadd.f32 0.0, %v1660
    %1662 = vdwg.mxu0
    %v1663 = vadd.f32 %v1640, %v1659
    %v1664 = vadd.f32 %v1641, %v1661
    %v1665 = vadd.f32 %v958, %v1663
    %v1666 = vadd.f32 %v959, %v1664
    %v1667 = vperm.slane %v993, 0
    %v1668 = vadd.f32 %v1665, %v1667
    %v1669 = vadd.f32 %v1666, %v1667
    %v1670 = vsel %vm87, %v1668, 0.0
    %1671 = vadd.xlane.f32.xlu0 %v1670
    %v1672 = vpop.xlane.xlu0 %1671
    %v1673 = vsel %vm87, %v1669, 0.0
    %1674 = vadd.xlane.f32.xlu0 %v1673
    %v1675 = vpop.xlane.xlu0 %1674
    %v1676 = vmul.f32 %v1672, %v100
    %v1677 = vmul.f32 %v1675, %v100
    %v1678 = vsub.f32 %v1668, %v1676
    %v1679 = vsub.f32 %v1669, %v1677
    %v1680 = vmul.f32 %v1678, %v1678
    %v1681 = vmul.f32 %v1679, %v1679
    %v1682 = vsel %vm87, %v1680, 0.0
    %1683 = vadd.xlane.f32.xlu0 %v1682
    %v1684 = vpop.xlane.xlu0 %1683
    %v1685 = vsel %vm87, %v1681, 0.0
    %1686 = vadd.xlane.f32.xlu0 %v1685
    %v1687 = vpop.xlane.xlu0 %1686
    %v1688 = vmul.f32 %v1684, %v100
    %v1689 = vmul.f32 %v1687, %v100
    %v1690 = vadd.f32 %v1688, 1e-05
    %v1691 = vadd.f32 %v1689, 1e-05
    %v1692 = vrsqrt.pop %v1690
    %v1693 = vmul.f32 %v1692, %v1690
    %v1694 = vmul.f32 %v1693, %v1692
    %v1695 = vmul.f32 0.5, %v1694
    %v1696 = vsub.f32 1.5, %v1695
    %v1697 = vmul.f32 %v1692, %v1696
    %vm1698 = vweird.f32 %v1690
    %vm1699 = vweird.f32 %v1692
    %vm1700 = vmor %vm1698, %vm1699
    %v1701 = vsel %vm1700, %v1692, %v1697
    %v1702 = vrsqrt.pop %v1691
    %v1703 = vmul.f32 %v1702, %v1691
    %v1704 = vmul.f32 %v1703, %v1702
    %v1705 = vmul.f32 0.5, %v1704
    %v1706 = vsub.f32 1.5, %v1705
    %v1707 = vmul.f32 %v1702, %v1706
    %vm1708 = vweird.f32 %v1691
    %vm1709 = vweird.f32 %v1702
    %vm1710 = vmor %vm1708, %vm1709
    %v1711 = vsel %vm1710, %v1702, %v1707
    %v1712 = vmul.f32 %v1678, %v1701
    %v1713 = vmul.f32 %v1679, %v1711
    %v1714 = vperm.slane %v990, 0
    %v1715 = vmul.f32 %v1712, %v1714
    %v1716 = vmul.f32 %v1713, %v1714
    %v1717 = vperm.slane %v991, 0
    %v1718 = vadd.f32 %v1715, %v1717
    %v1719 = vadd.f32 %v1716, %v1717
    %v1720 = vpack.c.bf16 %v1719, %v1718
    %v1721 = vperm.slane %v994, 0
    %v1726 = vunpack.c.l.b16 %v968
    %v1727 = vunpack.c.l.b16 %v969
    %v1728 = vunpack.c.l.b16 %v970
    %v1729 = vunpack.c.l.b16 %v971
    %v1730 = vpack.c.b16 %v1727, %v1726
    %v1731 = vpack.c.b16 %v1729, %v1728
    %v1735 = vsel %vm87, %v1720, 0
    %1737 = vmatpush.bf16.msra.mxu0 0
    %1738 = vmatpush.bf16.msra.mxu0 0
    %1739 = vmatpush.bf16.msra.mxu0 0
    %1740 = vmatpush.bf16.msra.mxu0 0
    %1741 = vmatpush.bf16.msra.mxu0 0
    %1742 = vmatpush.bf16.msra.mxu0 0
    %1743 = vmatpush.bf16.msra.mxu0 %v1731
    %1744 = vmatpush.bf16.msra.mxu0 %v1730
    %1745 = vmatmul.bf16.gmra.mxu0 %v1735
    %v1746 = vpop.f32.mrf.mxu0
    %v1747 = vadd.f32 %v1721, %v1746
    %v1748 = vpop.f32.mrf.mxu0
    %v1749 = vadd.f32 %v1721, %v1748
    %1750 = vdwg.mxu0
    %v1751 = vmul.f32 %v1747, 1.702
    %v1752 = vmul.f32 %v1749, 1.702
    %v1753 = vxor.u32 %v1751, 2147483648
    %v1754 = vxor.u32 %v1752, 2147483648
    %v1755 = vmul.f32 %v1753, 1.442695
    %v1756 = vpow.pop %v1755
    %v1757 = vmul.f32 %v1754, 1.442695
    %v1758 = vpow.pop %v1757
    %v1759 = vadd.f32 %v1756, 1.0
    %v1760 = vadd.f32 %v1758, 1.0
    %v1761 = vrcp.pop %v1759
    %v1762 = vmul.f32 %v1759, %v1761
    %v1763 = vsub.f32 1.0, %v1762
    %v1764 = vmul.f32 %v1761, %v1763
    %v1765 = vadd.f32 %v1761, %v1764
    %vm1766 = vweird.f32 %v1759
    %vm1767 = vweird.f32 %v1761
    %vm1768 = vmor %vm1766, %vm1767
    %v1769 = vsel %vm1768, %v1761, %v1765
    %v1770 = vand.u32 2147483647, %v1759
    %vm1771 = vcmp.eq.f32.partialorder %v1770, 8.507059e+37
    %v1772 = vand.u32 %v1759, 2147483648
    %v1773 = vor.u32 1.1754944e-38, %v1772
    %v1774 = vsel %vm1771, %v1773, %v1769
    %v1775 = vmul.f32 1.0, %v1774
    %v1776 = vrcp.pop %v1760
    %v1777 = vmul.f32 %v1760, %v1776
    %v1778 = vsub.f32 1.0, %v1777
    %v1779 = vmul.f32 %v1776, %v1778
    %v1780 = vadd.f32 %v1776, %v1779
    %vm1781 = vweird.f32 %v1760
    %vm1782 = vweird.f32 %v1776
    %vm1783 = vmor %vm1781, %vm1782
    %v1784 = vsel %vm1783, %v1776, %v1780
    %v1785 = vand.u32 2147483647, %v1760
    %vm1786 = vcmp.eq.f32.partialorder %v1785, 8.507059e+37
    %v1787 = vand.u32 %v1760, 2147483648
    %v1788 = vor.u32 1.1754944e-38, %v1787
    %v1789 = vsel %vm1786, %v1788, %v1784
    %v1790 = vmul.f32 1.0, %v1789
    %v1791 = vmul.f32 %v1747, %v1775
    %v1792 = vmul.f32 %v1749, %v1790
    %v1793 = vpack.c.bf16 %v1792, %v1791
    %v1794 = vperm.slane %v995, 0
    %v1811 = vunpack.c.l.b16 %v972
    %v1812 = vunpack.c.l.b16 %v973
    %v1813 = vunpack.c.l.b16 %v974
    %v1814 = vunpack.c.l.b16 %v975
    %v1815 = vunpack.c.l.b16 %v976
    %v1816 = vunpack.c.l.b16 %v977
    %v1817 = vunpack.c.l.b16 %v978
    %v1818 = vunpack.c.l.b16 %v979
    %v1819 = vunpack.c.l.b16 %v980
    %v1820 = vunpack.c.l.b16 %v981
    %v1821 = vunpack.c.l.b16 %v982
    %v1822 = vunpack.c.l.b16 %v983
    %v1823 = vunpack.c.l.b16 %v984
    %v1824 = vunpack.c.l.b16 %v985
    %v1825 = vunpack.c.l.b16 %v986
    %v1826 = vunpack.c.l.b16 %v987
    %v1827 = vpack.c.b16 %v1812, %v1811
    %v1828 = vpack.c.b16 %v1814, %v1813
    %v1829 = vpack.c.b16 %v1816, %v1815
    %v1830 = vpack.c.b16 %v1818, %v1817
    %v1831 = vpack.c.b16 %v1820, %v1819
    %v1832 = vpack.c.b16 %v1822, %v1821
    %v1833 = vpack.c.b16 %v1824, %v1823
    %v1834 = vpack.c.b16 %v1826, %v1825
    %1843 = vmatpush.bf16.msra.mxu0 %v1834
    %1844 = vmatpush.bf16.msra.mxu0 %v1833
    %1845 = vmatpush.bf16.msra.mxu0 %v1832
    %1846 = vmatpush.bf16.msra.mxu0 %v1831
    %1847 = vmatpush.bf16.msra.mxu0 %v1830
    %1848 = vmatpush.bf16.msra.mxu0 %v1829
    %1849 = vmatpush.bf16.msra.mxu0 %v1828
    %1850 = vmatpush.bf16.msra.mxu0 %v1827
    %1851 = vmatmul.bf16.gmra.mxu0 %v1793
    %v1852 = vpop.f32.mrf.mxu0
    %v1853 = vadd.f32 %v1794, %v1852
    %v1854 = vpop.f32.mrf.mxu0
    %v1855 = vadd.f32 %v1794, %v1854
    %1856 = vdwg.mxu0
    %v1857 = vadd.f32 %v1668, %v1853
    %v1858 = vadd.f32 %v1669, %v1855
    %v1859 = vld [vmem:[%s9 + $0x20] sm:$0x1]
    %v1860 = vld [vmem:[%s9 + $0x21] sm:$0x1]
    %v1861 = vsel %vm87, %v1857, 0.0
    %1862 = vadd.xlane.f32.xlu0 %v1861
    %v1863 = vpop.xlane.xlu0 %1862
    %v1864 = vsel %vm87, %v1858, 0.0
    %1865 = vadd.xlane.f32.xlu0 %v1864
    %v1866 = vpop.xlane.xlu0 %1865
    %v1867 = vmul.f32 %v1863, %v100
    %v1868 = vmul.f32 %v1866, %v100
    %v1869 = vsub.f32 %v1857, %v1867
    %v1870 = vsub.f32 %v1858, %v1868
    %v1871 = vmul.f32 %v1869, %v1869
    %v1872 = vmul.f32 %v1870, %v1870
    %v1873 = vsel %vm87, %v1871, 0.0
    %1874 = vadd.xlane.f32.xlu0 %v1873
    %v1875 = vpop.xlane.xlu0 %1874
    %v1876 = vsel %vm87, %v1872, 0.0
    %1877 = vadd.xlane.f32.xlu0 %v1876
    %v1878 = vpop.xlane.xlu0 %1877
    %v1879 = vmul.f32 %v1875, %v100
    %v1880 = vmul.f32 %v1878, %v100
    %v1881 = vadd.f32 %v1879, 1e-05
    %v1882 = vadd.f32 %v1880, 1e-05
    %v1883 = vrsqrt.pop %v1881
    %v1884 = vmul.f32 %v1883, %v1881
    %v1885 = vmul.f32 %v1884, %v1883
    %v1886 = vmul.f32 0.5, %v1885
    %v1887 = vsub.f32 1.5, %v1886
    %v1888 = vmul.f32 %v1883, %v1887
    %vm1889 = vweird.f32 %v1881
    %vm1890 = vweird.f32 %v1883
    %vm1891 = vmor %vm1889, %vm1890
    %v1892 = vsel %vm1891, %v1883, %v1888
    %v1893 = vrsqrt.pop %v1882
    %v1894 = vmul.f32 %v1893, %v1882
    %v1895 = vmul.f32 %v1894, %v1893
    %v1896 = vmul.f32 0.5, %v1895
    %v1897 = vsub.f32 1.5, %v1896
    %v1898 = vmul.f32 %v1893, %v1897
    %vm1899 = vweird.f32 %v1882
    %vm1900 = vweird.f32 %v1893
    %vm1901 = vmor %vm1899, %vm1900
    %v1902 = vsel %vm1901, %v1893, %v1898
    %v1903 = vmul.f32 %v1869, %v1892
    %v1904 = vmul.f32 %v1870, %v1902
    %v1905 = vperm.slane %v1859, 0
    %v1906 = vmul.f32 %v1903, %v1905
    %v1907 = vmul.f32 %v1904, %v1905
    %v1908 = vperm.slane %v1860, 0
    %v1909 = vadd.f32 %v1906, %v1908
    %v1910 = vadd.f32 %v1907, %v1908
    %v1911 = vld [vmem:[%s2] sm:$0x3]
    %v1912 = vpack.c.bf16 %v1911, %v1911
    %v1913 = vpack.c.bf16 %v1910, %v1909
    %vm1914 = vcmask 130048
    %v1916 = vsel %vm1914, %v1912, 0
    %1918 = vmatpush.bf16.msra.mxu0 0
    %1919 = vmatpush.bf16.msra.mxu0 0
    %1920 = vmatpush.bf16.msra.mxu0 0
    %1921 = vmatpush.bf16.msra.mxu0 0
    %1922 = vmatpush.bf16.msra.mxu0 0
    %1923 = vmatpush.bf16.msra.mxu0 0
    %1924 = vmatpush.bf16.msra.mxu0 0
    %1925 = vmatpush.bf16.msra.mxu0 %v1913
    %1926 = vmatmul.bf16.gmra.mxu0 %v1916
    %v1927 = vpop.f32.mrf.mxu0
    %v1928 = vadd.f32 0.0, %v1927
    %v1929 = vpop.f32.mrf.mxu0
    %1930 = vdwg.mxu0
    %v1931 = vld [vmem:[%s8 + $0x1c0] sm:$0xf]
    %v1932 = vld [vmem:[%s8 + $0x1c4] sm:$0xf]
    %v1933 = vld [vmem:[%s8 + $0x1c8] sm:$0xf]
    %v1934 = vld [vmem:[%s8 + $0x1cc] sm:$0xf]
    %v1935 = vpack.c.bf16 %v1928, %v1928
    %v1940 = vunpack.c.l.b16 %v1931
    %v1941 = vunpack.c.l.b16 %v1932
    %v1942 = vunpack.c.l.b16 %v1933
    %v1943 = vunpack.c.l.b16 %v1934
    %v1944 = vpack.c.b16 %v1941, %v1940
    %v1945 = vpack.c.b16 %v1943, %v1942
    %v1949 = vsel %vm87, %v1935, 0
    %1951 = vmatpush.bf16.msra.mxu0 0
    %1952 = vmatpush.bf16.msra.mxu0 0
    %1953 = vmatpush.bf16.msra.mxu0 0
    %1954 = vmatpush.bf16.msra.mxu0 0
    %1955 = vmatpush.bf16.msra.mxu0 0
    %1956 = vmatpush.bf16.msra.mxu0 0
    %1957 = vmatpush.bf16.msra.mxu0 %v1945
    %1958 = vmatpush.bf16.msra.mxu0 %v1944
    %1959 = vmatmul.bf16.gmra.mxu0 %v1949
    %v1960 = vpop.f32.mrf.mxu0
    %v1961 = vadd.f32 0.0, %v1960
    %v1962 = vpop.f32.mrf.mxu0
    %1963 = vdwg.mxu0
    %v1964 = vld [vmem:[%s3] sm:$0xff]
    %v1965 = vld [vmem:[%s3 + $0x8] sm:$0xff]
    %v1966 = vld [vmem:[%s3 + $0x10] sm:$0xff]
    %v1967 = vld [vmem:[%s3 + $0x18] sm:$0xf]
    %v1968 = vld [vmem:[%s3 + $0x1c] sm:$0xff]
    %v1969 = vld [vmem:[%s3 + $0x24] sm:$0xff]
    %v1970 = vld [vmem:[%s3 + $0x2c] sm:$0xff]
    %v1971 = vld [vmem:[%s3 + $0x34] sm:$0xf]
    %v1972 = vld [vmem:[%s3 + $0x38] sm:$0xff]
    %v1973 = vld [vmem:[%s3 + $0x40] sm:$0xff]
    %v1974 = vld [vmem:[%s3 + $0x48] sm:$0xff]
    %v1975 = vld [vmem:[%s3 + $0x50] sm:$0xf]
    %v1976 = vld [vmem:[%s3 + $0x54] sm:$0xff]
    %v1977 = vld [vmem:[%s3 + $0x5c] sm:$0xff]
    %v1978 = vld [vmem:[%s3 + $0x64] sm:$0xff]
    %v1979 = vld [vmem:[%s3 + $0x6c] sm:$0xf]
    %v1980 = vld [vmem:[%s8 + $0x1e0] sm:$0xf]
    %v1981 = vld [vmem:[%s8 + $0x1e4] sm:$0xf]
    %v1982 = vld [vmem:[%s8 + $0x1e8] sm:$0xf]
    %v1983 = vld [vmem:[%s8 + $0x1ec] sm:$0xf]
    %v1984 = vld [vmem:[%s8 + $0x1f0] sm:$0xf]
    %v1985 = vld [vmem:[%s8 + $0x1f4] sm:$0xf]
    %v1986 = vld [vmem:[%s8 + $0x1f8] sm:$0xf]
    %v1987 = vld [vmem:[%s8 + $0x1fc] sm:$0xf]
    %v1988 = vld [vmem:[%s8 + $0x200] sm:$0xf]
    %v1989 = vld [vmem:[%s8 + $0x204] sm:$0xf]
    %v1990 = vld [vmem:[%s8 + $0x208] sm:$0xf]
    %v1991 = vld [vmem:[%s8 + $0x20c] sm:$0xf]
    %v1992 = vld [vmem:[%s8 + $0x210] sm:$0xf]
    %v1993 = vld [vmem:[%s8 + $0x214] sm:$0xf]
    %v1994 = vld [vmem:[%s8 + $0x218] sm:$0xf]
    %v1995 = vld [vmem:[%s8 + $0x21c] sm:$0xf]
    %v1996 = vld [vmem:[%s8 + $0x220] sm:$0xf]
    %v1997 = vld [vmem:[%s8 + $0x224] sm:$0xf]
    %v1998 = vld [vmem:[%s8 + $0x228] sm:$0xf]
    %v1999 = vld [vmem:[%s8 + $0x22c] sm:$0xf]
    %v2000 = vld [vmem:[%s8 + $0x230] sm:$0xf]
    %v2001 = vld [vmem:[%s8 + $0x234] sm:$0xf]
    %v2002 = vld [vmem:[%s8 + $0x238] sm:$0xf]
    %v2003 = vld [vmem:[%s8 + $0x23c] sm:$0xf]
    %v2004 = vld [vmem:[%s8 + $0x240] sm:$0xf]
    %v2005 = vld [vmem:[%s8 + $0x244] sm:$0xf]
    %v2006 = vld [vmem:[%s8 + $0x248] sm:$0xf]
    %v2007 = vld [vmem:[%s8 + $0x24c] sm:$0xf]
    %v2008 = vld [vmem:[%s8 + $0x250] sm:$0xf]
    %v2009 = vld [vmem:[%s8 + $0x254] sm:$0xf]
    %v2010 = vld [vmem:[%s8 + $0x258] sm:$0xf]
    %v2011 = vld [vmem:[%s8 + $0x25c] sm:$0xf]
    %v2012 = vld [vmem:[%s8 + $0x260] sm:$0xf]
    %v2013 = vld [vmem:[%s8 + $0x264] sm:$0xf]
    %v2014 = vld [vmem:[%s8 + $0x268] sm:$0xf]
    %v2015 = vld [vmem:[%s8 + $0x26c] sm:$0xf]
    %v2016 = vld [vmem:[%s8 + $0x270] sm:$0xf]
    %v2017 = vld [vmem:[%s8 + $0x274] sm:$0xf]
    %v2018 = vld [vmem:[%s8 + $0x278] sm:$0xf]
    %v2019 = vld [vmem:[%s8 + $0x27c] sm:$0xf]
    %v2020 = vld [vmem:[%s8 + $0x280] sm:$0xf]
    %v2021 = vld [vmem:[%s8 + $0x284] sm:$0xf]
    %v2022 = vld [vmem:[%s8 + $0x288] sm:$0xf]
    %v2023 = vld [vmem:[%s8 + $0x28c] sm:$0xf]
    %v2024 = vld [vmem:[%s8 + $0x290] sm:$0xf]
    %v2025 = vld [vmem:[%s8 + $0x294] sm:$0xf]
    %v2026 = vld [vmem:[%s8 + $0x298] sm:$0xf]
    %v2027 = vld [vmem:[%s8 + $0x29c] sm:$0xf]
    %v2028 = vld [vmem:[%s8 + $0x2a0] sm:$0xf]
    %v2029 = vld [vmem:[%s8 + $0x2a4] sm:$0xf]
    %v2030 = vld [vmem:[%s8 + $0x2a8] sm:$0xf]
    %v2031 = vld [vmem:[%s8 + $0x2ac] sm:$0xf]
    %v2032 = vld [vmem:[%s8 + $0x2b0] sm:$0xf]
    %v2033 = vld [vmem:[%s8 + $0x2b4] sm:$0xf]
    %v2034 = vld [vmem:[%s8 + $0x2b8] sm:$0xf]
    %v2035 = vld [vmem:[%s8 + $0x2bc] sm:$0xf]
    %v2036 = vld [vmem:[%s8 + $0x2c0] sm:$0xf]
    %v2037 = vld [vmem:[%s8 + $0x2c4] sm:$0xf]
    %v2038 = vld [vmem:[%s8 + $0x2c8] sm:$0xf]
    %v2039 = vld [vmem:[%s8 + $0x2cc] sm:$0xf]
    %v2040 = vld [vmem:[%s8 + $0x2d0] sm:$0xf]
    %v2041 = vld [vmem:[%s8 + $0x2d4] sm:$0xf]
    %v2042 = vld [vmem:[%s8 + $0x2d8] sm:$0xf]
    %v2043 = vld [vmem:[%s8 + $0x2dc] sm:$0xf]
    %v2044 = vld [vmem:[%s8 + $0x2e0] sm:$0xf]
    %v2045 = vld [vmem:[%s8 + $0x2e4] sm:$0xf]
    %v2046 = vld [vmem:[%s8 + $0x2e8] sm:$0xf]
    %v2047 = vld [vmem:[%s8 + $0x2ec] sm:$0xf]
    %v2048 = vld [vmem:[%s8 + $0x2f0] sm:$0xf]
    %v2049 = vld [vmem:[%s8 + $0x2f4] sm:$0xf]
    %v2050 = vld [vmem:[%s8 + $0x2f8] sm:$0xf]
    %v2051 = vld [vmem:[%s8 + $0x2fc] sm:$0xf]
    %v2052 = vld [vmem:[%s8 + $0x300] sm:$0xf]
    %v2053 = vld [vmem:[%s8 + $0x304] sm:$0xf]
    %v2054 = vld [vmem:[%s8 + $0x308] sm:$0xf]
    %v2055 = vld [vmem:[%s8 + $0x30c] sm:$0xf]
    %v2056 = vld [vmem:[%s8 + $0x310] sm:$0xf]
    %v2057 = vld [vmem:[%s8 + $0x314] sm:$0xf]
    %v2058 = vld [vmem:[%s8 + $0x318] sm:$0xf]
    %v2059 = vld [vmem:[%s8 + $0x31c] sm:$0xf]
    %v2060 = vld [vmem:[%s8 + $0x320] sm:$0xf]
    %v2061 = vld [vmem:[%s8 + $0x324] sm:$0xf]
    %v2062 = vld [vmem:[%s8 + $0x328] sm:$0xf]
    %v2063 = vld [vmem:[%s8 + $0x32c] sm:$0xf]
    %v2064 = vld [vmem:[%s8 + $0x330] sm:$0xf]
    %v2065 = vld [vmem:[%s8 + $0x334] sm:$0xf]
    %v2066 = vld [vmem:[%s8 + $0x338] sm:$0xf]
    %v2067 = vld [vmem:[%s8 + $0x33c] sm:$0xf]
    %v2068 = vld [vmem:[%s8 + $0x340] sm:$0xf]
    %v2069 = vld [vmem:[%s8 + $0x344] sm:$0xf]
    %v2070 = vld [vmem:[%s8 + $0x348] sm:$0xf]
    %v2071 = vld [vmem:[%s8 + $0x34c] sm:$0xf]
    %v2072 = vld [vmem:[%s8 + $0x350] sm:$0xf]
    %v2073 = vld [vmem:[%s8 + $0x354] sm:$0xf]
    %v2074 = vld [vmem:[%s8 + $0x358] sm:$0xf]
    %v2075 = vld [vmem:[%s8 + $0x35c] sm:$0xf]
    %v2076 = vld [vmem:[%s8 + $0x360] sm:$0xf]
    %v2077 = vld [vmem:[%s8 + $0x364] sm:$0xf]
    %v2078 = vld [vmem:[%s8 + $0x368] sm:$0xf]
    %v2079 = vld [vmem:[%s8 + $0x36c] sm:$0xf]
    %v2080 = vld [vmem:[%s8 + $0x370] sm:$0xf]
    %v2081 = vld [vmem:[%s8 + $0x374] sm:$0xf]
    %v2082 = vld [vmem:[%s8 + $0x378] sm:$0xf]
    %v2083 = vld [vmem:[%s8 + $0x37c] sm:$0xf]
    %v2084 = vld [vmem:[%s8 + $0x380] sm:$0xf]
    %v2085 = vld [vmem:[%s8 + $0x384] sm:$0xf]
    %v2086 = vld [vmem:[%s8 + $0x388] sm:$0xf]
    %v2087 = vld [vmem:[%s8 + $0x38c] sm:$0xf]
    %v2088 = vld [vmem:[%s8 + $0x390] sm:$0xf]
    %v2089 = vld [vmem:[%s8 + $0x394] sm:$0xf]
    %v2090 = vld [vmem:[%s8 + $0x398] sm:$0xf]
    %v2091 = vld [vmem:[%s8 + $0x39c] sm:$0xf]
    %v2108 = vunpack.c.l.b16 %v1964
    %v2109 = vunpack.c.h.b16 %v1964
    %v2110 = vunpack.c.l.b16 %v1965
    %v2111 = vunpack.c.h.b16 %v1965
    %v2112 = vunpack.c.l.b16 %v1966
    %v2113 = vunpack.c.h.b16 %v1966
    %v2114 = vunpack.c.l.b16 %v1967
    %v2115 = vunpack.c.l.b16 %v1968
    %v2116 = vunpack.c.h.b16 %v1968
    %v2117 = vunpack.c.l.b16 %v1969
    %v2118 = vunpack.c.h.b16 %v1969
    %v2119 = vunpack.c.l.b16 %v1970
    %v2120 = vunpack.c.h.b16 %v1970
    %v2121 = vunpack.c.l.b16 %v1971
    %v2122 = vunpack.c.l.b16 %v1972
    %v2123 = vunpack.c.h.b16 %v1972
    %v2124 = vunpack.c.l.b16 %v1973
    %v2125 = vunpack.c.h.b16 %v1973
    %v2126 = vunpack.c.l.b16 %v1974
    %v2127 = vunpack.c.h.b16 %v1974
    %v2128 = vunpack.c.l.b16 %v1975
    %v2129 = vunpack.c.l.b16 %v1976
    %v2130 = vunpack.c.h.b16 %v1976
    %v2131 = vunpack.c.l.b16 %v1977
    %v2132 = vunpack.c.h.b16 %v1977
    %v2133 = vunpack.c.l.b16 %v1978
    %v2134 = vunpack.c.h.b16 %v1978
    %v2135 = vunpack.c.l.b16 %v1979
    %v2136 = vpack.c.b16 %v2115, %v2108
    %v2137 = vpack.c.b16 %v2116, %v2109
    %v2138 = vpack.c.b16 %v2117, %v2110
    %v2139 = vpack.c.b16 %v2118, %v2111
    %v2140 = vpack.c.b16 %v2119, %v2112
    %v2141 = vpack.c.b16 %v2120, %v2113
    %v2142 = vpack.c.b16 %v2121, %v2114
    %v2143 = vpack.c.b16 %v2129, %v2122
    %v2144 = vpack.c.b16 %v2130, %v2123
    %v2145 = vpack.c.b16 %v2131, %v2124
    %v2146 = vpack.c.b16 %v2132, %v2125
    %v2147 = vpack.c.b16 %v2133, %v2126
    %v2148 = vpack.c.b16 %v2134, %v2127
    %v2149 = vpack.c.b16 %v2135, %v2128
    %v2276 = vunpack.c.l.b16 %v1980
    %v2277 = vunpack.c.l.b16 %v1981
    %v2278 = vunpack.c.l.b16 %v1982
    %v2279 = vunpack.c.l.b16 %v1983
    %v2280 = vunpack.c.l.b16 %v1984
    %v2281 = vunpack.c.l.b16 %v1985
    %v2282 = vunpack.c.l.b16 %v1986
    %v2283 = vunpack.c.l.b16 %v1987
    %v2284 = vunpack.c.l.b16 %v1988
    %v2285 = vunpack.c.l.b16 %v1989
    %v2286 = vunpack.c.l.b16 %v1990
    %v2287 = vunpack.c.l.b16 %v1991
    %v2288 = vunpack.c.l.b16 %v1992
    %v2289 = vunpack.c.l.b16 %v1993
    %v2290 = vunpack.c.l.b16 %v1994
    %v2291 = vunpack.c.l.b16 %v1995
    %v2292 = vunpack.c.l.b16 %v1996
    %v2293 = vunpack.c.l.b16 %v1997
    %v2294 = vunpack.c.l.b16 %v1998
    %v2295 = vunpack.c.l.b16 %v1999
    %v2296 = vunpack.c.l.b16 %v2000
    %v2297 = vunpack.c.l.b16 %v2001
    %v2298 = vunpack.c.l.b16 %v2002
    %v2299 = vunpack.c.l.b16 %v2003
    %v2300 = vunpack.c.l.b16 %v2004
    %v2301 = vunpack.c.l.b16 %v2005
    %v2302 = vunpack.c.l.b16 %v2006
    %v2303 = vunpack.c.l.b16 %v2007
    %v2304 = vunpack.c.l.b16 %v2008
    %v2305 = vunpack.c.l.b16 %v2009
    %v2306 = vunpack.c.l.b16 %v2010
    %v2307 = vunpack.c.l.b16 %v2011
    %v2308 = vunpack.c.l.b16 %v2012
    %v2309 = vunpack.c.l.b16 %v2013
    %v2310 = vunpack.c.l.b16 %v2014
    %v2311 = vunpack.c.l.b16 %v2015
    %v2312 = vunpack.c.l.b16 %v2016
    %v2313 = vunpack.c.l.b16 %v2017
    %v2314 = vunpack.c.l.b16 %v2018
    %v2315 = vunpack.c.l.b16 %v2019
    %v2316 = vunpack.c.l.b16 %v2020
    %v2317 = vunpack.c.l.b16 %v2021
    %v2318 = vunpack.c.l.b16 %v2022
    %v2319 = vunpack.c.l.b16 %v2023
    %v2320 = vunpack.c.l.b16 %v2024
    %v2321 = vunpack.c.l.b16 %v2025
    %v2322 = vunpack.c.l.b16 %v2026
    %v2323 = vunpack.c.l.b16 %v2027
    %v2324 = vunpack.c.l.b16 %v2028
    %v2325 = vunpack.c.l.b16 %v2029
    %v2326 = vunpack.c.l.b16 %v2030
    %v2327 = vunpack.c.l.b16 %v2031
    %v2328 = vunpack.c.l.b16 %v2032
    %v2329 = vunpack.c.l.b16 %v2033
    %v2330 = vunpack.c.l.b16 %v2034
    %v2331 = vunpack.c.l.b16 %v2035
    %v2332 = vunpack.c.l.b16 %v2036
    %v2333 = vunpack.c.l.b16 %v2037
    %v2334 = vunpack.c.l.b16 %v2038
    %v2335 = vunpack.c.l.b16 %v2039
    %v2336 = vunpack.c.l.b16 %v2040
    %v2337 = vunpack.c.l.b16 %v2041
    %v2338 = vunpack.c.l.b16 %v2042
    %v2339 = vunpack.c.l.b16 %v2043
    %v2340 = vunpack.c.l.b16 %v2044
    %v2341 = vunpack.c.l.b16 %v2045
    %v2342 = vunpack.c.l.b16 %v2046
    %v2343 = vunpack.c.l.b16 %v2047
    %v2344 = vunpack.c.l.b16 %v2048
    %v2345 = vunpack.c.l.b16 %v2049
    %v2346 = vunpack.c.l.b16 %v2050
    %v2347 = vunpack.c.l.b16 %v2051
    %v2348 = vunpack.c.l.b16 %v2052
    %v2349 = vunpack.c.l.b16 %v2053
    %v2350 = vunpack.c.l.b16 %v2054
    %v2351 = vunpack.c.l.b16 %v2055
    %v2352 = vunpack.c.l.b16 %v2056
    %v2353 = vunpack.c.l.b16 %v2057
    %v2354 = vunpack.c.l.b16 %v2058
    %v2355 = vunpack.c.l.b16 %v2059
    %v2356 = vunpack.c.l.b16 %v2060
    %v2357 = vunpack.c.l.b16 %v2061
    %v2358 = vunpack.c.l.b16 %v2062
    %v2359 = vunpack.c.l.b16 %v2063
    %v2360 = vunpack.c.l.b16 %v2064
    %v2361 = vunpack.c.l.b16 %v2065
    %v2362 = vunpack.c.l.b16 %v2066
    %v2363 = vunpack.c.l.b16 %v2067
    %v2364 = vunpack.c.l.b16 %v2068
    %v2365 = vunpack.c.l.b16 %v2069
    %v2366 = vunpack.c.l.b16 %v2070
    %v2367 = vunpack.c.l.b16 %v2071
    %v2368 = vunpack.c.l.b16 %v2072
    %v2369 = vunpack.c.l.b16 %v2073
    %v2370 = vunpack.c.l.b16 %v2074
    %v2371 = vunpack.c.l.b16 %v2075
    %v2372 = vunpack.c.l.b16 %v2076
    %v2373 = vunpack.c.l.b16 %v2077
    %v2374 = vunpack.c.l.b16 %v2078
    %v2375 = vunpack.c.l.b16 %v2079
    %v2376 = vunpack.c.l.b16 %v2080
    %v2377 = vunpack.c.l.b16 %v2081
    %v2378 = vunpack.c.l.b16 %v2082
    %v2379 = vunpack.c.l.b16 %v2083
    %v2380 = vunpack.c.l.b16 %v2084
    %v2381 = vunpack.c.l.b16 %v2085
    %v2382 = vunpack.c.l.b16 %v2086
    %v2383 = vunpack.c.l.b16 %v2087
    %v2384 = vunpack.c.l.b16 %v2088
    %v2385 = vunpack.c.l.b16 %v2089
    %v2386 = vunpack.c.l.b16 %v2090
    %v2387 = vunpack.c.l.b16 %v2091
    %v2388 = vpack.c.b16 %v2277, %v2276
    %v2389 = vpack.c.b16 %v2279, %v2278
    %v2390 = vpack.c.b16 %v2281, %v2280
    %v2391 = vpack.c.b16 %v2283, %v2282
    %v2392 = vpack.c.b16 %v2285, %v2284
    %v2393 = vpack.c.b16 %v2287, %v2286
    %v2394 = vpack.c.b16 %v2289, %v2288
    %v2395 = vpack.c.b16 %v2291, %v2290
    %v2396 = vpack.c.b16 %v2293, %v2292
    %v2397 = vpack.c.b16 %v2295, %v2294
    %v2398 = vpack.c.b16 %v2297, %v2296
    %v2399 = vpack.c.b16 %v2299, %v2298
    %v2400 = vpack.c.b16 %v2301, %v2300
    %v2401 = vpack.c.b16 %v2303, %v2302
    %v2402 = vpack.c.b16 %v2305, %v2304
    %v2403 = vpack.c.b16 %v2307, %v2306
    %v2404 = vpack.c.b16 %v2309, %v2308
    %v2405 = vpack.c.b16 %v2311, %v2310
    %v2406 = vpack.c.b16 %v2313, %v2312
    %v2407 = vpack.c.b16 %v2315, %v2314
    %v2408 = vpack.c.b16 %v2317, %v2316
    %v2409 = vpack.c.b16 %v2319, %v2318
    %v2410 = vpack.c.b16 %v2321, %v2320
    %v2411 = vpack.c.b16 %v2323, %v2322
    %v2412 = vpack.c.b16 %v2325, %v2324
    %v2413 = vpack.c.b16 %v2327, %v2326
    %v2414 = vpack.c.b16 %v2329, %v2328
    %v2415 = vpack.c.b16 %v2331, %v2330
    %v2416 = vpack.c.b16 %v2333, %v2332
    %v2417 = vpack.c.b16 %v2335, %v2334
    %v2418 = vpack.c.b16 %v2337, %v2336
    %v2419 = vpack.c.b16 %v2339, %v2338
    %v2420 = vpack.c.b16 %v2341, %v2340
    %v2421 = vpack.c.b16 %v2343, %v2342
    %v2422 = vpack.c.b16 %v2345, %v2344
    %v2423 = vpack.c.b16 %v2347, %v2346
    %v2424 = vpack.c.b16 %v2349, %v2348
    %v2425 = vpack.c.b16 %v2351, %v2350
    %v2426 = vpack.c.b16 %v2353, %v2352
    %v2427 = vpack.c.b16 %v2355, %v2354
    %v2428 = vpack.c.b16 %v2357, %v2356
    %v2429 = vpack.c.b16 %v2359, %v2358
    %v2430 = vpack.c.b16 %v2361, %v2360
    %v2431 = vpack.c.b16 %v2363, %v2362
    %v2432 = vpack.c.b16 %v2365, %v2364
    %v2433 = vpack.c.b16 %v2367, %v2366
    %v2434 = vpack.c.b16 %v2369, %v2368
    %v2435 = vpack.c.b16 %v2371, %v2370
    %v2436 = vpack.c.b16 %v2373, %v2372
    %v2437 = vpack.c.b16 %v2375, %v2374
    %v2438 = vpack.c.b16 %v2377, %v2376
    %v2439 = vpack.c.b16 %v2379, %v2378
    %v2440 = vpack.c.b16 %v2381, %v2380
    %v2441 = vpack.c.b16 %v2383, %v2382
    %v2442 = vpack.c.b16 %v2385, %v2384
    %v2443 = vpack.c.b16 %v2387, %v2386
    %2500 = vmatpush.bf16.msra.mxu0 %v2395
    %2501 = vmatpush.bf16.msra.mxu0 %v2394
    %2502 = vmatpush.bf16.msra.mxu0 %v2393
    %2503 = vmatpush.bf16.msra.mxu0 %v2392
    %2504 = vmatpush.bf16.msra.mxu0 %v2391
    %2505 = vmatpush.bf16.msra.mxu0 %v2390
    %2506 = vmatpush.bf16.msra.mxu0 %v2389
    %2507 = vmatpush.bf16.msra.mxu0 %v2388
    %2508 = vmatmul.bf16.gmra.mxu0 %v2136
    %v2509 = vpop.f32.mrf.mxu0
    %v2510 = vadd.f32 0.0, %v2509
    %v2511 = vpop.f32.mrf.mxu0
    %v2512 = vadd.f32 0.0, %v2511
    %2513 = vmatmul.bf16.gmra.mxu0 %v2143
    %v2514 = vpop.f32.mrf.mxu0
    %v2515 = vadd.f32 0.0, %v2514
    %v2516 = vpop.f32.mrf.mxu0
    %v2517 = vadd.f32 0.0, %v2516
    %2518 = vdwg.mxu0
    %2519 = vmatpush.bf16.msra.mxu0 %v2403
    %2520 = vmatpush.bf16.msra.mxu0 %v2402
    %2521 = vmatpush.bf16.msra.mxu0 %v2401
    %2522 = vmatpush.bf16.msra.mxu0 %v2400
    %2523 = vmatpush.bf16.msra.mxu0 %v2399
    %2524 = vmatpush.bf16.msra.mxu0 %v2398
    %2525 = vmatpush.bf16.msra.mxu0 %v2397
    %2526 = vmatpush.bf16.msra.mxu0 %v2396
    %2527 = vmatmul.bf16.gmra.mxu0 %v2137
    %v2528 = vpop.f32.mrf.mxu0
    %v2529 = vadd.f32 %v2510, %v2528
    %v2530 = vpop.f32.mrf.mxu0
    %v2531 = vadd.f32 %v2512, %v2530
    %2532 = vmatmul.bf16.gmra.mxu0 %v2144
    %v2533 = vpop.f32.mrf.mxu0
    %v2534 = vadd.f32 %v2515, %v2533
    %v2535 = vpop.f32.mrf.mxu0
    %v2536 = vadd.f32 %v2517, %v2535
    %2537 = vdwg.mxu0
    %2538 = vmatpush.bf16.msra.mxu0 %v2411
    %2539 = vmatpush.bf16.msra.mxu0 %v2410
    %2540 = vmatpush.bf16.msra.mxu0 %v2409
    %2541 = vmatpush.bf16.msra.mxu0 %v2408
    %2542 = vmatpush.bf16.msra.mxu0 %v2407
    %2543 = vmatpush.bf16.msra.mxu0 %v2406
    %2544 = vmatpush.bf16.msra.mxu0 %v2405
    %2545 = vmatpush.bf16.msra.mxu0 %v2404
    %2546 = vmatmul.bf16.gmra.mxu0 %v2138
    %v2547 = vpop.f32.mrf.mxu0
    %v2548 = vadd.f32 %v2529, %v2547
    %v2549 = vpop.f32.mrf.mxu0
    %v2550 = vadd.f32 %v2531, %v2549
    %2551 = vmatmul.bf16.gmra.mxu0 %v2145
    %v2552 = vpop.f32.mrf.mxu0
    %v2553 = vadd.f32 %v2534, %v2552
    %v2554 = vpop.f32.mrf.mxu0
    %v2555 = vadd.f32 %v2536, %v2554
    %2556 = vdwg.mxu0
    %2557 = vmatpush.bf16.msra.mxu0 %v2419
    %2558 = vmatpush.bf16.msra.mxu0 %v2418
    %2559 = vmatpush.bf16.msra.mxu0 %v2417
    %2560 = vmatpush.bf16.msra.mxu0 %v2416
    %2561 = vmatpush.bf16.msra.mxu0 %v2415
    %2562 = vmatpush.bf16.msra.mxu0 %v2414
    %2563 = vmatpush.bf16.msra.mxu0 %v2413
    %2564 = vmatpush.bf16.msra.mxu0 %v2412
    %2565 = vmatmul.bf16.gmra.mxu0 %v2139
    %v2566 = vpop.f32.mrf.mxu0
    %v2567 = vadd.f32 %v2548, %v2566
    %v2568 = vpop.f32.mrf.mxu0
    %v2569 = vadd.f32 %v2550, %v2568
    %2570 = vmatmul.bf16.gmra.mxu0 %v2146
    %v2571 = vpop.f32.mrf.mxu0
    %v2572 = vadd.f32 %v2553, %v2571
    %v2573 = vpop.f32.mrf.mxu0
    %v2574 = vadd.f32 %v2555, %v2573
    %2575 = vdwg.mxu0
    %2576 = vmatpush.bf16.msra.mxu0 %v2427
    %2577 = vmatpush.bf16.msra.mxu0 %v2426
    %2578 = vmatpush.bf16.msra.mxu0 %v2425
    %2579 = vmatpush.bf16.msra.mxu0 %v2424
    %2580 = vmatpush.bf16.msra.mxu0 %v2423
    %2581 = vmatpush.bf16.msra.mxu0 %v2422
    %2582 = vmatpush.bf16.msra.mxu0 %v2421
    %2583 = vmatpush.bf16.msra.mxu0 %v2420
    %2584 = vmatmul.bf16.gmra.mxu0 %v2140
    %v2585 = vpop.f32.mrf.mxu0
    %v2586 = vadd.f32 %v2567, %v2585
    %v2587 = vpop.f32.mrf.mxu0
    %v2588 = vadd.f32 %v2569, %v2587
    %2589 = vmatmul.bf16.gmra.mxu0 %v2147
    %v2590 = vpop.f32.mrf.mxu0
    %v2591 = vadd.f32 %v2572, %v2590
    %v2592 = vpop.f32.mrf.mxu0
    %v2593 = vadd.f32 %v2574, %v2592
    %2594 = vdwg.mxu0
    %2595 = vmatpush.bf16.msra.mxu0 %v2435
    %2596 = vmatpush.bf16.msra.mxu0 %v2434
    %2597 = vmatpush.bf16.msra.mxu0 %v2433
    %2598 = vmatpush.bf16.msra.mxu0 %v2432
    %2599 = vmatpush.bf16.msra.mxu0 %v2431
    %2600 = vmatpush.bf16.msra.mxu0 %v2430
    %2601 = vmatpush.bf16.msra.mxu0 %v2429
    %2602 = vmatpush.bf16.msra.mxu0 %v2428
    %2603 = vmatmul.bf16.gmra.mxu0 %v2141
    %v2604 = vpop.f32.mrf.mxu0
    %v2605 = vadd.f32 %v2586, %v2604
    %v2606 = vpop.f32.mrf.mxu0
    %v2607 = vadd.f32 %v2588, %v2606
    %2608 = vmatmul.bf16.gmra.mxu0 %v2148
    %v2609 = vpop.f32.mrf.mxu0
    %v2610 = vadd.f32 %v2591, %v2609
    %v2611 = vpop.f32.mrf.mxu0
    %v2612 = vadd.f32 %v2593, %v2611
    %2613 = vdwg.mxu0
    %2614 = vmatpush.bf16.msra.mxu0 %v2443
    %2615 = vmatpush.bf16.msra.mxu0 %v2442
    %2616 = vmatpush.bf16.msra.mxu0 %v2441
    %2617 = vmatpush.bf16.msra.mxu0 %v2440
    %2618 = vmatpush.bf16.msra.mxu0 %v2439
    %2619 = vmatpush.bf16.msra.mxu0 %v2438
    %2620 = vmatpush.bf16.msra.mxu0 %v2437
    %2621 = vmatpush.bf16.msra.mxu0 %v2436
    %2622 = vmatmul.bf16.gmra.mxu0 %v2142
    %v2623 = vpop.f32.mrf.mxu0
    %v2624 = vadd.f32 %v2605, %v2623
    %v2625 = vpop.f32.mrf.mxu0
    %v2626 = vadd.f32 %v2607, %v2625
    %2627 = vmatmul.bf16.gmra.mxu0 %v2149
    %v2628 = vpop.f32.mrf.mxu0
    %v2629 = vadd.f32 %v2610, %v2628
    %v2630 = vpop.f32.mrf.mxu0
    %v2631 = vadd.f32 %v2612, %v2630
    %2632 = vdwg.mxu0
    %v2633 = vld [vmem:[%s4] sm:$0xff]
    %v2634 = vadd.f32 %v2624, %v2633
    %v2635 = vadd.f32 %v2626, %v2633
    %v2636 = vadd.f32 %v2629, %v2633
    %v2637 = vadd.f32 %v2631, %v2633
    %v2638 = vld [vmem:[%s9 + $0x22] sm:$0x1]
    %v2639 = vld [vmem:[%s9 + $0x23] sm:$0x1]
    %v2640 = vsel %vm87, %v2634, 0.0
    %2641 = vadd.xlane.f32.xlu0 %v2640
    %v2642 = vpop.xlane.xlu0 %2641
    %v2643 = vsel %vm87, %v2635, 0.0
    %2644 = vadd.xlane.f32.xlu0 %v2643
    %v2645 = vpop.xlane.xlu0 %2644
    %v2646 = vsel %vm87, %v2636, 0.0
    %2647 = vadd.xlane.f32.xlu0 %v2646
    %v2648 = vpop.xlane.xlu0 %2647
    %v2649 = vsel %vm87, %v2637, 0.0
    %2650 = vadd.xlane.f32.xlu0 %v2649
    %v2651 = vpop.xlane.xlu0 %2650
    %v2652 = vmul.f32 %v2642, %v100
    %v2653 = vmul.f32 %v2645, %v100
    %v2654 = vmul.f32 %v2648, %v100
    %v2655 = vmul.f32 %v2651, %v100
    %v2656 = vsub.f32 %v2634, %v2652
    %v2657 = vsub.f32 %v2635, %v2653
    %v2658 = vsub.f32 %v2636, %v2654
    %v2659 = vsub.f32 %v2637, %v2655
    %v2660 = vmul.f32 %v2656, %v2656
    %v2661 = vmul.f32 %v2657, %v2657
    %v2662 = vmul.f32 %v2658, %v2658
    %v2663 = vmul.f32 %v2659, %v2659
    %v2664 = vsel %vm87, %v2660, 0.0
    %2665 = vadd.xlane.f32.xlu0 %v2664
    %v2666 = vpop.xlane.xlu0 %2665
    %v2667 = vsel %vm87, %v2661, 0.0
    %2668 = vadd.xlane.f32.xlu0 %v2667
    %v2669 = vpop.xlane.xlu0 %2668
    %v2670 = vsel %vm87, %v2662, 0.0
    %2671 = vadd.xlane.f32.xlu0 %v2670
    %v2672 = vpop.xlane.xlu0 %2671
    %v2673 = vsel %vm87, %v2663, 0.0
    %2674 = vadd.xlane.f32.xlu0 %v2673
    %v2675 = vpop.xlane.xlu0 %2674
    %v2676 = vmul.f32 %v2666, %v100
    %v2677 = vmul.f32 %v2669, %v100
    %v2678 = vmul.f32 %v2672, %v100
    %v2679 = vmul.f32 %v2675, %v100
    %v2680 = vadd.f32 %v2676, 1e-05
    %v2681 = vadd.f32 %v2677, 1e-05
    %v2682 = vadd.f32 %v2678, 1e-05
    %v2683 = vadd.f32 %v2679, 1e-05
    %v2684 = vrsqrt.pop %v2680
    %v2685 = vmul.f32 %v2684, %v2680
    %v2686 = vmul.f32 %v2685, %v2684
    %v2687 = vmul.f32 0.5, %v2686
    %v2688 = vsub.f32 1.5, %v2687
    %v2689 = vmul.f32 %v2684, %v2688
    %vm2690 = vweird.f32 %v2680
    %vm2691 = vweird.f32 %v2684
    %vm2692 = vmor %vm2690, %vm2691
    %v2693 = vsel %vm2692, %v2684, %v2689
    %v2694 = vrsqrt.pop %v2681
    %v2695 = vmul.f32 %v2694, %v2681
    %v2696 = vmul.f32 %v2695, %v2694
    %v2697 = vmul.f32 0.5, %v2696
    %v2698 = vsub.f32 1.5, %v2697
    %v2699 = vmul.f32 %v2694, %v2698
    %vm2700 = vweird.f32 %v2681
    %vm2701 = vweird.f32 %v2694
    %vm2702 = vmor %vm2700, %vm2701
    %v2703 = vsel %vm2702, %v2694, %v2699
    %v2704 = vrsqrt.pop %v2682
    %v2705 = vmul.f32 %v2704, %v2682
    %v2706 = vmul.f32 %v2705, %v2704
    %v2707 = vmul.f32 0.5, %v2706
    %v2708 = vsub.f32 1.5, %v2707
    %v2709 = vmul.f32 %v2704, %v2708
    %vm2710 = vweird.f32 %v2682
    %vm2711 = vweird.f32 %v2704
    %vm2712 = vmor %vm2710, %vm2711
    %v2713 = vsel %vm2712, %v2704, %v2709
    %v2714 = vrsqrt.pop %v2683
    %v2715 = vmul.f32 %v2714, %v2683
    %v2716 = vmul.f32 %v2715, %v2714
    %v2717 = vmul.f32 0.5, %v2716
    %v2718 = vsub.f32 1.5, %v2717
    %v2719 = vmul.f32 %v2714, %v2718
    %vm2720 = vweird.f32 %v2683
    %vm2721 = vweird.f32 %v2714
    %vm2722 = vmor %vm2720, %vm2721
    %v2723 = vsel %vm2722, %v2714, %v2719
    %v2724 = vmul.f32 %v2656, %v2693
    %v2725 = vmul.f32 %v2657, %v2703
    %v2726 = vmul.f32 %v2658, %v2713
    %v2727 = vmul.f32 %v2659, %v2723
    %v2728 = vperm.slane %v2638, 0
    %v2729 = vmul.f32 %v2724, %v2728
    %v2730 = vmul.f32 %v2725, %v2728
    %v2731 = vmul.f32 %v2726, %v2728
    %v2732 = vmul.f32 %v2727, %v2728
    %v2733 = vperm.slane %v2639, 0
    %v2734 = vadd.f32 %v2729, %v2733
    %v2735 = vadd.f32 %v2730, %v2733
    %v2736 = vadd.f32 %v2731, %v2733
    %v2737 = vadd.f32 %v2732, %v2733
    %v2738 = vld [vmem:[%s5] sm:$0xff]
    %v2739 = vld [vmem:[%s8 + $0xe0] sm:$0xf]
    %v2740 = vld [vmem:[%s8 + $0xe4] sm:$0xf]
    %v2741 = vld [vmem:[%s8 + $0xe8] sm:$0xf]
    %v2742 = vld [vmem:[%s8 + $0xec] sm:$0xf]
    %v2743 = vld [vmem:[%s8 + $0xf0] sm:$0xf]
    %v2744 = vld [vmem:[%s8 + $0xf4] sm:$0xf]
    %v2745 = vld [vmem:[%s8 + $0xf8] sm:$0xf]
    %v2746 = vld [vmem:[%s8 + $0xfc] sm:$0xf]
    %v2747 = vld [vmem:[%s8 + $0x100] sm:$0xf]
    %v2748 = vld [vmem:[%s8 + $0x104] sm:$0xf]
    %v2749 = vld [vmem:[%s8 + $0x108] sm:$0xf]
    %v2750 = vld [vmem:[%s8 + $0x10c] sm:$0xf]
    %v2751 = vld [vmem:[%s8 + $0x110] sm:$0xf]
    %v2752 = vld [vmem:[%s8 + $0x114] sm:$0xf]
    %v2753 = vld [vmem:[%s8 + $0x118] sm:$0xf]
    %v2754 = vld [vmem:[%s8 + $0x11c] sm:$0xf]
    %v2755 = vld [vmem:[%s8 + $0x120] sm:$0xf]
    %v2756 = vld [vmem:[%s8 + $0x124] sm:$0xf]
    %v2757 = vld [vmem:[%s8 + $0x128] sm:$0xf]
    %v2758 = vld [vmem:[%s8 + $0x12c] sm:$0xf]
    %v2759 = vld [vmem:[%s8 + $0x130] sm:$0xf]
    %v2760 = vld [vmem:[%s8 + $0x134] sm:$0xf]
    %v2761 = vld [vmem:[%s8 + $0x138] sm:$0xf]
    %v2762 = vld [vmem:[%s8 + $0x13c] sm:$0xf]
    %v2763 = vld [vmem:[%s8 + $0x140] sm:$0xf]
    %v2764 = vld [vmem:[%s8 + $0x144] sm:$0xf]
    %v2765 = vld [vmem:[%s8 + $0x148] sm:$0xf]
    %v2766 = vld [vmem:[%s8 + $0x14c] sm:$0xf]
    %v2767 = vld [vmem:[%s9 + $0x10] sm:$0x1]
    %v2768 = vld [vmem:[%s9 + $0x11] sm:$0x1]
    %v2769 = vld [vmem:[%s9 + $0x12] sm:$0x1]
    %v2770 = vld [vmem:[%s9 + $0x13] sm:$0x1]
    %v2771 = vld [vmem:[%s9 + $0x14] sm:$0x1]
    %v2772 = vld [vmem:[%s9 + $0x15] sm:$0x1]
    %v2773 = vld [vmem:[%s9 + $0x16] sm:$0x1]
    %v2774 = vld [vmem:[%s9 + $0x17] sm:$0x1]
    %v2775 = vsel %vm87, %v2734, 0.0
    %2776 = vadd.xlane.f32.xlu0 %v2775
    %v2777 = vpop.xlane.xlu0 %2776
    %v2778 = vsel %vm87, %v2735, 0.0
    %2779 = vadd.xlane.f32.xlu0 %v2778
    %v2780 = vpop.xlane.xlu0 %2779
    %v2781 = vsel %vm87, %v2736, 0.0
    %2782 = vadd.xlane.f32.xlu0 %v2781
    %v2783 = vpop.xlane.xlu0 %2782
    %v2784 = vsel %vm87, %v2737, 0.0
    %2785 = vadd.xlane.f32.xlu0 %v2784
    %v2786 = vpop.xlane.xlu0 %2785
    %v2787 = vmul.f32 %v2777, %v100
    %v2788 = vmul.f32 %v2780, %v100
    %v2789 = vmul.f32 %v2783, %v100
    %v2790 = vmul.f32 %v2786, %v100
    %v2791 = vsub.f32 %v2734, %v2787
    %v2792 = vsub.f32 %v2735, %v2788
    %v2793 = vsub.f32 %v2736, %v2789
    %v2794 = vsub.f32 %v2737, %v2790
    %v2795 = vmul.f32 %v2791, %v2791
    %v2796 = vmul.f32 %v2792, %v2792
    %v2797 = vmul.f32 %v2793, %v2793
    %v2798 = vmul.f32 %v2794, %v2794
    %v2799 = vsel %vm87, %v2795, 0.0
    %2800 = vadd.xlane.f32.xlu0 %v2799
    %v2801 = vpop.xlane.xlu0 %2800
    %v2802 = vsel %vm87, %v2796, 0.0
    %2803 = vadd.xlane.f32.xlu0 %v2802
    %v2804 = vpop.xlane.xlu0 %2803
    %v2805 = vsel %vm87, %v2797, 0.0
    %2806 = vadd.xlane.f32.xlu0 %v2805
    %v2807 = vpop.xlane.xlu0 %2806
    %v2808 = vsel %vm87, %v2798, 0.0
    %2809 = vadd.xlane.f32.xlu0 %v2808
    %v2810 = vpop.xlane.xlu0 %2809
    %v2811 = vmul.f32 %v2801, %v100
    %v2812 = vmul.f32 %v2804, %v100
    %v2813 = vmul.f32 %v2807, %v100
    %v2814 = vmul.f32 %v2810, %v100
    %v2815 = vadd.f32 %v2811, 1e-05
    %v2816 = vadd.f32 %v2812, 1e-05
    %v2817 = vadd.f32 %v2813, 1e-05
    %v2818 = vadd.f32 %v2814, 1e-05
    %v2819 = vrsqrt.pop %v2815
    %v2820 = vmul.f32 %v2819, %v2815
    %v2821 = vmul.f32 %v2820, %v2819
    %v2822 = vmul.f32 0.5, %v2821
    %v2823 = vsub.f32 1.5, %v2822
    %v2824 = vmul.f32 %v2819, %v2823
    %vm2825 = vweird.f32 %v2815
    %vm2826 = vweird.f32 %v2819
    %vm2827 = vmor %vm2825, %vm2826
    %v2828 = vsel %vm2827, %v2819, %v2824
    %v2829 = vrsqrt.pop %v2816
    %v2830 = vmul.f32 %v2829, %v2816
    %v2831 = vmul.f32 %v2830, %v2829
    %v2832 = vmul.f32 0.5, %v2831
    %v2833 = vsub.f32 1.5, %v2832
    %v2834 = vmul.f32 %v2829, %v2833
    %vm2835 = vweird.f32 %v2816
    %vm2836 = vweird.f32 %v2829
    %vm2837 = vmor %vm2835, %vm2836
    %v2838 = vsel %vm2837, %v2829, %v2834
    %v2839 = vrsqrt.pop %v2817
    %v2840 = vmul.f32 %v2839, %v2817
    %v2841 = vmul.f32 %v2840, %v2839
    %v2842 = vmul.f32 0.5, %v2841
    %v2843 = vsub.f32 1.5, %v2842
    %v2844 = vmul.f32 %v2839, %v2843
    %vm2845 = vweird.f32 %v2817
    %vm2846 = vweird.f32 %v2839
    %vm2847 = vmor %vm2845, %vm2846
    %v2848 = vsel %vm2847, %v2839, %v2844
    %v2849 = vrsqrt.pop %v2818
    %v2850 = vmul.f32 %v2849, %v2818
    %v2851 = vmul.f32 %v2850, %v2849
    %v2852 = vmul.f32 0.5, %v2851
    %v2853 = vsub.f32 1.5, %v2852
    %v2854 = vmul.f32 %v2849, %v2853
    %vm2855 = vweird.f32 %v2818
    %vm2856 = vweird.f32 %v2849
    %vm2857 = vmor %vm2855, %vm2856
    %v2858 = vsel %vm2857, %v2849, %v2854
    %v2859 = vmul.f32 %v2791, %v2828
    %v2860 = vmul.f32 %v2792, %v2838
    %v2861 = vmul.f32 %v2793, %v2848
    %v2862 = vmul.f32 %v2794, %v2858
    %v2863 = vperm.slane %v2767, 0
    %v2864 = vmul.f32 %v2859, %v2863
    %v2865 = vmul.f32 %v2860, %v2863
    %v2866 = vmul.f32 %v2861, %v2863
    %v2867 = vmul.f32 %v2862, %v2863
    %v2868 = vperm.slane %v2768, 0
    %v2869 = vadd.f32 %v2864, %v2868
    %v2870 = vadd.f32 %v2865, %v2868
    %v2871 = vadd.f32 %v2866, %v2868
    %v2872 = vadd.f32 %v2867, %v2868
    %v2873 = vpack.c.bf16 %v2870, %v2869
    %v2874 = vpack.c.bf16 %v2872, %v2871
    %v2875 = vperm.slane %v2771, 0
    %v2880 = vunpack.c.l.b16 %v2739
    %v2881 = vunpack.c.l.b16 %v2740
    %v2882 = vunpack.c.l.b16 %v2741
    %v2883 = vunpack.c.l.b16 %v2742
    %v2884 = vpack.c.b16 %v2881, %v2880
    %v2885 = vpack.c.b16 %v2883, %v2882
    %v2889 = vsel %vm87, %v2873, 0
    %v2892 = vsel %vm87, %v2874, 0
    %2894 = vmatpush.bf16.msra.mxu0 0
    %2895 = vmatpush.bf16.msra.mxu0 0
    %2896 = vmatpush.bf16.msra.mxu0 0
    %2897 = vmatpush.bf16.msra.mxu0 0
    %2898 = vmatpush.bf16.msra.mxu0 0
    %2899 = vmatpush.bf16.msra.mxu0 0
    %2900 = vmatpush.bf16.msra.mxu0 %v2885
    %2901 = vmatpush.bf16.msra.mxu0 %v2884
    %2902 = vmatmul.bf16.gmra.mxu0 %v2889
    %v2903 = vpop.f32.mrf.mxu0
    %v2904 = vadd.f32 %v2875, %v2903
    %v2905 = vpop.f32.mrf.mxu0
    %v2906 = vadd.f32 %v2875, %v2905
    %2907 = vmatmul.bf16.gmra.mxu0 %v2892
    %v2908 = vpop.f32.mrf.mxu0
    %v2909 = vadd.f32 %v2875, %v2908
    %v2910 = vpop.f32.mrf.mxu0
    %v2911 = vadd.f32 %v2875, %v2910
    %2912 = vdwg.mxu0
    %2917 = vrot.lane.b32.xlu0 %v2904, 120
    %v2918 = vpop.permute.xlu0 %2917
    %2919 = vrot.lane.b32.xlu0 %v2906, 120
    %v2920 = vpop.permute.xlu0 %2919
    %2921 = vrot.lane.b32.xlu0 %v2909, 120
    %v2922 = vpop.permute.xlu0 %2921
    %2923 = vrot.lane.b32.xlu0 %v2911, 120
    %v2924 = vpop.permute.xlu0 %2923
    %2929 = vrot.lane.b32.xlu0 %v2904, 112
    %v2930 = vpop.permute.xlu0 %2929
    %2931 = vrot.lane.b32.xlu0 %v2906, 112
    %v2932 = vpop.permute.xlu0 %2931
    %2933 = vrot.lane.b32.xlu0 %v2909, 112
    %v2934 = vpop.permute.xlu0 %2933
    %2935 = vrot.lane.b32.xlu0 %v2911, 112
    %v2936 = vpop.permute.xlu0 %2935
    %2941 = vrot.lane.b32.xlu0 %v2904, 104
    %v2942 = vpop.permute.xlu0 %2941
    %2943 = vrot.lane.b32.xlu0 %v2906, 104
    %v2944 = vpop.permute.xlu0 %2943
    %2945 = vrot.lane.b32.xlu0 %v2909, 104
    %v2946 = vpop.permute.xlu0 %2945
    %2947 = vrot.lane.b32.xlu0 %v2911, 104
    %v2948 = vpop.permute.xlu0 %2947
    %v2953 = vpack.c.bf16 %v2904, %v2904
    %v2954 = vpack.c.bf16 %v2906, %v2906
    %v2955 = vpack.c.bf16 %v2909, %v2909
    %v2956 = vpack.c.bf16 %v2911, %v2911
    %v2957 = vpack.c.bf16 %v2918, %v2918
    %v2958 = vpack.c.bf16 %v2920, %v2920
    %v2959 = vpack.c.bf16 %v2922, %v2922
    %v2960 = vpack.c.bf16 %v2924, %v2924
    %v2961 = vpack.c.bf16 %v2930, %v2930
    %v2962 = vpack.c.bf16 %v2932, %v2932
    %v2963 = vpack.c.bf16 %v2934, %v2934
    %v2964 = vpack.c.bf16 %v2936, %v2936
    %v2965 = vpack.c.bf16 %v2942, %v2942
    %v2966 = vpack.c.bf16 %v2944, %v2944
    %v2967 = vpack.c.bf16 %v2946, %v2946
    %v2968 = vpack.c.bf16 %v2948, %v2948
    %v2970 = vunpack.c.l.b16 %v2953
    %v2971 = vpack.c.b16 %v2970, %v2970
    %2972 = vrot.lane.b32.xlu0 %v2971, 96
    %v2973 = vpop.permute.xlu0 %2972
    %v2975 = vsel %vm209, %v2953, 0
    %v2978 = vsel %vm209, %v2973, 0
    %2980 = vmatpush.bf16.xpose.msra.mxu0 0
    %2981 = vmatpush.bf16.xpose.msra.mxu0 0
    %2982 = vmatpush.bf16.xpose.msra.mxu0 0
    %2983 = vmatpush.bf16.xpose.msra.mxu0 0
    %2984 = vmatpush.bf16.xpose.msra.mxu0 0
    %2985 = vmatpush.bf16.xpose.msra.mxu0 0
    %2986 = vmatpush.bf16.xpose.msra.mxu0 0
    %2987 = vmatpush.bf16.xpose.msra.mxu0 %v2978
    %2988 = vmatmul.bf16.gmra.mxu0 %v2975
    %v2989 = vpop.f32.mrf.mxu0
    %v2990 = vadd.f32 0.0, %v2989
    %v2991 = vpop.f32.mrf.mxu0
    %2992 = vdwg.mxu0
    %v2994 = vunpack.c.l.b16 %v2954
    %v2995 = vpack.c.b16 %v2994, %v2994
    %2996 = vrot.lane.b32.xlu0 %v2995, 96
    %v2997 = vpop.permute.xlu0 %2996
    %v2999 = vsel %vm209, %v2954, 0
    %v3002 = vsel %vm209, %v2997, 0
    %3004 = vmatpush.bf16.xpose.msra.mxu0 0
    %3005 = vmatpush.bf16.xpose.msra.mxu0 0
    %3006 = vmatpush.bf16.xpose.msra.mxu0 0
    %3007 = vmatpush.bf16.xpose.msra.mxu0 0
    %3008 = vmatpush.bf16.xpose.msra.mxu0 0
    %3009 = vmatpush.bf16.xpose.msra.mxu0 0
    %3010 = vmatpush.bf16.xpose.msra.mxu0 0
    %3011 = vmatpush.bf16.xpose.msra.mxu0 %v3002
    %3012 = vmatmul.bf16.gmra.mxu0 %v2999
    %v3013 = vpop.f32.mrf.mxu0
    %v3014 = vadd.f32 0.0, %v3013
    %v3015 = vpop.f32.mrf.mxu0
    %3016 = vdwg.mxu0
    %v3018 = vunpack.c.l.b16 %v2955
    %v3019 = vpack.c.b16 %v3018, %v3018
    %3020 = vrot.lane.b32.xlu0 %v3019, 96
    %v3021 = vpop.permute.xlu0 %3020
    %v3023 = vsel %vm209, %v2955, 0
    %v3026 = vsel %vm209, %v3021, 0
    %3028 = vmatpush.bf16.xpose.msra.mxu0 0
    %3029 = vmatpush.bf16.xpose.msra.mxu0 0
    %3030 = vmatpush.bf16.xpose.msra.mxu0 0
    %3031 = vmatpush.bf16.xpose.msra.mxu0 0
    %3032 = vmatpush.bf16.xpose.msra.mxu0 0
    %3033 = vmatpush.bf16.xpose.msra.mxu0 0
    %3034 = vmatpush.bf16.xpose.msra.mxu0 0
    %3035 = vmatpush.bf16.xpose.msra.mxu0 %v3026
    %3036 = vmatmul.bf16.gmra.mxu0 %v3023
    %v3037 = vpop.f32.mrf.mxu0
    %v3038 = vadd.f32 0.0, %v3037
    %v3039 = vpop.f32.mrf.mxu0
    %3040 = vdwg.mxu0
    %v3042 = vunpack.c.l.b16 %v2956
    %v3043 = vpack.c.b16 %v3042, %v3042
    %3044 = vrot.lane.b32.xlu0 %v3043, 96
    %v3045 = vpop.permute.xlu0 %3044
    %v3047 = vsel %vm209, %v2956, 0
    %v3050 = vsel %vm209, %v3045, 0
    %3052 = vmatpush.bf16.xpose.msra.mxu0 0
    %3053 = vmatpush.bf16.xpose.msra.mxu0 0
    %3054 = vmatpush.bf16.xpose.msra.mxu0 0
    %3055 = vmatpush.bf16.xpose.msra.mxu0 0
    %3056 = vmatpush.bf16.xpose.msra.mxu0 0
    %3057 = vmatpush.bf16.xpose.msra.mxu0 0
    %3058 = vmatpush.bf16.xpose.msra.mxu0 0
    %3059 = vmatpush.bf16.xpose.msra.mxu0 %v3050
    %3060 = vmatmul.bf16.gmra.mxu0 %v3047
    %v3061 = vpop.f32.mrf.mxu0
    %v3062 = vadd.f32 0.0, %v3061
    %v3063 = vpop.f32.mrf.mxu0
    %3064 = vdwg.mxu0
    %v3066 = vunpack.c.l.b16 %v2957
    %v3067 = vpack.c.b16 %v3066, %v3066
    %3068 = vrot.lane.b32.xlu0 %v3067, 96
    %v3069 = vpop.permute.xlu0 %3068
    %v3071 = vsel %vm209, %v2957, 0
    %v3074 = vsel %vm209, %v3069, 0
    %3076 = vmatpush.bf16.xpose.msra.mxu0 0
    %3077 = vmatpush.bf16.xpose.msra.mxu0 0
    %3078 = vmatpush.bf16.xpose.msra.mxu0 0
    %3079 = vmatpush.bf16.xpose.msra.mxu0 0
    %3080 = vmatpush.bf16.xpose.msra.mxu0 0
    %3081 = vmatpush.bf16.xpose.msra.mxu0 0
    %3082 = vmatpush.bf16.xpose.msra.mxu0 0
    %3083 = vmatpush.bf16.xpose.msra.mxu0 %v3074
    %3084 = vmatmul.bf16.gmra.mxu0 %v3071
    %v3085 = vpop.f32.mrf.mxu0
    %v3086 = vadd.f32 0.0, %v3085
    %v3087 = vpop.f32.mrf.mxu0
    %3088 = vdwg.mxu0
    %v3090 = vunpack.c.l.b16 %v2958
    %v3091 = vpack.c.b16 %v3090, %v3090
    %3092 = vrot.lane.b32.xlu0 %v3091, 96
    %v3093 = vpop.permute.xlu0 %3092
    %v3095 = vsel %vm209, %v2958, 0
    %v3098 = vsel %vm209, %v3093, 0
    %3100 = vmatpush.bf16.xpose.msra.mxu0 0
    %3101 = vmatpush.bf16.xpose.msra.mxu0 0
    %3102 = vmatpush.bf16.xpose.msra.mxu0 0
    %3103 = vmatpush.bf16.xpose.msra.mxu0 0
    %3104 = vmatpush.bf16.xpose.msra.mxu0 0
    %3105 = vmatpush.bf16.xpose.msra.mxu0 0
    %3106 = vmatpush.bf16.xpose.msra.mxu0 0
    %3107 = vmatpush.bf16.xpose.msra.mxu0 %v3098
    %3108 = vmatmul.bf16.gmra.mxu0 %v3095
    %v3109 = vpop.f32.mrf.mxu0
    %v3110 = vadd.f32 0.0, %v3109
    %v3111 = vpop.f32.mrf.mxu0
    %3112 = vdwg.mxu0
    %v3114 = vunpack.c.l.b16 %v2959
    %v3115 = vpack.c.b16 %v3114, %v3114
    %3116 = vrot.lane.b32.xlu0 %v3115, 96
    %v3117 = vpop.permute.xlu0 %3116
    %v3119 = vsel %vm209, %v2959, 0
    %v3122 = vsel %vm209, %v3117, 0
    %3124 = vmatpush.bf16.xpose.msra.mxu0 0
    %3125 = vmatpush.bf16.xpose.msra.mxu0 0
    %3126 = vmatpush.bf16.xpose.msra.mxu0 0
    %3127 = vmatpush.bf16.xpose.msra.mxu0 0
    %3128 = vmatpush.bf16.xpose.msra.mxu0 0
    %3129 = vmatpush.bf16.xpose.msra.mxu0 0
    %3130 = vmatpush.bf16.xpose.msra.mxu0 0
    %3131 = vmatpush.bf16.xpose.msra.mxu0 %v3122
    %3132 = vmatmul.bf16.gmra.mxu0 %v3119
    %v3133 = vpop.f32.mrf.mxu0
    %v3134 = vadd.f32 0.0, %v3133
    %v3135 = vpop.f32.mrf.mxu0
    %3136 = vdwg.mxu0
    %v3138 = vunpack.c.l.b16 %v2960
    %v3139 = vpack.c.b16 %v3138, %v3138
    %3140 = vrot.lane.b32.xlu0 %v3139, 96
    %v3141 = vpop.permute.xlu0 %3140
    %v3143 = vsel %vm209, %v2960, 0
    %v3146 = vsel %vm209, %v3141, 0
    %3148 = vmatpush.bf16.xpose.msra.mxu0 0
    %3149 = vmatpush.bf16.xpose.msra.mxu0 0
    %3150 = vmatpush.bf16.xpose.msra.mxu0 0
    %3151 = vmatpush.bf16.xpose.msra.mxu0 0
    %3152 = vmatpush.bf16.xpose.msra.mxu0 0
    %3153 = vmatpush.bf16.xpose.msra.mxu0 0
    %3154 = vmatpush.bf16.xpose.msra.mxu0 0
    %3155 = vmatpush.bf16.xpose.msra.mxu0 %v3146
    %3156 = vmatmul.bf16.gmra.mxu0 %v3143
    %v3157 = vpop.f32.mrf.mxu0
    %v3158 = vadd.f32 0.0, %v3157
    %v3159 = vpop.f32.mrf.mxu0
    %3160 = vdwg.mxu0
    %v3162 = vunpack.c.l.b16 %v2961
    %v3163 = vpack.c.b16 %v3162, %v3162
    %3164 = vrot.lane.b32.xlu0 %v3163, 96
    %v3165 = vpop.permute.xlu0 %3164
    %v3167 = vsel %vm209, %v2961, 0
    %v3170 = vsel %vm209, %v3165, 0
    %3172 = vmatpush.bf16.xpose.msra.mxu0 0
    %3173 = vmatpush.bf16.xpose.msra.mxu0 0
    %3174 = vmatpush.bf16.xpose.msra.mxu0 0
    %3175 = vmatpush.bf16.xpose.msra.mxu0 0
    %3176 = vmatpush.bf16.xpose.msra.mxu0 0
    %3177 = vmatpush.bf16.xpose.msra.mxu0 0
    %3178 = vmatpush.bf16.xpose.msra.mxu0 0
    %3179 = vmatpush.bf16.xpose.msra.mxu0 %v3170
    %3180 = vmatmul.bf16.gmra.mxu0 %v3167
    %v3181 = vpop.f32.mrf.mxu0
    %v3182 = vadd.f32 0.0, %v3181
    %v3183 = vpop.f32.mrf.mxu0
    %3184 = vdwg.mxu0
    %v3186 = vunpack.c.l.b16 %v2962
    %v3187 = vpack.c.b16 %v3186, %v3186
    %3188 = vrot.lane.b32.xlu0 %v3187, 96
    %v3189 = vpop.permute.xlu0 %3188
    %v3191 = vsel %vm209, %v2962, 0
    %v3194 = vsel %vm209, %v3189, 0
    %3196 = vmatpush.bf16.xpose.msra.mxu0 0
    %3197 = vmatpush.bf16.xpose.msra.mxu0 0
    %3198 = vmatpush.bf16.xpose.msra.mxu0 0
    %3199 = vmatpush.bf16.xpose.msra.mxu0 0
    %3200 = vmatpush.bf16.xpose.msra.mxu0 0
    %3201 = vmatpush.bf16.xpose.msra.mxu0 0
    %3202 = vmatpush.bf16.xpose.msra.mxu0 0
    %3203 = vmatpush.bf16.xpose.msra.mxu0 %v3194
    %3204 = vmatmul.bf16.gmra.mxu0 %v3191
    %v3205 = vpop.f32.mrf.mxu0
    %v3206 = vadd.f32 0.0, %v3205
    %v3207 = vpop.f32.mrf.mxu0
    %3208 = vdwg.mxu0
    %v3210 = vunpack.c.l.b16 %v2963
    %v3211 = vpack.c.b16 %v3210, %v3210
    %3212 = vrot.lane.b32.xlu0 %v3211, 96
    %v3213 = vpop.permute.xlu0 %3212
    %v3215 = vsel %vm209, %v2963, 0
    %v3218 = vsel %vm209, %v3213, 0
    %3220 = vmatpush.bf16.xpose.msra.mxu0 0
    %3221 = vmatpush.bf16.xpose.msra.mxu0 0
    %3222 = vmatpush.bf16.xpose.msra.mxu0 0
    %3223 = vmatpush.bf16.xpose.msra.mxu0 0
    %3224 = vmatpush.bf16.xpose.msra.mxu0 0
    %3225 = vmatpush.bf16.xpose.msra.mxu0 0
    %3226 = vmatpush.bf16.xpose.msra.mxu0 0
    %3227 = vmatpush.bf16.xpose.msra.mxu0 %v3218
    %3228 = vmatmul.bf16.gmra.mxu0 %v3215
    %v3229 = vpop.f32.mrf.mxu0
    %v3230 = vadd.f32 0.0, %v3229
    %v3231 = vpop.f32.mrf.mxu0
    %3232 = vdwg.mxu0
    %v3234 = vunpack.c.l.b16 %v2964
    %v3235 = vpack.c.b16 %v3234, %v3234
    %3236 = vrot.lane.b32.xlu0 %v3235, 96
    %v3237 = vpop.permute.xlu0 %3236
    %v3239 = vsel %vm209, %v2964, 0
    %v3242 = vsel %vm209, %v3237, 0
    %3244 = vmatpush.bf16.xpose.msra.mxu0 0
    %3245 = vmatpush.bf16.xpose.msra.mxu0 0
    %3246 = vmatpush.bf16.xpose.msra.mxu0 0
    %3247 = vmatpush.bf16.xpose.msra.mxu0 0
    %3248 = vmatpush.bf16.xpose.msra.mxu0 0
    %3249 = vmatpush.bf16.xpose.msra.mxu0 0
    %3250 = vmatpush.bf16.xpose.msra.mxu0 0
    %3251 = vmatpush.bf16.xpose.msra.mxu0 %v3242
    %3252 = vmatmul.bf16.gmra.mxu0 %v3239
    %v3253 = vpop.f32.mrf.mxu0
    %v3254 = vadd.f32 0.0, %v3253
    %v3255 = vpop.f32.mrf.mxu0
    %3256 = vdwg.mxu0
    %v3258 = vunpack.c.l.b16 %v2965
    %v3259 = vpack.c.b16 %v3258, %v3258
    %3260 = vrot.lane.b32.xlu0 %v3259, 96
    %v3261 = vpop.permute.xlu0 %3260
    %v3263 = vsel %vm209, %v2965, 0
    %v3266 = vsel %vm209, %v3261, 0
    %3268 = vmatpush.bf16.xpose.msra.mxu0 0
    %3269 = vmatpush.bf16.xpose.msra.mxu0 0
    %3270 = vmatpush.bf16.xpose.msra.mxu0 0
    %3271 = vmatpush.bf16.xpose.msra.mxu0 0
    %3272 = vmatpush.bf16.xpose.msra.mxu0 0
    %3273 = vmatpush.bf16.xpose.msra.mxu0 0
    %3274 = vmatpush.bf16.xpose.msra.mxu0 0
    %3275 = vmatpush.bf16.xpose.msra.mxu0 %v3266
    %3276 = vmatmul.bf16.gmra.mxu0 %v3263
    %v3277 = vpop.f32.mrf.mxu0
    %v3278 = vadd.f32 0.0, %v3277
    %v3279 = vpop.f32.mrf.mxu0
    %3280 = vdwg.mxu0
    %v3282 = vunpack.c.l.b16 %v2966
    %v3283 = vpack.c.b16 %v3282, %v3282
    %3284 = vrot.lane.b32.xlu0 %v3283, 96
    %v3285 = vpop.permute.xlu0 %3284
    %v3287 = vsel %vm209, %v2966, 0
    %v3290 = vsel %vm209, %v3285, 0
    %3292 = vmatpush.bf16.xpose.msra.mxu0 0
    %3293 = vmatpush.bf16.xpose.msra.mxu0 0
    %3294 = vmatpush.bf16.xpose.msra.mxu0 0
    %3295 = vmatpush.bf16.xpose.msra.mxu0 0
    %3296 = vmatpush.bf16.xpose.msra.mxu0 0
    %3297 = vmatpush.bf16.xpose.msra.mxu0 0
    %3298 = vmatpush.bf16.xpose.msra.mxu0 0
    %3299 = vmatpush.bf16.xpose.msra.mxu0 %v3290
    %3300 = vmatmul.bf16.gmra.mxu0 %v3287
    %v3301 = vpop.f32.mrf.mxu0
    %v3302 = vadd.f32 0.0, %v3301
    %v3303 = vpop.f32.mrf.mxu0
    %3304 = vdwg.mxu0
    %v3306 = vunpack.c.l.b16 %v2967
    %v3307 = vpack.c.b16 %v3306, %v3306
    %3308 = vrot.lane.b32.xlu0 %v3307, 96
    %v3309 = vpop.permute.xlu0 %3308
    %v3311 = vsel %vm209, %v2967, 0
    %v3314 = vsel %vm209, %v3309, 0
    %3316 = vmatpush.bf16.xpose.msra.mxu0 0
    %3317 = vmatpush.bf16.xpose.msra.mxu0 0
    %3318 = vmatpush.bf16.xpose.msra.mxu0 0
    %3319 = vmatpush.bf16.xpose.msra.mxu0 0
    %3320 = vmatpush.bf16.xpose.msra.mxu0 0
    %3321 = vmatpush.bf16.xpose.msra.mxu0 0
    %3322 = vmatpush.bf16.xpose.msra.mxu0 0
    %3323 = vmatpush.bf16.xpose.msra.mxu0 %v3314
    %3324 = vmatmul.bf16.gmra.mxu0 %v3311
    %v3325 = vpop.f32.mrf.mxu0
    %v3326 = vadd.f32 0.0, %v3325
    %v3327 = vpop.f32.mrf.mxu0
    %3328 = vdwg.mxu0
    %v3330 = vunpack.c.l.b16 %v2968
    %v3331 = vpack.c.b16 %v3330, %v3330
    %3332 = vrot.lane.b32.xlu0 %v3331, 96
    %v3333 = vpop.permute.xlu0 %3332
    %v3335 = vsel %vm209, %v2968, 0
    %v3338 = vsel %vm209, %v3333, 0
    %3340 = vmatpush.bf16.xpose.msra.mxu0 0
    %3341 = vmatpush.bf16.xpose.msra.mxu0 0
    %3342 = vmatpush.bf16.xpose.msra.mxu0 0
    %3343 = vmatpush.bf16.xpose.msra.mxu0 0
    %3344 = vmatpush.bf16.xpose.msra.mxu0 0
    %3345 = vmatpush.bf16.xpose.msra.mxu0 0
    %3346 = vmatpush.bf16.xpose.msra.mxu0 0
    %3347 = vmatpush.bf16.xpose.msra.mxu0 %v3338
    %3348 = vmatmul.bf16.gmra.mxu0 %v3335
    %v3349 = vpop.f32.mrf.mxu0
    %v3350 = vadd.f32 0.0, %v3349
    %v3351 = vpop.f32.mrf.mxu0
    %3352 = vdwg.mxu0
    %v3353 = vmul.f32 %v2990, 0.35355338
    %v3354 = vmul.f32 %v3014, 0.35355338
    %v3355 = vmul.f32 %v3038, 0.35355338
    %v3356 = vmul.f32 %v3062, 0.35355338
    %v3357 = vmul.f32 %v3086, 0.35355338
    %v3358 = vmul.f32 %v3110, 0.35355338
    %v3359 = vmul.f32 %v3134, 0.35355338
    %v3360 = vmul.f32 %v3158, 0.35355338
    %v3361 = vmul.f32 %v3182, 0.35355338
    %v3362 = vmul.f32 %v3206, 0.35355338
    %v3363 = vmul.f32 %v3230, 0.35355338
    %v3364 = vmul.f32 %v3254, 0.35355338
    %v3365 = vmul.f32 %v3278, 0.35355338
    %v3366 = vmul.f32 %v3302, 0.35355338
    %v3367 = vmul.f32 %v3326, 0.35355338
    %v3368 = vmul.f32 %v3350, 0.35355338
    %v3369 = vadd.f32 %v3353, %v2738
    %v3370 = vadd.f32 %v3354, %v2738
    %v3371 = vadd.f32 %v3355, %v2738
    %v3372 = vadd.f32 %v3356, %v2738
    %v3373 = vadd.f32 %v3357, %v2738
    %v3374 = vadd.f32 %v3358, %v2738
    %v3375 = vadd.f32 %v3359, %v2738
    %v3376 = vadd.f32 %v3360, %v2738
    %v3377 = vadd.f32 %v3361, %v2738
    %v3378 = vadd.f32 %v3362, %v2738
    %v3379 = vadd.f32 %v3363, %v2738
    %v3380 = vadd.f32 %v3364, %v2738
    %v3381 = vadd.f32 %v3365, %v2738
    %v3382 = vadd.f32 %v3366, %v2738
    %v3383 = vadd.f32 %v3367, %v2738
    %v3384 = vadd.f32 %v3368, %v2738
    %v3385 = vsel %vm209, %v3369, -inf
    %3386 = vmax.xlane.f32.xlu0 %v3385
    %v3387 = vpop.xlane.xlu0 %3386
    %v3388 = vsel %vm209, %v3370, -inf
    %3389 = vmax.xlane.f32.xlu0 %v3388
    %v3390 = vpop.xlane.xlu0 %3389
    %v3391 = vsel %vm209, %v3371, -inf
    %3392 = vmax.xlane.f32.xlu0 %v3391
    %v3393 = vpop.xlane.xlu0 %3392
    %v3394 = vsel %vm209, %v3372, -inf
    %3395 = vmax.xlane.f32.xlu0 %v3394
    %v3396 = vpop.xlane.xlu0 %3395
    %v3397 = vsel %vm209, %v3373, -inf
    %3398 = vmax.xlane.f32.xlu0 %v3397
    %v3399 = vpop.xlane.xlu0 %3398
    %v3400 = vsel %vm209, %v3374, -inf
    %3401 = vmax.xlane.f32.xlu0 %v3400
    %v3402 = vpop.xlane.xlu0 %3401
    %v3403 = vsel %vm209, %v3375, -inf
    %3404 = vmax.xlane.f32.xlu0 %v3403
    %v3405 = vpop.xlane.xlu0 %3404
    %v3406 = vsel %vm209, %v3376, -inf
    %3407 = vmax.xlane.f32.xlu0 %v3406
    %v3408 = vpop.xlane.xlu0 %3407
    %v3409 = vsel %vm209, %v3377, -inf
    %3410 = vmax.xlane.f32.xlu0 %v3409
    %v3411 = vpop.xlane.xlu0 %3410
    %v3412 = vsel %vm209, %v3378, -inf
    %3413 = vmax.xlane.f32.xlu0 %v3412
    %v3414 = vpop.xlane.xlu0 %3413
    %v3415 = vsel %vm209, %v3379, -inf
    %3416 = vmax.xlane.f32.xlu0 %v3415
    %v3417 = vpop.xlane.xlu0 %3416
    %v3418 = vsel %vm209, %v3380, -inf
    %3419 = vmax.xlane.f32.xlu0 %v3418
    %v3420 = vpop.xlane.xlu0 %3419
    %v3421 = vsel %vm209, %v3381, -inf
    %3422 = vmax.xlane.f32.xlu0 %v3421
    %v3423 = vpop.xlane.xlu0 %3422
    %v3424 = vsel %vm209, %v3382, -inf
    %3425 = vmax.xlane.f32.xlu0 %v3424
    %v3426 = vpop.xlane.xlu0 %3425
    %v3427 = vsel %vm209, %v3383, -inf
    %3428 = vmax.xlane.f32.xlu0 %v3427
    %v3429 = vpop.xlane.xlu0 %3428
    %v3430 = vsel %vm209, %v3384, -inf
    %3431 = vmax.xlane.f32.xlu0 %v3430
    %v3432 = vpop.xlane.xlu0 %3431
    %v3433 = vsub.f32 %v3369, %v3387
    %v3434 = vsub.f32 %v3370, %v3390
    %v3435 = vsub.f32 %v3371, %v3393
    %v3436 = vsub.f32 %v3372, %v3396
    %v3437 = vsub.f32 %v3373, %v3399
    %v3438 = vsub.f32 %v3374, %v3402
    %v3439 = vsub.f32 %v3375, %v3405
    %v3440 = vsub.f32 %v3376, %v3408
    %v3441 = vsub.f32 %v3377, %v3411
    %v3442 = vsub.f32 %v3378, %v3414
    %v3443 = vsub.f32 %v3379, %v3417
    %v3444 = vsub.f32 %v3380, %v3420
    %v3445 = vsub.f32 %v3381, %v3423
    %v3446 = vsub.f32 %v3382, %v3426
    %v3447 = vsub.f32 %v3383, %v3429
    %v3448 = vsub.f32 %v3384, %v3432
    %v3449 = vmul.f32 %v3433, 1.442695
    %v3450 = vpow.pop %v3449
    %v3451 = vmul.f32 %v3434, 1.442695
    %v3452 = vpow.pop %v3451
    %v3453 = vmul.f32 %v3435, 1.442695
    %v3454 = vpow.pop %v3453
    %v3455 = vmul.f32 %v3436, 1.442695
    %v3456 = vpow.pop %v3455
    %v3457 = vmul.f32 %v3437, 1.442695
    %v3458 = vpow.pop %v3457
    %v3459 = vmul.f32 %v3438, 1.442695
    %v3460 = vpow.pop %v3459
    %v3461 = vmul.f32 %v3439, 1.442695
    %v3462 = vpow.pop %v3461
    %v3463 = vmul.f32 %v3440, 1.442695
    %v3464 = vpow.pop %v3463
    %v3465 = vmul.f32 %v3441, 1.442695
    %v3466 = vpow.pop %v3465
    %v3467 = vmul.f32 %v3442, 1.442695
    %v3468 = vpow.pop %v3467
    %v3469 = vmul.f32 %v3443, 1.442695
    %v3470 = vpow.pop %v3469
    %v3471 = vmul.f32 %v3444, 1.442695
    %v3472 = vpow.pop %v3471
    %v3473 = vmul.f32 %v3445, 1.442695
    %v3474 = vpow.pop %v3473
    %v3475 = vmul.f32 %v3446, 1.442695
    %v3476 = vpow.pop %v3475
    %v3477 = vmul.f32 %v3447, 1.442695
    %v3478 = vpow.pop %v3477
    %v3479 = vmul.f32 %v3448, 1.442695
    %v3480 = vpow.pop %v3479
    %v3481 = vsel %vm209, %v3450, 0.0
    %3482 = vadd.xlane.f32.xlu0 %v3481
    %v3483 = vpop.xlane.xlu0 %3482
    %v3484 = vsel %vm209, %v3452, 0.0
    %3485 = vadd.xlane.f32.xlu0 %v3484
    %v3486 = vpop.xlane.xlu0 %3485
    %v3487 = vsel %vm209, %v3454, 0.0
    %3488 = vadd.xlane.f32.xlu0 %v3487
    %v3489 = vpop.xlane.xlu0 %3488
    %v3490 = vsel %vm209, %v3456, 0.0
    %3491 = vadd.xlane.f32.xlu0 %v3490
    %v3492 = vpop.xlane.xlu0 %3491
    %v3493 = vsel %vm209, %v3458, 0.0
    %3494 = vadd.xlane.f32.xlu0 %v3493
    %v3495 = vpop.xlane.xlu0 %3494
    %v3496 = vsel %vm209, %v3460, 0.0
    %3497 = vadd.xlane.f32.xlu0 %v3496
    %v3498 = vpop.xlane.xlu0 %3497
    %v3499 = vsel %vm209, %v3462, 0.0
    %3500 = vadd.xlane.f32.xlu0 %v3499
    %v3501 = vpop.xlane.xlu0 %3500
    %v3502 = vsel %vm209, %v3464, 0.0
    %3503 = vadd.xlane.f32.xlu0 %v3502
    %v3504 = vpop.xlane.xlu0 %3503
    %v3505 = vsel %vm209, %v3466, 0.0
    %3506 = vadd.xlane.f32.xlu0 %v3505
    %v3507 = vpop.xlane.xlu0 %3506
    %v3508 = vsel %vm209, %v3468, 0.0
    %3509 = vadd.xlane.f32.xlu0 %v3508
    %v3510 = vpop.xlane.xlu0 %3509
    %v3511 = vsel %vm209, %v3470, 0.0
    %3512 = vadd.xlane.f32.xlu0 %v3511
    %v3513 = vpop.xlane.xlu0 %3512
    %v3514 = vsel %vm209, %v3472, 0.0
    %3515 = vadd.xlane.f32.xlu0 %v3514
    %v3516 = vpop.xlane.xlu0 %3515
    %v3517 = vsel %vm209, %v3474, 0.0
    %3518 = vadd.xlane.f32.xlu0 %v3517
    %v3519 = vpop.xlane.xlu0 %3518
    %v3520 = vsel %vm209, %v3476, 0.0
    %3521 = vadd.xlane.f32.xlu0 %v3520
    %v3522 = vpop.xlane.xlu0 %3521
    %v3523 = vsel %vm209, %v3478, 0.0
    %3524 = vadd.xlane.f32.xlu0 %v3523
    %v3525 = vpop.xlane.xlu0 %3524
    %v3526 = vsel %vm209, %v3480, 0.0
    %3527 = vadd.xlane.f32.xlu0 %v3526
    %v3528 = vpop.xlane.xlu0 %3527
    %v3529 = vrcp.pop %v3483
    %v3530 = vrcp.pop %v3486
    %v3531 = vrcp.pop %v3489
    %v3532 = vrcp.pop %v3492
    %v3533 = vrcp.pop %v3495
    %v3534 = vrcp.pop %v3498
    %v3535 = vrcp.pop %v3501
    %v3536 = vrcp.pop %v3504
    %v3537 = vrcp.pop %v3507
    %v3538 = vrcp.pop %v3510
    %v3539 = vrcp.pop %v3513
    %v3540 = vrcp.pop %v3516
    %v3541 = vrcp.pop %v3519
    %v3542 = vrcp.pop %v3522
    %v3543 = vrcp.pop %v3525
    %v3544 = vrcp.pop %v3528
    %v3545 = vmul.f32 %v3450, %v3529
    %v3546 = vmul.f32 %v3452, %v3530
    %v3547 = vmul.f32 %v3454, %v3531
    %v3548 = vmul.f32 %v3456, %v3532
    %v3549 = vmul.f32 %v3458, %v3533
    %v3550 = vmul.f32 %v3460, %v3534
    %v3551 = vmul.f32 %v3462, %v3535
    %v3552 = vmul.f32 %v3464, %v3536
    %v3553 = vmul.f32 %v3466, %v3537
    %v3554 = vmul.f32 %v3468, %v3538
    %v3555 = vmul.f32 %v3470, %v3539
    %v3556 = vmul.f32 %v3472, %v3540
    %v3557 = vmul.f32 %v3474, %v3541
    %v3558 = vmul.f32 %v3476, %v3542
    %v3559 = vmul.f32 %v3478, %v3543
    %v3560 = vmul.f32 %v3480, %v3544
    %v3561 = vpack.c.bf16 %v3545, %v3545
    %v3562 = vpack.c.bf16 %v3546, %v3546
    %v3563 = vpack.c.bf16 %v3547, %v3547
    %v3564 = vpack.c.bf16 %v3548, %v3548
    %v3565 = vpack.c.bf16 %v3549, %v3549
    %v3566 = vpack.c.bf16 %v3550, %v3550
    %v3567 = vpack.c.bf16 %v3551, %v3551
    %v3568 = vpack.c.bf16 %v3552, %v3552
    %v3569 = vpack.c.bf16 %v3553, %v3553
    %v3570 = vpack.c.bf16 %v3554, %v3554
    %v3571 = vpack.c.bf16 %v3555, %v3555
    %v3572 = vpack.c.bf16 %v3556, %v3556
    %v3573 = vpack.c.bf16 %v3557, %v3557
    %v3574 = vpack.c.bf16 %v3558, %v3558
    %v3575 = vpack.c.bf16 %v3559, %v3559
    %v3576 = vpack.c.bf16 %v3560, %v3560
    %3577 = vrot.lane.b32.xlu0 %v2971, 64
    %v3578 = vpop.permute.xlu0 %3577
    %v3580 = vsel %vm209, %v3561, 0
    %v3583 = vsel %vm514, %v3578, 0
    %3585 = vmatpush.bf16.msra.mxu0 0
    %3586 = vmatpush.bf16.msra.mxu0 0
    %3587 = vmatpush.bf16.msra.mxu0 0
    %3588 = vmatpush.bf16.msra.mxu0 0
    %3589 = vmatpush.bf16.msra.mxu0 0
    %3590 = vmatpush.bf16.msra.mxu0 0
    %3591 = vmatpush.bf16.msra.mxu0 0
    %3592 = vmatpush.bf16.msra.mxu0 %v3583
    %3593 = vmatmul.bf16.gmra.mxu0 %v3580
    %v3594 = vpop.f32.mrf.mxu0
    %v3595 = vadd.f32 0.0, %v3594
    %v3596 = vpop.f32.mrf.mxu0
    %3597 = vdwg.mxu0
    %3598 = vrot.lane.b32.xlu0 %v2995, 64
    %v3599 = vpop.permute.xlu0 %3598
    %v3601 = vsel %vm209, %v3562, 0
    %v3604 = vsel %vm514, %v3599, 0
    %3606 = vmatpush.bf16.msra.mxu0 0
    %3607 = vmatpush.bf16.msra.mxu0 0
    %3608 = vmatpush.bf16.msra.mxu0 0
    %3609 = vmatpush.bf16.msra.mxu0 0
    %3610 = vmatpush.bf16.msra.mxu0 0
    %3611 = vmatpush.bf16.msra.mxu0 0
    %3612 = vmatpush.bf16.msra.mxu0 0
    %3613 = vmatpush.bf16.msra.mxu0 %v3604
    %3614 = vmatmul.bf16.gmra.mxu0 %v3601
    %v3615 = vpop.f32.mrf.mxu0
    %v3616 = vadd.f32 0.0, %v3615
    %v3617 = vpop.f32.mrf.mxu0
    %3618 = vdwg.mxu0
    %3619 = vrot.lane.b32.xlu0 %v3019, 64
    %v3620 = vpop.permute.xlu0 %3619
    %v3622 = vsel %vm209, %v3563, 0
    %v3625 = vsel %vm514, %v3620, 0
    %3627 = vmatpush.bf16.msra.mxu0 0
    %3628 = vmatpush.bf16.msra.mxu0 0
    %3629 = vmatpush.bf16.msra.mxu0 0
    %3630 = vmatpush.bf16.msra.mxu0 0
    %3631 = vmatpush.bf16.msra.mxu0 0
    %3632 = vmatpush.bf16.msra.mxu0 0
    %3633 = vmatpush.bf16.msra.mxu0 0
    %3634 = vmatpush.bf16.msra.mxu0 %v3625
    %3635 = vmatmul.bf16.gmra.mxu0 %v3622
    %v3636 = vpop.f32.mrf.mxu0
    %v3637 = vadd.f32 0.0, %v3636
    %v3638 = vpop.f32.mrf.mxu0
    %3639 = vdwg.mxu0
    %3640 = vrot.lane.b32.xlu0 %v3043, 64
    %v3641 = vpop.permute.xlu0 %3640
    %v3643 = vsel %vm209, %v3564, 0
    %v3646 = vsel %vm514, %v3641, 0
    %3648 = vmatpush.bf16.msra.mxu0 0
    %3649 = vmatpush.bf16.msra.mxu0 0
    %3650 = vmatpush.bf16.msra.mxu0 0
    %3651 = vmatpush.bf16.msra.mxu0 0
    %3652 = vmatpush.bf16.msra.mxu0 0
    %3653 = vmatpush.bf16.msra.mxu0 0
    %3654 = vmatpush.bf16.msra.mxu0 0
    %3655 = vmatpush.bf16.msra.mxu0 %v3646
    %3656 = vmatmul.bf16.gmra.mxu0 %v3643
    %v3657 = vpop.f32.mrf.mxu0
    %v3658 = vadd.f32 0.0, %v3657
    %v3659 = vpop.f32.mrf.mxu0
    %3660 = vdwg.mxu0
    %3661 = vrot.lane.b32.xlu0 %v3067, 64
    %v3662 = vpop.permute.xlu0 %3661
    %v3664 = vsel %vm209, %v3565, 0
    %v3667 = vsel %vm514, %v3662, 0
    %3669 = vmatpush.bf16.msra.mxu0 0
    %3670 = vmatpush.bf16.msra.mxu0 0
    %3671 = vmatpush.bf16.msra.mxu0 0
    %3672 = vmatpush.bf16.msra.mxu0 0
    %3673 = vmatpush.bf16.msra.mxu0 0
    %3674 = vmatpush.bf16.msra.mxu0 0
    %3675 = vmatpush.bf16.msra.mxu0 0
    %3676 = vmatpush.bf16.msra.mxu0 %v3667
    %3677 = vmatmul.bf16.gmra.mxu0 %v3664
    %v3678 = vpop.f32.mrf.mxu0
    %v3679 = vadd.f32 0.0, %v3678
    %v3680 = vpop.f32.mrf.mxu0
    %3681 = vdwg.mxu0
    %3682 = vrot.lane.b32.xlu0 %v3091, 64
    %v3683 = vpop.permute.xlu0 %3682
    %v3685 = vsel %vm209, %v3566, 0
    %v3688 = vsel %vm514, %v3683, 0
    %3690 = vmatpush.bf16.msra.mxu0 0
    %3691 = vmatpush.bf16.msra.mxu0 0
    %3692 = vmatpush.bf16.msra.mxu0 0
    %3693 = vmatpush.bf16.msra.mxu0 0
    %3694 = vmatpush.bf16.msra.mxu0 0
    %3695 = vmatpush.bf16.msra.mxu0 0
    %3696 = vmatpush.bf16.msra.mxu0 0
    %3697 = vmatpush.bf16.msra.mxu0 %v3688
    %3698 = vmatmul.bf16.gmra.mxu0 %v3685
    %v3699 = vpop.f32.mrf.mxu0
    %v3700 = vadd.f32 0.0, %v3699
    %v3701 = vpop.f32.mrf.mxu0
    %3702 = vdwg.mxu0
    %3703 = vrot.lane.b32.xlu0 %v3115, 64
    %v3704 = vpop.permute.xlu0 %3703
    %v3706 = vsel %vm209, %v3567, 0
    %v3709 = vsel %vm514, %v3704, 0
    %3711 = vmatpush.bf16.msra.mxu0 0
    %3712 = vmatpush.bf16.msra.mxu0 0
    %3713 = vmatpush.bf16.msra.mxu0 0
    %3714 = vmatpush.bf16.msra.mxu0 0
    %3715 = vmatpush.bf16.msra.mxu0 0
    %3716 = vmatpush.bf16.msra.mxu0 0
    %3717 = vmatpush.bf16.msra.mxu0 0
    %3718 = vmatpush.bf16.msra.mxu0 %v3709
    %3719 = vmatmul.bf16.gmra.mxu0 %v3706
    %v3720 = vpop.f32.mrf.mxu0
    %v3721 = vadd.f32 0.0, %v3720
    %v3722 = vpop.f32.mrf.mxu0
    %3723 = vdwg.mxu0
    %3724 = vrot.lane.b32.xlu0 %v3139, 64
    %v3725 = vpop.permute.xlu0 %3724
    %v3727 = vsel %vm209, %v3568, 0
    %v3730 = vsel %vm514, %v3725, 0
    %3732 = vmatpush.bf16.msra.mxu0 0
    %3733 = vmatpush.bf16.msra.mxu0 0
    %3734 = vmatpush.bf16.msra.mxu0 0
    %3735 = vmatpush.bf16.msra.mxu0 0
    %3736 = vmatpush.bf16.msra.mxu0 0
    %3737 = vmatpush.bf16.msra.mxu0 0
    %3738 = vmatpush.bf16.msra.mxu0 0
    %3739 = vmatpush.bf16.msra.mxu0 %v3730
    %3740 = vmatmul.bf16.gmra.mxu0 %v3727
    %v3741 = vpop.f32.mrf.mxu0
    %v3742 = vadd.f32 0.0, %v3741
    %v3743 = vpop.f32.mrf.mxu0
    %3744 = vdwg.mxu0
    %3745 = vrot.lane.b32.xlu0 %v3163, 64
    %v3746 = vpop.permute.xlu0 %3745
    %v3748 = vsel %vm209, %v3569, 0
    %v3751 = vsel %vm514, %v3746, 0
    %3753 = vmatpush.bf16.msra.mxu0 0
    %3754 = vmatpush.bf16.msra.mxu0 0
    %3755 = vmatpush.bf16.msra.mxu0 0
    %3756 = vmatpush.bf16.msra.mxu0 0
    %3757 = vmatpush.bf16.msra.mxu0 0
    %3758 = vmatpush.bf16.msra.mxu0 0
    %3759 = vmatpush.bf16.msra.mxu0 0
    %3760 = vmatpush.bf16.msra.mxu0 %v3751
    %3761 = vmatmul.bf16.gmra.mxu0 %v3748
    %v3762 = vpop.f32.mrf.mxu0
    %v3763 = vadd.f32 0.0, %v3762
    %v3764 = vpop.f32.mrf.mxu0
    %3765 = vdwg.mxu0
    %3766 = vrot.lane.b32.xlu0 %v3187, 64
    %v3767 = vpop.permute.xlu0 %3766
    %v3769 = vsel %vm209, %v3570, 0
    %v3772 = vsel %vm514, %v3767, 0
    %3774 = vmatpush.bf16.msra.mxu0 0
    %3775 = vmatpush.bf16.msra.mxu0 0
    %3776 = vmatpush.bf16.msra.mxu0 0
    %3777 = vmatpush.bf16.msra.mxu0 0
    %3778 = vmatpush.bf16.msra.mxu0 0
    %3779 = vmatpush.bf16.msra.mxu0 0
    %3780 = vmatpush.bf16.msra.mxu0 0
    %3781 = vmatpush.bf16.msra.mxu0 %v3772
    %3782 = vmatmul.bf16.gmra.mxu0 %v3769
    %v3783 = vpop.f32.mrf.mxu0
    %v3784 = vadd.f32 0.0, %v3783
    %v3785 = vpop.f32.mrf.mxu0
    %3786 = vdwg.mxu0
    %3787 = vrot.lane.b32.xlu0 %v3211, 64
    %v3788 = vpop.permute.xlu0 %3787
    %v3790 = vsel %vm209, %v3571, 0
    %v3793 = vsel %vm514, %v3788, 0
    %3795 = vmatpush.bf16.msra.mxu0 0
    %3796 = vmatpush.bf16.msra.mxu0 0
    %3797 = vmatpush.bf16.msra.mxu0 0
    %3798 = vmatpush.bf16.msra.mxu0 0
    %3799 = vmatpush.bf16.msra.mxu0 0
    %3800 = vmatpush.bf16.msra.mxu0 0
    %3801 = vmatpush.bf16.msra.mxu0 0
    %3802 = vmatpush.bf16.msra.mxu0 %v3793
    %3803 = vmatmul.bf16.gmra.mxu0 %v3790
    %v3804 = vpop.f32.mrf.mxu0
    %v3805 = vadd.f32 0.0, %v3804
    %v3806 = vpop.f32.mrf.mxu0
    %3807 = vdwg.mxu0
    %3808 = vrot.lane.b32.xlu0 %v3235, 64
    %v3809 = vpop.permute.xlu0 %3808
    %v3811 = vsel %vm209, %v3572, 0
    %v3814 = vsel %vm514, %v3809, 0
    %3816 = vmatpush.bf16.msra.mxu0 0
    %3817 = vmatpush.bf16.msra.mxu0 0
    %3818 = vmatpush.bf16.msra.mxu0 0
    %3819 = vmatpush.bf16.msra.mxu0 0
    %3820 = vmatpush.bf16.msra.mxu0 0
    %3821 = vmatpush.bf16.msra.mxu0 0
    %3822 = vmatpush.bf16.msra.mxu0 0
    %3823 = vmatpush.bf16.msra.mxu0 %v3814
    %3824 = vmatmul.bf16.gmra.mxu0 %v3811
    %v3825 = vpop.f32.mrf.mxu0
    %v3826 = vadd.f32 0.0, %v3825
    %v3827 = vpop.f32.mrf.mxu0
    %3828 = vdwg.mxu0
    %3829 = vrot.lane.b32.xlu0 %v3259, 64
    %v3830 = vpop.permute.xlu0 %3829
    %v3832 = vsel %vm209, %v3573, 0
    %v3835 = vsel %vm514, %v3830, 0
    %3837 = vmatpush.bf16.msra.mxu0 0
    %3838 = vmatpush.bf16.msra.mxu0 0
    %3839 = vmatpush.bf16.msra.mxu0 0
    %3840 = vmatpush.bf16.msra.mxu0 0
    %3841 = vmatpush.bf16.msra.mxu0 0
    %3842 = vmatpush.bf16.msra.mxu0 0
    %3843 = vmatpush.bf16.msra.mxu0 0
    %3844 = vmatpush.bf16.msra.mxu0 %v3835
    %3845 = vmatmul.bf16.gmra.mxu0 %v3832
    %v3846 = vpop.f32.mrf.mxu0
    %v3847 = vadd.f32 0.0, %v3846
    %v3848 = vpop.f32.mrf.mxu0
    %3849 = vdwg.mxu0
    %3850 = vrot.lane.b32.xlu0 %v3283, 64
    %v3851 = vpop.permute.xlu0 %3850
    %v3853 = vsel %vm209, %v3574, 0
    %v3856 = vsel %vm514, %v3851, 0
    %3858 = vmatpush.bf16.msra.mxu0 0
    %3859 = vmatpush.bf16.msra.mxu0 0
    %3860 = vmatpush.bf16.msra.mxu0 0
    %3861 = vmatpush.bf16.msra.mxu0 0
    %3862 = vmatpush.bf16.msra.mxu0 0
    %3863 = vmatpush.bf16.msra.mxu0 0
    %3864 = vmatpush.bf16.msra.mxu0 0
    %3865 = vmatpush.bf16.msra.mxu0 %v3856
    %3866 = vmatmul.bf16.gmra.mxu0 %v3853
    %v3867 = vpop.f32.mrf.mxu0
    %v3868 = vadd.f32 0.0, %v3867
    %v3869 = vpop.f32.mrf.mxu0
    %3870 = vdwg.mxu0
    %3871 = vrot.lane.b32.xlu0 %v3307, 64
    %v3872 = vpop.permute.xlu0 %3871
    %v3874 = vsel %vm209, %v3575, 0
    %v3877 = vsel %vm514, %v3872, 0
    %3879 = vmatpush.bf16.msra.mxu0 0
    %3880 = vmatpush.bf16.msra.mxu0 0
    %3881 = vmatpush.bf16.msra.mxu0 0
    %3882 = vmatpush.bf16.msra.mxu0 0
    %3883 = vmatpush.bf16.msra.mxu0 0
    %3884 = vmatpush.bf16.msra.mxu0 0
    %3885 = vmatpush.bf16.msra.mxu0 0
    %3886 = vmatpush.bf16.msra.mxu0 %v3877
    %3887 = vmatmul.bf16.gmra.mxu0 %v3874
    %v3888 = vpop.f32.mrf.mxu0
    %v3889 = vadd.f32 0.0, %v3888
    %v3890 = vpop.f32.mrf.mxu0
    %3891 = vdwg.mxu0
    %3892 = vrot.lane.b32.xlu0 %v3331, 64
    %v3893 = vpop.permute.xlu0 %3892
    %v3895 = vsel %vm209, %v3576, 0
    %v3898 = vsel %vm514, %v3893, 0
    %3900 = vmatpush.bf16.msra.mxu0 0
    %3901 = vmatpush.bf16.msra.mxu0 0
    %3902 = vmatpush.bf16.msra.mxu0 0
    %3903 = vmatpush.bf16.msra.mxu0 0
    %3904 = vmatpush.bf16.msra.mxu0 0
    %3905 = vmatpush.bf16.msra.mxu0 0
    %3906 = vmatpush.bf16.msra.mxu0 0
    %3907 = vmatpush.bf16.msra.mxu0 %v3898
    %3908 = vmatmul.bf16.gmra.mxu0 %v3895
    %v3909 = vpop.f32.mrf.mxu0
    %v3910 = vadd.f32 0.0, %v3909
    %v3911 = vpop.f32.mrf.mxu0
    %3912 = vdwg.mxu0
    %v3913 = vpack.c.bf16 %v3616, %v3595
    %v3914 = vpack.c.bf16 %v3658, %v3637
    %v3915 = vpack.c.bf16 %v3700, %v3679
    %v3916 = vpack.c.bf16 %v3742, %v3721
    %v3918 = vsel %vm209, %v3915, 0
    %v3921 = vsel %vm209, %v3916, 0
    %v3924 = vsel %vm514, %v2744, 0
    %3926 = vmatpush.bf16.msra.mxu0 0
    %3927 = vmatpush.bf16.msra.mxu0 0
    %3928 = vmatpush.bf16.msra.mxu0 0
    %3929 = vmatpush.bf16.msra.mxu0 0
    %3930 = vmatpush.bf16.msra.mxu0 0
    %3931 = vmatpush.bf16.msra.mxu0 0
    %3932 = vmatpush.bf16.msra.mxu0 0
    %3933 = vmatpush.bf16.msra.mxu0 %v3924
    %3934 = vmatmul.bf16.gmra.mxu0 %v3918
    %v3935 = vpop.f32.mrf.mxu0
    %v3936 = vadd.f32 0.0, %v3935
    %v3937 = vpop.f32.mrf.mxu0
    %v3938 = vadd.f32 0.0, %v3937
    %3939 = vmatmul.bf16.gmra.mxu0 %v3921
    %v3940 = vpop.f32.mrf.mxu0
    %v3941 = vadd.f32 0.0, %v3940
    %v3942 = vpop.f32.mrf.mxu0
    %v3943 = vadd.f32 0.0, %v3942
    %3944 = vdwg.mxu0
    %v3946 = vsel %vm209, %v3913, 0
    %v3949 = vsel %vm209, %v3914, 0
    %v3952 = vsel %vm514, %v2743, 0
    %3954 = vmatpush.bf16.msra.mxu0 0
    %3955 = vmatpush.bf16.msra.mxu0 0
    %3956 = vmatpush.bf16.msra.mxu0 0
    %3957 = vmatpush.bf16.msra.mxu0 0
    %3958 = vmatpush.bf16.msra.mxu0 0
    %3959 = vmatpush.bf16.msra.mxu0 0
    %3960 = vmatpush.bf16.msra.mxu0 0
    %3961 = vmatpush.bf16.msra.mxu0 %v3952
    %3962 = vmatmul.bf16.gmra.mxu0 %v3946
    %v3963 = vpop.f32.mrf.mxu0
    %v3964 = vadd.f32 %v3936, %v3963
    %v3965 = vpop.f32.mrf.mxu0
    %v3966 = vadd.f32 %v3938, %v3965
    %3967 = vmatmul.bf16.gmra.mxu0 %v3949
    %v3968 = vpop.f32.mrf.mxu0
    %v3969 = vadd.f32 %v3941, %v3968
    %v3970 = vpop.f32.mrf.mxu0
    %v3971 = vadd.f32 %v3943, %v3970
    %3972 = vdwg.mxu0
    %v3973 = vpack.c.bf16 %v3784, %v3763
    %v3974 = vpack.c.bf16 %v3826, %v3805
    %v3976 = vsel %vm209, %v3973, 0
    %v3979 = vsel %vm209, %v3974, 0
    %v3982 = vsel %vm514, %v2745, 0
    %3984 = vmatpush.bf16.msra.mxu0 0
    %3985 = vmatpush.bf16.msra.mxu0 0
    %3986 = vmatpush.bf16.msra.mxu0 0
    %3987 = vmatpush.bf16.msra.mxu0 0
    %3988 = vmatpush.bf16.msra.mxu0 0
    %3989 = vmatpush.bf16.msra.mxu0 0
    %3990 = vmatpush.bf16.msra.mxu0 0
    %3991 = vmatpush.bf16.msra.mxu0 %v3982
    %3992 = vmatmul.bf16.gmra.mxu0 %v3976
    %v3993 = vpop.f32.mrf.mxu0
    %v3994 = vadd.f32 0.0, %v3993
    %v3995 = vpop.f32.mrf.mxu0
    %v3996 = vadd.f32 0.0, %v3995
    %3997 = vmatmul.bf16.gmra.mxu0 %v3979
    %v3998 = vpop.f32.mrf.mxu0
    %v3999 = vadd.f32 0.0, %v3998
    %v4000 = vpop.f32.mrf.mxu0
    %v4001 = vadd.f32 0.0, %v4000
    %4002 = vdwg.mxu0
    %v4003 = vadd.f32 %v3964, %v3994
    %v4004 = vadd.f32 %v3966, %v3996
    %v4005 = vadd.f32 %v3969, %v3999
    %v4006 = vadd.f32 %v3971, %v4001
    %v4007 = vpack.c.bf16 %v3868, %v3847
    %v4008 = vpack.c.bf16 %v3910, %v3889
    %v4010 = vsel %vm209, %v4007, 0
    %v4013 = vsel %vm209, %v4008, 0
    %v4016 = vsel %vm514, %v2746, 0
    %4018 = vmatpush.bf16.msra.mxu0 0
    %4019 = vmatpush.bf16.msra.mxu0 0
    %4020 = vmatpush.bf16.msra.mxu0 0
    %4021 = vmatpush.bf16.msra.mxu0 0
    %4022 = vmatpush.bf16.msra.mxu0 0
    %4023 = vmatpush.bf16.msra.mxu0 0
    %4024 = vmatpush.bf16.msra.mxu0 0
    %4025 = vmatpush.bf16.msra.mxu0 %v4016
    %4026 = vmatmul.bf16.gmra.mxu0 %v4010
    %v4027 = vpop.f32.mrf.mxu0
    %v4028 = vadd.f32 0.0, %v4027
    %v4029 = vpop.f32.mrf.mxu0
    %v4030 = vadd.f32 0.0, %v4029
    %4031 = vmatmul.bf16.gmra.mxu0 %v4013
    %v4032 = vpop.f32.mrf.mxu0
    %v4033 = vadd.f32 0.0, %v4032
    %v4034 = vpop.f32.mrf.mxu0
    %v4035 = vadd.f32 0.0, %v4034
    %4036 = vdwg.mxu0
    %v4037 = vadd.f32 %v4003, %v4028
    %v4038 = vadd.f32 %v4004, %v4030
    %v4039 = vadd.f32 %v4005, %v4033
    %v4040 = vadd.f32 %v4006, %v4035
    %v4041 = vadd.f32 %v2734, %v4037
    %v4042 = vadd.f32 %v2735, %v4038
    %v4043 = vadd.f32 %v2736, %v4039
    %v4044 = vadd.f32 %v2737, %v4040
    %v4045 = vperm.slane %v2772, 0
    %v4046 = vadd.f32 %v4041, %v4045
    %v4047 = vadd.f32 %v4042, %v4045
    %v4048 = vadd.f32 %v4043, %v4045
    %v4049 = vadd.f32 %v4044, %v4045
    %v4050 = vsel %vm87, %v4046, 0.0
    %4051 = vadd.xlane.f32.xlu0 %v4050
    %v4052 = vpop.xlane.xlu0 %4051
    %v4053 = vsel %vm87, %v4047, 0.0
    %4054 = vadd.xlane.f32.xlu0 %v4053
    %v4055 = vpop.xlane.xlu0 %4054
    %v4056 = vsel %vm87, %v4048, 0.0
    %4057 = vadd.xlane.f32.xlu0 %v4056
    %v4058 = vpop.xlane.xlu0 %4057
    %v4059 = vsel %vm87, %v4049, 0.0
    %4060 = vadd.xlane.f32.xlu0 %v4059
    %v4061 = vpop.xlane.xlu0 %4060
    %v4062 = vmul.f32 %v4052, %v100
    %v4063 = vmul.f32 %v4055, %v100
    %v4064 = vmul.f32 %v4058, %v100
    %v4065 = vmul.f32 %v4061, %v100
    %v4066 = vsub.f32 %v4046, %v4062
    %v4067 = vsub.f32 %v4047, %v4063
    %v4068 = vsub.f32 %v4048, %v4064
    %v4069 = vsub.f32 %v4049, %v4065
    %v4070 = vmul.f32 %v4066, %v4066
    %v4071 = vmul.f32 %v4067, %v4067
    %v4072 = vmul.f32 %v4068, %v4068
    %v4073 = vmul.f32 %v4069, %v4069
    %v4074 = vsel %vm87, %v4070, 0.0
    %4075 = vadd.xlane.f32.xlu0 %v4074
    %v4076 = vpop.xlane.xlu0 %4075
    %v4077 = vsel %vm87, %v4071, 0.0
    %4078 = vadd.xlane.f32.xlu0 %v4077
    %v4079 = vpop.xlane.xlu0 %4078
    %v4080 = vsel %vm87, %v4072, 0.0
    %4081 = vadd.xlane.f32.xlu0 %v4080
    %v4082 = vpop.xlane.xlu0 %4081
    %v4083 = vsel %vm87, %v4073, 0.0
    %4084 = vadd.xlane.f32.xlu0 %v4083
    %v4085 = vpop.xlane.xlu0 %4084
    %v4086 = vmul.f32 %v4076, %v100
    %v4087 = vmul.f32 %v4079, %v100
    %v4088 = vmul.f32 %v4082, %v100
    %v4089 = vmul.f32 %v4085, %v100
    %v4090 = vadd.f32 %v4086, 1e-05
    %v4091 = vadd.f32 %v4087, 1e-05
    %v4092 = vadd.f32 %v4088, 1e-05
    %v4093 = vadd.f32 %v4089, 1e-05
    %v4094 = vrsqrt.pop %v4090
    %v4095 = vmul.f32 %v4094, %v4090
    %v4096 = vmul.f32 %v4095, %v4094
    %v4097 = vmul.f32 0.5, %v4096
    %v4098 = vsub.f32 1.5, %v4097
    %v4099 = vmul.f32 %v4094, %v4098
    %vm4100 = vweird.f32 %v4090
    %vm4101 = vweird.f32 %v4094
    %vm4102 = vmor %vm4100, %vm4101
    %v4103 = vsel %vm4102, %v4094, %v4099
    %v4104 = vrsqrt.pop %v4091
    %v4105 = vmul.f32 %v4104, %v4091
    %v4106 = vmul.f32 %v4105, %v4104
    %v4107 = vmul.f32 0.5, %v4106
    %v4108 = vsub.f32 1.5, %v4107
    %v4109 = vmul.f32 %v4104, %v4108
    %vm4110 = vweird.f32 %v4091
    %vm4111 = vweird.f32 %v4104
    %vm4112 = vmor %vm4110, %vm4111
    %v4113 = vsel %vm4112, %v4104, %v4109
    %v4114 = vrsqrt.pop %v4092
    %v4115 = vmul.f32 %v4114, %v4092
    %v4116 = vmul.f32 %v4115, %v4114
    %v4117 = vmul.f32 0.5, %v4116
    %v4118 = vsub.f32 1.5, %v4117
    %v4119 = vmul.f32 %v4114, %v4118
    %vm4120 = vweird.f32 %v4092
    %vm4121 = vweird.f32 %v4114
    %vm4122 = vmor %vm4120, %vm4121
    %v4123 = vsel %vm4122, %v4114, %v4119
    %v4124 = vrsqrt.pop %v4093
    %v4125 = vmul.f32 %v4124, %v4093
    %v4126 = vmul.f32 %v4125, %v4124
    %v4127 = vmul.f32 0.5, %v4126
    %v4128 = vsub.f32 1.5, %v4127
    %v4129 = vmul.f32 %v4124, %v4128
    %vm4130 = vweird.f32 %v4093
    %vm4131 = vweird.f32 %v4124
    %vm4132 = vmor %vm4130, %vm4131
    %v4133 = vsel %vm4132, %v4124, %v4129
    %v4134 = vmul.f32 %v4066, %v4103
    %v4135 = vmul.f32 %v4067, %v4113
    %v4136 = vmul.f32 %v4068, %v4123
    %v4137 = vmul.f32 %v4069, %v4133
    %v4138 = vperm.slane %v2769, 0
    %v4139 = vmul.f32 %v4134, %v4138
    %v4140 = vmul.f32 %v4135, %v4138
    %v4141 = vmul.f32 %v4136, %v4138
    %v4142 = vmul.f32 %v4137, %v4138
    %v4143 = vperm.slane %v2770, 0
    %v4144 = vadd.f32 %v4139, %v4143
    %v4145 = vadd.f32 %v4140, %v4143
    %v4146 = vadd.f32 %v4141, %v4143
    %v4147 = vadd.f32 %v4142, %v4143
    %v4148 = vpack.c.bf16 %v4145, %v4144
    %v4149 = vpack.c.bf16 %v4147, %v4146
    %v4150 = vperm.slane %v2773, 0
    %v4155 = vunpack.c.l.b16 %v2747
    %v4156 = vunpack.c.l.b16 %v2748
    %v4157 = vunpack.c.l.b16 %v2749
    %v4158 = vunpack.c.l.b16 %v2750
    %v4159 = vpack.c.b16 %v4156, %v4155
    %v4160 = vpack.c.b16 %v4158, %v4157
    %v4164 = vsel %vm87, %v4148, 0
    %v4167 = vsel %vm87, %v4149, 0
    %4169 = vmatpush.bf16.msra.mxu0 0
    %4170 = vmatpush.bf16.msra.mxu0 0
    %4171 = vmatpush.bf16.msra.mxu0 0
    %4172 = vmatpush.bf16.msra.mxu0 0
    %4173 = vmatpush.bf16.msra.mxu0 0
    %4174 = vmatpush.bf16.msra.mxu0 0
    %4175 = vmatpush.bf16.msra.mxu0 %v4160
    %4176 = vmatpush.bf16.msra.mxu0 %v4159
    %4177 = vmatmul.bf16.gmra.mxu0 %v4164
    %v4178 = vpop.f32.mrf.mxu0
    %v4179 = vadd.f32 %v4150, %v4178
    %v4180 = vpop.f32.mrf.mxu0
    %v4181 = vadd.f32 %v4150, %v4180
    %4182 = vmatmul.bf16.gmra.mxu0 %v4167
    %v4183 = vpop.f32.mrf.mxu0
    %v4184 = vadd.f32 %v4150, %v4183
    %v4185 = vpop.f32.mrf.mxu0
    %v4186 = vadd.f32 %v4150, %v4185
    %4187 = vdwg.mxu0
    %v4188 = vmul.f32 %v4179, 1.702
    %v4189 = vmul.f32 %v4181, 1.702
    %v4190 = vmul.f32 %v4184, 1.702
    %v4191 = vmul.f32 %v4186, 1.702
    %v4192 = vxor.u32 %v4188, 2147483648
    %v4193 = vxor.u32 %v4189, 2147483648
    %v4194 = vxor.u32 %v4190, 2147483648
    %v4195 = vxor.u32 %v4191, 2147483648
    %v4196 = vmul.f32 %v4192, 1.442695
    %v4197 = vpow.pop %v4196
    %v4198 = vmul.f32 %v4193, 1.442695
    %v4199 = vpow.pop %v4198
    %v4200 = vmul.f32 %v4194, 1.442695
    %v4201 = vpow.pop %v4200
    %v4202 = vmul.f32 %v4195, 1.442695
    %v4203 = vpow.pop %v4202
    %v4204 = vadd.f32 %v4197, 1.0
    %v4205 = vadd.f32 %v4199, 1.0
    %v4206 = vadd.f32 %v4201, 1.0
    %v4207 = vadd.f32 %v4203, 1.0
    %v4208 = vrcp.pop %v4204
    %v4209 = vmul.f32 %v4204, %v4208
    %v4210 = vsub.f32 1.0, %v4209
    %v4211 = vmul.f32 %v4208, %v4210
    %v4212 = vadd.f32 %v4208, %v4211
    %vm4213 = vweird.f32 %v4204
    %vm4214 = vweird.f32 %v4208
    %vm4215 = vmor %vm4213, %vm4214
    %v4216 = vsel %vm4215, %v4208, %v4212
    %v4217 = vand.u32 2147483647, %v4204
    %vm4218 = vcmp.eq.f32.partialorder %v4217, 8.507059e+37
    %v4219 = vand.u32 %v4204, 2147483648
    %v4220 = vor.u32 1.1754944e-38, %v4219
    %v4221 = vsel %vm4218, %v4220, %v4216
    %v4222 = vmul.f32 1.0, %v4221
    %v4223 = vrcp.pop %v4205
    %v4224 = vmul.f32 %v4205, %v4223
    %v4225 = vsub.f32 1.0, %v4224
    %v4226 = vmul.f32 %v4223, %v4225
    %v4227 = vadd.f32 %v4223, %v4226
    %vm4228 = vweird.f32 %v4205
    %vm4229 = vweird.f32 %v4223
    %vm4230 = vmor %vm4228, %vm4229
    %v4231 = vsel %vm4230, %v4223, %v4227
    %v4232 = vand.u32 2147483647, %v4205
    %vm4233 = vcmp.eq.f32.partialorder %v4232, 8.507059e+37
    %v4234 = vand.u32 %v4205, 2147483648
    %v4235 = vor.u32 1.1754944e-38, %v4234
    %v4236 = vsel %vm4233, %v4235, %v4231
    %v4237 = vmul.f32 1.0, %v4236
    %v4238 = vrcp.pop %v4206
    %v4239 = vmul.f32 %v4206, %v4238
    %v4240 = vsub.f32 1.0, %v4239
    %v4241 = vmul.f32 %v4238, %v4240
    %v4242 = vadd.f32 %v4238, %v4241
    %vm4243 = vweird.f32 %v4206
    %vm4244 = vweird.f32 %v4238
    %vm4245 = vmor %vm4243, %vm4244
    %v4246 = vsel %vm4245, %v4238, %v4242
    %v4247 = vand.u32 2147483647, %v4206
    %vm4248 = vcmp.eq.f32.partialorder %v4247, 8.507059e+37
    %v4249 = vand.u32 %v4206, 2147483648
    %v4250 = vor.u32 1.1754944e-38, %v4249
    %v4251 = vsel %vm4248, %v4250, %v4246
    %v4252 = vmul.f32 1.0, %v4251
    %v4253 = vrcp.pop %v4207
    %v4254 = vmul.f32 %v4207, %v4253
    %v4255 = vsub.f32 1.0, %v4254
    %v4256 = vmul.f32 %v4253, %v4255
    %v4257 = vadd.f32 %v4253, %v4256
    %vm4258 = vweird.f32 %v4207
    %vm4259 = vweird.f32 %v4253
    %vm4260 = vmor %vm4258, %vm4259
    %v4261 = vsel %vm4260, %v4253, %v4257
    %v4262 = vand.u32 2147483647, %v4207
    %vm4263 = vcmp.eq.f32.partialorder %v4262, 8.507059e+37
    %v4264 = vand.u32 %v4207, 2147483648
    %v4265 = vor.u32 1.1754944e-38, %v4264
    %v4266 = vsel %vm4263, %v4265, %v4261
    %v4267 = vmul.f32 1.0, %v4266
    %v4268 = vmul.f32 %v4179, %v4222
    %v4269 = vmul.f32 %v4181, %v4237
    %v4270 = vmul.f32 %v4184, %v4252
    %v4271 = vmul.f32 %v4186, %v4267
    %v4272 = vpack.c.bf16 %v4269, %v4268
    %v4273 = vpack.c.bf16 %v4271, %v4270
    %v4274 = vperm.slane %v2774, 0
    %v4291 = vunpack.c.l.b16 %v2751
    %v4292 = vunpack.c.l.b16 %v2752
    %v4293 = vunpack.c.l.b16 %v2753
    %v4294 = vunpack.c.l.b16 %v2754
    %v4295 = vunpack.c.l.b16 %v2755
    %v4296 = vunpack.c.l.b16 %v2756
    %v4297 = vunpack.c.l.b16 %v2757
    %v4298 = vunpack.c.l.b16 %v2758
    %v4299 = vunpack.c.l.b16 %v2759
    %v4300 = vunpack.c.l.b16 %v2760
    %v4301 = vunpack.c.l.b16 %v2761
    %v4302 = vunpack.c.l.b16 %v2762
    %v4303 = vunpack.c.l.b16 %v2763
    %v4304 = vunpack.c.l.b16 %v2764
    %v4305 = vunpack.c.l.b16 %v2765
    %v4306 = vunpack.c.l.b16 %v2766
    %v4307 = vpack.c.b16 %v4292, %v4291
    %v4308 = vpack.c.b16 %v4294, %v4293
    %v4309 = vpack.c.b16 %v4296, %v4295
    %v4310 = vpack.c.b16 %v4298, %v4297
    %v4311 = vpack.c.b16 %v4300, %v4299
    %v4312 = vpack.c.b16 %v4302, %v4301
    %v4313 = vpack.c.b16 %v4304, %v4303
    %v4314 = vpack.c.b16 %v4306, %v4305
    %4323 = vmatpush.bf16.msra.mxu0 %v4314
    %4324 = vmatpush.bf16.msra.mxu0 %v4313
    %4325 = vmatpush.bf16.msra.mxu0 %v4312
    %4326 = vmatpush.bf16.msra.mxu0 %v4311
    %4327 = vmatpush.bf16.msra.mxu0 %v4310
    %4328 = vmatpush.bf16.msra.mxu0 %v4309
    %4329 = vmatpush.bf16.msra.mxu0 %v4308
    %4330 = vmatpush.bf16.msra.mxu0 %v4307
    %4331 = vmatmul.bf16.gmra.mxu0 %v4272
    %v4332 = vpop.f32.mrf.mxu0
    %v4333 = vadd.f32 %v4274, %v4332
    %v4334 = vpop.f32.mrf.mxu0
    %v4335 = vadd.f32 %v4274, %v4334
    %4336 = vmatmul.bf16.gmra.mxu0 %v4273
    %v4337 = vpop.f32.mrf.mxu0
    %v4338 = vadd.f32 %v4274, %v4337
    %v4339 = vpop.f32.mrf.mxu0
    %v4340 = vadd.f32 %v4274, %v4339
    %4341 = vdwg.mxu0
    %v4342 = vadd.f32 %v4046, %v4333
    %v4343 = vadd.f32 %v4047, %v4335
    %v4344 = vadd.f32 %v4048, %v4338
    %v4345 = vadd.f32 %v4049, %v4340
    %v4346 = vld [vmem:[%s8 + $0x150] sm:$0xf]
    %v4347 = vld [vmem:[%s8 + $0x154] sm:$0xf]
    %v4348 = vld [vmem:[%s8 + $0x158] sm:$0xf]
    %v4349 = vld [vmem:[%s8 + $0x15c] sm:$0xf]
    %v4350 = vld [vmem:[%s8 + $0x160] sm:$0xf]
    %v4351 = vld [vmem:[%s8 + $0x164] sm:$0xf]
    %v4352 = vld [vmem:[%s8 + $0x168] sm:$0xf]
    %v4353 = vld [vmem:[%s8 + $0x16c] sm:$0xf]
    %v4354 = vld [vmem:[%s8 + $0x170] sm:$0xf]
    %v4355 = vld [vmem:[%s8 + $0x174] sm:$0xf]
    %v4356 = vld [vmem:[%s8 + $0x178] sm:$0xf]
    %v4357 = vld [vmem:[%s8 + $0x17c] sm:$0xf]
    %v4358 = vld [vmem:[%s8 + $0x180] sm:$0xf]
    %v4359 = vld [vmem:[%s8 + $0x184] sm:$0xf]
    %v4360 = vld [vmem:[%s8 + $0x188] sm:$0xf]
    %v4361 = vld [vmem:[%s8 + $0x18c] sm:$0xf]
    %v4362 = vld [vmem:[%s8 + $0x190] sm:$0xf]
    %v4363 = vld [vmem:[%s8 + $0x194] sm:$0xf]
    %v4364 = vld [vmem:[%s8 + $0x198] sm:$0xf]
    %v4365 = vld [vmem:[%s8 + $0x19c] sm:$0xf]
    %v4366 = vld [vmem:[%s8 + $0x1a0] sm:$0xf]
    %v4367 = vld [vmem:[%s8 + $0x1a4] sm:$0xf]
    %v4368 = vld [vmem:[%s8 + $0x1a8] sm:$0xf]
    %v4369 = vld [vmem:[%s8 + $0x1ac] sm:$0xf]
    %v4370 = vld [vmem:[%s8 + $0x1b0] sm:$0xf]
    %v4371 = vld [vmem:[%s8 + $0x1b4] sm:$0xf]
    %v4372 = vld [vmem:[%s8 + $0x1b8] sm:$0xf]
    %v4373 = vld [vmem:[%s8 + $0x1bc] sm:$0xf]
    %v4374 = vld [vmem:[%s9 + $0x18] sm:$0x1]
    %v4375 = vld [vmem:[%s9 + $0x19] sm:$0x1]
    %v4376 = vld [vmem:[%s9 + $0x1a] sm:$0x1]
    %v4377 = vld [vmem:[%s9 + $0x1b] sm:$0x1]
    %v4378 = vld [vmem:[%s9 + $0x1c] sm:$0x1]
    %v4379 = vld [vmem:[%s9 + $0x1d] sm:$0x1]
    %v4380 = vld [vmem:[%s9 + $0x1e] sm:$0x1]
    %v4381 = vld [vmem:[%s9 + $0x1f] sm:$0x1]
    %v4382 = vsel %vm87, %v4342, 0.0
    %4383 = vadd.xlane.f32.xlu0 %v4382
    %v4384 = vpop.xlane.xlu0 %4383
    %v4385 = vsel %vm87, %v4343, 0.0
    %4386 = vadd.xlane.f32.xlu0 %v4385
    %v4387 = vpop.xlane.xlu0 %4386
    %v4388 = vsel %vm87, %v4344, 0.0
    %4389 = vadd.xlane.f32.xlu0 %v4388
    %v4390 = vpop.xlane.xlu0 %4389
    %v4391 = vsel %vm87, %v4345, 0.0
    %4392 = vadd.xlane.f32.xlu0 %v4391
    %v4393 = vpop.xlane.xlu0 %4392
    %v4394 = vmul.f32 %v4384, %v100
    %v4395 = vmul.f32 %v4387, %v100
    %v4396 = vmul.f32 %v4390, %v100
    %v4397 = vmul.f32 %v4393, %v100
    %v4398 = vsub.f32 %v4342, %v4394
    %v4399 = vsub.f32 %v4343, %v4395
    %v4400 = vsub.f32 %v4344, %v4396
    %v4401 = vsub.f32 %v4345, %v4397
    %v4402 = vmul.f32 %v4398, %v4398
    %v4403 = vmul.f32 %v4399, %v4399
    %v4404 = vmul.f32 %v4400, %v4400
    %v4405 = vmul.f32 %v4401, %v4401
    %v4406 = vsel %vm87, %v4402, 0.0
    %4407 = vadd.xlane.f32.xlu0 %v4406
    %v4408 = vpop.xlane.xlu0 %4407
    %v4409 = vsel %vm87, %v4403, 0.0
    %4410 = vadd.xlane.f32.xlu0 %v4409
    %v4411 = vpop.xlane.xlu0 %4410
    %v4412 = vsel %vm87, %v4404, 0.0
    %4413 = vadd.xlane.f32.xlu0 %v4412
    %v4414 = vpop.xlane.xlu0 %4413
    %v4415 = vsel %vm87, %v4405, 0.0
    %4416 = vadd.xlane.f32.xlu0 %v4415
    %v4417 = vpop.xlane.xlu0 %4416
    %v4418 = vmul.f32 %v4408, %v100
    %v4419 = vmul.f32 %v4411, %v100
    %v4420 = vmul.f32 %v4414, %v100
    %v4421 = vmul.f32 %v4417, %v100
    %v4422 = vadd.f32 %v4418, 1e-05
    %v4423 = vadd.f32 %v4419, 1e-05
    %v4424 = vadd.f32 %v4420, 1e-05
    %v4425 = vadd.f32 %v4421, 1e-05
    %v4426 = vrsqrt.pop %v4422
    %v4427 = vmul.f32 %v4426, %v4422
    %v4428 = vmul.f32 %v4427, %v4426
    %v4429 = vmul.f32 0.5, %v4428
    %v4430 = vsub.f32 1.5, %v4429
    %v4431 = vmul.f32 %v4426, %v4430
    %vm4432 = vweird.f32 %v4422
    %vm4433 = vweird.f32 %v4426
    %vm4434 = vmor %vm4432, %vm4433
    %v4435 = vsel %vm4434, %v4426, %v4431
    %v4436 = vrsqrt.pop %v4423
    %v4437 = vmul.f32 %v4436, %v4423
    %v4438 = vmul.f32 %v4437, %v4436
    %v4439 = vmul.f32 0.5, %v4438
    %v4440 = vsub.f32 1.5, %v4439
    %v4441 = vmul.f32 %v4436, %v4440
    %vm4442 = vweird.f32 %v4423
    %vm4443 = vweird.f32 %v4436
    %vm4444 = vmor %vm4442, %vm4443
    %v4445 = vsel %vm4444, %v4436, %v4441
    %v4446 = vrsqrt.pop %v4424
    %v4447 = vmul.f32 %v4446, %v4424
    %v4448 = vmul.f32 %v4447, %v4446
    %v4449 = vmul.f32 0.5, %v4448
    %v4450 = vsub.f32 1.5, %v4449
    %v4451 = vmul.f32 %v4446, %v4450
    %vm4452 = vweird.f32 %v4424
    %vm4453 = vweird.f32 %v4446
    %vm4454 = vmor %vm4452, %vm4453
    %v4455 = vsel %vm4454, %v4446, %v4451
    %v4456 = vrsqrt.pop %v4425
    %v4457 = vmul.f32 %v4456, %v4425
    %v4458 = vmul.f32 %v4457, %v4456
    %v4459 = vmul.f32 0.5, %v4458
    %v4460 = vsub.f32 1.5, %v4459
    %v4461 = vmul.f32 %v4456, %v4460
    %vm4462 = vweird.f32 %v4425
    %vm4463 = vweird.f32 %v4456
    %vm4464 = vmor %vm4462, %vm4463
    %v4465 = vsel %vm4464, %v4456, %v4461
    %v4466 = vmul.f32 %v4398, %v4435
    %v4467 = vmul.f32 %v4399, %v4445
    %v4468 = vmul.f32 %v4400, %v4455
    %v4469 = vmul.f32 %v4401, %v4465
    %v4470 = vperm.slane %v4374, 0
    %v4471 = vmul.f32 %v4466, %v4470
    %v4472 = vmul.f32 %v4467, %v4470
    %v4473 = vmul.f32 %v4468, %v4470
    %v4474 = vmul.f32 %v4469, %v4470
    %v4475 = vperm.slane %v4375, 0
    %v4476 = vadd.f32 %v4471, %v4475
    %v4477 = vadd.f32 %v4472, %v4475
    %v4478 = vadd.f32 %v4473, %v4475
    %v4479 = vadd.f32 %v4474, %v4475
    %v4480 = vpack.c.bf16 %v4477, %v4476
    %v4481 = vpack.c.bf16 %v4479, %v4478
    %v4482 = vperm.slane %v4378, 0
    %v4487 = vunpack.c.l.b16 %v4346
    %v4488 = vunpack.c.l.b16 %v4347
    %v4489 = vunpack.c.l.b16 %v4348
    %v4490 = vunpack.c.l.b16 %v4349
    %v4491 = vpack.c.b16 %v4488, %v4487
    %v4492 = vpack.c.b16 %v4490, %v4489
    %v4496 = vsel %vm87, %v4480, 0
    %v4499 = vsel %vm87, %v4481, 0
    %4501 = vmatpush.bf16.msra.mxu0 0
    %4502 = vmatpush.bf16.msra.mxu0 0
    %4503 = vmatpush.bf16.msra.mxu0 0
    %4504 = vmatpush.bf16.msra.mxu0 0
    %4505 = vmatpush.bf16.msra.mxu0 0
    %4506 = vmatpush.bf16.msra.mxu0 0
    %4507 = vmatpush.bf16.msra.mxu0 %v4492
    %4508 = vmatpush.bf16.msra.mxu0 %v4491
    %4509 = vmatmul.bf16.gmra.mxu0 %v4496
    %v4510 = vpop.f32.mrf.mxu0
    %v4511 = vadd.f32 %v4482, %v4510
    %v4512 = vpop.f32.mrf.mxu0
    %v4513 = vadd.f32 %v4482, %v4512
    %4514 = vmatmul.bf16.gmra.mxu0 %v4499
    %v4515 = vpop.f32.mrf.mxu0
    %v4516 = vadd.f32 %v4482, %v4515
    %v4517 = vpop.f32.mrf.mxu0
    %v4518 = vadd.f32 %v4482, %v4517
    %4519 = vdwg.mxu0
    %4524 = vrot.lane.b32.xlu0 %v4511, 120
    %v4525 = vpop.permute.xlu0 %4524
    %4526 = vrot.lane.b32.xlu0 %v4513, 120
    %v4527 = vpop.permute.xlu0 %4526
    %4528 = vrot.lane.b32.xlu0 %v4516, 120
    %v4529 = vpop.permute.xlu0 %4528
    %4530 = vrot.lane.b32.xlu0 %v4518, 120
    %v4531 = vpop.permute.xlu0 %4530
    %4536 = vrot.lane.b32.xlu0 %v4511, 112
    %v4537 = vpop.permute.xlu0 %4536
    %4538 = vrot.lane.b32.xlu0 %v4513, 112
    %v4539 = vpop.permute.xlu0 %4538
    %4540 = vrot.lane.b32.xlu0 %v4516, 112
    %v4541 = vpop.permute.xlu0 %4540
    %4542 = vrot.lane.b32.xlu0 %v4518, 112
    %v4543 = vpop.permute.xlu0 %4542
    %4548 = vrot.lane.b32.xlu0 %v4511, 104
    %v4549 = vpop.permute.xlu0 %4548
    %4550 = vrot.lane.b32.xlu0 %v4513, 104
    %v4551 = vpop.permute.xlu0 %4550
    %4552 = vrot.lane.b32.xlu0 %v4516, 104
    %v4553 = vpop.permute.xlu0 %4552
    %4554 = vrot.lane.b32.xlu0 %v4518, 104
    %v4555 = vpop.permute.xlu0 %4554
    %v4560 = vpack.c.bf16 %v4511, %v4511
    %v4561 = vpack.c.bf16 %v4513, %v4513
    %v4562 = vpack.c.bf16 %v4516, %v4516
    %v4563 = vpack.c.bf16 %v4518, %v4518
    %v4564 = vpack.c.bf16 %v4525, %v4525
    %v4565 = vpack.c.bf16 %v4527, %v4527
    %v4566 = vpack.c.bf16 %v4529, %v4529
    %v4567 = vpack.c.bf16 %v4531, %v4531
    %v4568 = vpack.c.bf16 %v4537, %v4537
    %v4569 = vpack.c.bf16 %v4539, %v4539
    %v4570 = vpack.c.bf16 %v4541, %v4541
    %v4571 = vpack.c.bf16 %v4543, %v4543
    %v4572 = vpack.c.bf16 %v4549, %v4549
    %v4573 = vpack.c.bf16 %v4551, %v4551
    %v4574 = vpack.c.bf16 %v4553, %v4553
    %v4575 = vpack.c.bf16 %v4555, %v4555
    %v4577 = vunpack.c.l.b16 %v4560
    %v4578 = vpack.c.b16 %v4577, %v4577
    %4579 = vrot.lane.b32.xlu0 %v4578, 96
    %v4580 = vpop.permute.xlu0 %4579
    %v4582 = vsel %vm209, %v4560, 0
    %v4585 = vsel %vm209, %v4580, 0
    %4587 = vmatpush.bf16.xpose.msra.mxu0 0
    %4588 = vmatpush.bf16.xpose.msra.mxu0 0
    %4589 = vmatpush.bf16.xpose.msra.mxu0 0
    %4590 = vmatpush.bf16.xpose.msra.mxu0 0
    %4591 = vmatpush.bf16.xpose.msra.mxu0 0
    %4592 = vmatpush.bf16.xpose.msra.mxu0 0
    %4593 = vmatpush.bf16.xpose.msra.mxu0 0
    %4594 = vmatpush.bf16.xpose.msra.mxu0 %v4585
    %4595 = vmatmul.bf16.gmra.mxu0 %v4582
    %v4596 = vpop.f32.mrf.mxu0
    %v4597 = vadd.f32 0.0, %v4596
    %v4598 = vpop.f32.mrf.mxu0
    %4599 = vdwg.mxu0
    %v4601 = vunpack.c.l.b16 %v4561
    %v4602 = vpack.c.b16 %v4601, %v4601
    %4603 = vrot.lane.b32.xlu0 %v4602, 96
    %v4604 = vpop.permute.xlu0 %4603
    %v4606 = vsel %vm209, %v4561, 0
    %v4609 = vsel %vm209, %v4604, 0
    %4611 = vmatpush.bf16.xpose.msra.mxu0 0
    %4612 = vmatpush.bf16.xpose.msra.mxu0 0
    %4613 = vmatpush.bf16.xpose.msra.mxu0 0
    %4614 = vmatpush.bf16.xpose.msra.mxu0 0
    %4615 = vmatpush.bf16.xpose.msra.mxu0 0
    %4616 = vmatpush.bf16.xpose.msra.mxu0 0
    %4617 = vmatpush.bf16.xpose.msra.mxu0 0
    %4618 = vmatpush.bf16.xpose.msra.mxu0 %v4609
    %4619 = vmatmul.bf16.gmra.mxu0 %v4606
    %v4620 = vpop.f32.mrf.mxu0
    %v4621 = vadd.f32 0.0, %v4620
    %v4622 = vpop.f32.mrf.mxu0
    %4623 = vdwg.mxu0
    %v4625 = vunpack.c.l.b16 %v4562
    %v4626 = vpack.c.b16 %v4625, %v4625
    %4627 = vrot.lane.b32.xlu0 %v4626, 96
    %v4628 = vpop.permute.xlu0 %4627
    %v4630 = vsel %vm209, %v4562, 0
    %v4633 = vsel %vm209, %v4628, 0
    %4635 = vmatpush.bf16.xpose.msra.mxu0 0
    %4636 = vmatpush.bf16.xpose.msra.mxu0 0
    %4637 = vmatpush.bf16.xpose.msra.mxu0 0
    %4638 = vmatpush.bf16.xpose.msra.mxu0 0
    %4639 = vmatpush.bf16.xpose.msra.mxu0 0
    %4640 = vmatpush.bf16.xpose.msra.mxu0 0
    %4641 = vmatpush.bf16.xpose.msra.mxu0 0
    %4642 = vmatpush.bf16.xpose.msra.mxu0 %v4633
    %4643 = vmatmul.bf16.gmra.mxu0 %v4630
    %v4644 = vpop.f32.mrf.mxu0
    %v4645 = vadd.f32 0.0, %v4644
    %v4646 = vpop.f32.mrf.mxu0
    %4647 = vdwg.mxu0
    %v4649 = vunpack.c.l.b16 %v4563
    %v4650 = vpack.c.b16 %v4649, %v4649
    %4651 = vrot.lane.b32.xlu0 %v4650, 96
    %v4652 = vpop.permute.xlu0 %4651
    %v4654 = vsel %vm209, %v4563, 0
    %v4657 = vsel %vm209, %v4652, 0
    %4659 = vmatpush.bf16.xpose.msra.mxu0 0
    %4660 = vmatpush.bf16.xpose.msra.mxu0 0
    %4661 = vmatpush.bf16.xpose.msra.mxu0 0
    %4662 = vmatpush.bf16.xpose.msra.mxu0 0
    %4663 = vmatpush.bf16.xpose.msra.mxu0 0
    %4664 = vmatpush.bf16.xpose.msra.mxu0 0
    %4665 = vmatpush.bf16.xpose.msra.mxu0 0
    %4666 = vmatpush.bf16.xpose.msra.mxu0 %v4657
    %4667 = vmatmul.bf16.gmra.mxu0 %v4654
    %v4668 = vpop.f32.mrf.mxu0
    %v4669 = vadd.f32 0.0, %v4668
    %v4670 = vpop.f32.mrf.mxu0
    %4671 = vdwg.mxu0
    %v4673 = vunpack.c.l.b16 %v4564
    %v4674 = vpack.c.b16 %v4673, %v4673
    %4675 = vrot.lane.b32.xlu0 %v4674, 96
    %v4676 = vpop.permute.xlu0 %4675
    %v4678 = vsel %vm209, %v4564, 0
    %v4681 = vsel %vm209, %v4676, 0
    %4683 = vmatpush.bf16.xpose.msra.mxu0 0
    %4684 = vmatpush.bf16.xpose.msra.mxu0 0
    %4685 = vmatpush.bf16.xpose.msra.mxu0 0
    %4686 = vmatpush.bf16.xpose.msra.mxu0 0
    %4687 = vmatpush.bf16.xpose.msra.mxu0 0
    %4688 = vmatpush.bf16.xpose.msra.mxu0 0
    %4689 = vmatpush.bf16.xpose.msra.mxu0 0
    %4690 = vmatpush.bf16.xpose.msra.mxu0 %v4681
    %4691 = vmatmul.bf16.gmra.mxu0 %v4678
    %v4692 = vpop.f32.mrf.mxu0
    %v4693 = vadd.f32 0.0, %v4692
    %v4694 = vpop.f32.mrf.mxu0
    %4695 = vdwg.mxu0
    %v4697 = vunpack.c.l.b16 %v4565
    %v4698 = vpack.c.b16 %v4697, %v4697
    %4699 = vrot.lane.b32.xlu0 %v4698, 96
    %v4700 = vpop.permute.xlu0 %4699
    %v4702 = vsel %vm209, %v4565, 0
    %v4705 = vsel %vm209, %v4700, 0
    %4707 = vmatpush.bf16.xpose.msra.mxu0 0
    %4708 = vmatpush.bf16.xpose.msra.mxu0 0
    %4709 = vmatpush.bf16.xpose.msra.mxu0 0
    %4710 = vmatpush.bf16.xpose.msra.mxu0 0
    %4711 = vmatpush.bf16.xpose.msra.mxu0 0
    %4712 = vmatpush.bf16.xpose.msra.mxu0 0
    %4713 = vmatpush.bf16.xpose.msra.mxu0 0
    %4714 = vmatpush.bf16.xpose.msra.mxu0 %v4705
    %4715 = vmatmul.bf16.gmra.mxu0 %v4702
    %v4716 = vpop.f32.mrf.mxu0
    %v4717 = vadd.f32 0.0, %v4716
    %v4718 = vpop.f32.mrf.mxu0
    %4719 = vdwg.mxu0
    %v4721 = vunpack.c.l.b16 %v4566
    %v4722 = vpack.c.b16 %v4721, %v4721
    %4723 = vrot.lane.b32.xlu0 %v4722, 96
    %v4724 = vpop.permute.xlu0 %4723
    %v4726 = vsel %vm209, %v4566, 0
    %v4729 = vsel %vm209, %v4724, 0
    %4731 = vmatpush.bf16.xpose.msra.mxu0 0
    %4732 = vmatpush.bf16.xpose.msra.mxu0 0
    %4733 = vmatpush.bf16.xpose.msra.mxu0 0
    %4734 = vmatpush.bf16.xpose.msra.mxu0 0
    %4735 = vmatpush.bf16.xpose.msra.mxu0 0
    %4736 = vmatpush.bf16.xpose.msra.mxu0 0
    %4737 = vmatpush.bf16.xpose.msra.mxu0 0
    %4738 = vmatpush.bf16.xpose.msra.mxu0 %v4729
    %4739 = vmatmul.bf16.gmra.mxu0 %v4726
    %v4740 = vpop.f32.mrf.mxu0
    %v4741 = vadd.f32 0.0, %v4740
    %v4742 = vpop.f32.mrf.mxu0
    %4743 = vdwg.mxu0
    %v4745 = vunpack.c.l.b16 %v4567
    %v4746 = vpack.c.b16 %v4745, %v4745
    %4747 = vrot.lane.b32.xlu0 %v4746, 96
    %v4748 = vpop.permute.xlu0 %4747
    %v4750 = vsel %vm209, %v4567, 0
    %v4753 = vsel %vm209, %v4748, 0
    %4755 = vmatpush.bf16.xpose.msra.mxu0 0
    %4756 = vmatpush.bf16.xpose.msra.mxu0 0
    %4757 = vmatpush.bf16.xpose.msra.mxu0 0
    %4758 = vmatpush.bf16.xpose.msra.mxu0 0
    %4759 = vmatpush.bf16.xpose.msra.mxu0 0
    %4760 = vmatpush.bf16.xpose.msra.mxu0 0
    %4761 = vmatpush.bf16.xpose.msra.mxu0 0
    %4762 = vmatpush.bf16.xpose.msra.mxu0 %v4753
    %4763 = vmatmul.bf16.gmra.mxu0 %v4750
    %v4764 = vpop.f32.mrf.mxu0
    %v4765 = vadd.f32 0.0, %v4764
    %v4766 = vpop.f32.mrf.mxu0
    %4767 = vdwg.mxu0
    %v4769 = vunpack.c.l.b16 %v4568
    %v4770 = vpack.c.b16 %v4769, %v4769
    %4771 = vrot.lane.b32.xlu0 %v4770, 96
    %v4772 = vpop.permute.xlu0 %4771
    %v4774 = vsel %vm209, %v4568, 0
    %v4777 = vsel %vm209, %v4772, 0
    %4779 = vmatpush.bf16.xpose.msra.mxu0 0
    %4780 = vmatpush.bf16.xpose.msra.mxu0 0
    %4781 = vmatpush.bf16.xpose.msra.mxu0 0
    %4782 = vmatpush.bf16.xpose.msra.mxu0 0
    %4783 = vmatpush.bf16.xpose.msra.mxu0 0
    %4784 = vmatpush.bf16.xpose.msra.mxu0 0
    %4785 = vmatpush.bf16.xpose.msra.mxu0 0
    %4786 = vmatpush.bf16.xpose.msra.mxu0 %v4777
    %4787 = vmatmul.bf16.gmra.mxu0 %v4774
    %v4788 = vpop.f32.mrf.mxu0
    %v4789 = vadd.f32 0.0, %v4788
    %v4790 = vpop.f32.mrf.mxu0
    %4791 = vdwg.mxu0
    %v4793 = vunpack.c.l.b16 %v4569
    %v4794 = vpack.c.b16 %v4793, %v4793
    %4795 = vrot.lane.b32.xlu0 %v4794, 96
    %v4796 = vpop.permute.xlu0 %4795
    %v4798 = vsel %vm209, %v4569, 0
    %v4801 = vsel %vm209, %v4796, 0
    %4803 = vmatpush.bf16.xpose.msra.mxu0 0
    %4804 = vmatpush.bf16.xpose.msra.mxu0 0
    %4805 = vmatpush.bf16.xpose.msra.mxu0 0
    %4806 = vmatpush.bf16.xpose.msra.mxu0 0
    %4807 = vmatpush.bf16.xpose.msra.mxu0 0
    %4808 = vmatpush.bf16.xpose.msra.mxu0 0
    %4809 = vmatpush.bf16.xpose.msra.mxu0 0
    %4810 = vmatpush.bf16.xpose.msra.mxu0 %v4801
    %4811 = vmatmul.bf16.gmra.mxu0 %v4798
    %v4812 = vpop.f32.mrf.mxu0
    %v4813 = vadd.f32 0.0, %v4812
    %v4814 = vpop.f32.mrf.mxu0
    %4815 = vdwg.mxu0
    %v4817 = vunpack.c.l.b16 %v4570
    %v4818 = vpack.c.b16 %v4817, %v4817
    %4819 = vrot.lane.b32.xlu0 %v4818, 96
    %v4820 = vpop.permute.xlu0 %4819
    %v4822 = vsel %vm209, %v4570, 0
    %v4825 = vsel %vm209, %v4820, 0
    %4827 = vmatpush.bf16.xpose.msra.mxu0 0
    %4828 = vmatpush.bf16.xpose.msra.mxu0 0
    %4829 = vmatpush.bf16.xpose.msra.mxu0 0
    %4830 = vmatpush.bf16.xpose.msra.mxu0 0
    %4831 = vmatpush.bf16.xpose.msra.mxu0 0
    %4832 = vmatpush.bf16.xpose.msra.mxu0 0
    %4833 = vmatpush.bf16.xpose.msra.mxu0 0
    %4834 = vmatpush.bf16.xpose.msra.mxu0 %v4825
    %4835 = vmatmul.bf16.gmra.mxu0 %v4822
    %v4836 = vpop.f32.mrf.mxu0
    %v4837 = vadd.f32 0.0, %v4836
    %v4838 = vpop.f32.mrf.mxu0
    %4839 = vdwg.mxu0
    %v4841 = vunpack.c.l.b16 %v4571
    %v4842 = vpack.c.b16 %v4841, %v4841
    %4843 = vrot.lane.b32.xlu0 %v4842, 96
    %v4844 = vpop.permute.xlu0 %4843
    %v4846 = vsel %vm209, %v4571, 0
    %v4849 = vsel %vm209, %v4844, 0
    %4851 = vmatpush.bf16.xpose.msra.mxu0 0
    %4852 = vmatpush.bf16.xpose.msra.mxu0 0
    %4853 = vmatpush.bf16.xpose.msra.mxu0 0
    %4854 = vmatpush.bf16.xpose.msra.mxu0 0
    %4855 = vmatpush.bf16.xpose.msra.mxu0 0
    %4856 = vmatpush.bf16.xpose.msra.mxu0 0
    %4857 = vmatpush.bf16.xpose.msra.mxu0 0
    %4858 = vmatpush.bf16.xpose.msra.mxu0 %v4849
    %4859 = vmatmul.bf16.gmra.mxu0 %v4846
    %v4860 = vpop.f32.mrf.mxu0
    %v4861 = vadd.f32 0.0, %v4860
    %v4862 = vpop.f32.mrf.mxu0
    %4863 = vdwg.mxu0
    %v4865 = vunpack.c.l.b16 %v4572
    %v4866 = vpack.c.b16 %v4865, %v4865
    %4867 = vrot.lane.b32.xlu0 %v4866, 96
    %v4868 = vpop.permute.xlu0 %4867
    %v4870 = vsel %vm209, %v4572, 0
    %v4873 = vsel %vm209, %v4868, 0
    %4875 = vmatpush.bf16.xpose.msra.mxu0 0
    %4876 = vmatpush.bf16.xpose.msra.mxu0 0
    %4877 = vmatpush.bf16.xpose.msra.mxu0 0
    %4878 = vmatpush.bf16.xpose.msra.mxu0 0
    %4879 = vmatpush.bf16.xpose.msra.mxu0 0
    %4880 = vmatpush.bf16.xpose.msra.mxu0 0
    %4881 = vmatpush.bf16.xpose.msra.mxu0 0
    %4882 = vmatpush.bf16.xpose.msra.mxu0 %v4873
    %4883 = vmatmul.bf16.gmra.mxu0 %v4870
    %v4884 = vpop.f32.mrf.mxu0
    %v4885 = vadd.f32 0.0, %v4884
    %v4886 = vpop.f32.mrf.mxu0
    %4887 = vdwg.mxu0
    %v4889 = vunpack.c.l.b16 %v4573
    %v4890 = vpack.c.b16 %v4889, %v4889
    %4891 = vrot.lane.b32.xlu0 %v4890, 96
    %v4892 = vpop.permute.xlu0 %4891
    %v4894 = vsel %vm209, %v4573, 0
    %v4897 = vsel %vm209, %v4892, 0
    %4899 = vmatpush.bf16.xpose.msra.mxu0 0
    %4900 = vmatpush.bf16.xpose.msra.mxu0 0
    %4901 = vmatpush.bf16.xpose.msra.mxu0 0
    %4902 = vmatpush.bf16.xpose.msra.mxu0 0
    %4903 = vmatpush.bf16.xpose.msra.mxu0 0
    %4904 = vmatpush.bf16.xpose.msra.mxu0 0
    %4905 = vmatpush.bf16.xpose.msra.mxu0 0
    %4906 = vmatpush.bf16.xpose.msra.mxu0 %v4897
    %4907 = vmatmul.bf16.gmra.mxu0 %v4894
    %v4908 = vpop.f32.mrf.mxu0
    %v4909 = vadd.f32 0.0, %v4908
    %v4910 = vpop.f32.mrf.mxu0
    %4911 = vdwg.mxu0
    %v4913 = vunpack.c.l.b16 %v4574
    %v4914 = vpack.c.b16 %v4913, %v4913
    %4915 = vrot.lane.b32.xlu0 %v4914, 96
    %v4916 = vpop.permute.xlu0 %4915
    %v4918 = vsel %vm209, %v4574, 0
    %v4921 = vsel %vm209, %v4916, 0
    %4923 = vmatpush.bf16.xpose.msra.mxu0 0
    %4924 = vmatpush.bf16.xpose.msra.mxu0 0
    %4925 = vmatpush.bf16.xpose.msra.mxu0 0
    %4926 = vmatpush.bf16.xpose.msra.mxu0 0
    %4927 = vmatpush.bf16.xpose.msra.mxu0 0
    %4928 = vmatpush.bf16.xpose.msra.mxu0 0
    %4929 = vmatpush.bf16.xpose.msra.mxu0 0
    %4930 = vmatpush.bf16.xpose.msra.mxu0 %v4921
    %4931 = vmatmul.bf16.gmra.mxu0 %v4918
    %v4932 = vpop.f32.mrf.mxu0
    %v4933 = vadd.f32 0.0, %v4932
    %v4934 = vpop.f32.mrf.mxu0
    %4935 = vdwg.mxu0
    %v4937 = vunpack.c.l.b16 %v4575
    %v4938 = vpack.c.b16 %v4937, %v4937
    %4939 = vrot.lane.b32.xlu0 %v4938, 96
    %v4940 = vpop.permute.xlu0 %4939
    %v4942 = vsel %vm209, %v4575, 0
    %v4945 = vsel %vm209, %v4940, 0
    %4947 = vmatpush.bf16.xpose.msra.mxu0 0
    %4948 = vmatpush.bf16.xpose.msra.mxu0 0
    %4949 = vmatpush.bf16.xpose.msra.mxu0 0
    %4950 = vmatpush.bf16.xpose.msra.mxu0 0
    %4951 = vmatpush.bf16.xpose.msra.mxu0 0
    %4952 = vmatpush.bf16.xpose.msra.mxu0 0
    %4953 = vmatpush.bf16.xpose.msra.mxu0 0
    %4954 = vmatpush.bf16.xpose.msra.mxu0 %v4945
    %4955 = vmatmul.bf16.gmra.mxu0 %v4942
    %v4956 = vpop.f32.mrf.mxu0
    %v4957 = vadd.f32 0.0, %v4956
    %v4958 = vpop.f32.mrf.mxu0
    %4959 = vdwg.mxu0
    %v4960 = vmul.f32 %v4597, 0.35355338
    %v4961 = vmul.f32 %v4621, 0.35355338
    %v4962 = vmul.f32 %v4645, 0.35355338
    %v4963 = vmul.f32 %v4669, 0.35355338
    %v4964 = vmul.f32 %v4693, 0.35355338
    %v4965 = vmul.f32 %v4717, 0.35355338
    %v4966 = vmul.f32 %v4741, 0.35355338
    %v4967 = vmul.f32 %v4765, 0.35355338
    %v4968 = vmul.f32 %v4789, 0.35355338
    %v4969 = vmul.f32 %v4813, 0.35355338
    %v4970 = vmul.f32 %v4837, 0.35355338
    %v4971 = vmul.f32 %v4861, 0.35355338
    %v4972 = vmul.f32 %v4885, 0.35355338
    %v4973 = vmul.f32 %v4909, 0.35355338
    %v4974 = vmul.f32 %v4933, 0.35355338
    %v4975 = vmul.f32 %v4957, 0.35355338
    %v4976 = vadd.f32 %v4960, %v2738
    %v4977 = vadd.f32 %v4961, %v2738
    %v4978 = vadd.f32 %v4962, %v2738
    %v4979 = vadd.f32 %v4963, %v2738
    %v4980 = vadd.f32 %v4964, %v2738
    %v4981 = vadd.f32 %v4965, %v2738
    %v4982 = vadd.f32 %v4966, %v2738
    %v4983 = vadd.f32 %v4967, %v2738
    %v4984 = vadd.f32 %v4968, %v2738
    %v4985 = vadd.f32 %v4969, %v2738
    %v4986 = vadd.f32 %v4970, %v2738
    %v4987 = vadd.f32 %v4971, %v2738
    %v4988 = vadd.f32 %v4972, %v2738
    %v4989 = vadd.f32 %v4973, %v2738
    %v4990 = vadd.f32 %v4974, %v2738
    %v4991 = vadd.f32 %v4975, %v2738
    %v4992 = vsel %vm209, %v4976, -inf
    %4993 = vmax.xlane.f32.xlu0 %v4992
    %v4994 = vpop.xlane.xlu0 %4993
    %v4995 = vsel %vm209, %v4977, -inf
    %4996 = vmax.xlane.f32.xlu0 %v4995
    %v4997 = vpop.xlane.xlu0 %4996
    %v4998 = vsel %vm209, %v4978, -inf
    %4999 = vmax.xlane.f32.xlu0 %v4998
    %v5000 = vpop.xlane.xlu0 %4999
    %v5001 = vsel %vm209, %v4979, -inf
    %5002 = vmax.xlane.f32.xlu0 %v5001
    %v5003 = vpop.xlane.xlu0 %5002
    %v5004 = vsel %vm209, %v4980, -inf
    %5005 = vmax.xlane.f32.xlu0 %v5004
    %v5006 = vpop.xlane.xlu0 %5005
    %v5007 = vsel %vm209, %v4981, -inf
    %5008 = vmax.xlane.f32.xlu0 %v5007
    %v5009 = vpop.xlane.xlu0 %5008
    %v5010 = vsel %vm209, %v4982, -inf
    %5011 = vmax.xlane.f32.xlu0 %v5010
    %v5012 = vpop.xlane.xlu0 %5011
    %v5013 = vsel %vm209, %v4983, -inf
    %5014 = vmax.xlane.f32.xlu0 %v5013
    %v5015 = vpop.xlane.xlu0 %5014
    %v5016 = vsel %vm209, %v4984, -inf
    %5017 = vmax.xlane.f32.xlu0 %v5016
    %v5018 = vpop.xlane.xlu0 %5017
    %v5019 = vsel %vm209, %v4985, -inf
    %5020 = vmax.xlane.f32.xlu0 %v5019
    %v5021 = vpop.xlane.xlu0 %5020
    %v5022 = vsel %vm209, %v4986, -inf
    %5023 = vmax.xlane.f32.xlu0 %v5022
    %v5024 = vpop.xlane.xlu0 %5023
    %v5025 = vsel %vm209, %v4987, -inf
    %5026 = vmax.xlane.f32.xlu0 %v5025
    %v5027 = vpop.xlane.xlu0 %5026
    %v5028 = vsel %vm209, %v4988, -inf
    %5029 = vmax.xlane.f32.xlu0 %v5028
    %v5030 = vpop.xlane.xlu0 %5029
    %v5031 = vsel %vm209, %v4989, -inf
    %5032 = vmax.xlane.f32.xlu0 %v5031
    %v5033 = vpop.xlane.xlu0 %5032
    %v5034 = vsel %vm209, %v4990, -inf
    %5035 = vmax.xlane.f32.xlu0 %v5034
    %v5036 = vpop.xlane.xlu0 %5035
    %v5037 = vsel %vm209, %v4991, -inf
    %5038 = vmax.xlane.f32.xlu0 %v5037
    %v5039 = vpop.xlane.xlu0 %5038
    %v5040 = vsub.f32 %v4976, %v4994
    %v5041 = vsub.f32 %v4977, %v4997
    %v5042 = vsub.f32 %v4978, %v5000
    %v5043 = vsub.f32 %v4979, %v5003
    %v5044 = vsub.f32 %v4980, %v5006
    %v5045 = vsub.f32 %v4981, %v5009
    %v5046 = vsub.f32 %v4982, %v5012
    %v5047 = vsub.f32 %v4983, %v5015
    %v5048 = vsub.f32 %v4984, %v5018
    %v5049 = vsub.f32 %v4985, %v5021
    %v5050 = vsub.f32 %v4986, %v5024
    %v5051 = vsub.f32 %v4987, %v5027
    %v5052 = vsub.f32 %v4988, %v5030
    %v5053 = vsub.f32 %v4989, %v5033
    %v5054 = vsub.f32 %v4990, %v5036
    %v5055 = vsub.f32 %v4991, %v5039
    %v5056 = vmul.f32 %v5040, 1.442695
    %v5057 = vpow.pop %v5056
    %v5058 = vmul.f32 %v5041, 1.442695
    %v5059 = vpow.pop %v5058
    %v5060 = vmul.f32 %v5042, 1.442695
    %v5061 = vpow.pop %v5060
    %v5062 = vmul.f32 %v5043, 1.442695
    %v5063 = vpow.pop %v5062
    %v5064 = vmul.f32 %v5044, 1.442695
    %v5065 = vpow.pop %v5064
    %v5066 = vmul.f32 %v5045, 1.442695
    %v5067 = vpow.pop %v5066
    %v5068 = vmul.f32 %v5046, 1.442695
    %v5069 = vpow.pop %v5068
    %v5070 = vmul.f32 %v5047, 1.442695
    %v5071 = vpow.pop %v5070
    %v5072 = vmul.f32 %v5048, 1.442695
    %v5073 = vpow.pop %v5072
    %v5074 = vmul.f32 %v5049, 1.442695
    %v5075 = vpow.pop %v5074
    %v5076 = vmul.f32 %v5050, 1.442695
    %v5077 = vpow.pop %v5076
    %v5078 = vmul.f32 %v5051, 1.442695
    %v5079 = vpow.pop %v5078
    %v5080 = vmul.f32 %v5052, 1.442695
    %v5081 = vpow.pop %v5080
    %v5082 = vmul.f32 %v5053, 1.442695
    %v5083 = vpow.pop %v5082
    %v5084 = vmul.f32 %v5054, 1.442695
    %v5085 = vpow.pop %v5084
    %v5086 = vmul.f32 %v5055, 1.442695
    %v5087 = vpow.pop %v5086
    %v5088 = vsel %vm209, %v5057, 0.0
    %5089 = vadd.xlane.f32.xlu0 %v5088
    %v5090 = vpop.xlane.xlu0 %5089
    %v5091 = vsel %vm209, %v5059, 0.0
    %5092 = vadd.xlane.f32.xlu0 %v5091
    %v5093 = vpop.xlane.xlu0 %5092
    %v5094 = vsel %vm209, %v5061, 0.0
    %5095 = vadd.xlane.f32.xlu0 %v5094
    %v5096 = vpop.xlane.xlu0 %5095
    %v5097 = vsel %vm209, %v5063, 0.0
    %5098 = vadd.xlane.f32.xlu0 %v5097
    %v5099 = vpop.xlane.xlu0 %5098
    %v5100 = vsel %vm209, %v5065, 0.0
    %5101 = vadd.xlane.f32.xlu0 %v5100
    %v5102 = vpop.xlane.xlu0 %5101
    %v5103 = vsel %vm209, %v5067, 0.0
    %5104 = vadd.xlane.f32.xlu0 %v5103
    %v5105 = vpop.xlane.xlu0 %5104
    %v5106 = vsel %vm209, %v5069, 0.0
    %5107 = vadd.xlane.f32.xlu0 %v5106
    %v5108 = vpop.xlane.xlu0 %5107
    %v5109 = vsel %vm209, %v5071, 0.0
    %5110 = vadd.xlane.f32.xlu0 %v5109
    %v5111 = vpop.xlane.xlu0 %5110
    %v5112 = vsel %vm209, %v5073, 0.0
    %5113 = vadd.xlane.f32.xlu0 %v5112
    %v5114 = vpop.xlane.xlu0 %5113
    %v5115 = vsel %vm209, %v5075, 0.0
    %5116 = vadd.xlane.f32.xlu0 %v5115
    %v5117 = vpop.xlane.xlu0 %5116
    %v5118 = vsel %vm209, %v5077, 0.0
    %5119 = vadd.xlane.f32.xlu0 %v5118
    %v5120 = vpop.xlane.xlu0 %5119
    %v5121 = vsel %vm209, %v5079, 0.0
    %5122 = vadd.xlane.f32.xlu0 %v5121
    %v5123 = vpop.xlane.xlu0 %5122
    %v5124 = vsel %vm209, %v5081, 0.0
    %5125 = vadd.xlane.f32.xlu0 %v5124
    %v5126 = vpop.xlane.xlu0 %5125
    %v5127 = vsel %vm209, %v5083, 0.0
    %5128 = vadd.xlane.f32.xlu0 %v5127
    %v5129 = vpop.xlane.xlu0 %5128
    %v5130 = vsel %vm209, %v5085, 0.0
    %5131 = vadd.xlane.f32.xlu0 %v5130
    %v5132 = vpop.xlane.xlu0 %5131
    %v5133 = vsel %vm209, %v5087, 0.0
    %5134 = vadd.xlane.f32.xlu0 %v5133
    %v5135 = vpop.xlane.xlu0 %5134
    %v5136 = vrcp.pop %v5090
    %v5137 = vrcp.pop %v5093
    %v5138 = vrcp.pop %v5096
    %v5139 = vrcp.pop %v5099
    %v5140 = vrcp.pop %v5102
    %v5141 = vrcp.pop %v5105
    %v5142 = vrcp.pop %v5108
    %v5143 = vrcp.pop %v5111
    %v5144 = vrcp.pop %v5114
    %v5145 = vrcp.pop %v5117
    %v5146 = vrcp.pop %v5120
    %v5147 = vrcp.pop %v5123
    %v5148 = vrcp.pop %v5126
    %v5149 = vrcp.pop %v5129
    %v5150 = vrcp.pop %v5132
    %v5151 = vrcp.pop %v5135
    %v5152 = vmul.f32 %v5057, %v5136
    %v5153 = vmul.f32 %v5059, %v5137
    %v5154 = vmul.f32 %v5061, %v5138
    %v5155 = vmul.f32 %v5063, %v5139
    %v5156 = vmul.f32 %v5065, %v5140
    %v5157 = vmul.f32 %v5067, %v5141
    %v5158 = vmul.f32 %v5069, %v5142
    %v5159 = vmul.f32 %v5071, %v5143
    %v5160 = vmul.f32 %v5073, %v5144
    %v5161 = vmul.f32 %v5075, %v5145
    %v5162 = vmul.f32 %v5077, %v5146
    %v5163 = vmul.f32 %v5079, %v5147
    %v5164 = vmul.f32 %v5081, %v5148
    %v5165 = vmul.f32 %v5083, %v5149
    %v5166 = vmul.f32 %v5085, %v5150
    %v5167 = vmul.f32 %v5087, %v5151
    %v5168 = vpack.c.bf16 %v5152, %v5152
    %v5169 = vpack.c.bf16 %v5153, %v5153
    %v5170 = vpack.c.bf16 %v5154, %v5154
    %v5171 = vpack.c.bf16 %v5155, %v5155
    %v5172 = vpack.c.bf16 %v5156, %v5156
    %v5173 = vpack.c.bf16 %v5157, %v5157
    %v5174 = vpack.c.bf16 %v5158, %v5158
    %v5175 = vpack.c.bf16 %v5159, %v5159
    %v5176 = vpack.c.bf16 %v5160, %v5160
    %v5177 = vpack.c.bf16 %v5161, %v5161
    %v5178 = vpack.c.bf16 %v5162, %v5162
    %v5179 = vpack.c.bf16 %v5163, %v5163
    %v5180 = vpack.c.bf16 %v5164, %v5164
    %v5181 = vpack.c.bf16 %v5165, %v5165
    %v5182 = vpack.c.bf16 %v5166, %v5166
    %v5183 = vpack.c.bf16 %v5167, %v5167
    %5184 = vrot.lane.b32.xlu0 %v4578, 64
    %v5185 = vpop.permute.xlu0 %5184
    %v5187 = vsel %vm209, %v5168, 0
    %v5190 = vsel %vm514, %v5185, 0
    %5192 = vmatpush.bf16.msra.mxu0 0
    %5193 = vmatpush.bf16.msra.mxu0 0
    %5194 = vmatpush.bf16.msra.mxu0 0
    %5195 = vmatpush.bf16.msra.mxu0 0
    %5196 = vmatpush.bf16.msra.mxu0 0
    %5197 = vmatpush.bf16.msra.mxu0 0
    %5198 = vmatpush.bf16.msra.mxu0 0
    %5199 = vmatpush.bf16.msra.mxu0 %v5190
    %5200 = vmatmul.bf16.gmra.mxu0 %v5187
    %v5201 = vpop.f32.mrf.mxu0
    %v5202 = vadd.f32 0.0, %v5201
    %v5203 = vpop.f32.mrf.mxu0
    %5204 = vdwg.mxu0
    %5205 = vrot.lane.b32.xlu0 %v4602, 64
    %v5206 = vpop.permute.xlu0 %5205
    %v5208 = vsel %vm209, %v5169, 0
    %v5211 = vsel %vm514, %v5206, 0
    %5213 = vmatpush.bf16.msra.mxu0 0
    %5214 = vmatpush.bf16.msra.mxu0 0
    %5215 = vmatpush.bf16.msra.mxu0 0
    %5216 = vmatpush.bf16.msra.mxu0 0
    %5217 = vmatpush.bf16.msra.mxu0 0
    %5218 = vmatpush.bf16.msra.mxu0 0
    %5219 = vmatpush.bf16.msra.mxu0 0
    %5220 = vmatpush.bf16.msra.mxu0 %v5211
    %5221 = vmatmul.bf16.gmra.mxu0 %v5208
    %v5222 = vpop.f32.mrf.mxu0
    %v5223 = vadd.f32 0.0, %v5222
    %v5224 = vpop.f32.mrf.mxu0
    %5225 = vdwg.mxu0
    %5226 = vrot.lane.b32.xlu0 %v4626, 64
    %v5227 = vpop.permute.xlu0 %5226
    %v5229 = vsel %vm209, %v5170, 0
    %v5232 = vsel %vm514, %v5227, 0
    %5234 = vmatpush.bf16.msra.mxu0 0
    %5235 = vmatpush.bf16.msra.mxu0 0
    %5236 = vmatpush.bf16.msra.mxu0 0
    %5237 = vmatpush.bf16.msra.mxu0 0
    %5238 = vmatpush.bf16.msra.mxu0 0
    %5239 = vmatpush.bf16.msra.mxu0 0
    %5240 = vmatpush.bf16.msra.mxu0 0
    %5241 = vmatpush.bf16.msra.mxu0 %v5232
    %5242 = vmatmul.bf16.gmra.mxu0 %v5229
    %v5243 = vpop.f32.mrf.mxu0
    %v5244 = vadd.f32 0.0, %v5243
    %v5245 = vpop.f32.mrf.mxu0
    %5246 = vdwg.mxu0
    %5247 = vrot.lane.b32.xlu0 %v4650, 64
    %v5248 = vpop.permute.xlu0 %5247
    %v5250 = vsel %vm209, %v5171, 0
    %v5253 = vsel %vm514, %v5248, 0
    %5255 = vmatpush.bf16.msra.mxu0 0
    %5256 = vmatpush.bf16.msra.mxu0 0
    %5257 = vmatpush.bf16.msra.mxu0 0
    %5258 = vmatpush.bf16.msra.mxu0 0
    %5259 = vmatpush.bf16.msra.mxu0 0
    %5260 = vmatpush.bf16.msra.mxu0 0
    %5261 = vmatpush.bf16.msra.mxu0 0
    %5262 = vmatpush.bf16.msra.mxu0 %v5253
    %5263 = vmatmul.bf16.gmra.mxu0 %v5250
    %v5264 = vpop.f32.mrf.mxu0
    %v5265 = vadd.f32 0.0, %v5264
    %v5266 = vpop.f32.mrf.mxu0
    %5267 = vdwg.mxu0
    %5268 = vrot.lane.b32.xlu0 %v4674, 64
    %v5269 = vpop.permute.xlu0 %5268
    %v5271 = vsel %vm209, %v5172, 0
    %v5274 = vsel %vm514, %v5269, 0
    %5276 = vmatpush.bf16.msra.mxu0 0
    %5277 = vmatpush.bf16.msra.mxu0 0
    %5278 = vmatpush.bf16.msra.mxu0 0
    %5279 = vmatpush.bf16.msra.mxu0 0
    %5280 = vmatpush.bf16.msra.mxu0 0
    %5281 = vmatpush.bf16.msra.mxu0 0
    %5282 = vmatpush.bf16.msra.mxu0 0
    %5283 = vmatpush.bf16.msra.mxu0 %v5274
    %5284 = vmatmul.bf16.gmra.mxu0 %v5271
    %v5285 = vpop.f32.mrf.mxu0
    %v5286 = vadd.f32 0.0, %v5285
    %v5287 = vpop.f32.mrf.mxu0
    %5288 = vdwg.mxu0
    %5289 = vrot.lane.b32.xlu0 %v4698, 64
    %v5290 = vpop.permute.xlu0 %5289
    %v5292 = vsel %vm209, %v5173, 0
    %v5295 = vsel %vm514, %v5290, 0
    %5297 = vmatpush.bf16.msra.mxu0 0
    %5298 = vmatpush.bf16.msra.mxu0 0
    %5299 = vmatpush.bf16.msra.mxu0 0
    %5300 = vmatpush.bf16.msra.mxu0 0
    %5301 = vmatpush.bf16.msra.mxu0 0
    %5302 = vmatpush.bf16.msra.mxu0 0
    %5303 = vmatpush.bf16.msra.mxu0 0
    %5304 = vmatpush.bf16.msra.mxu0 %v5295
    %5305 = vmatmul.bf16.gmra.mxu0 %v5292
    %v5306 = vpop.f32.mrf.mxu0
    %v5307 = vadd.f32 0.0, %v5306
    %v5308 = vpop.f32.mrf.mxu0
    %5309 = vdwg.mxu0
    %5310 = vrot.lane.b32.xlu0 %v4722, 64
    %v5311 = vpop.permute.xlu0 %5310
    %v5313 = vsel %vm209, %v5174, 0
    %v5316 = vsel %vm514, %v5311, 0
    %5318 = vmatpush.bf16.msra.mxu0 0
    %5319 = vmatpush.bf16.msra.mxu0 0
    %5320 = vmatpush.bf16.msra.mxu0 0
    %5321 = vmatpush.bf16.msra.mxu0 0
    %5322 = vmatpush.bf16.msra.mxu0 0
    %5323 = vmatpush.bf16.msra.mxu0 0
    %5324 = vmatpush.bf16.msra.mxu0 0
    %5325 = vmatpush.bf16.msra.mxu0 %v5316
    %5326 = vmatmul.bf16.gmra.mxu0 %v5313
    %v5327 = vpop.f32.mrf.mxu0
    %v5328 = vadd.f32 0.0, %v5327
    %v5329 = vpop.f32.mrf.mxu0
    %5330 = vdwg.mxu0
    %5331 = vrot.lane.b32.xlu0 %v4746, 64
    %v5332 = vpop.permute.xlu0 %5331
    %v5334 = vsel %vm209, %v5175, 0
    %v5337 = vsel %vm514, %v5332, 0
    %5339 = vmatpush.bf16.msra.mxu0 0
    %5340 = vmatpush.bf16.msra.mxu0 0
    %5341 = vmatpush.bf16.msra.mxu0 0
    %5342 = vmatpush.bf16.msra.mxu0 0
    %5343 = vmatpush.bf16.msra.mxu0 0
    %5344 = vmatpush.bf16.msra.mxu0 0
    %5345 = vmatpush.bf16.msra.mxu0 0
    %5346 = vmatpush.bf16.msra.mxu0 %v5337
    %5347 = vmatmul.bf16.gmra.mxu0 %v5334
    %v5348 = vpop.f32.mrf.mxu0
    %v5349 = vadd.f32 0.0, %v5348
    %v5350 = vpop.f32.mrf.mxu0
    %5351 = vdwg.mxu0
    %5352 = vrot.lane.b32.xlu0 %v4770, 64
    %v5353 = vpop.permute.xlu0 %5352
    %v5355 = vsel %vm209, %v5176, 0
    %v5358 = vsel %vm514, %v5353, 0
    %5360 = vmatpush.bf16.msra.mxu0 0
    %5361 = vmatpush.bf16.msra.mxu0 0
    %5362 = vmatpush.bf16.msra.mxu0 0
    %5363 = vmatpush.bf16.msra.mxu0 0
    %5364 = vmatpush.bf16.msra.mxu0 0
    %5365 = vmatpush.bf16.msra.mxu0 0
    %5366 = vmatpush.bf16.msra.mxu0 0
    %5367 = vmatpush.bf16.msra.mxu0 %v5358
    %5368 = vmatmul.bf16.gmra.mxu0 %v5355
    %v5369 = vpop.f32.mrf.mxu0
    %v5370 = vadd.f32 0.0, %v5369
    %v5371 = vpop.f32.mrf.mxu0
    %5372 = vdwg.mxu0
    %5373 = vrot.lane.b32.xlu0 %v4794, 64
    %v5374 = vpop.permute.xlu0 %5373
    %v5376 = vsel %vm209, %v5177, 0
    %v5379 = vsel %vm514, %v5374, 0
    %5381 = vmatpush.bf16.msra.mxu0 0
    %5382 = vmatpush.bf16.msra.mxu0 0
    %5383 = vmatpush.bf16.msra.mxu0 0
    %5384 = vmatpush.bf16.msra.mxu0 0
    %5385 = vmatpush.bf16.msra.mxu0 0
    %5386 = vmatpush.bf16.msra.mxu0 0
    %5387 = vmatpush.bf16.msra.mxu0 0
    %5388 = vmatpush.bf16.msra.mxu0 %v5379
    %5389 = vmatmul.bf16.gmra.mxu0 %v5376
    %v5390 = vpop.f32.mrf.mxu0
    %v5391 = vadd.f32 0.0, %v5390
    %v5392 = vpop.f32.mrf.mxu0
    %5393 = vdwg.mxu0
    %5394 = vrot.lane.b32.xlu0 %v4818, 64
    %v5395 = vpop.permute.xlu0 %5394
    %v5397 = vsel %vm209, %v5178, 0
    %v5400 = vsel %vm514, %v5395, 0
    %5402 = vmatpush.bf16.msra.mxu0 0
    %5403 = vmatpush.bf16.msra.mxu0 0
    %5404 = vmatpush.bf16.msra.mxu0 0
    %5405 = vmatpush.bf16.msra.mxu0 0
    %5406 = vmatpush.bf16.msra.mxu0 0
    %5407 = vmatpush.bf16.msra.mxu0 0
    %5408 = vmatpush.bf16.msra.mxu0 0
    %5409 = vmatpush.bf16.msra.mxu0 %v5400
    %5410 = vmatmul.bf16.gmra.mxu0 %v5397
    %v5411 = vpop.f32.mrf.mxu0
    %v5412 = vadd.f32 0.0, %v5411
    %v5413 = vpop.f32.mrf.mxu0
    %5414 = vdwg.mxu0
    %5415 = vrot.lane.b32.xlu0 %v4842, 64
    %v5416 = vpop.permute.xlu0 %5415
    %v5418 = vsel %vm209, %v5179, 0
    %v5421 = vsel %vm514, %v5416, 0
    %5423 = vmatpush.bf16.msra.mxu0 0
    %5424 = vmatpush.bf16.msra.mxu0 0
    %5425 = vmatpush.bf16.msra.mxu0 0
    %5426 = vmatpush.bf16.msra.mxu0 0
    %5427 = vmatpush.bf16.msra.mxu0 0
    %5428 = vmatpush.bf16.msra.mxu0 0
    %5429 = vmatpush.bf16.msra.mxu0 0
    %5430 = vmatpush.bf16.msra.mxu0 %v5421
    %5431 = vmatmul.bf16.gmra.mxu0 %v5418
    %v5432 = vpop.f32.mrf.mxu0
    %v5433 = vadd.f32 0.0, %v5432
    %v5434 = vpop.f32.mrf.mxu0
    %5435 = vdwg.mxu0
    %5436 = vrot.lane.b32.xlu0 %v4866, 64
    %v5437 = vpop.permute.xlu0 %5436
    %v5439 = vsel %vm209, %v5180, 0
    %v5442 = vsel %vm514, %v5437, 0
    %5444 = vmatpush.bf16.msra.mxu0 0
    %5445 = vmatpush.bf16.msra.mxu0 0
    %5446 = vmatpush.bf16.msra.mxu0 0
    %5447 = vmatpush.bf16.msra.mxu0 0
    %5448 = vmatpush.bf16.msra.mxu0 0
    %5449 = vmatpush.bf16.msra.mxu0 0
    %5450 = vmatpush.bf16.msra.mxu0 0
    %5451 = vmatpush.bf16.msra.mxu0 %v5442
    %5452 = vmatmul.bf16.gmra.mxu0 %v5439
    %v5453 = vpop.f32.mrf.mxu0
    %v5454 = vadd.f32 0.0, %v5453
    %v5455 = vpop.f32.mrf.mxu0
    %5456 = vdwg.mxu0
    %5457 = vrot.lane.b32.xlu0 %v4890, 64
    %v5458 = vpop.permute.xlu0 %5457
    %v5460 = vsel %vm209, %v5181, 0
    %v5463 = vsel %vm514, %v5458, 0
    %5465 = vmatpush.bf16.msra.mxu0 0
    %5466 = vmatpush.bf16.msra.mxu0 0
    %5467 = vmatpush.bf16.msra.mxu0 0
    %5468 = vmatpush.bf16.msra.mxu0 0
    %5469 = vmatpush.bf16.msra.mxu0 0
    %5470 = vmatpush.bf16.msra.mxu0 0
    %5471 = vmatpush.bf16.msra.mxu0 0
    %5472 = vmatpush.bf16.msra.mxu0 %v5463
    %5473 = vmatmul.bf16.gmra.mxu0 %v5460
    %v5474 = vpop.f32.mrf.mxu0
    %v5475 = vadd.f32 0.0, %v5474
    %v5476 = vpop.f32.mrf.mxu0
    %5477 = vdwg.mxu0
    %5478 = vrot.lane.b32.xlu0 %v4914, 64
    %v5479 = vpop.permute.xlu0 %5478
    %v5481 = vsel %vm209, %v5182, 0
    %v5484 = vsel %vm514, %v5479, 0
    %5486 = vmatpush.bf16.msra.mxu0 0
    %5487 = vmatpush.bf16.msra.mxu0 0
    %5488 = vmatpush.bf16.msra.mxu0 0
    %5489 = vmatpush.bf16.msra.mxu0 0
    %5490 = vmatpush.bf16.msra.mxu0 0
    %5491 = vmatpush.bf16.msra.mxu0 0
    %5492 = vmatpush.bf16.msra.mxu0 0
    %5493 = vmatpush.bf16.msra.mxu0 %v5484
    %5494 = vmatmul.bf16.gmra.mxu0 %v5481
    %v5495 = vpop.f32.mrf.mxu0
    %v5496 = vadd.f32 0.0, %v5495
    %v5497 = vpop.f32.mrf.mxu0
    %5498 = vdwg.mxu0
    %5499 = vrot.lane.b32.xlu0 %v4938, 64
    %v5500 = vpop.permute.xlu0 %5499
    %v5502 = vsel %vm209, %v5183, 0
    %v5505 = vsel %vm514, %v5500, 0
    %5507 = vmatpush.bf16.msra.mxu0 0
    %5508 = vmatpush.bf16.msra.mxu0 0
    %5509 = vmatpush.bf16.msra.mxu0 0
    %5510 = vmatpush.bf16.msra.mxu0 0
    %5511 = vmatpush.bf16.msra.mxu0 0
    %5512 = vmatpush.bf16.msra.mxu0 0
    %5513 = vmatpush.bf16.msra.mxu0 0
    %5514 = vmatpush.bf16.msra.mxu0 %v5505
    %5515 = vmatmul.bf16.gmra.mxu0 %v5502
    %v5516 = vpop.f32.mrf.mxu0
    %v5517 = vadd.f32 0.0, %v5516
    %v5518 = vpop.f32.mrf.mxu0
    %5519 = vdwg.mxu0
    %v5520 = vpack.c.bf16 %v5223, %v5202
    %v5521 = vpack.c.bf16 %v5265, %v5244
    %v5522 = vpack.c.bf16 %v5307, %v5286
    %v5523 = vpack.c.bf16 %v5349, %v5328
    %v5525 = vsel %vm209, %v5522, 0
    %v5528 = vsel %vm209, %v5523, 0
    %v5531 = vsel %vm514, %v4351, 0
    %5533 = vmatpush.bf16.msra.mxu0 0
    %5534 = vmatpush.bf16.msra.mxu0 0
    %5535 = vmatpush.bf16.msra.mxu0 0
    %5536 = vmatpush.bf16.msra.mxu0 0
    %5537 = vmatpush.bf16.msra.mxu0 0
    %5538 = vmatpush.bf16.msra.mxu0 0
    %5539 = vmatpush.bf16.msra.mxu0 0
    %5540 = vmatpush.bf16.msra.mxu0 %v5531
    %5541 = vmatmul.bf16.gmra.mxu0 %v5525
    %v5542 = vpop.f32.mrf.mxu0
    %v5543 = vadd.f32 0.0, %v5542
    %v5544 = vpop.f32.mrf.mxu0
    %v5545 = vadd.f32 0.0, %v5544
    %5546 = vmatmul.bf16.gmra.mxu0 %v5528
    %v5547 = vpop.f32.mrf.mxu0
    %v5548 = vadd.f32 0.0, %v5547
    %v5549 = vpop.f32.mrf.mxu0
    %v5550 = vadd.f32 0.0, %v5549
    %5551 = vdwg.mxu0
    %v5553 = vsel %vm209, %v5520, 0
    %v5556 = vsel %vm209, %v5521, 0
    %v5559 = vsel %vm514, %v4350, 0
    %5561 = vmatpush.bf16.msra.mxu0 0
    %5562 = vmatpush.bf16.msra.mxu0 0
    %5563 = vmatpush.bf16.msra.mxu0 0
    %5564 = vmatpush.bf16.msra.mxu0 0
    %5565 = vmatpush.bf16.msra.mxu0 0
    %5566 = vmatpush.bf16.msra.mxu0 0
    %5567 = vmatpush.bf16.msra.mxu0 0
    %5568 = vmatpush.bf16.msra.mxu0 %v5559
    %5569 = vmatmul.bf16.gmra.mxu0 %v5553
    %v5570 = vpop.f32.mrf.mxu0
    %v5571 = vadd.f32 %v5543, %v5570
    %v5572 = vpop.f32.mrf.mxu0
    %v5573 = vadd.f32 %v5545, %v5572
    %5574 = vmatmul.bf16.gmra.mxu0 %v5556
    %v5575 = vpop.f32.mrf.mxu0
    %v5576 = vadd.f32 %v5548, %v5575
    %v5577 = vpop.f32.mrf.mxu0
    %v5578 = vadd.f32 %v5550, %v5577
    %5579 = vdwg.mxu0
    %v5580 = vpack.c.bf16 %v5391, %v5370
    %v5581 = vpack.c.bf16 %v5433, %v5412
    %v5583 = vsel %vm209, %v5580, 0
    %v5586 = vsel %vm209, %v5581, 0
    %v5589 = vsel %vm514, %v4352, 0
    %5591 = vmatpush.bf16.msra.mxu0 0
    %5592 = vmatpush.bf16.msra.mxu0 0
    %5593 = vmatpush.bf16.msra.mxu0 0
    %5594 = vmatpush.bf16.msra.mxu0 0
    %5595 = vmatpush.bf16.msra.mxu0 0
    %5596 = vmatpush.bf16.msra.mxu0 0
    %5597 = vmatpush.bf16.msra.mxu0 0
    %5598 = vmatpush.bf16.msra.mxu0 %v5589
    %5599 = vmatmul.bf16.gmra.mxu0 %v5583
    %v5600 = vpop.f32.mrf.mxu0
    %v5601 = vadd.f32 0.0, %v5600
    %v5602 = vpop.f32.mrf.mxu0
    %v5603 = vadd.f32 0.0, %v5602
    %5604 = vmatmul.bf16.gmra.mxu0 %v5586
    %v5605 = vpop.f32.mrf.mxu0
    %v5606 = vadd.f32 0.0, %v5605
    %v5607 = vpop.f32.mrf.mxu0
    %v5608 = vadd.f32 0.0, %v5607
    %5609 = vdwg.mxu0
    %v5610 = vadd.f32 %v5571, %v5601
    %v5611 = vadd.f32 %v5573, %v5603
    %v5612 = vadd.f32 %v5576, %v5606
    %v5613 = vadd.f32 %v5578, %v5608
    %v5614 = vpack.c.bf16 %v5475, %v5454
    %v5615 = vpack.c.bf16 %v5517, %v5496
    %v5617 = vsel %vm209, %v5614, 0
    %v5620 = vsel %vm209, %v5615, 0
    %v5623 = vsel %vm514, %v4353, 0
    %5625 = vmatpush.bf16.msra.mxu0 0
    %5626 = vmatpush.bf16.msra.mxu0 0
    %5627 = vmatpush.bf16.msra.mxu0 0
    %5628 = vmatpush.bf16.msra.mxu0 0
    %5629 = vmatpush.bf16.msra.mxu0 0
    %5630 = vmatpush.bf16.msra.mxu0 0
    %5631 = vmatpush.bf16.msra.mxu0 0
    %5632 = vmatpush.bf16.msra.mxu0 %v5623
    %5633 = vmatmul.bf16.gmra.mxu0 %v5617
    %v5634 = vpop.f32.mrf.mxu0
    %v5635 = vadd.f32 0.0, %v5634
    %v5636 = vpop.f32.mrf.mxu0
    %v5637 = vadd.f32 0.0, %v5636
    %5638 = vmatmul.bf16.gmra.mxu0 %v5620
    %v5639 = vpop.f32.mrf.mxu0
    %v5640 = vadd.f32 0.0, %v5639
    %v5641 = vpop.f32.mrf.mxu0
    %v5642 = vadd.f32 0.0, %v5641
    %5643 = vdwg.mxu0
    %v5644 = vadd.f32 %v5610, %v5635
    %v5645 = vadd.f32 %v5611, %v5637
    %v5646 = vadd.f32 %v5612, %v5640
    %v5647 = vadd.f32 %v5613, %v5642
    %v5648 = vadd.f32 %v4342, %v5644
    %v5649 = vadd.f32 %v4343, %v5645
    %v5650 = vadd.f32 %v4344, %v5646
    %v5651 = vadd.f32 %v4345, %v5647
    %v5652 = vperm.slane %v4379, 0
    %v5653 = vadd.f32 %v5648, %v5652
    %v5654 = vadd.f32 %v5649, %v5652
    %v5655 = vadd.f32 %v5650, %v5652
    %v5656 = vadd.f32 %v5651, %v5652
    %v5657 = vsel %vm87, %v5653, 0.0
    %5658 = vadd.xlane.f32.xlu0 %v5657
    %v5659 = vpop.xlane.xlu0 %5658
    %v5660 = vsel %vm87, %v5654, 0.0
    %5661 = vadd.xlane.f32.xlu0 %v5660
    %v5662 = vpop.xlane.xlu0 %5661
    %v5663 = vsel %vm87, %v5655, 0.0
    %5664 = vadd.xlane.f32.xlu0 %v5663
    %v5665 = vpop.xlane.xlu0 %5664
    %v5666 = vsel %vm87, %v5656, 0.0
    %5667 = vadd.xlane.f32.xlu0 %v5666
    %v5668 = vpop.xlane.xlu0 %5667
    %v5669 = vmul.f32 %v5659, %v100
    %v5670 = vmul.f32 %v5662, %v100
    %v5671 = vmul.f32 %v5665, %v100
    %v5672 = vmul.f32 %v5668, %v100
    %v5673 = vsub.f32 %v5653, %v5669
    %v5674 = vsub.f32 %v5654, %v5670
    %v5675 = vsub.f32 %v5655, %v5671
    %v5676 = vsub.f32 %v5656, %v5672
    %v5677 = vmul.f32 %v5673, %v5673
    %v5678 = vmul.f32 %v5674, %v5674
    %v5679 = vmul.f32 %v5675, %v5675
    %v5680 = vmul.f32 %v5676, %v5676
    %v5681 = vsel %vm87, %v5677, 0.0
    %5682 = vadd.xlane.f32.xlu0 %v5681
    %v5683 = vpop.xlane.xlu0 %5682
    %v5684 = vsel %vm87, %v5678, 0.0
    %5685 = vadd.xlane.f32.xlu0 %v5684
    %v5686 = vpop.xlane.xlu0 %5685
    %v5687 = vsel %vm87, %v5679, 0.0
    %5688 = vadd.xlane.f32.xlu0 %v5687
    %v5689 = vpop.xlane.xlu0 %5688
    %v5690 = vsel %vm87, %v5680, 0.0
    %5691 = vadd.xlane.f32.xlu0 %v5690
    %v5692 = vpop.xlane.xlu0 %5691
    %v5693 = vmul.f32 %v5683, %v100
    %v5694 = vmul.f32 %v5686, %v100
    %v5695 = vmul.f32 %v5689, %v100
    %v5696 = vmul.f32 %v5692, %v100
    %v5697 = vadd.f32 %v5693, 1e-05
    %v5698 = vadd.f32 %v5694, 1e-05
    %v5699 = vadd.f32 %v5695, 1e-05
    %v5700 = vadd.f32 %v5696, 1e-05
    %v5701 = vrsqrt.pop %v5697
    %v5702 = vmul.f32 %v5701, %v5697
    %v5703 = vmul.f32 %v5702, %v5701
    %v5704 = vmul.f32 0.5, %v5703
    %v5705 = vsub.f32 1.5, %v5704
    %v5706 = vmul.f32 %v5701, %v5705
    %vm5707 = vweird.f32 %v5697
    %vm5708 = vweird.f32 %v5701
    %vm5709 = vmor %vm5707, %vm5708
    %v5710 = vsel %vm5709, %v5701, %v5706
    %v5711 = vrsqrt.pop %v5698
    %v5712 = vmul.f32 %v5711, %v5698
    %v5713 = vmul.f32 %v5712, %v5711
    %v5714 = vmul.f32 0.5, %v5713
    %v5715 = vsub.f32 1.5, %v5714
    %v5716 = vmul.f32 %v5711, %v5715
    %vm5717 = vweird.f32 %v5698
    %vm5718 = vweird.f32 %v5711
    %vm5719 = vmor %vm5717, %vm5718
    %v5720 = vsel %vm5719, %v5711, %v5716
    %v5721 = vrsqrt.pop %v5699
    %v5722 = vmul.f32 %v5721, %v5699
    %v5723 = vmul.f32 %v5722, %v5721
    %v5724 = vmul.f32 0.5, %v5723
    %v5725 = vsub.f32 1.5, %v5724
    %v5726 = vmul.f32 %v5721, %v5725
    %vm5727 = vweird.f32 %v5699
    %vm5728 = vweird.f32 %v5721
    %vm5729 = vmor %vm5727, %vm5728
    %v5730 = vsel %vm5729, %v5721, %v5726
    %v5731 = vrsqrt.pop %v5700
    %v5732 = vmul.f32 %v5731, %v5700
    %v5733 = vmul.f32 %v5732, %v5731
    %v5734 = vmul.f32 0.5, %v5733
    %v5735 = vsub.f32 1.5, %v5734
    %v5736 = vmul.f32 %v5731, %v5735
    %vm5737 = vweird.f32 %v5700
    %vm5738 = vweird.f32 %v5731
    %vm5739 = vmor %vm5737, %vm5738
    %v5740 = vsel %vm5739, %v5731, %v5736
    %v5741 = vmul.f32 %v5673, %v5710
    %v5742 = vmul.f32 %v5674, %v5720
    %v5743 = vmul.f32 %v5675, %v5730
    %v5744 = vmul.f32 %v5676, %v5740
    %v5745 = vperm.slane %v4376, 0
    %v5746 = vmul.f32 %v5741, %v5745
    %v5747 = vmul.f32 %v5742, %v5745
    %v5748 = vmul.f32 %v5743, %v5745
    %v5749 = vmul.f32 %v5744, %v5745
    %v5750 = vperm.slane %v4377, 0
    %v5751 = vadd.f32 %v5746, %v5750
    %v5752 = vadd.f32 %v5747, %v5750
    %v5753 = vadd.f32 %v5748, %v5750
    %v5754 = vadd.f32 %v5749, %v5750
    %v5755 = vpack.c.bf16 %v5752, %v5751
    %v5756 = vpack.c.bf16 %v5754, %v5753
    %v5757 = vperm.slane %v4380, 0
    %v5762 = vunpack.c.l.b16 %v4354
    %v5763 = vunpack.c.l.b16 %v4355
    %v5764 = vunpack.c.l.b16 %v4356
    %v5765 = vunpack.c.l.b16 %v4357
    %v5766 = vpack.c.b16 %v5763, %v5762
    %v5767 = vpack.c.b16 %v5765, %v5764
    %v5771 = vsel %vm87, %v5755, 0
    %v5774 = vsel %vm87, %v5756, 0
    %5776 = vmatpush.bf16.msra.mxu0 0
    %5777 = vmatpush.bf16.msra.mxu0 0
    %5778 = vmatpush.bf16.msra.mxu0 0
    %5779 = vmatpush.bf16.msra.mxu0 0
    %5780 = vmatpush.bf16.msra.mxu0 0
    %5781 = vmatpush.bf16.msra.mxu0 0
    %5782 = vmatpush.bf16.msra.mxu0 %v5767
    %5783 = vmatpush.bf16.msra.mxu0 %v5766
    %5784 = vmatmul.bf16.gmra.mxu0 %v5771
    %v5785 = vpop.f32.mrf.mxu0
    %v5786 = vadd.f32 %v5757, %v5785
    %v5787 = vpop.f32.mrf.mxu0
    %v5788 = vadd.f32 %v5757, %v5787
    %5789 = vmatmul.bf16.gmra.mxu0 %v5774
    %v5790 = vpop.f32.mrf.mxu0
    %v5791 = vadd.f32 %v5757, %v5790
    %v5792 = vpop.f32.mrf.mxu0
    %v5793 = vadd.f32 %v5757, %v5792
    %5794 = vdwg.mxu0
    %v5795 = vmul.f32 %v5786, 1.702
    %v5796 = vmul.f32 %v5788, 1.702
    %v5797 = vmul.f32 %v5791, 1.702
    %v5798 = vmul.f32 %v5793, 1.702
    %v5799 = vxor.u32 %v5795, 2147483648
    %v5800 = vxor.u32 %v5796, 2147483648
    %v5801 = vxor.u32 %v5797, 2147483648
    %v5802 = vxor.u32 %v5798, 2147483648
    %v5803 = vmul.f32 %v5799, 1.442695
    %v5804 = vpow.pop %v5803
    %v5805 = vmul.f32 %v5800, 1.442695
    %v5806 = vpow.pop %v5805
    %v5807 = vmul.f32 %v5801, 1.442695
    %v5808 = vpow.pop %v5807
    %v5809 = vmul.f32 %v5802, 1.442695
    %v5810 = vpow.pop %v5809
    %v5811 = vadd.f32 %v5804, 1.0
    %v5812 = vadd.f32 %v5806, 1.0
    %v5813 = vadd.f32 %v5808, 1.0
    %v5814 = vadd.f32 %v5810, 1.0
    %v5815 = vrcp.pop %v5811
    %v5816 = vmul.f32 %v5811, %v5815
    %v5817 = vsub.f32 1.0, %v5816
    %v5818 = vmul.f32 %v5815, %v5817
    %v5819 = vadd.f32 %v5815, %v5818
    %vm5820 = vweird.f32 %v5811
    %vm5821 = vweird.f32 %v5815
    %vm5822 = vmor %vm5820, %vm5821
    %v5823 = vsel %vm5822, %v5815, %v5819
    %v5824 = vand.u32 2147483647, %v5811
    %vm5825 = vcmp.eq.f32.partialorder %v5824, 8.507059e+37
    %v5826 = vand.u32 %v5811, 2147483648
    %v5827 = vor.u32 1.1754944e-38, %v5826
    %v5828 = vsel %vm5825, %v5827, %v5823
    %v5829 = vmul.f32 1.0, %v5828
    %v5830 = vrcp.pop %v5812
    %v5831 = vmul.f32 %v5812, %v5830
    %v5832 = vsub.f32 1.0, %v5831
    %v5833 = vmul.f32 %v5830, %v5832
    %v5834 = vadd.f32 %v5830, %v5833
    %vm5835 = vweird.f32 %v5812
    %vm5836 = vweird.f32 %v5830
    %vm5837 = vmor %vm5835, %vm5836
    %v5838 = vsel %vm5837, %v5830, %v5834
    %v5839 = vand.u32 2147483647, %v5812
    %vm5840 = vcmp.eq.f32.partialorder %v5839, 8.507059e+37
    %v5841 = vand.u32 %v5812, 2147483648
    %v5842 = vor.u32 1.1754944e-38, %v5841
    %v5843 = vsel %vm5840, %v5842, %v5838
    %v5844 = vmul.f32 1.0, %v5843
    %v5845 = vrcp.pop %v5813
    %v5846 = vmul.f32 %v5813, %v5845
    %v5847 = vsub.f32 1.0, %v5846
    %v5848 = vmul.f32 %v5845, %v5847
    %v5849 = vadd.f32 %v5845, %v5848
    %vm5850 = vweird.f32 %v5813
    %vm5851 = vweird.f32 %v5845
    %vm5852 = vmor %vm5850, %vm5851
    %v5853 = vsel %vm5852, %v5845, %v5849
    %v5854 = vand.u32 2147483647, %v5813
    %vm5855 = vcmp.eq.f32.partialorder %v5854, 8.507059e+37
    %v5856 = vand.u32 %v5813, 2147483648
    %v5857 = vor.u32 1.1754944e-38, %v5856
    %v5858 = vsel %vm5855, %v5857, %v5853
    %v5859 = vmul.f32 1.0, %v5858
    %v5860 = vrcp.pop %v5814
    %v5861 = vmul.f32 %v5814, %v5860
    %v5862 = vsub.f32 1.0, %v5861
    %v5863 = vmul.f32 %v5860, %v5862
    %v5864 = vadd.f32 %v5860, %v5863
    %vm5865 = vweird.f32 %v5814
    %vm5866 = vweird.f32 %v5860
    %vm5867 = vmor %vm5865, %vm5866
    %v5868 = vsel %vm5867, %v5860, %v5864
    %v5869 = vand.u32 2147483647, %v5814
    %vm5870 = vcmp.eq.f32.partialorder %v5869, 8.507059e+37
    %v5871 = vand.u32 %v5814, 2147483648
    %v5872 = vor.u32 1.1754944e-38, %v5871
    %v5873 = vsel %vm5870, %v5872, %v5868
    %v5874 = vmul.f32 1.0, %v5873
    %v5875 = vmul.f32 %v5786, %v5829
    %v5876 = vmul.f32 %v5788, %v5844
    %v5877 = vmul.f32 %v5791, %v5859
    %v5878 = vmul.f32 %v5793, %v5874
    %v5879 = vpack.c.bf16 %v5876, %v5875
    %v5880 = vpack.c.bf16 %v5878, %v5877
    %v5881 = vperm.slane %v4381, 0
    %v5898 = vunpack.c.l.b16 %v4358
    %v5899 = vunpack.c.l.b16 %v4359
    %v5900 = vunpack.c.l.b16 %v4360
    %v5901 = vunpack.c.l.b16 %v4361
    %v5902 = vunpack.c.l.b16 %v4362
    %v5903 = vunpack.c.l.b16 %v4363
    %v5904 = vunpack.c.l.b16 %v4364
    %v5905 = vunpack.c.l.b16 %v4365
    %v5906 = vunpack.c.l.b16 %v4366
    %v5907 = vunpack.c.l.b16 %v4367
    %v5908 = vunpack.c.l.b16 %v4368
    %v5909 = vunpack.c.l.b16 %v4369
    %v5910 = vunpack.c.l.b16 %v4370
    %v5911 = vunpack.c.l.b16 %v4371
    %v5912 = vunpack.c.l.b16 %v4372
    %v5913 = vunpack.c.l.b16 %v4373
    %v5914 = vpack.c.b16 %v5899, %v5898
    %v5915 = vpack.c.b16 %v5901, %v5900
    %v5916 = vpack.c.b16 %v5903, %v5902
    %v5917 = vpack.c.b16 %v5905, %v5904
    %v5918 = vpack.c.b16 %v5907, %v5906
    %v5919 = vpack.c.b16 %v5909, %v5908
    %v5920 = vpack.c.b16 %v5911, %v5910
    %v5921 = vpack.c.b16 %v5913, %v5912
    %5930 = vmatpush.bf16.msra.mxu0 %v5921
    %5931 = vmatpush.bf16.msra.mxu0 %v5920
    %5932 = vmatpush.bf16.msra.mxu0 %v5919
    %5933 = vmatpush.bf16.msra.mxu0 %v5918
    %5934 = vmatpush.bf16.msra.mxu0 %v5917
    %5935 = vmatpush.bf16.msra.mxu0 %v5916
    %5936 = vmatpush.bf16.msra.mxu0 %v5915
    %5937 = vmatpush.bf16.msra.mxu0 %v5914
    %5938 = vmatmul.bf16.gmra.mxu0 %v5879
    %v5939 = vpop.f32.mrf.mxu0
    %v5940 = vadd.f32 %v5881, %v5939
    %v5941 = vpop.f32.mrf.mxu0
    %v5942 = vadd.f32 %v5881, %v5941
    %5943 = vmatmul.bf16.gmra.mxu0 %v5880
    %v5944 = vpop.f32.mrf.mxu0
    %v5945 = vadd.f32 %v5881, %v5944
    %v5946 = vpop.f32.mrf.mxu0
    %v5947 = vadd.f32 %v5881, %v5946
    %5948 = vdwg.mxu0
    %v5949 = vadd.f32 %v5653, %v5940
    %v5950 = vadd.f32 %v5654, %v5942
    %v5951 = vadd.f32 %v5655, %v5945
    %v5952 = vadd.f32 %v5656, %v5947
    %v5953 = vld [vmem:[%s6] sm:$0xf]
    %v5954 = vpack.c.bf16 %v5953, %v5953
    %v5955 = vpack.c.bf16 %v5950, %v5949
    %v5956 = vpack.c.bf16 %v5952, %v5951
    %v5958 = vsel %vm87, %v5954, 0
    %5960 = vmatpush.bf16.msra.mxu0 0
    %5961 = vmatpush.bf16.msra.mxu0 0
    %5962 = vmatpush.bf16.msra.mxu0 0
    %5963 = vmatpush.bf16.msra.mxu0 0
    %5964 = vmatpush.bf16.msra.mxu0 0
    %5965 = vmatpush.bf16.msra.mxu0 0
    %5966 = vmatpush.bf16.msra.mxu0 %v5956
    %5967 = vmatpush.bf16.msra.mxu0 %v5955
    %5968 = vmatmul.bf16.gmra.mxu0 %v5958
    %v5969 = vpop.f32.mrf.mxu0
    %v5970 = vadd.f32 0.0, %v5969
    %v5971 = vpop.f32.mrf.mxu0
    %5972 = vdwg.mxu0
    %v5973 = vld [vmem:[%s9 + $0x24] sm:$0x1]
    %v5974 = vld [vmem:[%s9 + $0x25] sm:$0x1]
    %vm5975 = vcmask 257024
    %v5976 = vsel %vm5975, %v5970, 0.0
    %5977 = vadd.xlane.f32.xlu0 %v5976
    %v5978 = vpop.xlane.xlu0 %5977
    %v5979 = vmul.f32 %v5978, %v100
    %v5980 = vsub.f32 %v5970, %v5979
    %v5981 = vmul.f32 %v5980, %v5980
    %v5982 = vsel %vm5975, %v5981, 0.0
    %5983 = vadd.xlane.f32.xlu0 %v5982
    %v5984 = vpop.xlane.xlu0 %5983
    %v5985 = vmul.f32 %v5984, %v100
    %v5986 = vadd.f32 %v5985, 1e-05
    %v5987 = vrsqrt.pop %v5986
    %v5988 = vmul.f32 %v5987, %v5986
    %v5989 = vmul.f32 %v5988, %v5987
    %v5990 = vmul.f32 0.5, %v5989
    %v5991 = vsub.f32 1.5, %v5990
    %v5992 = vmul.f32 %v5987, %v5991
    %vm5993 = vweird.f32 %v5986
    %vm5994 = vweird.f32 %v5987
    %vm5995 = vmor %vm5993, %vm5994
    %v5996 = vsel %vm5995, %v5987, %v5992
    %v5997 = vmul.f32 %v5980, %v5996
    %v5998 = vperm.slane %v5973, 0
    %v5999 = vmul.f32 %v5997, %v5998
    %v6000 = vperm.slane %v5974, 0
    %v6001 = vadd.f32 %v5999, %v6000
    %v6002 = vld [vmem:[%s8 + $0x1d0] sm:$0xf]
    %v6003 = vld [vmem:[%s8 + $0x1d4] sm:$0xf]
    %v6004 = vld [vmem:[%s8 + $0x1d8] sm:$0xf]
    %v6005 = vld [vmem:[%s8 + $0x1dc] sm:$0xf]
    %v6006 = vpack.c.bf16 %v6001, %v6001
    %v6011 = vunpack.c.l.b16 %v6002
    %v6012 = vunpack.c.l.b16 %v6003
    %v6013 = vunpack.c.l.b16 %v6004
    %v6014 = vunpack.c.l.b16 %v6005
    %v6015 = vpack.c.b16 %v6012, %v6011
    %v6016 = vpack.c.b16 %v6014, %v6013
    %v6020 = vsel %vm87, %v6006, 0
    %6022 = vmatpush.bf16.msra.mxu0 0
    %6023 = vmatpush.bf16.msra.mxu0 0
    %6024 = vmatpush.bf16.msra.mxu0 0
    %6025 = vmatpush.bf16.msra.mxu0 0
    %6026 = vmatpush.bf16.msra.mxu0 0
    %6027 = vmatpush.bf16.msra.mxu0 0
    %6028 = vmatpush.bf16.msra.mxu0 %v6016
    %6029 = vmatpush.bf16.msra.mxu0 %v6015
    %6030 = vmatmul.bf16.gmra.mxu0 %v6020
    %v6031 = vpop.f32.mrf.mxu0
    %v6032 = vadd.f32 0.0, %v6031
    %v6033 = vpop.f32.mrf.mxu0
    %6034 = vdwg.mxu0
    %v6035 = vmul.f32 %v6032, %v6032
    %v6036 = vsel %vm5975, %v6035, 0.0
    %6037 = vadd.xlane.f32.xlu0 %v6036
    %v6038 = vpop.xlane.xlu0 %6037
    %v6039 = vrsqrt.pop %v6038
    %v6040 = vmul.f32 %v6039, %v6038
    %v6041 = vmul.f32 %v6040, %v6039
    %v6042 = vmul.f32 0.5, %v6041
    %v6043 = vsub.f32 1.5, %v6042
    %v6044 = vmul.f32 %v6039, %v6043
    %vm6045 = vweird.f32 %v6038
    %vm6046 = vweird.f32 %v6039
    %vm6047 = vmor %vm6045, %vm6046
    %v6048 = vsel %vm6047, %v6039, %v6044
    %v6049 = vmul.f32 %v6032, %v6048
    %v6050 = vld [vmem:[%s7] sm:$0x3]
    %vm6051 = vcmask 31744
    %v6053 = vsel %vm6051, %v6050, 0
    %v6056 = vsel %vm514, %v6049, 0
    %6058 = vmatpush.msra.mxu0 0.0
    %6059 = vmatpush.msra.mxu0 0.0
    %6060 = vmatpush.msra.mxu0 0.0
    %6061 = vmatpush.msra.mxu0 0.0
    %6062 = vmatpush.msra.mxu0 0.0
    %6063 = vmatpush.msra.mxu0 0.0
    %6064 = vmatpush.msra.mxu0 0.0
    %6065 = vmatpush.msra.mxu0 0.0
    %6066 = vmatpush.msra.mxu0 0.0
    %6067 = vmatpush.msra.mxu0 0.0
    %6068 = vmatpush.msra.mxu0 0.0
    %6069 = vmatpush.msra.mxu0 0.0
    %6070 = vmatpush.msra.mxu0 0.0
    %6071 = vmatpush.msra.mxu0 0.0
    %6072 = vmatpush.msra.mxu0 0.0
    %6073 = vmatpush.msra.mxu0 %v6056
    %6074 = vmatmul.f32.gmra.mxu0 %v6053
    %v6075 = vpop.f32.mrf.mxu0
    %v6076 = vadd.f32 0.0, %v6075
    %6077 = vdwg.mxu0
    %vm6078 = vcmask 25600
    %v6079 = vsel %vm6078, %v6050, 0.0
    %6080 = vadd.xlane.f32.xlu0 %v6079
    %v6081 = vpop.xlane.xlu0 %6080
    %vm6082 = vcmp.eq.f32.partialorder %v6081, 0.0
    %v6083 = vsel %vm6082, 1.0, %v6081
    %v6084 = vrcp.pop %v6083
    %v6085 = vmul.f32 %v6076, %v6084
    %v6086 = vmul.f32 %v1961, %v1961
    %vm6087 = vcmask 254976
    %v6088 = vsel %vm6087, %v6086, 0.0
    %6089 = vadd.xlane.f32.xlu0 %v6088
    %v6090 = vpop.xlane.xlu0 %6089
    %v6091 = vrsqrt.pop %v6090
    %v6092 = vmul.f32 %v6091, %v6090
    %v6093 = vmul.f32 %v6092, %v6091
    %v6094 = vmul.f32 0.5, %v6093
    %v6095 = vsub.f32 1.5, %v6094
    %v6096 = vmul.f32 %v6091, %v6095
    %vm6097 = vweird.f32 %v6090
    %vm6098 = vweird.f32 %v6091
    %vm6099 = vmor %vm6097, %vm6098
    %v6100 = vsel %vm6099, %v6091, %v6096
    %v6101 = vmul.f32 %v1961, %v6100
    %v6102 = vmul.f32 %v6085, %v6085
    %v6103 = vsel %vm6087, %v6102, 0.0
    %6104 = vadd.xlane.f32.xlu0 %v6103
    %v6105 = vpop.xlane.xlu0 %6104
    %v6106 = vrsqrt.pop %v6105
    %v6107 = vmul.f32 %v6106, %v6105
    %v6108 = vmul.f32 %v6107, %v6106
    %v6109 = vmul.f32 0.5, %v6108
    %v6110 = vsub.f32 1.5, %v6109
    %v6111 = vmul.f32 %v6106, %v6110
    %vm6112 = vweird.f32 %v6105
    %vm6113 = vweird.f32 %v6106
    %vm6114 = vmor %vm6112, %vm6113
    %v6115 = vsel %vm6114, %v6106, %v6111
    %v6116 = vmul.f32 %v6085, %v6115
    %v6118 = vsel %vm87, %v6101, 0
    %v6121 = vsel %vm87, %v6116, 0
    %6123 = vmatpush.xpose.msra.mxu0 0.0
    %6124 = vmatpush.xpose.msra.mxu0 0.0
    %6125 = vmatpush.xpose.msra.mxu0 0.0
    %6126 = vmatpush.xpose.msra.mxu0 0.0
    %6127 = vmatpush.xpose.msra.mxu0 0.0
    %6128 = vmatpush.xpose.msra.mxu0 0.0
    %6129 = vmatpush.xpose.msra.mxu0 0.0
    %6130 = vmatpush.xpose.msra.mxu0 0.0
    %6131 = vmatpush.xpose.msra.mxu0 0.0
    %6132 = vmatpush.xpose.msra.mxu0 0.0
    %6133 = vmatpush.xpose.msra.mxu0 0.0
    %6134 = vmatpush.xpose.msra.mxu0 0.0
    %6135 = vmatpush.xpose.msra.mxu0 0.0
    %6136 = vmatpush.xpose.msra.mxu0 0.0
    %6137 = vmatpush.xpose.msra.mxu0 0.0
    %6138 = vmatpush.xpose.msra.mxu0 %v6121
    %6139 = vmatmul.f32.gmra.mxu0 %v6118
    %v6140 = vpop.f32.mrf.mxu0
    %v6141 = vadd.f32 0.0, %v6140
    %6142 = vdwg.mxu0
    %s6143 = sld [smem:[#allocation2]]
    %v6144 = vstv %s6143
    %v6145 = vmul.f32 %v6141, %v6144
    %v6146 = vlaneseq
    %v6147 = vshrl.u32 %v6146, 7
    %v6148 = vlaneseq
    %v6149 = vand.u32 %v6148, 127
    %vm6150 = vcmp.eq.s32.totalorder %v6147, %v6149
    %v6151 = vsel %vm6150, %v6145, 0.0
    %vm6152 = vcmask 9216
    %v6153 = vsel %vm6152, %v6151, 0.0
    %6154 = vadd.xlane.f32.xlu0 %v6153
    %v6155 = vpop.xlane.xlu0 %6154
    %v6156 = vrot.slane %v6153, 4
    %v6157 = vadd.f32 %v6153, %v6156
    %v6158 = vrot.slane %v6157, 2
    %v6159 = vadd.f32 %v6157, %v6158
    %v6160 = vrot.slane %v6159, 1
    %v6161 = vadd.f32 %v6159, %v6160
    %v6162 = vsel %vm6152, %v6145, -inf
    %6163 = vmax.xlane.f32.xlu0 %v6162
    %v6164 = vpop.xlane.xlu0 %6163
    %v6165 = vsub.f32 %v6145, %v6164
    %v6166 = vmul.f32 %v6165, 1.442695
    %v6167 = vpow.pop %v6166
    %v6168 = vsel %vm6152, %v6167, 0.0
    %6169 = vadd.xlane.f32.xlu0 %v6168
    %v6170 = vpop.xlane.xlu0 %6169
    %v6171 = vlog2.pop %v6170
    %v6172 = vmul.f32 %v6171, 0.6931472
    %v6173 = vadd.f32 %v6172, %v6164
    %v6174 = vrot.slane %v6162, 4
    %v6175 = vmax.f32 %v6162, %v6174
    %v6176 = vrot.slane %v6175, 2
    %v6177 = vmax.f32 %v6175, %v6176
    %v6178 = vrot.slane %v6177, 1
    %v6179 = vmax.f32 %v6177, %v6178
    %v6180 = vsub.f32 %v6145, %v6179
    %v6181 = vmul.f32 %v6180, 1.442695
    %v6182 = vpow.pop %v6181
    %v6183 = vsel %vm6152, %v6182, 0.0
    %v6184 = vrot.slane %v6183, 4
    %v6185 = vadd.f32 %v6183, %v6184
    %v6186 = vrot.slane %v6185, 2
    %v6187 = vadd.f32 %v6185, %v6186
    %v6188 = vrot.slane %v6187, 1
    %v6189 = vadd.f32 %v6187, %v6188
    %v6190 = vlog2.pop %v6189
    %v6191 = vmul.f32 %v6190, 0.6931472
    %v6192 = vadd.f32 %v6191, %v6179
    %v6193 = vsub.f32 %v6155, %v6173
    %vm6194 = vcmask 1024
    %v6195 = vsel %vm6194, %v6193, 0.0
    %6196 = vadd.xlane.f32.xlu0 %v6195
    %v6197 = vpop.xlane.xlu0 %6196
    %v6198 = vrot.slane %v6197, 4
    %v6199 = vadd.f32 %v6197, %v6198
    %v6200 = vrot.slane %v6199, 2
    %v6201 = vadd.f32 %v6199, %v6200
    %v6202 = vrot.slane %v6201, 1
    %v6203 = vadd.f32 %v6201, %v6202
    %s6204 = vtos %v6203
    %v6205 = vstv %s6204
    %v6206 = vsub.f32 0.0, %v6205
    %v6207 = vrcp.pop 2.0
    %v6208 = vmul.f32 2.0, %v6207
    %v6209 = vsub.f32 1.0, %v6208
    %v6210 = vmul.f32 %v6207, %v6209
    %v6211 = vadd.f32 %v6207, %v6210
    %vm6212 = vweird.f32 %v6207
    %v6213 = vsel %vm6212, %v6207, %v6211
    %v6214 = vmul.f32 %v6206, %v6213
    %v6215 = vsub.f32 %v6161, %v6192
    %vm6216 = vcmask 8192
    %v6217 = vsel %vm6216, %v6215, 0.0
    %6218 = vadd.xlane.f32.xlu0 %v6217
    %v6219 = vpop.xlane.xlu0 %6218
    %v6220 = vrot.slane %v6219, 4
    %v6221 = vadd.f32 %v6219, %v6220
    %v6222 = vrot.slane %v6221, 2
    %v6223 = vadd.f32 %v6221, %v6222
    %v6224 = vrot.slane %v6223, 1
    %v6225 = vadd.f32 %v6223, %v6224
    %s6226 = vtos %v6225
    %v6227 = vstv %s6226
    %v6228 = vsub.f32 0.0, %v6227
    %v6229 = vmul.f32 %v6228, %v6213
    %v6230 = vadd.f32 %v6214, %v6229
    %v6231 = vmul.f32 %v6230, 0.5
    %vm6232 = vcmask 0
    %6233 = vst.msk [vmem:[#allocation3] sm:$0x1] %vm6232, %v6231
    // Predicated region
    $region46: #{vtr_forward.1} parent=1 // pred_check
      _
    $region47: #{vtr_forward.1} parent=1 // pred_check_branch
      %6235 = sbr.rel (0) target = $region49
    $region48: #{vtr_forward.1} parent=1 // pred_region
      %6237 = vsyncadd [#allocation4], 0
      %s6239 = sshll.u32 [#allocation3], 4
      %s6240 = int_to_ptr.vmem [resolvable:$true] %s6239
      %s6241 = sshll.u32 %s11, 4
      %s6242 = int_to_ptr.hbm [resolvable:$true] %s6241
      %6244 = dma.vmem_to_hbm [thread:$0]  %s6240, 16, %s6242, [#allocation4]
    $region49: #{vtr_forward.1} parent=1 // pred_fallthru
      _
    // Predicated region
    $region50: #{vtr_forward.1} parent=1 // pred_check
      _
    $region51: #{vtr_forward.1} parent=1 // pred_check_branch
      %6246 = sbr.rel (0) target = $region53
    $region52: #{vtr_forward.1} parent=1 // pred_region
      %6248 = dma.done [#allocation4], 16
    $region53: #{vtr_forward.1} parent=1 // pred_fallthru
      _
    %6249 = vsyncpa [#allocation4], 1

</llo_original>
